<compile_context>
chip_gen: v7x
topology: tpu7x:2x2x1
jax: 0.10.0
libtpu: 0.0.40
codegen_flags: <defaults>
</compile_context>

<pallas_src>
import math

import numpy as np
import jax
import jax.numpy as jnp
from jax import lax
from jax.experimental import pallas as pl
from jax.experimental.pallas import tpu as pltpu

# ----------------------------- model hyper-parameters -----------------------------
B = 2                 # batch
IMG_C, IMG_H, IMG_W = 3, 32, 32
PATCH = 8
N_H, N_W = IMG_H // PATCH, IMG_W // PATCH
N_PATCH = N_H * N_W           # 16 tokens (4x4 grid)
ENC_DIM = 32                  # ViT embed dim
N_HEADS = 2
MLP_DIM = 64
EMB_DIM = 16                  # prompt / image-embedding channels (SAM: 256)
NUM_MASK_TOKENS = 4           # num_multimask_outputs + 1
DEC_MLP_DIM = 32
UP_C1, UP_C2 = 8, 4           # upscaling channel widths (SAM: dim//4, dim//8)
UPX = 4                       # total mask-decoder upscaling factor (2x conv-transpose, twice)
SUBPIX = UPX * UPX            # sub-pixel positions per image token
N_PROMPT = 2                  # two box-corner prompt tokens
N_QUERY = 1 + NUM_MASK_TOKENS + N_PROMPT   # iou token + mask tokens + prompt tokens = 7
LN_EPS = 1e-6


# ----------------------------- in-kernel helpers -----------------------------
def _bf16_dot(a, b):
    """MXU matmul: bf16 inputs, f32 accumulation."""
    return jnp.dot(a.astype(jnp.bfloat16), b.astype(jnp.bfloat16),
                   preferred_element_type=jnp.float32)


def _bf16_dot_t(a, b):
    """a @ b.T (contract the feature axis of both), bf16 inputs, f32 accumulation."""
    return lax.dot_general(a.astype(jnp.bfloat16), b.astype(jnp.bfloat16),
                           (((1,), (1,)), ((), ())),
                           preferred_element_type=jnp.float32)


def _gelu(y):
    # tanh-approx GELU (PyTorch nn.GELU default is the erf form; approximation is intentional)
    return 0.5 * y * (1.0 + jnp.tanh(0.7978845608028654 * (y + 0.044715 * y * y * y)))


def _layernorm(x, g, b, eps=LN_EPS):
    mu = jnp.mean(x, axis=-1, keepdims=True)
    d = x - mu
    var = jnp.mean(d * d, axis=-1, keepdims=True)
    return d * lax.rsqrt(var + eps) * g + b


def _softmax_rows(s):
    s = s - jnp.max(s, axis=-1, keepdims=True)
    e = jnp.exp(s)
    return e * pl.reciprocal(jnp.sum(e, axis=-1, keepdims=True), approx=True)


# ----------------------------- fused kernels -----------------------------
def _encoder_kernel(patch_ref, pw_ref, pb_ref, pos_ref,
                    ln1g_ref, ln1b_ref, qkvw_ref, qkvb_ref, projw_ref, projb_ref,
                    ln2g_ref, ln2b_ref, mw1_ref, mb1_ref, mw2_ref, mb2_ref,
                    neckw_ref, neckb_ref, nlng_ref, nlnb_ref, out_ref):
    """Whole image encoder for one batch element: patch-embed + transformer block + neck."""
    x = patch_ref[0]                                                     # (N_PATCH, P*P*C)
    tok = _bf16_dot(x, pw_ref[...]) + pb_ref[...] + pos_ref[...]         # patch embed + pos

    # transformer block (pre-LN)
    h = _layernorm(tok, ln1g_ref[...], ln1b_ref[...])
    qkv = _bf16_dot(h, qkvw_ref[...]) + qkvb_ref[...]                    # (N, 3D)
    dh = ENC_DIM // N_HEADS
    proj_w = projw_ref[...]
    attn = projb_ref[...]                                                # start from output bias
    for hh in range(N_HEADS):                                            # static unroll
        q = qkv[:, hh * dh:(hh + 1) * dh]
        k = qkv[:, ENC_DIM + hh * dh:ENC_DIM + (hh + 1) * dh]
        v = qkv[:, 2 * ENC_DIM + hh * dh:2 * ENC_DIM + (hh + 1) * dh]
        p = _softmax_rows(_bf16_dot_t(q, k) * (1.0 / math.sqrt(dh)))
        o = _bf16_dot(p, v)
        # concat-over-heads followed by the output projection == sum of per-head slices
        attn = attn + _bf16_dot(o, proj_w[hh * dh:(hh + 1) * dh, :])
    tok = tok + attn

    h = _layernorm(tok, ln2g_ref[...], ln2b_ref[...])
    m = _gelu(_bf16_dot(h, mw1_ref[...]) + mb1_ref[...])
    m = _bf16_dot(m, mw2_ref[...]) + mb2_ref[...]
    tok = tok + m

    # neck (1x1 conv == linear) + LayerNorm
    e = _bf16_dot(tok, neckw_ref[...]) + neckb_ref[...]
    out_ref[0] = _layernorm(e, nlng_ref[...], nlnb_ref[...])


def _decoder_kernel(q0_ref, emb_ref, impe_ref, nomask_ref,
                    wq_ref, bq_ref, wk_ref, bk_ref, wv_ref, bv_ref, wo_ref, bo_ref,
                    ng_ref, nb_ref,
                    mw1_ref, mb1_ref, mw2_ref, mb2_ref,
                    up1w_ref, up1b_ref, ulng_ref, ulnb_ref, g8_ref, up2w_ref, up2b_ref,
                    hw1_ref, hb1_ref, hw2_ref, hb2_ref, hw3_ref, hb3_ref,
                    tile_ref, gsum_ref, out_ref):
    """Whole mask decoder for one batch element: two-way attention + final attention +
    output upscaling + hypernetwork head.  Emits the low-res mask in a pre-pixel-shuffle
    layout: rows = (i, j) token grid, cols = (s1, s2, t1, t2) sub-pixel offsets."""
    E = EMB_DIM
    scale = 1.0 / math.sqrt(E)

    queries = q0_ref[0]                                # (7, E): [iou, mask0..3, box corners]
    query_pe = queries                                 # initial token embeddings act as query PE
    keys = emb_ref[0] + nomask_ref[...]                # image embedding + dense (no-mask) embedding
    key_pe = impe_ref[...]

    def attention(i, q_in, k_in, v_in):
        qh = _bf16_dot(q_in, wq_ref[i]) + bq_ref[i]
        kh = _bf16_dot(k_in, wk_ref[i]) + bk_ref[i]
        vh = _bf16_dot(v_in, wv_ref[i]) + bv_ref[i]
        p = _softmax_rows(_bf16_dot_t(qh, kh) * scale)
        return _bf16_dot(_bf16_dot(p, vh), wo_ref[i]) + bo_ref[i]

    def norm(i, x):
        return _layernorm(x, ng_ref[i], nb_ref[i])

    # ---- two-way attention block (skip_first_layer_pe=True) ----
    queries = norm(0, attention(0, queries, queries, queries))          # token self-attention
    k_pe = keys + key_pe                                                # kept resident, reused below
    q_pe = queries + query_pe
    queries = norm(1, queries + attention(1, q_pe, k_pe, keys))         # tokens -> image
    m = jnp.maximum(_bf16_dot(queries, mw1_ref[...]) + mb1_ref[...], 0.0)
    m = _bf16_dot(m, mw2_ref[...]) + mb2_ref[...]
    queries = norm(2, queries + m)                                      # token MLP
    q_pe = queries + query_pe
    keys = norm(3, keys + attention(2, k_pe, q_pe, queries))            # image -> tokens
    # ---- final token -> image attention ----
    k_pe = keys + key_pe
    queries = norm(4, queries + attention(3, q_pe, k_pe, keys))

    mask_tok0 = queries[1:2, :]                                         # multimask_output=False

    # ---- output upscaling: conv-transpose(2,2) twice; pixel shuffle deferred to wrapper ----
    u1 = _bf16_dot(keys, up1w_ref[...]) + up1b_ref[...]                 # (N, 4*C1) cols=(s1,s2,c1)
    g8 = g8_ref[...]                                                    # group-mean matrix (f32)
    mu = jnp.dot(u1, g8, preferred_element_type=jnp.float32)            # per-(s1,s2) channel mean
    d = u1 - mu
    var = jnp.dot(d * d, g8, preferred_element_type=jnp.float32)
    u1 = d * lax.rsqrt(var + LN_EPS) * ulng_ref[...] + ulnb_ref[...]    # grouped LayerNorm over C1
    u1 = _gelu(u1)
    u2 = _gelu(_bf16_dot(u1, up2w_ref[...]) + up2b_ref[...])            # (N, 16*C2) cols=(s1,s2,t1,t2,c2)

    # ---- hypernetwork MLP for mask token 0 (heads 1..3 and IOU head are dead in MedSAM) ----
    h0 = jnp.maximum(_bf16_dot(mask_tok0, hw1_ref[...]) + hb1_ref[...], 0.0)
    h0 = jnp.maximum(_bf16_dot(h0, hw2_ref[...]) + hb2_ref[...], 0.0)
    h0 = _bf16_dot(h0, hw3_ref[...]) + hb3_ref[...]                     # (1, C2)
    h0_t = jnp.dot(h0, tile_ref[...], preferred_element_type=jnp.float32)   # (1, 16*C2) tiled
    # contract the C2 channel inside every (s1,s2,t1,t2) group -> (N_PATCH, SUBPIX)
    out_ref[0] = jnp.dot(u2 * h0_t, gsum_ref[...], preferred_element_type=jnp.float32)


def _resize_kernel(m_ref, wh_ref, wwt_ref, out_ref):
    """Bilinear (align_corners=False) resize as  out = Wh @ mask @ Ww^T  (f32 for fidelity)."""
    t = jnp.dot(wh_ref[...], m_ref[0], preferred_element_type=jnp.float32)
    out_ref[0] = jnp.dot(t, wwt_ref[...], preferred_element_type=jnp.float32)


# ----------------------------- BlockSpec helpers / pallas_call wrappers -----------------------------
def _rep_spec(shape):
    """Full-array block replicated across the batch grid axis."""
    n = len(shape)
    return pl.BlockSpec(tuple(shape), lambda b: (0,) * n)


def _batch_spec(tail):
    """(1, *tail) block indexed by the batch grid axis."""
    n = len(tail)
    return pl.BlockSpec((1,) + tuple(tail), lambda b: (b,) + (0,) * n)


_PARALLEL = pltpu.CompilerParams(dimension_semantics=("parallel",))   # v7x: one sample per TC

ENC_WEIGHT_NAMES = [
    "patch_w", "patch_b", "pos_embed",
    "enc_ln1_g", "enc_ln1_b", "enc_qkv_w", "enc_qkv_b", "enc_proj_w", "enc_proj_b",
    "enc_ln2_g", "enc_ln2_b", "enc_mlp_w1", "enc_mlp_b1", "enc_mlp_w2", "enc_mlp_b2",
    "neck_w", "neck_b", "neck_ln_g", "neck_ln_b",
]

DEC_WEIGHT_NAMES = [
    "attn_wq", "attn_bq", "attn_wk", "attn_bk", "attn_wv", "attn_bv", "attn_wo", "attn_bo",
    "norm_g", "norm_b",
    "dec_mlp_w1", "dec_mlp_b1", "dec_mlp_w2", "dec_mlp_b2",
    "up1_w", "up1_b", "upln_g", "upln_b", "g8", "up2_blk", "up2_b",
    "hyp_w1", "hyp_b1", "hyp_w2", "hyp_b2", "hyp_w3", "hyp_b3",
    "tile", "gsum",
]


def run_image_encoder(q, patches):
    Bn = patches.shape[0]
    weights = [q[n] for n in ENC_WEIGHT_NAMES]
    return pl.pallas_call(
        _encoder_kernel,
        out_shape=jax.ShapeDtypeStruct((Bn, N_PATCH, EMB_DIM), jnp.float32),
        grid=(Bn,),
        in_specs=[_batch_spec((N_PATCH, IMG_C * PATCH * PATCH))]
                 + [_rep_spec(w.shape) for w in weights],
        out_specs=_batch_spec((N_PATCH, EMB_DIM)),
        compiler_params=_PARALLEL,
    )(patches, *weights)


def run_mask_decoder(q, queries0, img_emb, image_pe):
    Bn = img_emb.shape[0]
    weights = [q[n] for n in DEC_WEIGHT_NAMES]
    return pl.pallas_call(
        _decoder_kernel,
        out_shape=jax.ShapeDtypeStruct((Bn, N_PATCH, SUBPIX), jnp.float32),
        grid=(Bn,),
        in_specs=[_batch_spec((N_QUERY, EMB_DIM)),
                  _batch_spec((N_PATCH, EMB_DIM)),
                  _rep_spec((N_PATCH, EMB_DIM)),
                  _rep_spec((1, EMB_DIM))]
                 + [_rep_spec(w.shape) for w in weights],
        out_specs=_batch_spec((N_PATCH, SUBPIX)),
        compiler_params=_PARALLEL,
    )(queries0, img_emb, image_pe, q["no_mask_embed"], *weights)


def run_bilinear_resize(q, mask_sp):
    Bn, Hl, Wl = mask_sp.shape
    H, W = q["Wh"].shape[0], q["WwT"].shape[1]
    return pl.pallas_call(
        _resize_kernel,
        out_shape=jax.ShapeDtypeStruct((Bn, H, W), jnp.float32),
        grid=(Bn,),
        in_specs=[_batch_spec((Hl, Wl)), _rep_spec(q["Wh"].shape), _rep_spec(q["WwT"].shape)],
        out_specs=_batch_spec((H, W)),
        compiler_params=_PARALLEL,
    )(mask_sp, q["Wh"], q["WwT"])


# ----------------------------- parameter init & packing -----------------------------
class PInit:
    def __init__(self, key):
        self.key = key

    def __call__(self, shape, scale=0.05):
        self.key, sub = jax.random.split(self.key)
        return scale * jax.random.normal(sub, shape, dtype=jnp.float32)


def init_params(key):
    init = PInit(key)
    D, E = ENC_DIM, EMB_DIM
    p = {}
    # image encoder
    p["patch_w"] = init((IMG_C * PATCH * PATCH, D)); p["patch_b"] = init((1, D))
    p["pos_embed"] = init((N_PATCH, D))
    p["enc_ln1_g"] = jnp.ones((1, D)); p["enc_ln1_b"] = jnp.zeros((1, D))
    p["enc_qkv_w"] = init((D, 3 * D)); p["enc_qkv_b"] = init((1, 3 * D))
    p["enc_proj_w"] = init((D, D));    p["enc_proj_b"] = init((1, D))
    p["enc_ln2_g"] = jnp.ones((1, D)); p["enc_ln2_b"] = jnp.zeros((1, D))
    p["enc_mlp_w1"] = init((D, MLP_DIM)); p["enc_mlp_b1"] = init((1, MLP_DIM))
    p["enc_mlp_w2"] = init((MLP_DIM, D)); p["enc_mlp_b2"] = init((1, D))
    p["neck_w"] = init((D, E)); p["neck_b"] = init((1, E))
    p["neck_ln_g"] = jnp.ones((1, E)); p["neck_ln_b"] = jnp.zeros((1, E))
    # prompt encoder (frozen in PyTorch)
    p["pe_gauss"] = init((2, E // 2), scale=1.0)
    p["pt_emb_tl"] = init((1, E)); p["pt_emb_br"] = init((1, E))
    p["no_mask_embed"] = init((1, E))
    # mask decoder
    p["iou_token"] = init((1, E)); p["mask_tokens"] = init((NUM_MASK_TOKENS, E))
    for name in ["self_attn", "cross_t2i", "cross_i2t", "final_t2i"]:
        for proj in ["q", "k", "v", "o"]:
            p[f"{name}_{proj}_w"] = init((E, E)); p[f"{name}_{proj}_b"] = init((1, E))
    for i in range(1, 5):
        p[f"dec_norm{i}_g"] = jnp.ones((1, E)); p[f"dec_norm{i}_b"] = jnp.zeros((1, E))
    p["dec_norm_final_g"] = jnp.ones((1, E)); p["dec_norm_final_b"] = jnp.zeros((1, E))
    p["dec_mlp_w1"] = init((E, DEC_MLP_DIM)); p["dec_mlp_b1"] = init((1, DEC_MLP_DIM))
    p["dec_mlp_w2"] = init((DEC_MLP_DIM, E)); p["dec_mlp_b2"] = init((1, E))
    p["up1_w"] = init((E, 4 * UP_C1)); p["up1_b"] = init((1, 4 * UP_C1))
    p["up_ln_g"] = jnp.ones((1, UP_C1)); p["up_ln_b"] = jnp.zeros((1, UP_C1))
    p["up2_w"] = init((UP_C1, 4 * UP_C2)); p["up2_b"] = init((1, 4 * UP_C2))
    # hypernetwork head for mask 0 only: MedSAM uses multimask_output=False, so the heads
    # for masks 1..3 and the IOU-prediction head never affect the output (dead code removed).
    p["hyper0_w1"] = init((E, E)); p["hyper0_b1"] = init((1, E))
    p["hyper0_w2"] = init((E, E)); p["hyper0_b2"] = init((1, E))
    p["hyper0_w3"] = init((E, UP_C2)); p["hyper0_b3"] = init((1, UP_C2))
    return p


def bilinear_matrix(n_out, n_in):
    """Row-interpolation matrix reproducing F.interpolate(mode='bilinear', align_corners=False)."""
    scale = n_in / n_out
    i = np.arange(n_out)
    src = (i + 0.5) * scale - 0.5
    src = np.clip(src, 0.0, None)
    i0 = np.minimum(np.floor(src).astype(np.int64), n_in - 1)
    i1 = np.minimum(i0 + 1, n_in - 1)
    frac = src - i0
    W = np.zeros((n_out, n_in), dtype=np.float32)
    W[np.arange(n_out), i0] += 1.0 - frac
    W[np.arange(n_out), i1] += frac
    return jnp.asarray(W)


def pack_params(p):
    """Repack the logical parameters into the fused/stacked layout used by the kernels.
    Pure re-layout: the forward math is unchanged."""
    bf = jnp.bfloat16
    q = {}
    # image encoder (matmul weights in bf16 for the MXU; biases / LN params stay f32)
    for n in ["patch_w", "enc_qkv_w", "enc_proj_w", "enc_mlp_w1", "enc_mlp_w2", "neck_w"]:
        q[n] = p[n].astype(bf)
    for n in ["patch_b", "pos_embed", "enc_ln1_g", "enc_ln1_b", "enc_qkv_b", "enc_proj_b",
              "enc_ln2_g", "enc_ln2_b", "enc_mlp_b1", "enc_mlp_b2", "neck_b",
              "neck_ln_g", "neck_ln_b", "pe_gauss", "pt_emb_tl", "pt_emb_br", "no_mask_embed"]:
        q[n] = p[n]
    # mask decoder: stack the four attention modules along a leading axis
    order = ["self_attn", "cross_t2i", "cross_i2t", "final_t2i"]
    for proj in ["q", "k", "v", "o"]:
        q[f"attn_w{proj}"] = jnp.stack([p[f"{n}_{proj}_w"] for n in order]).astype(bf)   # (4, E, E)
        q[f"attn_b{proj}"] = jnp.stack([p[f"{n}_{proj}_b"] for n in order])              # (4, 1, E)
    q["norm_g"] = jnp.stack([p["dec_norm1_g"], p["dec_norm2_g"], p["dec_norm3_g"],
                             p["dec_norm4_g"], p["dec_norm_final_g"]])                   # (5, 1, E)
    q["norm_b"] = jnp.stack([p["dec_norm1_b"], p["dec_norm2_b"], p["dec_norm3_b"],
                             p["dec_norm4_b"], p["dec_norm_final_b"]])
    q["dec_mlp_w1"] = p["dec_mlp_w1"].astype(bf); q["dec_mlp_b1"] = p["dec_mlp_b1"]
    q["dec_mlp_w2"] = p["dec_mlp_w2"].astype(bf); q["dec_mlp_b2"] = p["dec_mlp_b2"]
    q["base_tokens"] = jnp.concatenate([p["iou_token"], p["mask_tokens"]], axis=0)       # (5, E)
    # first 2x up-conv + grouped LayerNorm (gamma/beta tiled over the 4 (s1,s2) sub-pixels)
    q["up1_w"] = p["up1_w"].astype(bf); q["up1_b"] = p["up1_b"]
    q["upln_g"] = jnp.tile(p["up_ln_g"], (1, 4)); q["upln_b"] = jnp.tile(p["up_ln_b"], (1, 4))
    # second 2x up-conv as a block-diagonal weight acting on the (s1,s2)-grouped column layout
    blk = np.zeros((4 * UP_C1, SUBPIX * UP_C2), np.float32)
    up2_w = np.asarray(p["up2_w"])
    for s in range(4):
        blk[s * UP_C1:(s + 1) * UP_C1, s * 4 * UP_C2:(s + 1) * 4 * UP_C2] = up2_w
    q["up2_blk"] = jnp.asarray(blk).astype(bf)
    q["up2_b"] = jnp.tile(p["up2_b"], (1, 4))
    # hypernetwork head for mask 0
    q["hyp_w1"] = p["hyper0_w1"].astype(bf); q["hyp_b1"] = p["hyper0_b1"]
    q["hyp_w2"] = p["hyper0_w2"].astype(bf); q["hyp_b2"] = p["hyper0_b2"]
    q["hyp_w3"] = p["hyper0_w3"].astype(bf); q["hyp_b3"] = p["hyper0_b3"]
    # fixed index-arithmetic matrices (grouped-LN mean, channel tiling, grouped channel sum)
    r = np.arange(4 * UP_C1)
    q["g8"] = jnp.asarray(((r[:, None] // UP_C1) == (r[None, :] // UP_C1)).astype(np.float32) / UP_C1)
    k = np.arange(SUBPIX * UP_C2)
    tile = np.zeros((UP_C2, SUBPIX * UP_C2), np.float32); tile[k % UP_C2, k] = 1.0
    q["tile"] = jnp.asarray(tile)
    gsum = np.zeros((SUBPIX * UP_C2, SUBPIX), np.float32); gsum[k, k // UP_C2] = 1.0
    q["gsum"] = jnp.asarray(gsum)
    # bilinear resize matrices for F.interpolate(align_corners=False)
    q["Wh"] = bilinear_matrix(IMG_H, UPX * N_H)
    q["WwT"] = jnp.transpose(bilinear_matrix(IMG_W, UPX * N_W))
    return q


# ----------------------------- MedSAM forward -----------------------------
def medsam_forward(q, image, box):
    """image: (B, 3, H, W) float32 NCHW; box: (B, 4) float32 (x0, y0, x1, y1).
    Returns ori_res_masks: (B, 1, H, W) float32 NCHW."""
    Bn, C, H, W = image.shape
    nH, nW = H // PATCH, W // PATCH

    # ---- image encoder (one fused Pallas kernel; batch on a parallel grid axis) ----
    x = jnp.transpose(image, (0, 2, 3, 1))                               # NHWC (layout glue)
    patches = x.reshape(Bn, nH, PATCH, nW, PATCH, C)
    patches = jnp.transpose(patches, (0, 1, 3, 2, 4, 5)).reshape(Bn, nH * nW, PATCH * PATCH * C)
    image_embedding = run_image_encoder(q, patches)                      # (B, N, E)

    # ---- prompt encoder (frozen; tiny random-Fourier glue kept in XLA) ----
    def pe_encode(coords01):
        c = 2.0 * coords01 - 1.0
        c = 2.0 * jnp.pi * (c @ q["pe_gauss"])
        return jnp.concatenate([jnp.sin(c), jnp.cos(c)], axis=-1)

    box_t = jnp.asarray(box, dtype=jnp.float32)
    if box_t.ndim == 2:                                                  # matches MedSAM.forward
        box_t = box_t[:, None, :]                                        # (B, 1, 4)
    coords = box_t.reshape(Bn, 2, 2) + 0.5
    coords = coords / jnp.array([W, H], dtype=jnp.float32)               # x/W, y/H
    corner = pe_encode(coords)                                           # (B, 2, E)
    corner = corner.at[:, 0, :].add(q["pt_emb_tl"][0])
    corner = corner.at[:, 1, :].add(q["pt_emb_br"][0])
    sparse_embeddings = lax.stop_gradient(corner)                        # prompt encoder is frozen
    gx = (jnp.arange(nW, dtype=jnp.float32) + 0.5) / nW
    gy = (jnp.arange(nH, dtype=jnp.float32) + 0.5) / nH
    X, Y = jnp.meshgrid(gx, gy, indexing="xy")
    image_pe = pe_encode(jnp.stack([X, Y], -1)).reshape(nH * nW, EMB_DIM)   # get_dense_pe()

    # ---- mask decoder (one fused Pallas kernel per batch grid step) ----
    queries0 = jnp.concatenate(
        [jnp.broadcast_to(q["base_tokens"][None], (Bn, 1 + NUM_MASK_TOKENS, EMB_DIM)),
         sparse_embeddings], axis=1)                                     # (B, 7, E)
    mask_pre = run_mask_decoder(q, queries0, image_embedding, image_pe)  # (B, N, SUBPIX)

    # pixel-shuffle unscramble (pure wrapper-side layout plumbing; compute already in-kernel):
    # rows = (i, j) token grid, cols = (s1, s2, t1, t2) sub-pixel offsets.
    m = mask_pre.reshape(Bn, nH, nW, 2, 2, 2, 2)
    low_res_masks = jnp.transpose(m, (0, 1, 3, 5, 2, 4, 6)).reshape(Bn, UPX * nH, UPX * nW)

    # ---- F.interpolate(bilinear, align_corners=False) as one fused kernel: Wh @ mask @ Ww^T ----
    ori = run_bilinear_resize(q, low_res_masks)                          # (B, H, W)
    return ori.reshape(Bn, 1, H, W)


# ----------------------------- main -----------------------------
if __name__ == "__main__":
    key = jax.random.PRNGKey(0)
    k_img, k_param = jax.random.split(key, 2)
    image = jax.random.normal(k_img, (B, IMG_C, IMG_H, IMG_W), dtype=jnp.float32)
    box = jnp.array([[4.0, 6.0, 24.0, 28.0],
                     [2.0, 2.0, 30.0, 30.0]], dtype=jnp.float32)         # (B, 4)
    params = pack_params(init_params(k_param))

    fwd = jax.jit(medsam_forward)
    out = jax.block_until_ready(fwd(params, image, box))
    assert out.shape == (B, 1, IMG_H, IMG_W), out.shape
    assert bool(jnp.all(jnp.isfinite(out)))
    print("KERNEL_OK")
</pallas_src>

<mosaic_0001>
module attributes {stable_mosaic.version = 11 : i64} {
  func.func @_encoder_kernel(%arg0: i32, %arg1: memref<1x16x192xf32, #tpu.memory_space<vmem>>, %arg2: memref<192x32xbf16, #tpu.memory_space<vmem>>, %arg3: memref<1x32xf32, #tpu.memory_space<vmem>>, %arg4: memref<16x32xf32, #tpu.memory_space<vmem>>, %arg5: memref<1x32xf32, #tpu.memory_space<vmem>>, %arg6: memref<1x32xf32, #tpu.memory_space<vmem>>, %arg7: memref<32x96xbf16, #tpu.memory_space<vmem>>, %arg8: memref<1x96xf32, #tpu.memory_space<vmem>>, %arg9: memref<32x32xbf16, #tpu.memory_space<vmem>>, %arg10: memref<1x32xf32, #tpu.memory_space<vmem>>, %arg11: memref<1x32xf32, #tpu.memory_space<vmem>>, %arg12: memref<1x32xf32, #tpu.memory_space<vmem>>, %arg13: memref<32x64xbf16, #tpu.memory_space<vmem>>, %arg14: memref<1x64xf32, #tpu.memory_space<vmem>>, %arg15: memref<64x32xbf16, #tpu.memory_space<vmem>>, %arg16: memref<1x32xf32, #tpu.memory_space<vmem>>, %arg17: memref<32x16xbf16, #tpu.memory_space<vmem>>, %arg18: memref<1x16xf32, #tpu.memory_space<vmem>>, %arg19: memref<1x16xf32, #tpu.memory_space<vmem>>, %arg20: memref<1x16xf32, #tpu.memory_space<vmem>>, %arg21: memref<1x16x16xf32, #tpu.memory_space<vmem>>) attributes {dimension_semantics = [#tpu.dimension_semantics<parallel>], iteration_bounds = array<i64: 2>, scalar_prefetch = 0 : i64, scratch_operands = 0 : i64, tpu.core_type = #tpu.core_type<tc>, window_params = [{transform_indices = @transform_0, window_bounds = array<i64: 1, 16, 192>}, {pipeline_mode = #tpu.pipeline_mode<synchronous>, transform_indices = @transform_1, window_bounds = array<i64: 192, 32>}, {pipeline_mode = #tpu.pipeline_mode<synchronous>, transform_indices = @transform_2, window_bounds = array<i64: 1, 32>}, {pipeline_mode = #tpu.pipeline_mode<synchronous>, transform_indices = @transform_3, window_bounds = array<i64: 16, 32>}, {pipeline_mode = #tpu.pipeline_mode<synchronous>, transform_indices = @transform_4, window_bounds = array<i64: 1, 32>}, {pipeline_mode = #tpu.pipeline_mode<synchronous>, transform_indices = @transform_5, window_bounds = array<i64: 1, 32>}, {pipeline_mode = #tpu.pipeline_mode<synchronous>, transform_indices = @transform_6, window_bounds = array<i64: 32, 96>}, {pipeline_mode = #tpu.pipeline_mode<synchronous>, transform_indices = @transform_7, window_bounds = array<i64: 1, 96>}, {pipeline_mode = #tpu.pipeline_mode<synchronous>, transform_indices = @transform_8, window_bounds = array<i64: 32, 32>}, {pipeline_mode = #tpu.pipeline_mode<synchronous>, transform_indices = @transform_9, window_bounds = array<i64: 1, 32>}, {pipeline_mode = #tpu.pipeline_mode<synchronous>, transform_indices = @transform_10, window_bounds = array<i64: 1, 32>}, {pipeline_mode = #tpu.pipeline_mode<synchronous>, transform_indices = @transform_11, window_bounds = array<i64: 1, 32>}, {pipeline_mode = #tpu.pipeline_mode<synchronous>, transform_indices = @transform_12, window_bounds = array<i64: 32, 64>}, {pipeline_mode = #tpu.pipeline_mode<synchronous>, transform_indices = @transform_13, window_bounds = array<i64: 1, 64>}, {pipeline_mode = #tpu.pipeline_mode<synchronous>, transform_indices = @transform_14, window_bounds = array<i64: 64, 32>}, {pipeline_mode = #tpu.pipeline_mode<synchronous>, transform_indices = @transform_15, window_bounds = array<i64: 1, 32>}, {pipeline_mode = #tpu.pipeline_mode<synchronous>, transform_indices = @transform_16, window_bounds = array<i64: 32, 16>}, {pipeline_mode = #tpu.pipeline_mode<synchronous>, transform_indices = @transform_17, window_bounds = array<i64: 1, 16>}, {pipeline_mode = #tpu.pipeline_mode<synchronous>, transform_indices = @transform_18, window_bounds = array<i64: 1, 16>}, {pipeline_mode = #tpu.pipeline_mode<synchronous>, transform_indices = @transform_19, window_bounds = array<i64: 1, 16>}, {transform_indices = @transform_20, window_bounds = array<i64: 1, 16, 16>}]} {
    %c0 = arith.constant 0 : index
    %c0_0 = arith.constant 0 : index
    %c0_1 = arith.constant 0 : index
    %0 = vector.load %arg1[%c0, %c0_0, %c0_1] : memref<1x16x192xf32, #tpu.memory_space<vmem>>, vector<1x16x192xf32>
    %1 = vector.shape_cast %0 : vector<1x16x192xf32> to vector<16x192xf32>
    %c0_2 = arith.constant 0 : index
    %c0_3 = arith.constant 0 : index
    %2 = vector.load %arg2[%c0_2, %c0_3] : memref<192x32xbf16, #tpu.memory_space<vmem>>, vector<192x32xbf16>
    %3 = arith.truncf %1 : vector<16x192xf32> to vector<16x192xbf16>
    %cst = arith.constant dense<0.000000e+00> : vector<16x32xf32>
    %4 = tpu.matmul %3, %2, %cst {dimension_numbers = #tpu.dot_dimension_numbers<[1], [0], [0], [1], [0, 0, 1, 1], [], []>} : vector<16x192xbf16>, vector<192x32xbf16>, vector<16x32xf32> -> vector<16x32xf32>
    %c0_4 = arith.constant 0 : index
    %c0_5 = arith.constant 0 : index
    %5 = vector.load %arg3[%c0_4, %c0_5] : memref<1x32xf32, #tpu.memory_space<vmem>>, vector<1x32xf32>
    %6 = vector.broadcast %5 : vector<1x32xf32> to vector<16x32xf32>
    %7 = arith.addf %4, %6 : vector<16x32xf32>
    %c0_6 = arith.constant 0 : index
    %c0_7 = arith.constant 0 : index
    %8 = vector.load %arg4[%c0_6, %c0_7] : memref<16x32xf32, #tpu.memory_space<vmem>>, vector<16x32xf32>
    %9 = arith.addf %7, %8 : vector<16x32xf32>
    %c0_8 = arith.constant 0 : index
    %c0_9 = arith.constant 0 : index
    %10 = vector.load %arg5[%c0_8, %c0_9] : memref<1x32xf32, #tpu.memory_space<vmem>>, vector<1x32xf32>
    %c0_10 = arith.constant 0 : index
    %c0_11 = arith.constant 0 : index
    %11 = vector.load %arg6[%c0_10, %c0_11] : memref<1x32xf32, #tpu.memory_space<vmem>>, vector<1x32xf32>
    %cst_12 = arith.constant dense<0.000000e+00> : vector<16xf32>
    %12 = vector.multi_reduction <add>, %9, %cst_12 [1] : vector<16x32xf32> to vector<16xf32>
    %13 = vector.shape_cast %12 : vector<16xf32> to vector<16x1xf32>
    %cst_13 = arith.constant 3.200000e+01 : f32
    %14 = vector.broadcast %cst_13 : f32 to vector<16x1xf32>
    %15 = arith.divf %13, %14 : vector<16x1xf32>
    %16 = vector.broadcast %15 : vector<16x1xf32> to vector<16x32xf32>
    %17 = arith.subf %9, %16 : vector<16x32xf32>
    %18 = arith.mulf %17, %17 : vector<16x32xf32>
    %cst_14 = arith.constant dense<0.000000e+00> : vector<16xf32>
    %19 = vector.multi_reduction <add>, %18, %cst_14 [1] : vector<16x32xf32> to vector<16xf32>
    %20 = vector.shape_cast %19 : vector<16xf32> to vector<16x1xf32>
    %cst_15 = arith.constant 3.200000e+01 : f32
    %21 = vector.broadcast %cst_15 : f32 to vector<16x1xf32>
    %22 = arith.divf %20, %21 : vector<16x1xf32>
    %cst_16 = arith.constant 9.99999997E-7 : f32
    %23 = vector.broadcast %cst_16 : f32 to vector<16x1xf32>
    %24 = arith.addf %22, %23 : vector<16x1xf32>
    %25 = math.rsqrt %24 : vector<16x1xf32>
    %26 = vector.broadcast %25 : vector<16x1xf32> to vector<16x32xf32>
    %27 = arith.mulf %17, %26 : vector<16x32xf32>
    %28 = vector.broadcast %10 : vector<1x32xf32> to vector<16x32xf32>
    %29 = arith.mulf %27, %28 : vector<16x32xf32>
    %30 = vector.broadcast %11 : vector<1x32xf32> to vector<16x32xf32>
    %31 = arith.addf %29, %30 : vector<16x32xf32>
    %c0_17 = arith.constant 0 : index
    %c0_18 = arith.constant 0 : index
    %32 = vector.load %arg7[%c0_17, %c0_18] : memref<32x96xbf16, #tpu.memory_space<vmem>>, vector<32x96xbf16>
    %33 = arith.truncf %31 : vector<16x32xf32> to vector<16x32xbf16>
    %cst_19 = arith.constant dense<0.000000e+00> : vector<16x96xf32>
    %34 = tpu.matmul %33, %32, %cst_19 {dimension_numbers = #tpu.dot_dimension_numbers<[1], [0], [0], [1], [0, 0, 1, 1], [], []>} : vector<16x32xbf16>, vector<32x96xbf16>, vector<16x96xf32> -> vector<16x96xf32>
    %c0_20 = arith.constant 0 : index
    %c0_21 = arith.constant 0 : index
    %35 = vector.load %arg8[%c0_20, %c0_21] : memref<1x96xf32, #tpu.memory_space<vmem>>, vector<1x96xf32>
    %36 = vector.broadcast %35 : vector<1x96xf32> to vector<16x96xf32>
    %37 = arith.addf %34, %36 : vector<16x96xf32>
    %c0_22 = arith.constant 0 : index
    %c0_23 = arith.constant 0 : index
    %38 = vector.load %arg9[%c0_22, %c0_23] : memref<32x32xbf16, #tpu.memory_space<vmem>>, vector<32x32xbf16>
    %c0_24 = arith.constant 0 : index
    %c0_25 = arith.constant 0 : index
    %39 = vector.load %arg10[%c0_24, %c0_25] : memref<1x32xf32, #tpu.memory_space<vmem>>, vector<1x32xf32>
    %40 = vector.extract_strided_slice %37 {offsets = [0, 0], sizes = [16, 16], strides = [1, 1]} : vector<16x96xf32> to vector<16x16xf32>
    %41 = vector.extract_strided_slice %37 {offsets = [0, 32], sizes = [16, 16], strides = [1, 1]} : vector<16x96xf32> to vector<16x16xf32>
    %42 = vector.extract_strided_slice %37 {offsets = [0, 64], sizes = [16, 16], strides = [1, 1]} : vector<16x96xf32> to vector<16x16xf32>
    %43 = arith.truncf %40 : vector<16x16xf32> to vector<16x16xbf16>
    %44 = arith.truncf %41 : vector<16x16xf32> to vector<16x16xbf16>
    %cst_26 = arith.constant dense<0.000000e+00> : vector<16x16xf32>
    %45 = tpu.matmul %43, %44, %cst_26 {dimension_numbers = #tpu.dot_dimension_numbers<[1], [1], [0], [0], [0, 0, 1, 0], [], []>} : vector<16x16xbf16>, vector<16x16xbf16>, vector<16x16xf32> -> vector<16x16xf32>
    %cst_27 = arith.constant 2.500000e-01 : f32
    %46 = vector.broadcast %cst_27 : f32 to vector<16x16xf32>
    %47 = arith.mulf %45, %46 : vector<16x16xf32>
    %cst_28 = arith.constant dense<0xFF800000> : vector<16xf32>
    %48 = vector.multi_reduction <maximumf>, %47, %cst_28 [1] : vector<16x16xf32> to vector<16xf32>
    %49 = vector.shape_cast %48 : vector<16xf32> to vector<16x1xf32>
    %50 = vector.broadcast %49 : vector<16x1xf32> to vector<16x16xf32>
    %51 = arith.subf %47, %50 : vector<16x16xf32>
    %52 = math.exp %51 : vector<16x16xf32>
    %cst_29 = arith.constant dense<0.000000e+00> : vector<16xf32>
    %53 = vector.multi_reduction <add>, %52, %cst_29 [1] : vector<16x16xf32> to vector<16xf32>
    %54 = vector.shape_cast %53 : vector<16xf32> to vector<16x1xf32>
    %55 = tpu.reciprocal %54 {approx = true} : vector<16x1xf32> -> vector<16x1xf32>
    %56 = vector.broadcast %55 : vector<16x1xf32> to vector<16x16xf32>
    %57 = arith.mulf %52, %56 : vector<16x16xf32>
    %58 = arith.truncf %57 : vector<16x16xf32> to vector<16x16xbf16>
    %59 = arith.truncf %42 : vector<16x16xf32> to vector<16x16xbf16>
    %cst_30 = arith.constant dense<0.000000e+00> : vector<16x16xf32>
    %60 = tpu.matmul %58, %59, %cst_30 {dimension_numbers = #tpu.dot_dimension_numbers<[1], [0], [0], [1], [0, 0, 1, 1], [], []>} : vector<16x16xbf16>, vector<16x16xbf16>, vector<16x16xf32> -> vector<16x16xf32>
    %61 = vector.extract_strided_slice %38 {offsets = [0, 0], sizes = [16, 32], strides = [1, 1]} : vector<32x32xbf16> to vector<16x32xbf16>
    %62 = arith.truncf %60 : vector<16x16xf32> to vector<16x16xbf16>
    %cst_31 = arith.constant dense<0.000000e+00> : vector<16x32xf32>
    %63 = tpu.matmul %62, %61, %cst_31 {dimension_numbers = #tpu.dot_dimension_numbers<[1], [0], [0], [1], [0, 0, 1, 1], [], []>} : vector<16x16xbf16>, vector<16x32xbf16>, vector<16x32xf32> -> vector<16x32xf32>
    %64 = vector.broadcast %39 : vector<1x32xf32> to vector<16x32xf32>
    %65 = arith.addf %64, %63 : vector<16x32xf32>
    %66 = vector.extract_strided_slice %37 {offsets = [0, 16], sizes = [16, 16], strides = [1, 1]} : vector<16x96xf32> to vector<16x16xf32>
    %67 = vector.extract_strided_slice %37 {offsets = [0, 48], sizes = [16, 16], strides = [1, 1]} : vector<16x96xf32> to vector<16x16xf32>
    %68 = vector.extract_strided_slice %37 {offsets = [0, 80], sizes = [16, 16], strides = [1, 1]} : vector<16x96xf32> to vector<16x16xf32>
    %69 = arith.truncf %66 : vector<16x16xf32> to vector<16x16xbf16>
    %70 = arith.truncf %67 : vector<16x16xf32> to vector<16x16xbf16>
    %cst_32 = arith.constant dense<0.000000e+00> : vector<16x16xf32>
    %71 = tpu.matmul %69, %70, %cst_32 {dimension_numbers = #tpu.dot_dimension_numbers<[1], [1], [0], [0], [0, 0, 1, 0], [], []>} : vector<16x16xbf16>, vector<16x16xbf16>, vector<16x16xf32> -> vector<16x16xf32>
    %cst_33 = arith.constant 2.500000e-01 : f32
    %72 = vector.broadcast %cst_33 : f32 to vector<16x16xf32>
    %73 = arith.mulf %71, %72 : vector<16x16xf32>
    %cst_34 = arith.constant dense<0xFF800000> : vector<16xf32>
    %74 = vector.multi_reduction <maximumf>, %73, %cst_34 [1] : vector<16x16xf32> to vector<16xf32>
    %75 = vector.shape_cast %74 : vector<16xf32> to vector<16x1xf32>
    %76 = vector.broadcast %75 : vector<16x1xf32> to vector<16x16xf32>
    %77 = arith.subf %73, %76 : vector<16x16xf32>
    %78 = math.exp %77 : vector<16x16xf32>
    %cst_35 = arith.constant dense<0.000000e+00> : vector<16xf32>
    %79 = vector.multi_reduction <add>, %78, %cst_35 [1] : vector<16x16xf32> to vector<16xf32>
    %80 = vector.shape_cast %79 : vector<16xf32> to vector<16x1xf32>
    %81 = tpu.reciprocal %80 {approx = true} : vector<16x1xf32> -> vector<16x1xf32>
    %82 = vector.broadcast %81 : vector<16x1xf32> to vector<16x16xf32>
    %83 = arith.mulf %78, %82 : vector<16x16xf32>
    %84 = arith.truncf %83 : vector<16x16xf32> to vector<16x16xbf16>
    %85 = arith.truncf %68 : vector<16x16xf32> to vector<16x16xbf16>
    %cst_36 = arith.constant dense<0.000000e+00> : vector<16x16xf32>
    %86 = tpu.matmul %84, %85, %cst_36 {dimension_numbers = #tpu.dot_dimension_numbers<[1], [0], [0], [1], [0, 0, 1, 1], [], []>} : vector<16x16xbf16>, vector<16x16xbf16>, vector<16x16xf32> -> vector<16x16xf32>
    %87 = vector.extract_strided_slice %38 {offsets = [16, 0], sizes = [16, 32], strides = [1, 1]} : vector<32x32xbf16> to vector<16x32xbf16>
    %88 = arith.truncf %86 : vector<16x16xf32> to vector<16x16xbf16>
    %cst_37 = arith.constant dense<0.000000e+00> : vector<16x32xf32>
    %89 = tpu.matmul %88, %87, %cst_37 {dimension_numbers = #tpu.dot_dimension_numbers<[1], [0], [0], [1], [0, 0, 1, 1], [], []>} : vector<16x16xbf16>, vector<16x32xbf16>, vector<16x32xf32> -> vector<16x32xf32>
    %90 = arith.addf %65, %89 : vector<16x32xf32>
    %91 = arith.addf %9, %90 : vector<16x32xf32>
    %c0_38 = arith.constant 0 : index
    %c0_39 = arith.constant 0 : index
    %92 = vector.load %arg11[%c0_38, %c0_39] : memref<1x32xf32, #tpu.memory_space<vmem>>, vector<1x32xf32>
    %c0_40 = arith.constant 0 : index
    %c0_41 = arith.constant 0 : index
    %93 = vector.load %arg12[%c0_40, %c0_41] : memref<1x32xf32, #tpu.memory_space<vmem>>, vector<1x32xf32>
    %cst_42 = arith.constant dense<0.000000e+00> : vector<16xf32>
    %94 = vector.multi_reduction <add>, %91, %cst_42 [1] : vector<16x32xf32> to vector<16xf32>
    %95 = vector.shape_cast %94 : vector<16xf32> to vector<16x1xf32>
    %cst_43 = arith.constant 3.200000e+01 : f32
    %96 = vector.broadcast %cst_43 : f32 to vector<16x1xf32>
    %97 = arith.divf %95, %96 : vector<16x1xf32>
    %98 = vector.broadcast %97 : vector<16x1xf32> to vector<16x32xf32>
    %99 = arith.subf %91, %98 : vector<16x32xf32>
    %100 = arith.mulf %99, %99 : vector<16x32xf32>
    %cst_44 = arith.constant dense<0.000000e+00> : vector<16xf32>
    %101 = vector.multi_reduction <add>, %100, %cst_44 [1] : vector<16x32xf32> to vector<16xf32>
    %102 = vector.shape_cast %101 : vector<16xf32> to vector<16x1xf32>
    %cst_45 = arith.constant 3.200000e+01 : f32
    %103 = vector.broadcast %cst_45 : f32 to vector<16x1xf32>
    %104 = arith.divf %102, %103 : vector<16x1xf32>
    %cst_46 = arith.constant 9.99999997E-7 : f32
    %105 = vector.broadcast %cst_46 : f32 to vector<16x1xf32>
    %106 = arith.addf %104, %105 : vector<16x1xf32>
    %107 = math.rsqrt %106 : vector<16x1xf32>
    %108 = vector.broadcast %107 : vector<16x1xf32> to vector<16x32xf32>
    %109 = arith.mulf %99, %108 : vector<16x32xf32>
    %110 = vector.broadcast %92 : vector<1x32xf32> to vector<16x32xf32>
    %111 = arith.mulf %109, %110 : vector<16x32xf32>
    %112 = vector.broadcast %93 : vector<1x32xf32> to vector<16x32xf32>
    %113 = arith.addf %111, %112 : vector<16x32xf32>
    %c0_47 = arith.constant 0 : index
    %c0_48 = arith.constant 0 : index
    %114 = vector.load %arg13[%c0_47, %c0_48] : memref<32x64xbf16, #tpu.memory_space<vmem>>, vector<32x64xbf16>
    %115 = arith.truncf %113 : vector<16x32xf32> to vector<16x32xbf16>
    %cst_49 = arith.constant dense<0.000000e+00> : vector<16x64xf32>
    %116 = tpu.matmul %115, %114, %cst_49 {dimension_numbers = #tpu.dot_dimension_numbers<[1], [0], [0], [1], [0, 0, 1, 1], [], []>} : vector<16x32xbf16>, vector<32x64xbf16>, vector<16x64xf32> -> vector<16x64xf32>
    %c0_50 = arith.constant 0 : index
    %c0_51 = arith.constant 0 : index
    %117 = vector.load %arg14[%c0_50, %c0_51] : memref<1x64xf32, #tpu.memory_space<vmem>>, vector<1x64xf32>
    %118 = vector.broadcast %117 : vector<1x64xf32> to vector<16x64xf32>
    %119 = arith.addf %116, %118 : vector<16x64xf32>
    %cst_52 = arith.constant 5.000000e-01 : f32
    %120 = vector.broadcast %cst_52 : f32 to vector<16x64xf32>
    %121 = arith.mulf %120, %119 : vector<16x64xf32>
    %cst_53 = arith.constant 4.471500e-02 : f32
    %122 = vector.broadcast %cst_53 : f32 to vector<16x64xf32>
    %123 = arith.mulf %122, %119 : vector<16x64xf32>
    %124 = arith.mulf %123, %119 : vector<16x64xf32>
    %125 = arith.mulf %124, %119 : vector<16x64xf32>
    %126 = arith.addf %119, %125 : vector<16x64xf32>
    %cst_54 = arith.constant 0.797884583 : f32
    %127 = vector.broadcast %cst_54 : f32 to vector<16x64xf32>
    %128 = arith.mulf %127, %126 : vector<16x64xf32>
    %129 = math.tanh %128 : vector<16x64xf32>
    %cst_55 = arith.constant 1.000000e+00 : f32
    %130 = vector.broadcast %cst_55 : f32 to vector<16x64xf32>
    %131 = arith.addf %130, %129 : vector<16x64xf32>
    %132 = arith.mulf %121, %131 : vector<16x64xf32>
    %c0_56 = arith.constant 0 : index
    %c0_57 = arith.constant 0 : index
    %133 = vector.load %arg15[%c0_56, %c0_57] : memref<64x32xbf16, #tpu.memory_space<vmem>>, vector<64x32xbf16>
    %134 = arith.truncf %132 : vector<16x64xf32> to vector<16x64xbf16>
    %cst_58 = arith.constant dense<0.000000e+00> : vector<16x32xf32>
    %135 = tpu.matmul %134, %133, %cst_58 {dimension_numbers = #tpu.dot_dimension_numbers<[1], [0], [0], [1], [0, 0, 1, 1], [], []>} : vector<16x64xbf16>, vector<64x32xbf16>, vector<16x32xf32> -> vector<16x32xf32>
    %c0_59 = arith.constant 0 : index
    %c0_60 = arith.constant 0 : index
    %136 = vector.load %arg16[%c0_59, %c0_60] : memref<1x32xf32, #tpu.memory_space<vmem>>, vector<1x32xf32>
    %137 = vector.broadcast %136 : vector<1x32xf32> to vector<16x32xf32>
    %138 = arith.addf %135, %137 : vector<16x32xf32>
    %139 = arith.addf %91, %138 : vector<16x32xf32>
    %c0_61 = arith.constant 0 : index
    %c0_62 = arith.constant 0 : index
    %140 = vector.load %arg17[%c0_61, %c0_62] : memref<32x16xbf16, #tpu.memory_space<vmem>>, vector<32x16xbf16>
    %141 = arith.truncf %139 : vector<16x32xf32> to vector<16x32xbf16>
    %cst_63 = arith.constant dense<0.000000e+00> : vector<16x16xf32>
    %142 = tpu.matmul %141, %140, %cst_63 {dimension_numbers = #tpu.dot_dimension_numbers<[1], [0], [0], [1], [0, 0, 1, 1], [], []>} : vector<16x32xbf16>, vector<32x16xbf16>, vector<16x16xf32> -> vector<16x16xf32>
    %c0_64 = arith.constant 0 : index
    %c0_65 = arith.constant 0 : index
    %143 = vector.load %arg18[%c0_64, %c0_65] : memref<1x16xf32, #tpu.memory_space<vmem>>, vector<1x16xf32>
    %144 = vector.broadcast %143 : vector<1x16xf32> to vector<16x16xf32>
    %145 = arith.addf %142, %144 : vector<16x16xf32>
    %c0_66 = arith.constant 0 : index
    %c0_67 = arith.constant 0 : index
    %146 = vector.load %arg19[%c0_66, %c0_67] : memref<1x16xf32, #tpu.memory_space<vmem>>, vector<1x16xf32>
    %c0_68 = arith.constant 0 : index
    %c0_69 = arith.constant 0 : index
    %147 = vector.load %arg20[%c0_68, %c0_69] : memref<1x16xf32, #tpu.memory_space<vmem>>, vector<1x16xf32>
    %cst_70 = arith.constant dense<0.000000e+00> : vector<16xf32>
    %148 = vector.multi_reduction <add>, %145, %cst_70 [1] : vector<16x16xf32> to vector<16xf32>
    %149 = vector.shape_cast %148 : vector<16xf32> to vector<16x1xf32>
    %cst_71 = arith.constant 1.600000e+01 : f32
    %150 = vector.broadcast %cst_71 : f32 to vector<16x1xf32>
    %151 = arith.divf %149, %150 : vector<16x1xf32>
    %152 = vector.broadcast %151 : vector<16x1xf32> to vector<16x16xf32>
    %153 = arith.subf %145, %152 : vector<16x16xf32>
    %154 = arith.mulf %153, %153 : vector<16x16xf32>
    %cst_72 = arith.constant dense<0.000000e+00> : vector<16xf32>
    %155 = vector.multi_reduction <add>, %154, %cst_72 [1] : vector<16x16xf32> to vector<16xf32>
    %156 = vector.shape_cast %155 : vector<16xf32> to vector<16x1xf32>
    %cst_73 = arith.constant 1.600000e+01 : f32
    %157 = vector.broadcast %cst_73 : f32 to vector<16x1xf32>
    %158 = arith.divf %156, %157 : vector<16x1xf32>
    %cst_74 = arith.constant 9.99999997E-7 : f32
    %159 = vector.broadcast %cst_74 : f32 to vector<16x1xf32>
    %160 = arith.addf %158, %159 : vector<16x1xf32>
    %161 = math.rsqrt %160 : vector<16x1xf32>
    %162 = vector.broadcast %161 : vector<16x1xf32> to vector<16x16xf32>
    %163 = arith.mulf %153, %162 : vector<16x16xf32>
    %164 = vector.broadcast %146 : vector<1x16xf32> to vector<16x16xf32>
    %165 = arith.mulf %163, %164 : vector<16x16xf32>
    %166 = vector.broadcast %147 : vector<1x16xf32> to vector<16x16xf32>
    %167 = arith.addf %165, %166 : vector<16x16xf32>
    %c0_75 = arith.constant 0 : index
    %c0_76 = arith.constant 0 : index
    %c0_77 = arith.constant 0 : index
    %168 = vector.load %arg21[%c0_75, %c0_76, %c0_77] : memref<1x16x16xf32, #tpu.memory_space<vmem>>, vector<1x16x16xf32>
    %169 = vector.shape_cast %168 : vector<1x16x16xf32> to vector<16x16xf32>
    %170 = vector.shape_cast %167 : vector<16x16xf32> to vector<1x16x16xf32>
    tpu.vector_store %arg21[%c0_75, %c0_76, %c0_77], %170 {strides = array<i32>} : memref<1x16x16xf32, #tpu.memory_space<vmem>>, vector<1x16x16xf32>,
    return
  }
  func.func @transform_0(%arg0: i32) -> (i32, i32, i32) {
    %c0_i32 = arith.constant 0 : i32
    %c0_i32_0 = arith.constant 0 : i32
    %c0_i32_1 = arith.constant 0 : i32
    return %arg0, %c0_i32, %c0_i32_0 : i32, i32, i32
  }
  func.func @transform_1(%arg0: i32) -> (i32, i32) {
    %c0_i32 = arith.constant 0 : i32
    %c0_i32_0 = arith.constant 0 : i32
    %c0_i32_1 = arith.constant 0 : i32
    return %c0_i32, %c0_i32_0 : i32, i32
  }
  func.func @transform_2(%arg0: i32) -> (i32, i32) {
    %c0_i32 = arith.constant 0 : i32
    %c0_i32_0 = arith.constant 0 : i32
    %c0_i32_1 = arith.constant 0 : i32
    return %c0_i32, %c0_i32_0 : i32, i32
  }
  func.func @transform_3(%arg0: i32) -> (i32, i32) {
    %c0_i32 = arith.constant 0 : i32
    %c0_i32_0 = arith.constant 0 : i32
    %c0_i32_1 = arith.constant 0 : i32
    return %c0_i32, %c0_i32_0 : i32, i32
  }
  func.func @transform_4(%arg0: i32) -> (i32, i32) {
    %c0_i32 = arith.constant 0 : i32
    %c0_i32_0 = arith.constant 0 : i32
    %c0_i32_1 = arith.constant 0 : i32
    return %c0_i32, %c0_i32_0 : i32, i32
  }
  func.func @transform_5(%arg0: i32) -> (i32, i32) {
    %c0_i32 = arith.constant 0 : i32
    %c0_i32_0 = arith.constant 0 : i32
    %c0_i32_1 = arith.constant 0 : i32
    return %c0_i32, %c0_i32_0 : i32, i32
  }
  func.func @transform_6(%arg0: i32) -> (i32, i32) {
    %c0_i32 = arith.constant 0 : i32
    %c0_i32_0 = arith.constant 0 : i32
    %c0_i32_1 = arith.constant 0 : i32
    return %c0_i32, %c0_i32_0 : i32, i32
  }
  func.func @transform_7(%arg0: i32) -> (i32, i32) {
    %c0_i32 = arith.constant 0 : i32
    %c0_i32_0 = arith.constant 0 : i32
    %c0_i32_1 = arith.constant 0 : i32
    return %c0_i32, %c0_i32_0 : i32, i32
  }
  func.func @transform_8(%arg0: i32) -> (i32, i32) {
    %c0_i32 = arith.constant 0 : i32
    %c0_i32_0 = arith.constant 0 : i32
    %c0_i32_1 = arith.constant 0 : i32
    return %c0_i32, %c0_i32_0 : i32, i32
  }
  func.func @transform_9(%arg0: i32) -> (i32, i32) {
    %c0_i32 = arith.constant 0 : i32
    %c0_i32_0 = arith.constant 0 : i32
    %c0_i32_1 = arith.constant 0 : i32
    return %c0_i32, %c0_i32_0 : i32, i32
  }
  func.func @transform_10(%arg0: i32) -> (i32, i32) {
    %c0_i32 = arith.constant 0 : i32
    %c0_i32_0 = arith.constant 0 : i32
    %c0_i32_1 = arith.constant 0 : i32
    return %c0_i32, %c0_i32_0 : i32, i32
  }
  func.func @transform_11(%arg0: i32) -> (i32, i32) {
    %c0_i32 = arith.constant 0 : i32
    %c0_i32_0 = arith.constant 0 : i32
    %c0_i32_1 = arith.constant 0 : i32
    return %c0_i32, %c0_i32_0 : i32, i32
  }
  func.func @transform_12(%arg0: i32) -> (i32, i32) {
    %c0_i32 = arith.constant 0 : i32
    %c0_i32_0 = arith.constant 0 : i32
    %c0_i32_1 = arith.constant 0 : i32
    return %c0_i32, %c0_i32_0 : i32, i32
  }
  func.func @transform_13(%arg0: i32) -> (i32, i32) {
    %c0_i32 = arith.constant 0 : i32
    %c0_i32_0 = arith.constant 0 : i32
    %c0_i32_1 = arith.constant 0 : i32
    return %c0_i32, %c0_i32_0 : i32, i32
  }
  func.func @transform_14(%arg0: i32) -> (i32, i32) {
    %c0_i32 = arith.constant 0 : i32
    %c0_i32_0 = arith.constant 0 : i32
    %c0_i32_1 = arith.constant 0 : i32
    return %c0_i32, %c0_i32_0 : i32, i32
  }
  func.func @transform_15(%arg0: i32) -> (i32, i32) {
    %c0_i32 = arith.constant 0 : i32
    %c0_i32_0 = arith.constant 0 : i32
    %c0_i32_1 = arith.constant 0 : i32
    return %c0_i32, %c0_i32_0 : i32, i32
  }
  func.func @transform_16(%arg0: i32) -> (i32, i32) {
    %c0_i32 = arith.constant 0 : i32
    %c0_i32_0 = arith.constant 0 : i32
    %c0_i32_1 = arith.constant 0 : i32
    return %c0_i32, %c0_i32_0 : i32, i32
  }
  func.func @transform_17(%arg0: i32) -> (i32, i32) {
    %c0_i32 = arith.constant 0 : i32
    %c0_i32_0 = arith.constant 0 : i32
    %c0_i32_1 = arith.constant 0 : i32
    return %c0_i32, %c0_i32_0 : i32, i32
  }
  func.func @transform_18(%arg0: i32) -> (i32, i32) {
    %c0_i32 = arith.constant 0 : i32
    %c0_i32_0 = arith.constant 0 : i32
    %c0_i32_1 = arith.constant 0 : i32
    return %c0_i32, %c0_i32_0 : i32, i32
  }
  func.func @transform_19(%arg0: i32) -> (i32, i32) {
    %c0_i32 = arith.constant 0 : i32
    %c0_i32_0 = arith.constant 0 : i32
    %c0_i32_1 = arith.constant 0 : i32
    return %c0_i32, %c0_i32_0 : i32, i32
  }
  func.func @transform_20(%arg0: i32) -> (i32, i32, i32) {
    %c0_i32 = arith.constant 0 : i32
    %c0_i32_0 = arith.constant 0 : i32
    %c0_i32_1 = arith.constant 0 : i32
    return %arg0, %c0_i32, %c0_i32_0 : i32, i32, i32
  }
}

module attributes {stable_mosaic.version = 11 : i64} {
  func.func @_decoder_kernel(%arg0: i32, %arg1: memref<1x7x16xf32, #tpu.memory_space<vmem>>, %arg2: memref<1x16x16xf32, #tpu.memory_space<vmem>>, %arg3: memref<16x16xf32, #tpu.memory_space<vmem>>, %arg4: memref<1x16xf32, #tpu.memory_space<vmem>>, %arg5: memref<4x16x16xbf16, #tpu.memory_space<vmem>>, %arg6: memref<4x1x16xf32, #tpu.memory_space<vmem>>, %arg7: memref<4x16x16xbf16, #tpu.memory_space<vmem>>, %arg8: memref<4x1x16xf32, #tpu.memory_space<vmem>>, %arg9: memref<4x16x16xbf16, #tpu.memory_space<vmem>>, %arg10: memref<4x1x16xf32, #tpu.memory_space<vmem>>, %arg11: memref<4x16x16xbf16, #tpu.memory_space<vmem>>, %arg12: memref<4x1x16xf32, #tpu.memory_space<vmem>>, %arg13: memref<5x1x16xf32, #tpu.memory_space<vmem>>, %arg14: memref<5x1x16xf32, #tpu.memory_space<vmem>>, %arg15: memref<16x32xbf16, #tpu.memory_space<vmem>>, %arg16: memref<1x32xf32, #tpu.memory_space<vmem>>, %arg17: memref<32x16xbf16, #tpu.memory_space<vmem>>, %arg18: memref<1x16xf32, #tpu.memory_space<vmem>>, %arg19: memref<16x32xbf16, #tpu.memory_space<vmem>>, %arg20: memref<1x32xf32, #tpu.memory_space<vmem>>, %arg21: memref<1x32xf32, #tpu.memory_space<vmem>>, %arg22: memref<1x32xf32, #tpu.memory_space<vmem>>, %arg23: memref<32x32xf32, #tpu.memory_space<vmem>>, %arg24: memref<32x64xbf16, #tpu.memory_space<vmem>>, %arg25: memref<1x64xf32, #tpu.memory_space<vmem>>, %arg26: memref<16x16xbf16, #tpu.memory_space<vmem>>, %arg27: memref<1x16xf32, #tpu.memory_space<vmem>>, %arg28: memref<16x16xbf16, #tpu.memory_space<vmem>>, %arg29: memref<1x16xf32, #tpu.memory_space<vmem>>, %arg30: memref<16x4xbf16, #tpu.memory_space<vmem>>, %arg31: memref<1x4xf32, #tpu.memory_space<vmem>>, %arg32: memref<4x64xf32, #tpu.memory_space<vmem>>, %arg33: memref<64x16xf32, #tpu.memory_space<vmem>>, %arg34: memref<1x16x16xf32, #tpu.memory_space<vmem>>) attributes {dimension_semantics = [#tpu.dimension_semantics<parallel>], iteration_bounds = array<i64: 2>, scalar_prefetch = 0 : i64, scratch_operands = 0 : i64, tpu.core_type = #tpu.core_type<tc>, window_params = [{transform_indices = @transform_0, window_bounds = array<i64: 1, 7, 16>}, {transform_indices = @transform_1, window_bounds = array<i64: 1, 16, 16>}, {pipeline_mode = #tpu.pipeline_mode<synchronous>, transform_indices = @transform_2, window_bounds = array<i64: 16, 16>}, {pipeline_mode = #tpu.pipeline_mode<synchronous>, transform_indices = @transform_3, window_bounds = array<i64: 1, 16>}, {pipeline_mode = #tpu.pipeline_mode<synchronous>, transform_indices = @transform_4, window_bounds = array<i64: 4, 16, 16>}, {pipeline_mode = #tpu.pipeline_mode<synchronous>, transform_indices = @transform_5, window_bounds = array<i64: 4, 1, 16>}, {pipeline_mode = #tpu.pipeline_mode<synchronous>, transform_indices = @transform_6, window_bounds = array<i64: 4, 16, 16>}, {pipeline_mode = #tpu.pipeline_mode<synchronous>, transform_indices = @transform_7, window_bounds = array<i64: 4, 1, 16>}, {pipeline_mode = #tpu.pipeline_mode<synchronous>, transform_indices = @transform_8, window_bounds = array<i64: 4, 16, 16>}, {pipeline_mode = #tpu.pipeline_mode<synchronous>, transform_indices = @transform_9, window_bounds = array<i64: 4, 1, 16>}, {pipeline_mode = #tpu.pipeline_mode<synchronous>, transform_indices = @transform_10, window_bounds = array<i64: 4, 16, 16>}, {pipeline_mode = #tpu.pipeline_mode<synchronous>, transform_indices = @transform_11, window_bounds = array<i64: 4, 1, 16>}, {pipeline_mode = #tpu.pipeline_mode<synchronous>, transform_indices = @transform_12, window_bounds = array<i64: 5, 1, 16>}, {pipeline_mode = #tpu.pipeline_mode<synchronous>, transform_indices = @transform_13, window_bounds = array<i64: 5, 1, 16>}, {pipeline_mode = #tpu.pipeline_mode<synchronous>, transform_indices = @transform_14, window_bounds = array<i64: 16, 32>}, {pipeline_mode = #tpu.pipeline_mode<synchronous>, transform_indices = @transform_15, window_bounds = array<i64: 1, 32>}, {pipeline_mode = #tpu.pipeline_mode<synchronous>, transform_indices = @transform_16, window_bounds = array<i64: 32, 16>}, {pipeline_mode = #tpu.pipeline_mode<synchronous>, transform_indices = @transform_17, window_bounds = array<i64: 1, 16>}, {pipeline_mode = #tpu.pipeline_mode<synchronous>, transform_indices = @transform_18, window_bounds = array<i64: 16, 32>}, {pipeline_mode = #tpu.pipeline_mode<synchronous>, transform_indices = @transform_19, window_bounds = array<i64: 1, 32>}, {pipeline_mode = #tpu.pipeline_mode<synchronous>, transform_indices = @transform_20, window_bounds = array<i64: 1, 32>}, {pipeline_mode = #tpu.pipeline_mode<synchronous>, transform_indices = @transform_21, window_bounds = array<i64: 1, 32>}, {pipeline_mode = #tpu.pipeline_mode<synchronous>, transform_indices = @transform_22, window_bounds = array<i64: 32, 32>}, {pipeline_mode = #tpu.pipeline_mode<synchronous>, transform_indices = @transform_23, window_bounds = array<i64: 32, 64>}, {pipeline_mode = #tpu.pipeline_mode<synchronous>, transform_indices = @transform_24, window_bounds = array<i64: 1, 64>}, {pipeline_mode = #tpu.pipeline_mode<synchronous>, transform_indices = @transform_25, window_bounds = array<i64: 16, 16>}, {pipeline_mode = #tpu.pipeline_mode<synchronous>, transform_indices = @transform_26, window_bounds = array<i64: 1, 16>}, {pipeline_mode = #tpu.pipeline_mode<synchronous>, transform_indices = @transform_27, window_bounds = array<i64: 16, 16>}, {pipeline_mode = #tpu.pipeline_mode<synchronous>, transform_indices = @transform_28, window_bounds = array<i64: 1, 16>}, {pipeline_mode = #tpu.pipeline_mode<synchronous>, transform_indices = @transform_29, window_bounds = array<i64: 16, 4>}, {pipeline_mode = #tpu.pipeline_mode<synchronous>, transform_indices = @transform_30, window_bounds = array<i64: 1, 4>}, {pipeline_mode = #tpu.pipeline_mode<synchronous>, transform_indices = @transform_31, window_bounds = array<i64: 4, 64>}, {pipeline_mode = #tpu.pipeline_mode<synchronous>, transform_indices = @transform_32, window_bounds = array<i64: 64, 16>}, {transform_indices = @transform_33, window_bounds = array<i64: 1, 16, 16>}]} {
    %c0 = arith.constant 0 : index
    %c0_0 = arith.constant 0 : index
    %c0_1 = arith.constant 0 : index
    %0 = vector.load %arg1[%c0, %c0_0, %c0_1] : memref<1x7x16xf32, #tpu.memory_space<vmem>>, vector<1x7x16xf32>
    %1 = vector.shape_cast %0 : vector<1x7x16xf32> to vector<7x16xf32>
    %c0_2 = arith.constant 0 : index
    %c0_3 = arith.constant 0 : index
    %c0_4 = arith.constant 0 : index
    %2 = vector.load %arg2[%c0_2, %c0_3, %c0_4] : memref<1x16x16xf32, #tpu.memory_space<vmem>>, vector<1x16x16xf32>
    %3 = vector.shape_cast %2 : vector<1x16x16xf32> to vector<16x16xf32>
    %c0_5 = arith.constant 0 : index
    %c0_6 = arith.constant 0 : index
    %4 = vector.load %arg4[%c0_5, %c0_6] : memref<1x16xf32, #tpu.memory_space<vmem>>, vector<1x16xf32>
    %5 = vector.broadcast %4 : vector<1x16xf32> to vector<16x16xf32>
    %6 = arith.addf %3, %5 : vector<16x16xf32>
    %c0_7 = arith.constant 0 : index
    %c0_8 = arith.constant 0 : index
    %7 = vector.load %arg3[%c0_7, %c0_8] : memref<16x16xf32, #tpu.memory_space<vmem>>, vector<16x16xf32>
    %c0_9 = arith.constant 0 : index
    %c0_10 = arith.constant 0 : index
    %c0_11 = arith.constant 0 : index
    %8 = vector.load %arg5[%c0_9, %c0_10, %c0_11] : memref<4x16x16xbf16, #tpu.memory_space<vmem>>, vector<1x16x16xbf16>
    %9 = vector.shape_cast %8 : vector<1x16x16xbf16> to vector<16x16xbf16>
    %10 = arith.truncf %1 : vector<7x16xf32> to vector<7x16xbf16>
    %cst = arith.constant dense<0.000000e+00> : vector<7x16xf32>
    %11 = tpu.matmul %10, %9, %cst {dimension_numbers = #tpu.dot_dimension_numbers<[1], [0], [0], [1], [0, 0, 1, 1], [], []>} : vector<7x16xbf16>, vector<16x16xbf16>, vector<7x16xf32> -> vector<7x16xf32>
    %c0_12 = arith.constant 0 : index
    %c0_13 = arith.constant 0 : index
    %c0_14 = arith.constant 0 : index
    %12 = vector.load %arg6[%c0_12, %c0_13, %c0_14] : memref<4x1x16xf32, #tpu.memory_space<vmem>>, vector<1x1x16xf32>
    %13 = vector.shape_cast %12 : vector<1x1x16xf32> to vector<1x16xf32>
    %14 = vector.broadcast %13 : vector<1x16xf32> to vector<7x16xf32>
    %15 = arith.addf %11, %14 : vector<7x16xf32>
    %c0_15 = arith.constant 0 : index
    %c0_16 = arith.constant 0 : index
    %c0_17 = arith.constant 0 : index
    %16 = vector.load %arg7[%c0_15, %c0_16, %c0_17] : memref<4x16x16xbf16, #tpu.memory_space<vmem>>, vector<1x16x16xbf16>
    %17 = vector.shape_cast %16 : vector<1x16x16xbf16> to vector<16x16xbf16>
    %18 = arith.truncf %1 : vector<7x16xf32> to vector<7x16xbf16>
    %cst_18 = arith.constant dense<0.000000e+00> : vector<7x16xf32>
    %19 = tpu.matmul %18, %17, %cst_18 {dimension_numbers = #tpu.dot_dimension_numbers<[1], [0], [0], [1], [0, 0, 1, 1], [], []>} : vector<7x16xbf16>, vector<16x16xbf16>, vector<7x16xf32> -> vector<7x16xf32>
    %c0_19 = arith.constant 0 : index
    %c0_20 = arith.constant 0 : index
    %c0_21 = arith.constant 0 : index
    %20 = vector.load %arg8[%c0_19, %c0_20, %c0_21] : memref<4x1x16xf32, #tpu.memory_space<vmem>>, vector<1x1x16xf32>
    %21 = vector.shape_cast %20 : vector<1x1x16xf32> to vector<1x16xf32>
    %22 = vector.broadcast %21 : vector<1x16xf32> to vector<7x16xf32>
    %23 = arith.addf %19, %22 : vector<7x16xf32>
    %c0_22 = arith.constant 0 : index
    %c0_23 = arith.constant 0 : index
    %c0_24 = arith.constant 0 : index
    %24 = vector.load %arg9[%c0_22, %c0_23, %c0_24] : memref<4x16x16xbf16, #tpu.memory_space<vmem>>, vector<1x16x16xbf16>
    %25 = vector.shape_cast %24 : vector<1x16x16xbf16> to vector<16x16xbf16>
    %26 = arith.truncf %1 : vector<7x16xf32> to vector<7x16xbf16>
    %cst_25 = arith.constant dense<0.000000e+00> : vector<7x16xf32>
    %27 = tpu.matmul %26, %25, %cst_25 {dimension_numbers = #tpu.dot_dimension_numbers<[1], [0], [0], [1], [0, 0, 1, 1], [], []>} : vector<7x16xbf16>, vector<16x16xbf16>, vector<7x16xf32> -> vector<7x16xf32>
    %c0_26 = arith.constant 0 : index
    %c0_27 = arith.constant 0 : index
    %c0_28 = arith.constant 0 : index
    %28 = vector.load %arg10[%c0_26, %c0_27, %c0_28] : memref<4x1x16xf32, #tpu.memory_space<vmem>>, vector<1x1x16xf32>
    %29 = vector.shape_cast %28 : vector<1x1x16xf32> to vector<1x16xf32>
    %30 = vector.broadcast %29 : vector<1x16xf32> to vector<7x16xf32>
    %31 = arith.addf %27, %30 : vector<7x16xf32>
    %32 = arith.truncf %15 : vector<7x16xf32> to vector<7x16xbf16>
    %33 = arith.truncf %23 : vector<7x16xf32> to vector<7x16xbf16>
    %cst_29 = arith.constant dense<0.000000e+00> : vector<7x7xf32>
    %34 = tpu.matmul %32, %33, %cst_29 {dimension_numbers = #tpu.dot_dimension_numbers<[1], [1], [0], [0], [0, 0, 1, 0], [], []>} : vector<7x16xbf16>, vector<7x16xbf16>, vector<7x7xf32> -> vector<7x7xf32>
    %cst_30 = arith.constant 2.500000e-01 : f32
    %35 = vector.broadcast %cst_30 : f32 to vector<7x7xf32>
    %36 = arith.mulf %34, %35 : vector<7x7xf32>
    %cst_31 = arith.constant dense<0xFF800000> : vector<7xf32>
    %37 = vector.multi_reduction <maximumf>, %36, %cst_31 [1] : vector<7x7xf32> to vector<7xf32>
    %38 = vector.shape_cast %37 : vector<7xf32> to vector<7x1xf32>
    %39 = vector.broadcast %38 : vector<7x1xf32> to vector<7x7xf32>
    %40 = arith.subf %36, %39 : vector<7x7xf32>
    %41 = math.exp %40 : vector<7x7xf32>
    %cst_32 = arith.constant dense<0.000000e+00> : vector<7xf32>
    %42 = vector.multi_reduction <add>, %41, %cst_32 [1] : vector<7x7xf32> to vector<7xf32>
    %43 = vector.shape_cast %42 : vector<7xf32> to vector<7x1xf32>
    %44 = tpu.reciprocal %43 {approx = true} : vector<7x1xf32> -> vector<7x1xf32>
    %45 = vector.broadcast %44 : vector<7x1xf32> to vector<7x7xf32>
    %46 = arith.mulf %41, %45 : vector<7x7xf32>
    %47 = arith.truncf %46 : vector<7x7xf32> to vector<7x7xbf16>
    %48 = arith.truncf %31 : vector<7x16xf32> to vector<7x16xbf16>
    %cst_33 = arith.constant dense<0.000000e+00> : vector<7x16xf32>
    %49 = tpu.matmul %47, %48, %cst_33 {dimension_numbers = #tpu.dot_dimension_numbers<[1], [0], [0], [1], [0, 0, 1, 1], [], []>} : vector<7x7xbf16>, vector<7x16xbf16>, vector<7x16xf32> -> vector<7x16xf32>
    %c0_34 = arith.constant 0 : index
    %c0_35 = arith.constant 0 : index
    %c0_36 = arith.constant 0 : index
    %50 = vector.load %arg11[%c0_34, %c0_35, %c0_36] : memref<4x16x16xbf16, #tpu.memory_space<vmem>>, vector<1x16x16xbf16>
    %51 = vector.shape_cast %50 : vector<1x16x16xbf16> to vector<16x16xbf16>
    %52 = arith.truncf %49 : vector<7x16xf32> to vector<7x16xbf16>
    %cst_37 = arith.constant dense<0.000000e+00> : vector<7x16xf32>
    %53 = tpu.matmul %52, %51, %cst_37 {dimension_numbers = #tpu.dot_dimension_numbers<[1], [0], [0], [1], [0, 0, 1, 1], [], []>} : vector<7x16xbf16>, vector<16x16xbf16>, vector<7x16xf32> -> vector<7x16xf32>
    %c0_38 = arith.constant 0 : index
    %c0_39 = arith.constant 0 : index
    %c0_40 = arith.constant 0 : index
    %54 = vector.load %arg12[%c0_38, %c0_39, %c0_40] : memref<4x1x16xf32, #tpu.memory_space<vmem>>, vector<1x1x16xf32>
    %55 = vector.shape_cast %54 : vector<1x1x16xf32> to vector<1x16xf32>
    %56 = vector.broadcast %55 : vector<1x16xf32> to vector<7x16xf32>
    %57 = arith.addf %53, %56 : vector<7x16xf32>
    %c0_41 = arith.constant 0 : index
    %c0_42 = arith.constant 0 : index
    %c0_43 = arith.constant 0 : index
    %58 = vector.load %arg13[%c0_41, %c0_42, %c0_43] : memref<5x1x16xf32, #tpu.memory_space<vmem>>, vector<1x1x16xf32>
    %59 = vector.shape_cast %58 : vector<1x1x16xf32> to vector<1x16xf32>
    %c0_44 = arith.constant 0 : index
    %c0_45 = arith.constant 0 : index
    %c0_46 = arith.constant 0 : index
    %60 = vector.load %arg14[%c0_44, %c0_45, %c0_46] : memref<5x1x16xf32, #tpu.memory_space<vmem>>, vector<1x1x16xf32>
    %61 = vector.shape_cast %60 : vector<1x1x16xf32> to vector<1x16xf32>
    %cst_47 = arith.constant dense<0.000000e+00> : vector<7xf32>
    %62 = vector.multi_reduction <add>, %57, %cst_47 [1] : vector<7x16xf32> to vector<7xf32>
    %63 = vector.shape_cast %62 : vector<7xf32> to vector<7x1xf32>
    %cst_48 = arith.constant 1.600000e+01 : f32
    %64 = vector.broadcast %cst_48 : f32 to vector<7x1xf32>
    %65 = arith.divf %63, %64 : vector<7x1xf32>
    %66 = vector.broadcast %65 : vector<7x1xf32> to vector<7x16xf32>
    %67 = arith.subf %57, %66 : vector<7x16xf32>
    %68 = arith.mulf %67, %67 : vector<7x16xf32>
    %cst_49 = arith.constant dense<0.000000e+00> : vector<7xf32>
    %69 = vector.multi_reduction <add>, %68, %cst_49 [1] : vector<7x16xf32> to vector<7xf32>
    %70 = vector.shape_cast %69 : vector<7xf32> to vector<7x1xf32>
    %cst_50 = arith.constant 1.600000e+01 : f32
    %71 = vector.broadcast %cst_50 : f32 to vector<7x1xf32>
    %72 = arith.divf %70, %71 : vector<7x1xf32>
    %cst_51 = arith.constant 9.99999997E-7 : f32
    %73 = vector.broadcast %cst_51 : f32 to vector<7x1xf32>
    %74 = arith.addf %72, %73 : vector<7x1xf32>
    %75 = math.rsqrt %74 : vector<7x1xf32>
    %76 = vector.broadcast %75 : vector<7x1xf32> to vector<7x16xf32>
    %77 = arith.mulf %67, %76 : vector<7x16xf32>
    %78 = vector.broadcast %59 : vector<1x16xf32> to vector<7x16xf32>
    %79 = arith.mulf %77, %78 : vector<7x16xf32>
    %80 = vector.broadcast %61 : vector<1x16xf32> to vector<7x16xf32>
    %81 = arith.addf %79, %80 : vector<7x16xf32>
    %82 = arith.addf %6, %7 : vector<16x16xf32>
    %83 = arith.addf %81, %1 : vector<7x16xf32>
    %c1 = arith.constant 1 : index
    %c0_52 = arith.constant 0 : index
    %c0_53 = arith.constant 0 : index
    %84 = vector.load %arg5[%c1, %c0_52, %c0_53] : memref<4x16x16xbf16, #tpu.memory_space<vmem>>, vector<1x16x16xbf16>
    %85 = vector.shape_cast %84 : vector<1x16x16xbf16> to vector<16x16xbf16>
    %86 = arith.truncf %83 : vector<7x16xf32> to vector<7x16xbf16>
    %cst_54 = arith.constant dense<0.000000e+00> : vector<7x16xf32>
    %87 = tpu.matmul %86, %85, %cst_54 {dimension_numbers = #tpu.dot_dimension_numbers<[1], [0], [0], [1], [0, 0, 1, 1], [], []>} : vector<7x16xbf16>, vector<16x16xbf16>, vector<7x16xf32> -> vector<7x16xf32>
    %c1_55 = arith.constant 1 : index
    %c0_56 = arith.constant 0 : index
    %c0_57 = arith.constant 0 : index
    %88 = vector.load %arg6[%c1_55, %c0_56, %c0_57] : memref<4x1x16xf32, #tpu.memory_space<vmem>>, vector<1x1x16xf32>
    %89 = vector.shape_cast %88 : vector<1x1x16xf32> to vector<1x16xf32>
    %90 = vector.broadcast %89 : vector<1x16xf32> to vector<7x16xf32>
    %91 = arith.addf %87, %90 : vector<7x16xf32>
    %c1_58 = arith.constant 1 : index
    %c0_59 = arith.constant 0 : index
    %c0_60 = arith.constant 0 : index
    %92 = vector.load %arg7[%c1_58, %c0_59, %c0_60] : memref<4x16x16xbf16, #tpu.memory_space<vmem>>, vector<1x16x16xbf16>
    %93 = vector.shape_cast %92 : vector<1x16x16xbf16> to vector<16x16xbf16>
    %94 = arith.truncf %82 : vector<16x16xf32> to vector<16x16xbf16>
    %cst_61 = arith.constant dense<0.000000e+00> : vector<16x16xf32>
    %95 = tpu.matmul %94, %93, %cst_61 {dimension_numbers = #tpu.dot_dimension_numbers<[1], [0], [0], [1], [0, 0, 1, 1], [], []>} : vector<16x16xbf16>, vector<16x16xbf16>, vector<16x16xf32> -> vector<16x16xf32>
    %c1_62 = arith.constant 1 : index
    %c0_63 = arith.constant 0 : index
    %c0_64 = arith.constant 0 : index
    %96 = vector.load %arg8[%c1_62, %c0_63, %c0_64] : memref<4x1x16xf32, #tpu.memory_space<vmem>>, vector<1x1x16xf32>
    %97 = vector.shape_cast %96 : vector<1x1x16xf32> to vector<1x16xf32>
    %98 = vector.broadcast %97 : vector<1x16xf32> to vector<16x16xf32>
    %99 = arith.addf %95, %98 : vector<16x16xf32>
    %c1_65 = arith.constant 1 : index
    %c0_66 = arith.constant 0 : index
    %c0_67 = arith.constant 0 : index
    %100 = vector.load %arg9[%c1_65, %c0_66, %c0_67] : memref<4x16x16xbf16, #tpu.memory_space<vmem>>, vector<1x16x16xbf16>
    %101 = vector.shape_cast %100 : vector<1x16x16xbf16> to vector<16x16xbf16>
    %102 = arith.truncf %6 : vector<16x16xf32> to vector<16x16xbf16>
    %cst_68 = arith.constant dense<0.000000e+00> : vector<16x16xf32>
    %103 = tpu.matmul %102, %101, %cst_68 {dimension_numbers = #tpu.dot_dimension_numbers<[1], [0], [0], [1], [0, 0, 1, 1], [], []>} : vector<16x16xbf16>, vector<16x16xbf16>, vector<16x16xf32> -> vector<16x16xf32>
    %c1_69 = arith.constant 1 : index
    %c0_70 = arith.constant 0 : index
    %c0_71 = arith.constant 0 : index
    %104 = vector.load %arg10[%c1_69, %c0_70, %c0_71] : memref<4x1x16xf32, #tpu.memory_space<vmem>>, vector<1x1x16xf32>
    %105 = vector.shape_cast %104 : vector<1x1x16xf32> to vector<1x16xf32>
    %106 = vector.broadcast %105 : vector<1x16xf32> to vector<16x16xf32>
    %107 = arith.addf %103, %106 : vector<16x16xf32>
    %108 = arith.truncf %91 : vector<7x16xf32> to vector<7x16xbf16>
    %109 = arith.truncf %99 : vector<16x16xf32> to vector<16x16xbf16>
    %cst_72 = arith.constant dense<0.000000e+00> : vector<7x16xf32>
    %110 = tpu.matmul %108, %109, %cst_72 {dimension_numbers = #tpu.dot_dimension_numbers<[1], [1], [0], [0], [0, 0, 1, 0], [], []>} : vector<7x16xbf16>, vector<16x16xbf16>, vector<7x16xf32> -> vector<7x16xf32>
    %cst_73 = arith.constant 2.500000e-01 : f32
    %111 = vector.broadcast %cst_73 : f32 to vector<7x16xf32>
    %112 = arith.mulf %110, %111 : vector<7x16xf32>
    %cst_74 = arith.constant dense<0xFF800000> : vector<7xf32>
    %113 = vector.multi_reduction <maximumf>, %112, %cst_74 [1] : vector<7x16xf32> to vector<7xf32>
    %114 = vector.shape_cast %113 : vector<7xf32> to vector<7x1xf32>
    %115 = vector.broadcast %114 : vector<7x1xf32> to vector<7x16xf32>
    %116 = arith.subf %112, %115 : vector<7x16xf32>
    %117 = math.exp %116 : vector<7x16xf32>
    %cst_75 = arith.constant dense<0.000000e+00> : vector<7xf32>
    %118 = vector.multi_reduction <add>, %117, %cst_75 [1] : vector<7x16xf32> to vector<7xf32>
    %119 = vector.shape_cast %118 : vector<7xf32> to vector<7x1xf32>
    %120 = tpu.reciprocal %119 {approx = true} : vector<7x1xf32> -> vector<7x1xf32>
    %121 = vector.broadcast %120 : vector<7x1xf32> to vector<7x16xf32>
    %122 = arith.mulf %117, %121 : vector<7x16xf32>
    %123 = arith.truncf %122 : vector<7x16xf32> to vector<7x16xbf16>
    %124 = arith.truncf %107 : vector<16x16xf32> to vector<16x16xbf16>
    %cst_76 = arith.constant dense<0.000000e+00> : vector<7x16xf32>
    %125 = tpu.matmul %123, %124, %cst_76 {dimension_numbers = #tpu.dot_dimension_numbers<[1], [0], [0], [1], [0, 0, 1, 1], [], []>} : vector<7x16xbf16>, vector<16x16xbf16>, vector<7x16xf32> -> vector<7x16xf32>
    %c1_77 = arith.constant 1 : index
    %c0_78 = arith.constant 0 : index
    %c0_79 = arith.constant 0 : index
    %126 = vector.load %arg11[%c1_77, %c0_78, %c0_79] : memref<4x16x16xbf16, #tpu.memory_space<vmem>>, vector<1x16x16xbf16>
    %127 = vector.shape_cast %126 : vector<1x16x16xbf16> to vector<16x16xbf16>
    %128 = arith.truncf %125 : vector<7x16xf32> to vector<7x16xbf16>
    %cst_80 = arith.constant dense<0.000000e+00> : vector<7x16xf32>
    %129 = tpu.matmul %128, %127, %cst_80 {dimension_numbers = #tpu.dot_dimension_numbers<[1], [0], [0], [1], [0, 0, 1, 1], [], []>} : vector<7x16xbf16>, vector<16x16xbf16>, vector<7x16xf32> -> vector<7x16xf32>
    %c1_81 = arith.constant 1 : index
    %c0_82 = arith.constant 0 : index
    %c0_83 = arith.constant 0 : index
    %130 = vector.load %arg12[%c1_81, %c0_82, %c0_83] : memref<4x1x16xf32, #tpu.memory_space<vmem>>, vector<1x1x16xf32>
    %131 = vector.shape_cast %130 : vector<1x1x16xf32> to vector<1x16xf32>
    %132 = vector.broadcast %131 : vector<1x16xf32> to vector<7x16xf32>
    %133 = arith.addf %129, %132 : vector<7x16xf32>
    %134 = arith.addf %81, %133 : vector<7x16xf32>
    %c1_84 = arith.constant 1 : index
    %c0_85 = arith.constant 0 : index
    %c0_86 = arith.constant 0 : index
    %135 = vector.load %arg13[%c1_84, %c0_85, %c0_86] : memref<5x1x16xf32, #tpu.memory_space<vmem>>, vector<1x1x16xf32>
    %136 = vector.shape_cast %135 : vector<1x1x16xf32> to vector<1x16xf32>
    %c1_87 = arith.constant 1 : index
    %c0_88 = arith.constant 0 : index
    %c0_89 = arith.constant 0 : index
    %137 = vector.load %arg14[%c1_87, %c0_88, %c0_89] : memref<5x1x16xf32, #tpu.memory_space<vmem>>, vector<1x1x16xf32>
    %138 = vector.shape_cast %137 : vector<1x1x16xf32> to vector<1x16xf32>
    %cst_90 = arith.constant dense<0.000000e+00> : vector<7xf32>
    %139 = vector.multi_reduction <add>, %134, %cst_90 [1] : vector<7x16xf32> to vector<7xf32>
    %140 = vector.shape_cast %139 : vector<7xf32> to vector<7x1xf32>
    %cst_91 = arith.constant 1.600000e+01 : f32
    %141 = vector.broadcast %cst_91 : f32 to vector<7x1xf32>
    %142 = arith.divf %140, %141 : vector<7x1xf32>
    %143 = vector.broadcast %142 : vector<7x1xf32> to vector<7x16xf32>
    %144 = arith.subf %134, %143 : vector<7x16xf32>
    %145 = arith.mulf %144, %144 : vector<7x16xf32>
    %cst_92 = arith.constant dense<0.000000e+00> : vector<7xf32>
    %146 = vector.multi_reduction <add>, %145, %cst_92 [1] : vector<7x16xf32> to vector<7xf32>
    %147 = vector.shape_cast %146 : vector<7xf32> to vector<7x1xf32>
    %cst_93 = arith.constant 1.600000e+01 : f32
    %148 = vector.broadcast %cst_93 : f32 to vector<7x1xf32>
    %149 = arith.divf %147, %148 : vector<7x1xf32>
    %cst_94 = arith.constant 9.99999997E-7 : f32
    %150 = vector.broadcast %cst_94 : f32 to vector<7x1xf32>
    %151 = arith.addf %149, %150 : vector<7x1xf32>
    %152 = math.rsqrt %151 : vector<7x1xf32>
    %153 = vector.broadcast %152 : vector<7x1xf32> to vector<7x16xf32>
    %154 = arith.mulf %144, %153 : vector<7x16xf32>
    %155 = vector.broadcast %136 : vector<1x16xf32> to vector<7x16xf32>
    %156 = arith.mulf %154, %155 : vector<7x16xf32>
    %157 = vector.broadcast %138 : vector<1x16xf32> to vector<7x16xf32>
    %158 = arith.addf %156, %157 : vector<7x16xf32>
    %c0_95 = arith.constant 0 : index
    %c0_96 = arith.constant 0 : index
    %159 = vector.load %arg15[%c0_95, %c0_96] : memref<16x32xbf16, #tpu.memory_space<vmem>>, vector<16x32xbf16>
    %160 = arith.truncf %158 : vector<7x16xf32> to vector<7x16xbf16>
    %cst_97 = arith.constant dense<0.000000e+00> : vector<7x32xf32>
    %161 = tpu.matmul %160, %159, %cst_97 {dimension_numbers = #tpu.dot_dimension_numbers<[1], [0], [0], [1], [0, 0, 1, 1], [], []>} : vector<7x16xbf16>, vector<16x32xbf16>, vector<7x32xf32> -> vector<7x32xf32>
    %c0_98 = arith.constant 0 : index
    %c0_99 = arith.constant 0 : index
    %162 = vector.load %arg16[%c0_98, %c0_99] : memref<1x32xf32, #tpu.memory_space<vmem>>, vector<1x32xf32>
    %163 = vector.broadcast %162 : vector<1x32xf32> to vector<7x32xf32>
    %164 = arith.addf %161, %163 : vector<7x32xf32>
    %cst_100 = arith.constant 0.000000e+00 : f32
    %165 = vector.broadcast %cst_100 : f32 to vector<7x32xf32>
    %166 = arith.maximumf %164, %165 : vector<7x32xf32>
    %c0_101 = arith.constant 0 : index
    %c0_102 = arith.constant 0 : index
    %167 = vector.load %arg17[%c0_101, %c0_102] : memref<32x16xbf16, #tpu.memory_space<vmem>>, vector<32x16xbf16>
    %168 = arith.truncf %166 : vector<7x32xf32> to vector<7x32xbf16>
    %cst_103 = arith.constant dense<0.000000e+00> : vector<7x16xf32>
    %169 = tpu.matmul %168, %167, %cst_103 {dimension_numbers = #tpu.dot_dimension_numbers<[1], [0], [0], [1], [0, 0, 1, 1], [], []>} : vector<7x32xbf16>, vector<32x16xbf16>, vector<7x16xf32> -> vector<7x16xf32>
    %c0_104 = arith.constant 0 : index
    %c0_105 = arith.constant 0 : index
    %170 = vector.load %arg18[%c0_104, %c0_105] : memref<1x16xf32, #tpu.memory_space<vmem>>, vector<1x16xf32>
    %171 = vector.broadcast %170 : vector<1x16xf32> to vector<7x16xf32>
    %172 = arith.addf %169, %171 : vector<7x16xf32>
    %173 = arith.addf %158, %172 : vector<7x16xf32>
    %c2 = arith.constant 2 : index
    %c0_106 = arith.constant 0 : index
    %c0_107 = arith.constant 0 : index
    %174 = vector.load %arg13[%c2, %c0_106, %c0_107] : memref<5x1x16xf32, #tpu.memory_space<vmem>>, vector<1x1x16xf32>
    %175 = vector.shape_cast %174 : vector<1x1x16xf32> to vector<1x16xf32>
    %c2_108 = arith.constant 2 : index
    %c0_109 = arith.constant 0 : index
    %c0_110 = arith.constant 0 : index
    %176 = vector.load %arg14[%c2_108, %c0_109, %c0_110] : memref<5x1x16xf32, #tpu.memory_space<vmem>>, vector<1x1x16xf32>
    %177 = vector.shape_cast %176 : vector<1x1x16xf32> to vector<1x16xf32>
    %cst_111 = arith.constant dense<0.000000e+00> : vector<7xf32>
    %178 = vector.multi_reduction <add>, %173, %cst_111 [1] : vector<7x16xf32> to vector<7xf32>
    %179 = vector.shape_cast %178 : vector<7xf32> to vector<7x1xf32>
    %cst_112 = arith.constant 1.600000e+01 : f32
    %180 = vector.broadcast %cst_112 : f32 to vector<7x1xf32>
    %181 = arith.divf %179, %180 : vector<7x1xf32>
    %182 = vector.broadcast %181 : vector<7x1xf32> to vector<7x16xf32>
    %183 = arith.subf %173, %182 : vector<7x16xf32>
    %184 = arith.mulf %183, %183 : vector<7x16xf32>
    %cst_113 = arith.constant dense<0.000000e+00> : vector<7xf32>
    %185 = vector.multi_reduction <add>, %184, %cst_113 [1] : vector<7x16xf32> to vector<7xf32>
    %186 = vector.shape_cast %185 : vector<7xf32> to vector<7x1xf32>
    %cst_114 = arith.constant 1.600000e+01 : f32
    %187 = vector.broadcast %cst_114 : f32 to vector<7x1xf32>
    %188 = arith.divf %186, %187 : vector<7x1xf32>
    %cst_115 = arith.constant 9.99999997E-7 : f32
    %189 = vector.broadcast %cst_115 : f32 to vector<7x1xf32>
    %190 = arith.addf %188, %189 : vector<7x1xf32>
    %191 = math.rsqrt %190 : vector<7x1xf32>
    %192 = vector.broadcast %191 : vector<7x1xf32> to vector<7x16xf32>
    %193 = arith.mulf %183, %192 : vector<7x16xf32>
    %194 = vector.broadcast %175 : vector<1x16xf32> to vector<7x16xf32>
    %195 = arith.mulf %193, %194 : vector<7x16xf32>
    %196 = vector.broadcast %177 : vector<1x16xf32> to vector<7x16xf32>
    %197 = arith.addf %195, %196 : vector<7x16xf32>
    %198 = arith.addf %197, %1 : vector<7x16xf32>
    %c2_116 = arith.constant 2 : index
    %c0_117 = arith.constant 0 : index
    %c0_118 = arith.constant 0 : index
    %199 = vector.load %arg5[%c2_116, %c0_117, %c0_118] : memref<4x16x16xbf16, #tpu.memory_space<vmem>>, vector<1x16x16xbf16>
    %200 = vector.shape_cast %199 : vector<1x16x16xbf16> to vector<16x16xbf16>
    %201 = arith.truncf %82 : vector<16x16xf32> to vector<16x16xbf16>
    %cst_119 = arith.constant dense<0.000000e+00> : vector<16x16xf32>
    %202 = tpu.matmul %201, %200, %cst_119 {dimension_numbers = #tpu.dot_dimension_numbers<[1], [0], [0], [1], [0, 0, 1, 1], [], []>} : vector<16x16xbf16>, vector<16x16xbf16>, vector<16x16xf32> -> vector<16x16xf32>
    %c2_120 = arith.constant 2 : index
    %c0_121 = arith.constant 0 : index
    %c0_122 = arith.constant 0 : index
    %203 = vector.load %arg6[%c2_120, %c0_121, %c0_122] : memref<4x1x16xf32, #tpu.memory_space<vmem>>, vector<1x1x16xf32>
    %204 = vector.shape_cast %203 : vector<1x1x16xf32> to vector<1x16xf32>
    %205 = vector.broadcast %204 : vector<1x16xf32> to vector<16x16xf32>
    %206 = arith.addf %202, %205 : vector<16x16xf32>
    %c2_123 = arith.constant 2 : index
    %c0_124 = arith.constant 0 : index
    %c0_125 = arith.constant 0 : index
    %207 = vector.load %arg7[%c2_123, %c0_124, %c0_125] : memref<4x16x16xbf16, #tpu.memory_space<vmem>>, vector<1x16x16xbf16>
    %208 = vector.shape_cast %207 : vector<1x16x16xbf16> to vector<16x16xbf16>
    %209 = arith.truncf %198 : vector<7x16xf32> to vector<7x16xbf16>
    %cst_126 = arith.constant dense<0.000000e+00> : vector<7x16xf32>
    %210 = tpu.matmul %209, %208, %cst_126 {dimension_numbers = #tpu.dot_dimension_numbers<[1], [0], [0], [1], [0, 0, 1, 1], [], []>} : vector<7x16xbf16>, vector<16x16xbf16>, vector<7x16xf32> -> vector<7x16xf32>
    %c2_127 = arith.constant 2 : index
    %c0_128 = arith.constant 0 : index
    %c0_129 = arith.constant 0 : index
    %211 = vector.load %arg8[%c2_127, %c0_128, %c0_129] : memref<4x1x16xf32, #tpu.memory_space<vmem>>, vector<1x1x16xf32>
    %212 = vector.shape_cast %211 : vector<1x1x16xf32> to vector<1x16xf32>
    %213 = vector.broadcast %212 : vector<1x16xf32> to vector<7x16xf32>
    %214 = arith.addf %210, %213 : vector<7x16xf32>
    %c2_130 = arith.constant 2 : index
    %c0_131 = arith.constant 0 : index
    %c0_132 = arith.constant 0 : index
    %215 = vector.load %arg9[%c2_130, %c0_131, %c0_132] : memref<4x16x16xbf16, #tpu.memory_space<vmem>>, vector<1x16x16xbf16>
    %216 = vector.shape_cast %215 : vector<1x16x16xbf16> to vector<16x16xbf16>
    %217 = arith.truncf %197 : vector<7x16xf32> to vector<7x16xbf16>
    %cst_133 = arith.constant dense<0.000000e+00> : vector<7x16xf32>
    %218 = tpu.matmul %217, %216, %cst_133 {dimension_numbers = #tpu.dot_dimension_numbers<[1], [0], [0], [1], [0, 0, 1, 1], [], []>} : vector<7x16xbf16>, vector<16x16xbf16>, vector<7x16xf32> -> vector<7x16xf32>
    %c2_134 = arith.constant 2 : index
    %c0_135 = arith.constant 0 : index
    %c0_136 = arith.constant 0 : index
    %219 = vector.load %arg10[%c2_134, %c0_135, %c0_136] : memref<4x1x16xf32, #tpu.memory_space<vmem>>, vector<1x1x16xf32>
    %220 = vector.shape_cast %219 : vector<1x1x16xf32> to vector<1x16xf32>
    %221 = vector.broadcast %220 : vector<1x16xf32> to vector<7x16xf32>
    %222 = arith.addf %218, %221 : vector<7x16xf32>
    %223 = arith.truncf %206 : vector<16x16xf32> to vector<16x16xbf16>
    %224 = arith.truncf %214 : vector<7x16xf32> to vector<7x16xbf16>
    %cst_137 = arith.constant dense<0.000000e+00> : vector<16x7xf32>
    %225 = tpu.matmul %223, %224, %cst_137 {dimension_numbers = #tpu.dot_dimension_numbers<[1], [1], [0], [0], [0, 0, 1, 0], [], []>} : vector<16x16xbf16>, vector<7x16xbf16>, vector<16x7xf32> -> vector<16x7xf32>
    %cst_138 = arith.constant 2.500000e-01 : f32
    %226 = vector.broadcast %cst_138 : f32 to vector<16x7xf32>
    %227 = arith.mulf %225, %226 : vector<16x7xf32>
    %cst_139 = arith.constant dense<0xFF800000> : vector<16xf32>
    %228 = vector.multi_reduction <maximumf>, %227, %cst_139 [1] : vector<16x7xf32> to vector<16xf32>
    %229 = vector.shape_cast %228 : vector<16xf32> to vector<16x1xf32>
    %230 = vector.broadcast %229 : vector<16x1xf32> to vector<16x7xf32>
    %231 = arith.subf %227, %230 : vector<16x7xf32>
    %232 = math.exp %231 : vector<16x7xf32>
    %cst_140 = arith.constant dense<0.000000e+00> : vector<16xf32>
    %233 = vector.multi_reduction <add>, %232, %cst_140 [1] : vector<16x7xf32> to vector<16xf32>
    %234 = vector.shape_cast %233 : vector<16xf32> to vector<16x1xf32>
    %235 = tpu.reciprocal %234 {approx = true} : vector<16x1xf32> -> vector<16x1xf32>
    %236 = vector.broadcast %235 : vector<16x1xf32> to vector<16x7xf32>
    %237 = arith.mulf %232, %236 : vector<16x7xf32>
    %238 = arith.truncf %237 : vector<16x7xf32> to vector<16x7xbf16>
    %239 = arith.truncf %222 : vector<7x16xf32> to vector<7x16xbf16>
    %cst_141 = arith.constant dense<0.000000e+00> : vector<16x16xf32>
    %240 = tpu.matmul %238, %239, %cst_141 {dimension_numbers = #tpu.dot_dimension_numbers<[1], [0], [0], [1], [0, 0, 1, 1], [], []>} : vector<16x7xbf16>, vector<7x16xbf16>, vector<16x16xf32> -> vector<16x16xf32>
    %c2_142 = arith.constant 2 : index
    %c0_143 = arith.constant 0 : index
    %c0_144 = arith.constant 0 : index
    %241 = vector.load %arg11[%c2_142, %c0_143, %c0_144] : memref<4x16x16xbf16, #tpu.memory_space<vmem>>, vector<1x16x16xbf16>
    %242 = vector.shape_cast %241 : vector<1x16x16xbf16> to vector<16x16xbf16>
    %243 = arith.truncf %240 : vector<16x16xf32> to vector<16x16xbf16>
    %cst_145 = arith.constant dense<0.000000e+00> : vector<16x16xf32>
    %244 = tpu.matmul %243, %242, %cst_145 {dimension_numbers = #tpu.dot_dimension_numbers<[1], [0], [0], [1], [0, 0, 1, 1], [], []>} : vector<16x16xbf16>, vector<16x16xbf16>, vector<16x16xf32> -> vector<16x16xf32>
    %c2_146 = arith.constant 2 : index
    %c0_147 = arith.constant 0 : index
    %c0_148 = arith.constant 0 : index
    %245 = vector.load %arg12[%c2_146, %c0_147, %c0_148] : memref<4x1x16xf32, #tpu.memory_space<vmem>>, vector<1x1x16xf32>
    %246 = vector.shape_cast %245 : vector<1x1x16xf32> to vector<1x16xf32>
    %247 = vector.broadcast %246 : vector<1x16xf32> to vector<16x16xf32>
    %248 = arith.addf %244, %247 : vector<16x16xf32>
    %249 = arith.addf %6, %248 : vector<16x16xf32>
    %c3 = arith.constant 3 : index
    %c0_149 = arith.constant 0 : index
    %c0_150 = arith.constant 0 : index
    %250 = vector.load %arg13[%c3, %c0_149, %c0_150] : memref<5x1x16xf32, #tpu.memory_space<vmem>>, vector<1x1x16xf32>
    %251 = vector.shape_cast %250 : vector<1x1x16xf32> to vector<1x16xf32>
    %c3_151 = arith.constant 3 : index
    %c0_152 = arith.constant 0 : index
    %c0_153 = arith.constant 0 : index
    %252 = vector.load %arg14[%c3_151, %c0_152, %c0_153] : memref<5x1x16xf32, #tpu.memory_space<vmem>>, vector<1x1x16xf32>
    %253 = vector.shape_cast %252 : vector<1x1x16xf32> to vector<1x16xf32>
    %cst_154 = arith.constant dense<0.000000e+00> : vector<16xf32>
    %254 = vector.multi_reduction <add>, %249, %cst_154 [1] : vector<16x16xf32> to vector<16xf32>
    %255 = vector.shape_cast %254 : vector<16xf32> to vector<16x1xf32>
    %cst_155 = arith.constant 1.600000e+01 : f32
    %256 = vector.broadcast %cst_155 : f32 to vector<16x1xf32>
    %257 = arith.divf %255, %256 : vector<16x1xf32>
    %258 = vector.broadcast %257 : vector<16x1xf32> to vector<16x16xf32>
    %259 = arith.subf %249, %258 : vector<16x16xf32>
    %260 = arith.mulf %259, %259 : vector<16x16xf32>
    %cst_156 = arith.constant dense<0.000000e+00> : vector<16xf32>
    %261 = vector.multi_reduction <add>, %260, %cst_156 [1] : vector<16x16xf32> to vector<16xf32>
    %262 = vector.shape_cast %261 : vector<16xf32> to vector<16x1xf32>
    %cst_157 = arith.constant 1.600000e+01 : f32
    %263 = vector.broadcast %cst_157 : f32 to vector<16x1xf32>
    %264 = arith.divf %262, %263 : vector<16x1xf32>
    %cst_158 = arith.constant 9.99999997E-7 : f32
    %265 = vector.broadcast %cst_158 : f32 to vector<16x1xf32>
    %266 = arith.addf %264, %265 : vector<16x1xf32>
    %267 = math.rsqrt %266 : vector<16x1xf32>
    %268 = vector.broadcast %267 : vector<16x1xf32> to vector<16x16xf32>
    %269 = arith.mulf %259, %268 : vector<16x16xf32>
    %270 = vector.broadcast %251 : vector<1x16xf32> to vector<16x16xf32>
    %271 = arith.mulf %269, %270 : vector<16x16xf32>
    %272 = vector.broadcast %253 : vector<1x16xf32> to vector<16x16xf32>
    %273 = arith.addf %271, %272 : vector<16x16xf32>
    %274 = arith.addf %273, %7 : vector<16x16xf32>
    %c3_159 = arith.constant 3 : index
    %c0_160 = arith.constant 0 : index
    %c0_161 = arith.constant 0 : index
    %275 = vector.load %arg5[%c3_159, %c0_160, %c0_161] : memref<4x16x16xbf16, #tpu.memory_space<vmem>>, vector<1x16x16xbf16>
    %276 = vector.shape_cast %275 : vector<1x16x16xbf16> to vector<16x16xbf16>
    %277 = arith.truncf %198 : vector<7x16xf32> to vector<7x16xbf16>
    %cst_162 = arith.constant dense<0.000000e+00> : vector<7x16xf32>
    %278 = tpu.matmul %277, %276, %cst_162 {dimension_numbers = #tpu.dot_dimension_numbers<[1], [0], [0], [1], [0, 0, 1, 1], [], []>} : vector<7x16xbf16>, vector<16x16xbf16>, vector<7x16xf32> -> vector<7x16xf32>
    %c3_163 = arith.constant 3 : index
    %c0_164 = arith.constant 0 : index
    %c0_165 = arith.constant 0 : index
    %279 = vector.load %arg6[%c3_163, %c0_164, %c0_165] : memref<4x1x16xf32, #tpu.memory_space<vmem>>, vector<1x1x16xf32>
    %280 = vector.shape_cast %279 : vector<1x1x16xf32> to vector<1x16xf32>
    %281 = vector.broadcast %280 : vector<1x16xf32> to vector<7x16xf32>
    %282 = arith.addf %278, %281 : vector<7x16xf32>
    %c3_166 = arith.constant 3 : index
    %c0_167 = arith.constant 0 : index
    %c0_168 = arith.constant 0 : index
    %283 = vector.load %arg7[%c3_166, %c0_167, %c0_168] : memref<4x16x16xbf16, #tpu.memory_space<vmem>>, vector<1x16x16xbf16>
    %284 = vector.shape_cast %283 : vector<1x16x16xbf16> to vector<16x16xbf16>
    %285 = arith.truncf %274 : vector<16x16xf32> to vector<16x16xbf16>
    %cst_169 = arith.constant dense<0.000000e+00> : vector<16x16xf32>
    %286 = tpu.matmul %285, %284, %cst_169 {dimension_numbers = #tpu.dot_dimension_numbers<[1], [0], [0], [1], [0, 0, 1, 1], [], []>} : vector<16x16xbf16>, vector<16x16xbf16>, vector<16x16xf32> -> vector<16x16xf32>
    %c3_170 = arith.constant 3 : index
    %c0_171 = arith.constant 0 : index
    %c0_172 = arith.constant 0 : index
    %287 = vector.load %arg8[%c3_170, %c0_171, %c0_172] : memref<4x1x16xf32, #tpu.memory_space<vmem>>, vector<1x1x16xf32>
    %288 = vector.shape_cast %287 : vector<1x1x16xf32> to vector<1x16xf32>
    %289 = vector.broadcast %288 : vector<1x16xf32> to vector<16x16xf32>
    %290 = arith.addf %286, %289 : vector<16x16xf32>
    %c3_173 = arith.constant 3 : index
    %c0_174 = arith.constant 0 : index
    %c0_175 = arith.constant 0 : index
    %291 = vector.load %arg9[%c3_173, %c0_174, %c0_175] : memref<4x16x16xbf16, #tpu.memory_space<vmem>>, vector<1x16x16xbf16>
    %292 = vector.shape_cast %291 : vector<1x16x16xbf16> to vector<16x16xbf16>
    %293 = arith.truncf %273 : vector<16x16xf32> to vector<16x16xbf16>
    %cst_176 = arith.constant dense<0.000000e+00> : vector<16x16xf32>
    %294 = tpu.matmul %293, %292, %cst_176 {dimension_numbers = #tpu.dot_dimension_numbers<[1], [0], [0], [1], [0, 0, 1, 1], [], []>} : vector<16x16xbf16>, vector<16x16xbf16>, vector<16x16xf32> -> vector<16x16xf32>
    %c3_177 = arith.constant 3 : index
    %c0_178 = arith.constant 0 : index
    %c0_179 = arith.constant 0 : index
    %295 = vector.load %arg10[%c3_177, %c0_178, %c0_179] : memref<4x1x16xf32, #tpu.memory_space<vmem>>, vector<1x1x16xf32>
    %296 = vector.shape_cast %295 : vector<1x1x16xf32> to vector<1x16xf32>
    %297 = vector.broadcast %296 : vector<1x16xf32> to vector<16x16xf32>
    %298 = arith.addf %294, %297 : vector<16x16xf32>
    %299 = arith.truncf %282 : vector<7x16xf32> to vector<7x16xbf16>
    %300 = arith.truncf %290 : vector<16x16xf32> to vector<16x16xbf16>
    %cst_180 = arith.constant dense<0.000000e+00> : vector<7x16xf32>
    %301 = tpu.matmul %299, %300, %cst_180 {dimension_numbers = #tpu.dot_dimension_numbers<[1], [1], [0], [0], [0, 0, 1, 0], [], []>} : vector<7x16xbf16>, vector<16x16xbf16>, vector<7x16xf32> -> vector<7x16xf32>
    %cst_181 = arith.constant 2.500000e-01 : f32
    %302 = vector.broadcast %cst_181 : f32 to vector<7x16xf32>
    %303 = arith.mulf %301, %302 : vector<7x16xf32>
    %cst_182 = arith.constant dense<0xFF800000> : vector<7xf32>
    %304 = vector.multi_reduction <maximumf>, %303, %cst_182 [1] : vector<7x16xf32> to vector<7xf32>
    %305 = vector.shape_cast %304 : vector<7xf32> to vector<7x1xf32>
    %306 = vector.broadcast %305 : vector<7x1xf32> to vector<7x16xf32>
    %307 = arith.subf %303, %306 : vector<7x16xf32>
    %308 = math.exp %307 : vector<7x16xf32>
    %cst_183 = arith.constant dense<0.000000e+00> : vector<7xf32>
    %309 = vector.multi_reduction <add>, %308, %cst_183 [1] : vector<7x16xf32> to vector<7xf32>
    %310 = vector.shape_cast %309 : vector<7xf32> to vector<7x1xf32>
    %311 = tpu.reciprocal %310 {approx = true} : vector<7x1xf32> -> vector<7x1xf32>
    %312 = vector.broadcast %311 : vector<7x1xf32> to vector<7x16xf32>
    %313 = arith.mulf %308, %312 : vector<7x16xf32>
    %314 = arith.truncf %313 : vector<7x16xf32> to vector<7x16xbf16>
    %315 = arith.truncf %298 : vector<16x16xf32> to vector<16x16xbf16>
    %cst_184 = arith.constant dense<0.000000e+00> : vector<7x16xf32>
    %316 = tpu.matmul %314, %315, %cst_184 {dimension_numbers = #tpu.dot_dimension_numbers<[1], [0], [0], [1], [0, 0, 1, 1], [], []>} : vector<7x16xbf16>, vector<16x16xbf16>, vector<7x16xf32> -> vector<7x16xf32>
    %c3_185 = arith.constant 3 : index
    %c0_186 = arith.constant 0 : index
    %c0_187 = arith.constant 0 : index
    %317 = vector.load %arg11[%c3_185, %c0_186, %c0_187] : memref<4x16x16xbf16, #tpu.memory_space<vmem>>, vector<1x16x16xbf16>
    %318 = vector.shape_cast %317 : vector<1x16x16xbf16> to vector<16x16xbf16>
    %319 = arith.truncf %316 : vector<7x16xf32> to vector<7x16xbf16>
    %cst_188 = arith.constant dense<0.000000e+00> : vector<7x16xf32>
    %320 = tpu.matmul %319, %318, %cst_188 {dimension_numbers = #tpu.dot_dimension_numbers<[1], [0], [0], [1], [0, 0, 1, 1], [], []>} : vector<7x16xbf16>, vector<16x16xbf16>, vector<7x16xf32> -> vector<7x16xf32>
    %c3_189 = arith.constant 3 : index
    %c0_190 = arith.constant 0 : index
    %c0_191 = arith.constant 0 : index
    %321 = vector.load %arg12[%c3_189, %c0_190, %c0_191] : memref<4x1x16xf32, #tpu.memory_space<vmem>>, vector<1x1x16xf32>
    %322 = vector.shape_cast %321 : vector<1x1x16xf32> to vector<1x16xf32>
    %323 = vector.broadcast %322 : vector<1x16xf32> to vector<7x16xf32>
    %324 = arith.addf %320, %323 : vector<7x16xf32>
    %325 = arith.addf %197, %324 : vector<7x16xf32>
    %c4 = arith.constant 4 : index
    %c0_192 = arith.constant 0 : index
    %c0_193 = arith.constant 0 : index
    %326 = vector.load %arg13[%c4, %c0_192, %c0_193] : memref<5x1x16xf32, #tpu.memory_space<vmem>>, vector<1x1x16xf32>
    %327 = vector.shape_cast %326 : vector<1x1x16xf32> to vector<1x16xf32>
    %c4_194 = arith.constant 4 : index
    %c0_195 = arith.constant 0 : index
    %c0_196 = arith.constant 0 : index
    %328 = vector.load %arg14[%c4_194, %c0_195, %c0_196] : memref<5x1x16xf32, #tpu.memory_space<vmem>>, vector<1x1x16xf32>
    %329 = vector.shape_cast %328 : vector<1x1x16xf32> to vector<1x16xf32>
    %cst_197 = arith.constant dense<0.000000e+00> : vector<7xf32>
    %330 = vector.multi_reduction <add>, %325, %cst_197 [1] : vector<7x16xf32> to vector<7xf32>
    %331 = vector.shape_cast %330 : vector<7xf32> to vector<7x1xf32>
    %cst_198 = arith.constant 1.600000e+01 : f32
    %332 = vector.broadcast %cst_198 : f32 to vector<7x1xf32>
    %333 = arith.divf %331, %332 : vector<7x1xf32>
    %334 = vector.broadcast %333 : vector<7x1xf32> to vector<7x16xf32>
    %335 = arith.subf %325, %334 : vector<7x16xf32>
    %336 = arith.mulf %335, %335 : vector<7x16xf32>
    %cst_199 = arith.constant dense<0.000000e+00> : vector<7xf32>
    %337 = vector.multi_reduction <add>, %336, %cst_199 [1] : vector<7x16xf32> to vector<7xf32>
    %338 = vector.shape_cast %337 : vector<7xf32> to vector<7x1xf32>
    %cst_200 = arith.constant 1.600000e+01 : f32
    %339 = vector.broadcast %cst_200 : f32 to vector<7x1xf32>
    %340 = arith.divf %338, %339 : vector<7x1xf32>
    %cst_201 = arith.constant 9.99999997E-7 : f32
    %341 = vector.broadcast %cst_201 : f32 to vector<7x1xf32>
    %342 = arith.addf %340, %341 : vector<7x1xf32>
    %343 = math.rsqrt %342 : vector<7x1xf32>
    %344 = vector.broadcast %343 : vector<7x1xf32> to vector<7x16xf32>
    %345 = arith.mulf %335, %344 : vector<7x16xf32>
    %346 = vector.broadcast %327 : vector<1x16xf32> to vector<7x16xf32>
    %347 = arith.mulf %345, %346 : vector<7x16xf32>
    %348 = vector.broadcast %329 : vector<1x16xf32> to vector<7x16xf32>
    %349 = arith.addf %347, %348 : vector<7x16xf32>
    %350 = vector.extract_strided_slice %349 {offsets = [1, 0], sizes = [1, 16], strides = [1, 1]} : vector<7x16xf32> to vector<1x16xf32>
    %c0_202 = arith.constant 0 : index
    %c0_203 = arith.constant 0 : index
    %351 = vector.load %arg19[%c0_202, %c0_203] : memref<16x32xbf16, #tpu.memory_space<vmem>>, vector<16x32xbf16>
    %352 = arith.truncf %273 : vector<16x16xf32> to vector<16x16xbf16>
    %cst_204 = arith.constant dense<0.000000e+00> : vector<16x32xf32>
    %353 = tpu.matmul %352, %351, %cst_204 {dimension_numbers = #tpu.dot_dimension_numbers<[1], [0], [0], [1], [0, 0, 1, 1], [], []>} : vector<16x16xbf16>, vector<16x32xbf16>, vector<16x32xf32> -> vector<16x32xf32>
    %c0_205 = arith.constant 0 : index
    %c0_206 = arith.constant 0 : index
    %354 = vector.load %arg20[%c0_205, %c0_206] : memref<1x32xf32, #tpu.memory_space<vmem>>, vector<1x32xf32>
    %355 = vector.broadcast %354 : vector<1x32xf32> to vector<16x32xf32>
    %356 = arith.addf %353, %355 : vector<16x32xf32>
    %c0_207 = arith.constant 0 : index
    %c0_208 = arith.constant 0 : index
    %357 = vector.load %arg23[%c0_207, %c0_208] : memref<32x32xf32, #tpu.memory_space<vmem>>, vector<32x32xf32>
    %cst_209 = arith.constant dense<0.000000e+00> : vector<16x32xf32>
    %358 = tpu.matmul %356, %357, %cst_209 {dimension_numbers = #tpu.dot_dimension_numbers<[1], [0], [0], [1], [0, 0, 1, 1], [], []>} : vector<16x32xf32>, vector<32x32xf32>, vector<16x32xf32> -> vector<16x32xf32>
    %359 = arith.subf %356, %358 : vector<16x32xf32>
    %360 = arith.mulf %359, %359 : vector<16x32xf32>
    %cst_210 = arith.constant dense<0.000000e+00> : vector<16x32xf32>
    %361 = tpu.matmul %360, %357, %cst_210 {dimension_numbers = #tpu.dot_dimension_numbers<[1], [0], [0], [1], [0, 0, 1, 1], [], []>} : vector<16x32xf32>, vector<32x32xf32>, vector<16x32xf32> -> vector<16x32xf32>
    %cst_211 = arith.constant 9.99999997E-7 : f32
    %362 = vector.broadcast %cst_211 : f32 to vector<16x32xf32>
    %363 = arith.addf %361, %362 : vector<16x32xf32>
    %364 = math.rsqrt %363 : vector<16x32xf32>
    %365 = arith.mulf %359, %364 : vector<16x32xf32>
    %c0_212 = arith.constant 0 : index
    %c0_213 = arith.constant 0 : index
    %366 = vector.load %arg21[%c0_212, %c0_213] : memref<1x32xf32, #tpu.memory_space<vmem>>, vector<1x32xf32>
    %367 = vector.broadcast %366 : vector<1x32xf32> to vector<16x32xf32>
    %368 = arith.mulf %365, %367 : vector<16x32xf32>
    %c0_214 = arith.constant 0 : index
    %c0_215 = arith.constant 0 : index
    %369 = vector.load %arg22[%c0_214, %c0_215] : memref<1x32xf32, #tpu.memory_space<vmem>>, vector<1x32xf32>
    %370 = vector.broadcast %369 : vector<1x32xf32> to vector<16x32xf32>
    %371 = arith.addf %368, %370 : vector<16x32xf32>
    %cst_216 = arith.constant 5.000000e-01 : f32
    %372 = vector.broadcast %cst_216 : f32 to vector<16x32xf32>
    %373 = arith.mulf %372, %371 : vector<16x32xf32>
    %cst_217 = arith.constant 4.471500e-02 : f32
    %374 = vector.broadcast %cst_217 : f32 to vector<16x32xf32>
    %375 = arith.mulf %374, %371 : vector<16x32xf32>
    %376 = arith.mulf %375, %371 : vector<16x32xf32>
    %377 = arith.mulf %376, %371 : vector<16x32xf32>
    %378 = arith.addf %371, %377 : vector<16x32xf32>
    %cst_218 = arith.constant 0.797884583 : f32
    %379 = vector.broadcast %cst_218 : f32 to vector<16x32xf32>
    %380 = arith.mulf %379, %378 : vector<16x32xf32>
    %381 = math.tanh %380 : vector<16x32xf32>
    %cst_219 = arith.constant 1.000000e+00 : f32
    %382 = vector.broadcast %cst_219 : f32 to vector<16x32xf32>
    %383 = arith.addf %382, %381 : vector<16x32xf32>
    %384 = arith.mulf %373, %383 : vector<16x32xf32>
    %c0_220 = arith.constant 0 : index
    %c0_221 = arith.constant 0 : index
    %385 = vector.load %arg24[%c0_220, %c0_221] : memref<32x64xbf16, #tpu.memory_space<vmem>>, vector<32x64xbf16>
    %386 = arith.truncf %384 : vector<16x32xf32> to vector<16x32xbf16>
    %cst_222 = arith.constant dense<0.000000e+00> : vector<16x64xf32>
    %387 = tpu.matmul %386, %385, %cst_222 {dimension_numbers = #tpu.dot_dimension_numbers<[1], [0], [0], [1], [0, 0, 1, 1], [], []>} : vector<16x32xbf16>, vector<32x64xbf16>, vector<16x64xf32> -> vector<16x64xf32>
    %c0_223 = arith.constant 0 : index
    %c0_224 = arith.constant 0 : index
    %388 = vector.load %arg25[%c0_223, %c0_224] : memref<1x64xf32, #tpu.memory_space<vmem>>, vector<1x64xf32>
    %389 = vector.broadcast %388 : vector<1x64xf32> to vector<16x64xf32>
    %390 = arith.addf %387, %389 : vector<16x64xf32>
    %cst_225 = arith.constant 5.000000e-01 : f32
    %391 = vector.broadcast %cst_225 : f32 to vector<16x64xf32>
    %392 = arith.mulf %391, %390 : vector<16x64xf32>
    %cst_226 = arith.constant 4.471500e-02 : f32
    %393 = vector.broadcast %cst_226 : f32 to vector<16x64xf32>
    %394 = arith.mulf %393, %390 : vector<16x64xf32>
    %395 = arith.mulf %394, %390 : vector<16x64xf32>
    %396 = arith.mulf %395, %390 : vector<16x64xf32>
    %397 = arith.addf %390, %396 : vector<16x64xf32>
    %cst_227 = arith.constant 0.797884583 : f32
    %398 = vector.broadcast %cst_227 : f32 to vector<16x64xf32>
    %399 = arith.mulf %398, %397 : vector<16x64xf32>
    %400 = math.tanh %399 : vector<16x64xf32>
    %cst_228 = arith.constant 1.000000e+00 : f32
    %401 = vector.broadcast %cst_228 : f32 to vector<16x64xf32>
    %402 = arith.addf %401, %400 : vector<16x64xf32>
    %403 = arith.mulf %392, %402 : vector<16x64xf32>
    %c0_229 = arith.constant 0 : index
    %c0_230 = arith.constant 0 : index
    %404 = vector.load %arg26[%c0_229, %c0_230] : memref<16x16xbf16, #tpu.memory_space<vmem>>, vector<16x16xbf16>
    %405 = arith.truncf %350 : vector<1x16xf32> to vector<1x16xbf16>
    %cst_231 = arith.constant dense<0.000000e+00> : vector<1x16xf32>
    %406 = tpu.matmul %405, %404, %cst_231 {dimension_numbers = #tpu.dot_dimension_numbers<[1], [0], [0], [1], [0, 0, 1, 1], [], []>} : vector<1x16xbf16>, vector<16x16xbf16>, vector<1x16xf32> -> vector<1x16xf32>
    %c0_232 = arith.constant 0 : index
    %c0_233 = arith.constant 0 : index
    %407 = vector.load %arg27[%c0_232, %c0_233] : memref<1x16xf32, #tpu.memory_space<vmem>>, vector<1x16xf32>
    %408 = arith.addf %406, %407 : vector<1x16xf32>
    %cst_234 = arith.constant 0.000000e+00 : f32
    %409 = vector.broadcast %cst_234 : f32 to vector<1x16xf32>
    %410 = arith.maximumf %408, %409 : vector<1x16xf32>
    %c0_235 = arith.constant 0 : index
    %c0_236 = arith.constant 0 : index
    %411 = vector.load %arg28[%c0_235, %c0_236] : memref<16x16xbf16, #tpu.memory_space<vmem>>, vector<16x16xbf16>
    %412 = arith.truncf %410 : vector<1x16xf32> to vector<1x16xbf16>
    %cst_237 = arith.constant dense<0.000000e+00> : vector<1x16xf32>
    %413 = tpu.matmul %412, %411, %cst_237 {dimension_numbers = #tpu.dot_dimension_numbers<[1], [0], [0], [1], [0, 0, 1, 1], [], []>} : vector<1x16xbf16>, vector<16x16xbf16>, vector<1x16xf32> -> vector<1x16xf32>
    %c0_238 = arith.constant 0 : index
    %c0_239 = arith.constant 0 : index
    %414 = vector.load %arg29[%c0_238, %c0_239] : memref<1x16xf32, #tpu.memory_space<vmem>>, vector<1x16xf32>
    %415 = arith.addf %413, %414 : vector<1x16xf32>
    %cst_240 = arith.constant 0.000000e+00 : f32
    %416 = vector.broadcast %cst_240 : f32 to vector<1x16xf32>
    %417 = arith.maximumf %415, %416 : vector<1x16xf32>
    %c0_241 = arith.constant 0 : index
    %c0_242 = arith.constant 0 : index
    %418 = vector.load %arg30[%c0_241, %c0_242] : memref<16x4xbf16, #tpu.memory_space<vmem>>, vector<16x4xbf16>
    %419 = arith.truncf %417 : vector<1x16xf32> to vector<1x16xbf16>
    %cst_243 = arith.constant dense<0.000000e+00> : vector<1x4xf32>
    %420 = tpu.matmul %419, %418, %cst_243 {dimension_numbers = #tpu.dot_dimension_numbers<[1], [0], [0], [1], [0, 0, 1, 1], [], []>} : vector<1x16xbf16>, vector<16x4xbf16>, vector<1x4xf32> -> vector<1x4xf32>
    %c0_244 = arith.constant 0 : index
    %c0_245 = arith.constant 0 : index
    %421 = vector.load %arg31[%c0_244, %c0_245] : memref<1x4xf32, #tpu.memory_space<vmem>>, vector<1x4xf32>
    %422 = arith.addf %420, %421 : vector<1x4xf32>
    %c0_246 = arith.constant 0 : index
    %c0_247 = arith.constant 0 : index
    %423 = vector.load %arg32[%c0_246, %c0_247] : memref<4x64xf32, #tpu.memory_space<vmem>>, vector<4x64xf32>
    %cst_248 = arith.constant dense<0.000000e+00> : vector<1x64xf32>
    %424 = tpu.matmul %422, %423, %cst_248 {dimension_numbers = #tpu.dot_dimension_numbers<[1], [0], [0], [1], [0, 0, 1, 1], [], []>} : vector<1x4xf32>, vector<4x64xf32>, vector<1x64xf32> -> vector<1x64xf32>
    %425 = vector.broadcast %424 : vector<1x64xf32> to vector<16x64xf32>
    %426 = arith.mulf %403, %425 : vector<16x64xf32>
    %c0_249 = arith.constant 0 : index
    %c0_250 = arith.constant 0 : index
    %427 = vector.load %arg33[%c0_249, %c0_250] : memref<64x16xf32, #tpu.memory_space<vmem>>, vector<64x16xf32>
    %cst_251 = arith.constant dense<0.000000e+00> : vector<16x16xf32>
    %428 = tpu.matmul %426, %427, %cst_251 {dimension_numbers = #tpu.dot_dimension_numbers<[1], [0], [0], [1], [0, 0, 1, 1], [], []>} : vector<16x64xf32>, vector<64x16xf32>, vector<16x16xf32> -> vector<16x16xf32>
    %c0_252 = arith.constant 0 : index
    %c0_253 = arith.constant 0 : index
    %c0_254 = arith.constant 0 : index
    %429 = vector.load %arg34[%c0_252, %c0_253, %c0_254] : memref<1x16x16xf32, #tpu.memory_space<vmem>>, vector<1x16x16xf32>
    %430 = vector.shape_cast %429 : vector<1x16x16xf32> to vector<16x16xf32>
    %431 = vector.shape_cast %428 : vector<16x16xf32> to vector<1x16x16xf32>
    tpu.vector_store %arg34[%c0_252, %c0_253, %c0_254], %431 {strides = array<i32>} : memref<1x16x16xf32, #tpu.memory_space<vmem>>, vector<1x16x16xf32>,
    return
  }
  func.func @transform_0(%arg0: i32) -> (i32, i32, i32) {
    %c0_i32 = arith.constant 0 : i32
    %c0_i32_0 = arith.constant 0 : i32
    %c0_i32_1 = arith.constant 0 : i32
    return %arg0, %c0_i32, %c0_i32_0 : i32, i32, i32
  }
  func.func @transform_1(%arg0: i32) -> (i32, i32, i32) {
    %c0_i32 = arith.constant 0 : i32
    %c0_i32_0 = arith.constant 0 : i32
    %c0_i32_1 = arith.constant 0 : i32
    return %arg0, %c0_i32, %c0_i32_0 : i32, i32, i32
  }
  func.func @transform_2(%arg0: i32) -> (i32, i32) {
    %c0_i32 = arith.constant 0 : i32
    %c0_i32_0 = arith.constant 0 : i32
    %c0_i32_1 = arith.constant 0 : i32
    return %c0_i32, %c0_i32_0 : i32, i32
  }
  func.func @transform_3(%arg0: i32) -> (i32, i32) {
    %c0_i32 = arith.constant 0 : i32
    %c0_i32_0 = arith.constant 0 : i32
    %c0_i32_1 = arith.constant 0 : i32
    return %c0_i32, %c0_i32_0 : i32, i32
  }
  func.func @transform_4(%arg0: i32) -> (i32, i32, i32) {
    %c0_i32 = arith.constant 0 : i32
    %c0_i32_0 = arith.constant 0 : i32
    %c0_i32_1 = arith.constant 0 : i32
    %c0_i32_2 = arith.constant 0 : i32
    return %c0_i32, %c0_i32_0, %c0_i32_1 : i32, i32, i32
  }
  func.func @transform_5(%arg0: i32) -> (i32, i32, i32) {
    %c0_i32 = arith.constant 0 : i32
    %c0_i32_0 = arith.constant 0 : i32
    %c0_i32_1 = arith.constant 0 : i32
    %c0_i32_2 = arith.constant 0 : i32
    return %c0_i32, %c0_i32_0, %c0_i32_1 : i32, i32, i32
  }
  func.func @transform_6(%arg0: i32) -> (i32, i32, i32) {
    %c0_i32 = arith.constant 0 : i32
    %c0_i32_0 = arith.constant 0 : i32
    %c0_i32_1 = arith.constant 0 : i32
    %c0_i32_2 = arith.constant 0 : i32
    return %c0_i32, %c0_i32_0, %c0_i32_1 : i32, i32, i32
  }
  func.func @transform_7(%arg0: i32) -> (i32, i32, i32) {
    %c0_i32 = arith.constant 0 : i32
    %c0_i32_0 = arith.constant 0 : i32
    %c0_i32_1 = arith.constant 0 : i32
    %c0_i32_2 = arith.constant 0 : i32
    return %c0_i32, %c0_i32_0, %c0_i32_1 : i32, i32, i32
  }
  func.func @transform_8(%arg0: i32) -> (i32, i32, i32) {
    %c0_i32 = arith.constant 0 : i32
    %c0_i32_0 = arith.constant 0 : i32
    %c0_i32_1 = arith.constant 0 : i32
    %c0_i32_2 = arith.constant 0 : i32
    return %c0_i32, %c0_i32_0, %c0_i32_1 : i32, i32, i32
  }
  func.func @transform_9(%arg0: i32) -> (i32, i32, i32) {
    %c0_i32 = arith.constant 0 : i32
    %c0_i32_0 = arith.constant 0 : i32
    %c0_i32_1 = arith.constant 0 : i32
    %c0_i32_2 = arith.constant 0 : i32
    return %c0_i32, %c0_i32_0, %c0_i32_1 : i32, i32, i32
  }
  func.func @transform_10(%arg0: i32) -> (i32, i32, i32) {
    %c0_i32 = arith.constant 0 : i32
    %c0_i32_0 = arith.constant 0 : i32
    %c0_i32_1 = arith.constant 0 : i32
    %c0_i32_2 = arith.constant 0 : i32
    return %c0_i32, %c0_i32_0, %c0_i32_1 : i32, i32, i32
  }
  func.func @transform_11(%arg0: i32) -> (i32, i32, i32) {
    %c0_i32 = arith.constant 0 : i32
    %c0_i32_0 = arith.constant 0 : i32
    %c0_i32_1 = arith.constant 0 : i32
    %c0_i32_2 = arith.constant 0 : i32
    return %c0_i32, %c0_i32_0, %c0_i32_1 : i32, i32, i32
  }
  func.func @transform_12(%arg0: i32) -> (i32, i32, i32) {
    %c0_i32 = arith.constant 0 : i32
    %c0_i32_0 = arith.constant 0 : i32
    %c0_i32_1 = arith.constant 0 : i32
    %c0_i32_2 = arith.constant 0 : i32
    return %c0_i32, %c0_i32_0, %c0_i32_1 : i32, i32, i32
  }
  func.func @transform_13(%arg0: i32) -> (i32, i32, i32) {
    %c0_i32 = arith.constant 0 : i32
    %c0_i32_0 = arith.constant 0 : i32
    %c0_i32_1 = arith.constant 0 : i32
    %c0_i32_2 = arith.constant 0 : i32
    return %c0_i32, %c0_i32_0, %c0_i32_1 : i32, i32, i32
  }
  func.func @transform_14(%arg0: i32) -> (i32, i32) {
    %c0_i32 = arith.constant 0 : i32
    %c0_i32_0 = arith.constant 0 : i32
    %c0_i32_1 = arith.constant 0 : i32
    return %c0_i32, %c0_i32_0 : i32, i32
  }
  func.func @transform_15(%arg0: i32) -> (i32, i32) {
    %c0_i32 = arith.constant 0 : i32
    %c0_i32_0 = arith.constant 0 : i32
    %c0_i32_1 = arith.constant 0 : i32
    return %c0_i32, %c0_i32_0 : i32, i32
  }
  func.func @transform_16(%arg0: i32) -> (i32, i32) {
    %c0_i32 = arith.constant 0 : i32
    %c0_i32_0 = arith.constant 0 : i32
    %c0_i32_1 = arith.constant 0 : i32
    return %c0_i32, %c0_i32_0 : i32, i32
  }
  func.func @transform_17(%arg0: i32) -> (i32, i32) {
    %c0_i32 = arith.constant 0 : i32
    %c0_i32_0 = arith.constant 0 : i32
    %c0_i32_1 = arith.constant 0 : i32
    return %c0_i32, %c0_i32_0 : i32, i32
  }
  func.func @transform_18(%arg0: i32) -> (i32, i32) {
    %c0_i32 = arith.constant 0 : i32
    %c0_i32_0 = arith.constant 0 : i32
    %c0_i32_1 = arith.constant 0 : i32
    return %c0_i32, %c0_i32_0 : i32, i32
  }
  func.func @transform_19(%arg0: i32) -> (i32, i32) {
    %c0_i32 = arith.constant 0 : i32
    %c0_i32_0 = arith.constant 0 : i32
    %c0_i32_1 = arith.constant 0 : i32
    return %c0_i32, %c0_i32_0 : i32, i32
  }
  func.func @transform_20(%arg0: i32) -> (i32, i32) {
    %c0_i32 = arith.constant 0 : i32
    %c0_i32_0 = arith.constant 0 : i32
    %c0_i32_1 = arith.constant 0 : i32
    return %c0_i32, %c0_i32_0 : i32, i32
  }
  func.func @transform_21(%arg0: i32) -> (i32, i32) {
    %c0_i32 = arith.constant 0 : i32
    %c0_i32_0 = arith.constant 0 : i32
    %c0_i32_1 = arith.constant 0 : i32
    return %c0_i32, %c0_i32_0 : i32, i32
  }
  func.func @transform_22(%arg0: i32) -> (i32, i32) {
    %c0_i32 = arith.constant 0 : i32
    %c0_i32_0 = arith.constant 0 : i32
    %c0_i32_1 = arith.constant 0 : i32
    return %c0_i32, %c0_i32_0 : i32, i32
  }
  func.func @transform_23(%arg0: i32) -> (i32, i32) {
    %c0_i32 = arith.constant 0 : i32
    %c0_i32_0 = arith.constant 0 : i32
    %c0_i32_1 = arith.constant 0 : i32
    return %c0_i32, %c0_i32_0 : i32, i32
  }
  func.func @transform_24(%arg0: i32) -> (i32, i32) {
    %c0_i32 = arith.constant 0 : i32
    %c0_i32_0 = arith.constant 0 : i32
    %c0_i32_1 = arith.constant 0 : i32
    return %c0_i32, %c0_i32_0 : i32, i32
  }
  func.func @transform_25(%arg0: i32) -> (i32, i32) {
    %c0_i32 = arith.constant 0 : i32
    %c0_i32_0 = arith.constant 0 : i32
    %c0_i32_1 = arith.constant 0 : i32
    return %c0_i32, %c0_i32_0 : i32, i32
  }
  func.func @transform_26(%arg0: i32) -> (i32, i32) {
    %c0_i32 = arith.constant 0 : i32
    %c0_i32_0 = arith.constant 0 : i32
    %c0_i32_1 = arith.constant 0 : i32
    return %c0_i32, %c0_i32_0 : i32, i32
  }
  func.func @transform_27(%arg0: i32) -> (i32, i32) {
    %c0_i32 = arith.constant 0 : i32
    %c0_i32_0 = arith.constant 0 : i32
    %c0_i32_1 = arith.constant 0 : i32
    return %c0_i32, %c0_i32_0 : i32, i32
  }
  func.func @transform_28(%arg0: i32) -> (i32, i32) {
    %c0_i32 = arith.constant 0 : i32
    %c0_i32_0 = arith.constant 0 : i32
    %c0_i32_1 = arith.constant 0 : i32
    return %c0_i32, %c0_i32_0 : i32, i32
  }
  func.func @transform_29(%arg0: i32) -> (i32, i32) {
    %c0_i32 = arith.constant 0 : i32
    %c0_i32_0 = arith.constant 0 : i32
    %c0_i32_1 = arith.constant 0 : i32
    return %c0_i32, %c0_i32_0 : i32, i32
  }
  func.func @transform_30(%arg0: i32) -> (i32, i32) {
    %c0_i32 = arith.constant 0 : i32
    %c0_i32_0 = arith.constant 0 : i32
    %c0_i32_1 = arith.constant 0 : i32
    return %c0_i32, %c0_i32_0 : i32, i32
  }
  func.func @transform_31(%arg0: i32) -> (i32, i32) {
    %c0_i32 = arith.constant 0 : i32
    %c0_i32_0 = arith.constant 0 : i32
    %c0_i32_1 = arith.constant 0 : i32
    return %c0_i32, %c0_i32_0 : i32, i32
  }
  func.func @transform_32(%arg0: i32) -> (i32, i32) {
    %c0_i32 = arith.constant 0 : i32
    %c0_i32_0 = arith.constant 0 : i32
    %c0_i32_1 = arith.constant 0 : i32
    return %c0_i32, %c0_i32_0 : i32, i32
  }
  func.func @transform_33(%arg0: i32) -> (i32, i32, i32) {
    %c0_i32 = arith.constant 0 : i32
    %c0_i32_0 = arith.constant 0 : i32
    %c0_i32_1 = arith.constant 0 : i32
    return %arg0, %c0_i32, %c0_i32_0 : i32, i32, i32
  }
}

module attributes {stable_mosaic.version = 11 : i64} {
  func.func @_resize_kernel(%arg0: i32, %arg1: memref<1x16x16xf32, #tpu.memory_space<vmem>>, %arg2: memref<32x16xf32, #tpu.memory_space<vmem>>, %arg3: memref<16x32xf32, #tpu.memory_space<vmem>>, %arg4: memref<1x32x32xf32, #tpu.memory_space<vmem>>) attributes {dimension_semantics = [#tpu.dimension_semantics<parallel>], iteration_bounds = array<i64: 2>, scalar_prefetch = 0 : i64, scratch_operands = 0 : i64, tpu.core_type = #tpu.core_type<tc>, window_params = [{transform_indices = @transform_0, window_bounds = array<i64: 1, 16, 16>}, {pipeline_mode = #tpu.pipeline_mode<synchronous>, transform_indices = @transform_1, window_bounds = array<i64: 32, 16>}, {pipeline_mode = #tpu.pipeline_mode<synchronous>, transform_indices = @transform_2, window_bounds = array<i64: 16, 32>}, {transform_indices = @transform_3, window_bounds = array<i64: 1, 32, 32>}]} {
    %c0 = arith.constant 0 : index
    %c0_0 = arith.constant 0 : index
    %0 = vector.load %arg2[%c0, %c0_0] : memref<32x16xf32, #tpu.memory_space<vmem>>, vector<32x16xf32>
    %c0_1 = arith.constant 0 : index
    %c0_2 = arith.constant 0 : index
    %c0_3 = arith.constant 0 : index
    %1 = vector.load %arg1[%c0_1, %c0_2, %c0_3] : memref<1x16x16xf32, #tpu.memory_space<vmem>>, vector<1x16x16xf32>
    %2 = vector.shape_cast %1 : vector<1x16x16xf32> to vector<16x16xf32>
    %cst = arith.constant dense<0.000000e+00> : vector<32x16xf32>
    %3 = tpu.matmul %0, %2, %cst {dimension_numbers = #tpu.dot_dimension_numbers<[1], [0], [0], [1], [0, 0, 1, 1], [], []>} : vector<32x16xf32>, vector<16x16xf32>, vector<32x16xf32> -> vector<32x16xf32>
    %c0_4 = arith.constant 0 : index
    %c0_5 = arith.constant 0 : index
    %4 = vector.load %arg3[%c0_4, %c0_5] : memref<16x32xf32, #tpu.memory_space<vmem>>, vector<16x32xf32>
    %cst_6 = arith.constant dense<0.000000e+00> : vector<32x32xf32>
    %5 = tpu.matmul %3, %4, %cst_6 {dimension_numbers = #tpu.dot_dimension_numbers<[1], [0], [0], [1], [0, 0, 1, 1], [], []>} : vector<32x16xf32>, vector<16x32xf32>, vector<32x32xf32> -> vector<32x32xf32>
    %c0_7 = arith.constant 0 : index
    %c0_8 = arith.constant 0 : index
    %c0_9 = arith.constant 0 : index
    %6 = vector.load %arg4[%c0_7, %c0_8, %c0_9] : memref<1x32x32xf32, #tpu.memory_space<vmem>>, vector<1x32x32xf32>
    %7 = vector.shape_cast %6 : vector<1x32x32xf32> to vector<32x32xf32>
    %8 = vector.shape_cast %5 : vector<32x32xf32> to vector<1x32x32xf32>
    tpu.vector_store %arg4[%c0_7, %c0_8, %c0_9], %8 {strides = array<i32>} : memref<1x32x32xf32, #tpu.memory_space<vmem>>, vector<1x32x32xf32>,
    return
  }
  func.func @transform_0(%arg0: i32) -> (i32, i32, i32) {
    %c0_i32 = arith.constant 0 : i32
    %c0_i32_0 = arith.constant 0 : i32
    %c0_i32_1 = arith.constant 0 : i32
    return %arg0, %c0_i32, %c0_i32_0 : i32, i32, i32
  }
  func.func @transform_1(%arg0: i32) -> (i32, i32) {
    %c0_i32 = arith.constant 0 : i32
    %c0_i32_0 = arith.constant 0 : i32
    %c0_i32_1 = arith.constant 0 : i32
    return %c0_i32, %c0_i32_0 : i32, i32
  }
  func.func @transform_2(%arg0: i32) -> (i32, i32) {
    %c0_i32 = arith.constant 0 : i32
    %c0_i32_0 = arith.constant 0 : i32
    %c0_i32_1 = arith.constant 0 : i32
    return %c0_i32, %c0_i32_0 : i32, i32
  }
  func.func @transform_3(%arg0: i32) -> (i32, i32, i32) {
    %c0_i32 = arith.constant 0 : i32
    %c0_i32_0 = arith.constant 0 : i32
    %c0_i32_1 = arith.constant 0 : i32
    return %arg0, %c0_i32, %c0_i32_0 : i32, i32, i32
  }
}

</mosaic_0001>

<llo_original>
// kernel: medsam_forward.3
$region0: #{medsam_forward.3}
  #allocation0 [shape = 'u32[]', space=smem, size = 0x4, offset = 0x4, fixed_abs, tag = 'smem constant byte address 0x4 - core index']
  #allocation1 [shape = 'u32[144,128]{1,0:T(1,128)}', space=vmem, size = 0x12000, scoped, tag = 'internal scratch']
  %s0 = inlined_call_operand.vmem [shape: f32[2,16,192], index: 0, kind: input, shape index: {}]
  %s1 = inlined_call_operand.vmem [shape: bf16[192,32], index: 1, kind: input, shape index: {}]
  %s2 = inlined_call_operand.vmem [shape: f32[1,32], index: 2, kind: input, shape index: {}]
  %s3 = inlined_call_operand.vmem [shape: f32[16,32], index: 3, kind: input, shape index: {}]
  %s4 = inlined_call_operand.vmem [shape: f32[1,32], index: 4, kind: input, shape index: {}]
  %s5 = inlined_call_operand.vmem [shape: f32[1,32], index: 5, kind: input, shape index: {}]
  %s6 = inlined_call_operand.vmem [shape: bf16[32,96], index: 6, kind: input, shape index: {}]
  %s7 = inlined_call_operand.vmem [shape: f32[1,96], index: 7, kind: input, shape index: {}]
  %s8 = inlined_call_operand.vmem [shape: bf16[32,32], index: 8, kind: input, shape index: {}]
  %s9 = inlined_call_operand.vmem [shape: f32[1,32], index: 9, kind: input, shape index: {}]
  %s10 = inlined_call_operand.vmem [shape: f32[1,32], index: 10, kind: input, shape index: {}]
  %s11 = inlined_call_operand.vmem [shape: f32[1,32], index: 11, kind: input, shape index: {}]
  %s12 = inlined_call_operand.vmem [shape: bf16[32,64], index: 12, kind: input, shape index: {}]
  %s13 = inlined_call_operand.vmem [shape: f32[1,64], index: 13, kind: input, shape index: {}]
  %s14 = inlined_call_operand.vmem [shape: bf16[64,32], index: 14, kind: input, shape index: {}]
  %s15 = inlined_call_operand.vmem [shape: f32[1,32], index: 15, kind: input, shape index: {}]
  %s16 = inlined_call_operand.vmem [shape: bf16[32,16], index: 16, kind: input, shape index: {}]
  %s17 = inlined_call_operand.vmem [shape: f32[1,16], index: 17, kind: input, shape index: {}]
  %s18 = inlined_call_operand.vmem [shape: f32[1,16], index: 18, kind: input, shape index: {}]
  %s19 = inlined_call_operand.vmem [shape: f32[1,16], index: 19, kind: input, shape index: {}]
  %s20 = inlined_call_operand.vmem [shape: f32[2,16,16], index: 20, kind: output, shape index: {}]
  %s21 = sld [smem:[#allocation0]]
  $region113: #{medsam_forward.3} parent=0
    _
  %s23 = ssub.s32 1, %s21
  %s24 = scalar_select 0, %s23, %s21
  loop: start=0, step=1, limit=4
  $region2: #{medsam_forward.3} parent=0 // loop_pre_header
    _
  $region3: #{medsam_forward.3} parent=0 // loop_header
    %s26 = sphi 0, %s30
    %p27 = scmp.ge.s32.totalorder %s26, 4
    %s36 = sphi 0, %s38
    %s39 = sphi 0, %s36
    %s40 = sphi 0, %s39
    %s56 = sphi 0, %s40
    %s60 = sphi 0, %s60
    %s62 = sphi 0, %s60
    %s63 = sphi 0, %s62
    %s77 = sphi 0, %s63
    %s81 = sphi 0, %s81
    %s83 = sphi 0, %s81
    %s84 = sphi 0, %s83
    %s98 = sphi 0, %s84
    %s102 = sphi 0, %s102
    %s104 = sphi 0, %s102
    %s105 = sphi 0, %s104
    %s119 = sphi 0, %s105
    %s123 = sphi 0, %s123
    %s125 = sphi 0, %s123
    %s126 = sphi 0, %s125
    %s140 = sphi 0, %s126
    %s144 = sphi 0, %s144
    %s146 = sphi 0, %s144
    %s147 = sphi 0, %s146
    %s161 = sphi 0, %s147
    %s165 = sphi 0, %s165
    %s167 = sphi 0, %s165
    %s168 = sphi 0, %s167
    %s182 = sphi 0, %s168
    %s186 = sphi 0, %s186
    %s188 = sphi 0, %s186
    %s189 = sphi 0, %s188
    %s203 = sphi 0, %s189
    %s207 = sphi 0, %s207
    %s209 = sphi 0, %s207
    %s210 = sphi 0, %s209
    %s224 = sphi 0, %s210
    %s228 = sphi 0, %s228
    %s230 = sphi 0, %s228
    %s231 = sphi 0, %s230
    %s245 = sphi 0, %s231
    %s249 = sphi 0, %s249
    %s251 = sphi 0, %s249
    %s252 = sphi 0, %s251
    %s266 = sphi 0, %s252
    %s270 = sphi 0, %s270
    %s272 = sphi 0, %s270
    %s273 = sphi 0, %s272
    %s287 = sphi 0, %s273
    %s291 = sphi 0, %s291
    %s293 = sphi 0, %s291
    %s294 = sphi 0, %s293
    %s308 = sphi 0, %s294
    %s312 = sphi 0, %s312
    %s314 = sphi 0, %s312
    %s315 = sphi 0, %s314
    %s329 = sphi 0, %s315
    %s333 = sphi 0, %s333
    %s335 = sphi 0, %s333
    %s336 = sphi 0, %s335
    %s350 = sphi 0, %s336
    %s354 = sphi 0, %s354
    %s356 = sphi 0, %s354
    %s357 = sphi 0, %s356
    %s371 = sphi 0, %s357
    %s375 = sphi 0, %s375
    %s377 = sphi 0, %s375
    %s378 = sphi 0, %s377
    %s392 = sphi 0, %s378
    %s396 = sphi 0, %s396
    %s398 = sphi 0, %s396
    %s399 = sphi 0, %s398
    %s413 = sphi 0, %s399
    %s417 = sphi 0, %s417
    %s419 = sphi 0, %s417
    %s420 = sphi 0, %s419
    %s434 = sphi 0, %s420
    %s438 = sphi 0, %s438
    %s440 = sphi 0, %s438
    %s441 = sphi 0, %s440
    %s455 = sphi 0, %s441
    %s461 = sphi 0, %s463
    %s464 = sphi 0, %s461
    %s465 = sphi 0, %s464
    %s481 = sphi 0, %s465
  $region4: #{medsam_forward.3} parent=0 // loop_header_branch
    %29 = sbr.rel (%p27) target = $region8
  $region5: #{medsam_forward.3} parent=0 // loop_body
    %s31 = ssub.s32 %s26, 1
    %s32 = ssub.s32 %s26, 2
    %s33 = sadd.s32 %s26, 1
    %s34 = ssub.s32 %s26, %s33
    %p35 = scmp.eq.s32.totalorder %s34, 0
    %s37 = sadd.s32 %s36, 1
    %s38 = scalar_select %p35, %s36, %s37
    %p41 = pneg %p35
    %p42 = scmp.eq.s32.totalorder %s26, 1
    %p43 = por %p41, %p42
    %p44 = scmp.ne.s32.totalorder %s36, %s39
    %p45 = scmp.eq.s32.totalorder %s26, 0
    %p46 = por %p44, %p45
    %p47 = scmp.ne.s32.totalorder %s36, %s39
    %p48 = scmp.eq.s32.totalorder %s31, 1
    %p49 = por %p47, %p48
    %p50 = scmp.ne.s32.totalorder %s39, %s40
    %p51 = scmp.eq.s32.totalorder %s31, 0
    %p52 = por %p50, %p51
    %p53 = scmp.ne.s32.totalorder %s39, %s40
    %p54 = scmp.eq.s32.totalorder %s32, 1
    %p55 = por %p53, %p54
    %p57 = scmp.ne.s32.totalorder %s40, %s56
    %p58 = scmp.eq.s32.totalorder %s32, 0
    %p59 = por %p57, %p58
    %s61 = sadd.s32 %s60, 1
    %p64 = scmp.eq.s32.totalorder %s26, 1
    %p65 = scmp.ne.s32.totalorder %s60, %s62
    %p66 = scmp.eq.s32.totalorder %s26, 0
    %p67 = por %p65, %p66
    %p68 = scmp.ne.s32.totalorder %s60, %s62
    %p69 = scmp.eq.s32.totalorder %s31, 1
    %p70 = por %p68, %p69
    %p71 = scmp.ne.s32.totalorder %s62, %s63
    %p72 = scmp.eq.s32.totalorder %s31, 0
    %p73 = por %p71, %p72
    %p74 = scmp.ne.s32.totalorder %s62, %s63
    %p75 = scmp.eq.s32.totalorder %s32, 1
    %p76 = por %p74, %p75
    %p78 = scmp.ne.s32.totalorder %s63, %s77
    %p79 = scmp.eq.s32.totalorder %s32, 0
    %p80 = por %p78, %p79
    %s82 = sadd.s32 %s81, 1
    %p85 = scmp.eq.s32.totalorder %s26, 1
    %p86 = scmp.ne.s32.totalorder %s81, %s83
    %p87 = scmp.eq.s32.totalorder %s26, 0
    %p88 = por %p86, %p87
    %p89 = scmp.ne.s32.totalorder %s81, %s83
    %p90 = scmp.eq.s32.totalorder %s31, 1
    %p91 = por %p89, %p90
    %p92 = scmp.ne.s32.totalorder %s83, %s84
    %p93 = scmp.eq.s32.totalorder %s31, 0
    %p94 = por %p92, %p93
    %p95 = scmp.ne.s32.totalorder %s83, %s84
    %p96 = scmp.eq.s32.totalorder %s32, 1
    %p97 = por %p95, %p96
    %p99 = scmp.ne.s32.totalorder %s84, %s98
    %p100 = scmp.eq.s32.totalorder %s32, 0
    %p101 = por %p99, %p100
    %s103 = sadd.s32 %s102, 1
    %p106 = scmp.eq.s32.totalorder %s26, 1
    %p107 = scmp.ne.s32.totalorder %s102, %s104
    %p108 = scmp.eq.s32.totalorder %s26, 0
    %p109 = por %p107, %p108
    %p110 = scmp.ne.s32.totalorder %s102, %s104
    %p111 = scmp.eq.s32.totalorder %s31, 1
    %p112 = por %p110, %p111
    %p113 = scmp.ne.s32.totalorder %s104, %s105
    %p114 = scmp.eq.s32.totalorder %s31, 0
    %p115 = por %p113, %p114
    %p116 = scmp.ne.s32.totalorder %s104, %s105
    %p117 = scmp.eq.s32.totalorder %s32, 1
    %p118 = por %p116, %p117
    %p120 = scmp.ne.s32.totalorder %s105, %s119
    %p121 = scmp.eq.s32.totalorder %s32, 0
    %p122 = por %p120, %p121
    %s124 = sadd.s32 %s123, 1
    %p127 = scmp.eq.s32.totalorder %s26, 1
    %p128 = scmp.ne.s32.totalorder %s123, %s125
    %p129 = scmp.eq.s32.totalorder %s26, 0
    %p130 = por %p128, %p129
    %p131 = scmp.ne.s32.totalorder %s123, %s125
    %p132 = scmp.eq.s32.totalorder %s31, 1
    %p133 = por %p131, %p132
    %p134 = scmp.ne.s32.totalorder %s125, %s126
    %p135 = scmp.eq.s32.totalorder %s31, 0
    %p136 = por %p134, %p135
    %p137 = scmp.ne.s32.totalorder %s125, %s126
    %p138 = scmp.eq.s32.totalorder %s32, 1
    %p139 = por %p137, %p138
    %p141 = scmp.ne.s32.totalorder %s126, %s140
    %p142 = scmp.eq.s32.totalorder %s32, 0
    %p143 = por %p141, %p142
    %s145 = sadd.s32 %s144, 1
    %p148 = scmp.eq.s32.totalorder %s26, 1
    %p149 = scmp.ne.s32.totalorder %s144, %s146
    %p150 = scmp.eq.s32.totalorder %s26, 0
    %p151 = por %p149, %p150
    %p152 = scmp.ne.s32.totalorder %s144, %s146
    %p153 = scmp.eq.s32.totalorder %s31, 1
    %p154 = por %p152, %p153
    %p155 = scmp.ne.s32.totalorder %s146, %s147
    %p156 = scmp.eq.s32.totalorder %s31, 0
    %p157 = por %p155, %p156
    %p158 = scmp.ne.s32.totalorder %s146, %s147
    %p159 = scmp.eq.s32.totalorder %s32, 1
    %p160 = por %p158, %p159
    %p162 = scmp.ne.s32.totalorder %s147, %s161
    %p163 = scmp.eq.s32.totalorder %s32, 0
    %p164 = por %p162, %p163
    %s166 = sadd.s32 %s165, 1
    %p169 = scmp.eq.s32.totalorder %s26, 1
    %p170 = scmp.ne.s32.totalorder %s165, %s167
    %p171 = scmp.eq.s32.totalorder %s26, 0
    %p172 = por %p170, %p171
    %p173 = scmp.ne.s32.totalorder %s165, %s167
    %p174 = scmp.eq.s32.totalorder %s31, 1
    %p175 = por %p173, %p174
    %p176 = scmp.ne.s32.totalorder %s167, %s168
    %p177 = scmp.eq.s32.totalorder %s31, 0
    %p178 = por %p176, %p177
    %p179 = scmp.ne.s32.totalorder %s167, %s168
    %p180 = scmp.eq.s32.totalorder %s32, 1
    %p181 = por %p179, %p180
    %p183 = scmp.ne.s32.totalorder %s168, %s182
    %p184 = scmp.eq.s32.totalorder %s32, 0
    %p185 = por %p183, %p184
    %s187 = sadd.s32 %s186, 1
    %p190 = scmp.eq.s32.totalorder %s26, 1
    %p191 = scmp.ne.s32.totalorder %s186, %s188
    %p192 = scmp.eq.s32.totalorder %s26, 0
    %p193 = por %p191, %p192
    %p194 = scmp.ne.s32.totalorder %s186, %s188
    %p195 = scmp.eq.s32.totalorder %s31, 1
    %p196 = por %p194, %p195
    %p197 = scmp.ne.s32.totalorder %s188, %s189
    %p198 = scmp.eq.s32.totalorder %s31, 0
    %p199 = por %p197, %p198
    %p200 = scmp.ne.s32.totalorder %s188, %s189
    %p201 = scmp.eq.s32.totalorder %s32, 1
    %p202 = por %p200, %p201
    %p204 = scmp.ne.s32.totalorder %s189, %s203
    %p205 = scmp.eq.s32.totalorder %s32, 0
    %p206 = por %p204, %p205
    %s208 = sadd.s32 %s207, 1
    %p211 = scmp.eq.s32.totalorder %s26, 1
    %p212 = scmp.ne.s32.totalorder %s207, %s209
    %p213 = scmp.eq.s32.totalorder %s26, 0
    %p214 = por %p212, %p213
    %p215 = scmp.ne.s32.totalorder %s207, %s209
    %p216 = scmp.eq.s32.totalorder %s31, 1
    %p217 = por %p215, %p216
    %p218 = scmp.ne.s32.totalorder %s209, %s210
    %p219 = scmp.eq.s32.totalorder %s31, 0
    %p220 = por %p218, %p219
    %p221 = scmp.ne.s32.totalorder %s209, %s210
    %p222 = scmp.eq.s32.totalorder %s32, 1
    %p223 = por %p221, %p222
    %p225 = scmp.ne.s32.totalorder %s210, %s224
    %p226 = scmp.eq.s32.totalorder %s32, 0
    %p227 = por %p225, %p226
    %s229 = sadd.s32 %s228, 1
    %p232 = scmp.eq.s32.totalorder %s26, 1
    %p233 = scmp.ne.s32.totalorder %s228, %s230
    %p234 = scmp.eq.s32.totalorder %s26, 0
    %p235 = por %p233, %p234
    %p236 = scmp.ne.s32.totalorder %s228, %s230
    %p237 = scmp.eq.s32.totalorder %s31, 1
    %p238 = por %p236, %p237
    %p239 = scmp.ne.s32.totalorder %s230, %s231
    %p240 = scmp.eq.s32.totalorder %s31, 0
    %p241 = por %p239, %p240
    %p242 = scmp.ne.s32.totalorder %s230, %s231
    %p243 = scmp.eq.s32.totalorder %s32, 1
    %p244 = por %p242, %p243
    %p246 = scmp.ne.s32.totalorder %s231, %s245
    %p247 = scmp.eq.s32.totalorder %s32, 0
    %p248 = por %p246, %p247
    %s250 = sadd.s32 %s249, 1
    %p253 = scmp.eq.s32.totalorder %s26, 1
    %p254 = scmp.ne.s32.totalorder %s249, %s251
    %p255 = scmp.eq.s32.totalorder %s26, 0
    %p256 = por %p254, %p255
    %p257 = scmp.ne.s32.totalorder %s249, %s251
    %p258 = scmp.eq.s32.totalorder %s31, 1
    %p259 = por %p257, %p258
    %p260 = scmp.ne.s32.totalorder %s251, %s252
    %p261 = scmp.eq.s32.totalorder %s31, 0
    %p262 = por %p260, %p261
    %p263 = scmp.ne.s32.totalorder %s251, %s252
    %p264 = scmp.eq.s32.totalorder %s32, 1
    %p265 = por %p263, %p264
    %p267 = scmp.ne.s32.totalorder %s252, %s266
    %p268 = scmp.eq.s32.totalorder %s32, 0
    %p269 = por %p267, %p268
    %s271 = sadd.s32 %s270, 1
    %p274 = scmp.eq.s32.totalorder %s26, 1
    %p275 = scmp.ne.s32.totalorder %s270, %s272
    %p276 = scmp.eq.s32.totalorder %s26, 0
    %p277 = por %p275, %p276
    %p278 = scmp.ne.s32.totalorder %s270, %s272
    %p279 = scmp.eq.s32.totalorder %s31, 1
    %p280 = por %p278, %p279
    %p281 = scmp.ne.s32.totalorder %s272, %s273
    %p282 = scmp.eq.s32.totalorder %s31, 0
    %p283 = por %p281, %p282
    %p284 = scmp.ne.s32.totalorder %s272, %s273
    %p285 = scmp.eq.s32.totalorder %s32, 1
    %p286 = por %p284, %p285
    %p288 = scmp.ne.s32.totalorder %s273, %s287
    %p289 = scmp.eq.s32.totalorder %s32, 0
    %p290 = por %p288, %p289
    %s292 = sadd.s32 %s291, 1
    %p295 = scmp.eq.s32.totalorder %s26, 1
    %p296 = scmp.ne.s32.totalorder %s291, %s293
    %p297 = scmp.eq.s32.totalorder %s26, 0
    %p298 = por %p296, %p297
    %p299 = scmp.ne.s32.totalorder %s291, %s293
    %p300 = scmp.eq.s32.totalorder %s31, 1
    %p301 = por %p299, %p300
    %p302 = scmp.ne.s32.totalorder %s293, %s294
    %p303 = scmp.eq.s32.totalorder %s31, 0
    %p304 = por %p302, %p303
    %p305 = scmp.ne.s32.totalorder %s293, %s294
    %p306 = scmp.eq.s32.totalorder %s32, 1
    %p307 = por %p305, %p306
    %p309 = scmp.ne.s32.totalorder %s294, %s308
    %p310 = scmp.eq.s32.totalorder %s32, 0
    %p311 = por %p309, %p310
    %s313 = sadd.s32 %s312, 1
    %p316 = scmp.eq.s32.totalorder %s26, 1
    %p317 = scmp.ne.s32.totalorder %s312, %s314
    %p318 = scmp.eq.s32.totalorder %s26, 0
    %p319 = por %p317, %p318
    %p320 = scmp.ne.s32.totalorder %s312, %s314
    %p321 = scmp.eq.s32.totalorder %s31, 1
    %p322 = por %p320, %p321
    %p323 = scmp.ne.s32.totalorder %s314, %s315
    %p324 = scmp.eq.s32.totalorder %s31, 0
    %p325 = por %p323, %p324
    %p326 = scmp.ne.s32.totalorder %s314, %s315
    %p327 = scmp.eq.s32.totalorder %s32, 1
    %p328 = por %p326, %p327
    %p330 = scmp.ne.s32.totalorder %s315, %s329
    %p331 = scmp.eq.s32.totalorder %s32, 0
    %p332 = por %p330, %p331
    %s334 = sadd.s32 %s333, 1
    %p337 = scmp.eq.s32.totalorder %s26, 1
    %p338 = scmp.ne.s32.totalorder %s333, %s335
    %p339 = scmp.eq.s32.totalorder %s26, 0
    %p340 = por %p338, %p339
    %p341 = scmp.ne.s32.totalorder %s333, %s335
    %p342 = scmp.eq.s32.totalorder %s31, 1
    %p343 = por %p341, %p342
    %p344 = scmp.ne.s32.totalorder %s335, %s336
    %p345 = scmp.eq.s32.totalorder %s31, 0
    %p346 = por %p344, %p345
    %p347 = scmp.ne.s32.totalorder %s335, %s336
    %p348 = scmp.eq.s32.totalorder %s32, 1
    %p349 = por %p347, %p348
    %p351 = scmp.ne.s32.totalorder %s336, %s350
    %p352 = scmp.eq.s32.totalorder %s32, 0
    %p353 = por %p351, %p352
    %s355 = sadd.s32 %s354, 1
    %p358 = scmp.eq.s32.totalorder %s26, 1
    %p359 = scmp.ne.s32.totalorder %s354, %s356
    %p360 = scmp.eq.s32.totalorder %s26, 0
    %p361 = por %p359, %p360
    %p362 = scmp.ne.s32.totalorder %s354, %s356
    %p363 = scmp.eq.s32.totalorder %s31, 1
    %p364 = por %p362, %p363
    %p365 = scmp.ne.s32.totalorder %s356, %s357
    %p366 = scmp.eq.s32.totalorder %s31, 0
    %p367 = por %p365, %p366
    %p368 = scmp.ne.s32.totalorder %s356, %s357
    %p369 = scmp.eq.s32.totalorder %s32, 1
    %p370 = por %p368, %p369
    %p372 = scmp.ne.s32.totalorder %s357, %s371
    %p373 = scmp.eq.s32.totalorder %s32, 0
    %p374 = por %p372, %p373
    %s376 = sadd.s32 %s375, 1
    %p379 = scmp.eq.s32.totalorder %s26, 1
    %p380 = scmp.ne.s32.totalorder %s375, %s377
    %p381 = scmp.eq.s32.totalorder %s26, 0
    %p382 = por %p380, %p381
    %p383 = scmp.ne.s32.totalorder %s375, %s377
    %p384 = scmp.eq.s32.totalorder %s31, 1
    %p385 = por %p383, %p384
    %p386 = scmp.ne.s32.totalorder %s377, %s378
    %p387 = scmp.eq.s32.totalorder %s31, 0
    %p388 = por %p386, %p387
    %p389 = scmp.ne.s32.totalorder %s377, %s378
    %p390 = scmp.eq.s32.totalorder %s32, 1
    %p391 = por %p389, %p390
    %p393 = scmp.ne.s32.totalorder %s378, %s392
    %p394 = scmp.eq.s32.totalorder %s32, 0
    %p395 = por %p393, %p394
    %s397 = sadd.s32 %s396, 1
    %p400 = scmp.eq.s32.totalorder %s26, 1
    %p401 = scmp.ne.s32.totalorder %s396, %s398
    %p402 = scmp.eq.s32.totalorder %s26, 0
    %p403 = por %p401, %p402
    %p404 = scmp.ne.s32.totalorder %s396, %s398
    %p405 = scmp.eq.s32.totalorder %s31, 1
    %p406 = por %p404, %p405
    %p407 = scmp.ne.s32.totalorder %s398, %s399
    %p408 = scmp.eq.s32.totalorder %s31, 0
    %p409 = por %p407, %p408
    %p410 = scmp.ne.s32.totalorder %s398, %s399
    %p411 = scmp.eq.s32.totalorder %s32, 1
    %p412 = por %p410, %p411
    %p414 = scmp.ne.s32.totalorder %s399, %s413
    %p415 = scmp.eq.s32.totalorder %s32, 0
    %p416 = por %p414, %p415
    %s418 = sadd.s32 %s417, 1
    %p421 = scmp.eq.s32.totalorder %s26, 1
    %p422 = scmp.ne.s32.totalorder %s417, %s419
    %p423 = scmp.eq.s32.totalorder %s26, 0
    %p424 = por %p422, %p423
    %p425 = scmp.ne.s32.totalorder %s417, %s419
    %p426 = scmp.eq.s32.totalorder %s31, 1
    %p427 = por %p425, %p426
    %p428 = scmp.ne.s32.totalorder %s419, %s420
    %p429 = scmp.eq.s32.totalorder %s31, 0
    %p430 = por %p428, %p429
    %p431 = scmp.ne.s32.totalorder %s419, %s420
    %p432 = scmp.eq.s32.totalorder %s32, 1
    %p433 = por %p431, %p432
    %p435 = scmp.ne.s32.totalorder %s420, %s434
    %p436 = scmp.eq.s32.totalorder %s32, 0
    %p437 = por %p435, %p436
    %s439 = sadd.s32 %s438, 1
    %p442 = scmp.eq.s32.totalorder %s26, 1
    %p443 = scmp.ne.s32.totalorder %s438, %s440
    %p444 = scmp.eq.s32.totalorder %s26, 0
    %p445 = por %p443, %p444
    %p446 = scmp.ne.s32.totalorder %s438, %s440
    %p447 = scmp.eq.s32.totalorder %s31, 1
    %p448 = por %p446, %p447
    %p449 = scmp.ne.s32.totalorder %s440, %s441
    %p450 = scmp.eq.s32.totalorder %s31, 0
    %p451 = por %p449, %p450
    %p452 = scmp.ne.s32.totalorder %s440, %s441
    %p453 = scmp.eq.s32.totalorder %s32, 1
    %p454 = por %p452, %p453
    %p456 = scmp.ne.s32.totalorder %s441, %s455
    %p457 = scmp.eq.s32.totalorder %s32, 0
    %p458 = por %p456, %p457
    %s459 = ssub.s32 %s26, %s33
    %p460 = scmp.eq.s32.totalorder %s459, 0
    %s462 = sadd.s32 %s461, 1
    %s463 = scalar_select %p460, %s461, %s462
    %p466 = pneg %p460
    %p467 = scmp.eq.s32.totalorder %s26, 1
    %p468 = por %p466, %p467
    %p469 = scmp.ne.s32.totalorder %s461, %s464
    %p470 = scmp.eq.s32.totalorder %s26, 0
    %p471 = por %p469, %p470
    %p472 = scmp.ne.s32.totalorder %s461, %s464
    %p473 = scmp.eq.s32.totalorder %s31, 1
    %p474 = por %p472, %p473
    %p475 = scmp.ne.s32.totalorder %s464, %s465
    %p476 = scmp.eq.s32.totalorder %s31, 0
    %p477 = por %p475, %p476
    %p478 = scmp.ne.s32.totalorder %s464, %s465
    %p479 = scmp.eq.s32.totalorder %s32, 1
    %p480 = por %p478, %p479
    %p482 = scmp.ne.s32.totalorder %s465, %s481
    %p483 = scmp.eq.s32.totalorder %s32, 0
    %p484 = por %p482, %p483
    %p485 = scmp.le.s32.totalorder 1, %s26
    %p486 = scmp.lt.s32.totalorder %s26, 3
    %p487 = pnand %p485, %p486
    %p488 = pneg %p487
    // Predicated region
    $region9: #{medsam_forward.3} parent=5 // pred_check
      _
    $region10: #{medsam_forward.3} parent=5 // pred_check_branch
      %490 = sbr.rel (%p487) target = $region12
    $region11: #{medsam_forward.3} parent=5 // pred_region
      %s491 = ssub.s32 %s26, 1
      // Predicated region
      $region13: #{medsam_forward.3} parent=11 // pred_check
        %p492 = pneg %p73
      $region14: #{medsam_forward.3} parent=11 // pred_check_branch
        %494 = sbr.rel (%p492) target = $region16
      $region15: #{medsam_forward.3} parent=11 // pred_region
        _
      $region16: #{medsam_forward.3} parent=11 // pred_fallthru
        _
      // Predicated region
      $region17: #{medsam_forward.3} parent=11 // pred_check
        %p495 = pneg %p94
      $region18: #{medsam_forward.3} parent=11 // pred_check_branch
        %497 = sbr.rel (%p495) target = $region20
      $region19: #{medsam_forward.3} parent=11 // pred_region
        _
      $region20: #{medsam_forward.3} parent=11 // pred_fallthru
        _
      // Predicated region
      $region21: #{medsam_forward.3} parent=11 // pred_check
        %p498 = pneg %p115
      $region22: #{medsam_forward.3} parent=11 // pred_check_branch
        %500 = sbr.rel (%p498) target = $region24
      $region23: #{medsam_forward.3} parent=11 // pred_region
        _
      $region24: #{medsam_forward.3} parent=11 // pred_fallthru
        _
      // Predicated region
      $region25: #{medsam_forward.3} parent=11 // pred_check
        %p501 = pneg %p136
      $region26: #{medsam_forward.3} parent=11 // pred_check_branch
        %503 = sbr.rel (%p501) target = $region28
      $region27: #{medsam_forward.3} parent=11 // pred_region
        _
      $region28: #{medsam_forward.3} parent=11 // pred_fallthru
        _
      // Predicated region
      $region29: #{medsam_forward.3} parent=11 // pred_check
        %p504 = pneg %p157
      $region30: #{medsam_forward.3} parent=11 // pred_check_branch
        %506 = sbr.rel (%p504) target = $region32
      $region31: #{medsam_forward.3} parent=11 // pred_region
        _
      $region32: #{medsam_forward.3} parent=11 // pred_fallthru
        _
      // Predicated region
      $region33: #{medsam_forward.3} parent=11 // pred_check
        %p507 = pneg %p178
      $region34: #{medsam_forward.3} parent=11 // pred_check_branch
        %509 = sbr.rel (%p507) target = $region36
      $region35: #{medsam_forward.3} parent=11 // pred_region
        _
      $region36: #{medsam_forward.3} parent=11 // pred_fallthru
        _
      // Predicated region
      $region37: #{medsam_forward.3} parent=11 // pred_check
        %p510 = pneg %p199
      $region38: #{medsam_forward.3} parent=11 // pred_check_branch
        %512 = sbr.rel (%p510) target = $region40
      $region39: #{medsam_forward.3} parent=11 // pred_region
        _
      $region40: #{medsam_forward.3} parent=11 // pred_fallthru
        _
      // Predicated region
      $region41: #{medsam_forward.3} parent=11 // pred_check
        %p513 = pneg %p220
      $region42: #{medsam_forward.3} parent=11 // pred_check_branch
        %515 = sbr.rel (%p513) target = $region44
      $region43: #{medsam_forward.3} parent=11 // pred_region
        _
      $region44: #{medsam_forward.3} parent=11 // pred_fallthru
        _
      // Predicated region
      $region45: #{medsam_forward.3} parent=11 // pred_check
        %p516 = pneg %p241
      $region46: #{medsam_forward.3} parent=11 // pred_check_branch
        %518 = sbr.rel (%p516) target = $region48
      $region47: #{medsam_forward.3} parent=11 // pred_region
        _
      $region48: #{medsam_forward.3} parent=11 // pred_fallthru
        _
      // Predicated region
      $region49: #{medsam_forward.3} parent=11 // pred_check
        %p519 = pneg %p262
      $region50: #{medsam_forward.3} parent=11 // pred_check_branch
        %521 = sbr.rel (%p519) target = $region52
      $region51: #{medsam_forward.3} parent=11 // pred_region
        _
      $region52: #{medsam_forward.3} parent=11 // pred_fallthru
        _
      // Predicated region
      $region53: #{medsam_forward.3} parent=11 // pred_check
        %p522 = pneg %p283
      $region54: #{medsam_forward.3} parent=11 // pred_check_branch
        %524 = sbr.rel (%p522) target = $region56
      $region55: #{medsam_forward.3} parent=11 // pred_region
        _
      $region56: #{medsam_forward.3} parent=11 // pred_fallthru
        _
      // Predicated region
      $region57: #{medsam_forward.3} parent=11 // pred_check
        %p525 = pneg %p304
      $region58: #{medsam_forward.3} parent=11 // pred_check_branch
        %527 = sbr.rel (%p525) target = $region60
      $region59: #{medsam_forward.3} parent=11 // pred_region
        _
      $region60: #{medsam_forward.3} parent=11 // pred_fallthru
        _
      // Predicated region
      $region61: #{medsam_forward.3} parent=11 // pred_check
        %p528 = pneg %p325
      $region62: #{medsam_forward.3} parent=11 // pred_check_branch
        %530 = sbr.rel (%p528) target = $region64
      $region63: #{medsam_forward.3} parent=11 // pred_region
        _
      $region64: #{medsam_forward.3} parent=11 // pred_fallthru
        _
      // Predicated region
      $region65: #{medsam_forward.3} parent=11 // pred_check
        %p531 = pneg %p346
      $region66: #{medsam_forward.3} parent=11 // pred_check_branch
        %533 = sbr.rel (%p531) target = $region68
      $region67: #{medsam_forward.3} parent=11 // pred_region
        _
      $region68: #{medsam_forward.3} parent=11 // pred_fallthru
        _
      // Predicated region
      $region69: #{medsam_forward.3} parent=11 // pred_check
        %p534 = pneg %p367
      $region70: #{medsam_forward.3} parent=11 // pred_check_branch
        %536 = sbr.rel (%p534) target = $region72
      $region71: #{medsam_forward.3} parent=11 // pred_region
        _
      $region72: #{medsam_forward.3} parent=11 // pred_fallthru
        _
      // Predicated region
      $region73: #{medsam_forward.3} parent=11 // pred_check
        %p537 = pneg %p388
      $region74: #{medsam_forward.3} parent=11 // pred_check_branch
        %539 = sbr.rel (%p537) target = $region76
      $region75: #{medsam_forward.3} parent=11 // pred_region
        _
      $region76: #{medsam_forward.3} parent=11 // pred_fallthru
        _
      // Predicated region
      $region77: #{medsam_forward.3} parent=11 // pred_check
        %p540 = pneg %p409
      $region78: #{medsam_forward.3} parent=11 // pred_check_branch
        %542 = sbr.rel (%p540) target = $region80
      $region79: #{medsam_forward.3} parent=11 // pred_region
        _
      $region80: #{medsam_forward.3} parent=11 // pred_fallthru
        _
      // Predicated region
      $region81: #{medsam_forward.3} parent=11 // pred_check
        %p543 = pneg %p430
      $region82: #{medsam_forward.3} parent=11 // pred_check_branch
        %545 = sbr.rel (%p543) target = $region84
      $region83: #{medsam_forward.3} parent=11 // pred_region
        _
      $region84: #{medsam_forward.3} parent=11 // pred_fallthru
        _
      // Predicated region
      $region85: #{medsam_forward.3} parent=11 // pred_check
        %p546 = pneg %p451
      $region86: #{medsam_forward.3} parent=11 // pred_check_branch
        %548 = sbr.rel (%p546) target = $region88
      $region87: #{medsam_forward.3} parent=11 // pred_region
        _
      $region88: #{medsam_forward.3} parent=11 // pred_fallthru
        _
    $region12: #{medsam_forward.3} parent=5 // pred_fallthru
      _
    %p549 = scmp.lt.s32.totalorder %s26, 2
    // Predicated region
    $region89: #{medsam_forward.3} parent=5 // pred_check
      %p550 = pneg %p549
    $region90: #{medsam_forward.3} parent=5 // pred_check_branch
      %552 = sbr.rel (%p550) target = $region92
    $region91: #{medsam_forward.3} parent=5 // pred_region
      // Predicated region
      $region93: #{medsam_forward.3} parent=91 // pred_check
        %p553 = pneg %p46
      $region94: #{medsam_forward.3} parent=91 // pred_check_branch
        %555 = sbr.rel (%p553) target = $region96
      $region95: #{medsam_forward.3} parent=91 // pred_region
        %p556 = scmp.lt.s32.totalorder %s26, 1
        %s557 = scalar_select %p556, %s26, 1
        %s558 = smul.addr %s557, 4
        %s559 = smul.addr %s558, 8
        %s560 = scalar_lea.vmem %s0, %s559
      $region96: #{medsam_forward.3} parent=91 // pred_fallthru
        _
    $region92: #{medsam_forward.3} parent=5 // pred_fallthru
      _
    %p561 = scmp.le.s32.totalorder 1, %s26
    %p562 = scmp.lt.s32.totalorder %s26, 3
    %p563 = pnand %p561, %p562
    %p564 = pneg %p563
    // Predicated region
    $region97: #{medsam_forward.3} parent=5 // pred_check
      _
    $region98: #{medsam_forward.3} parent=5 // pred_check_branch
      %566 = sbr.rel (%p563) target = $region100
    $region99: #{medsam_forward.3} parent=5 // pred_region
      %s567 = ssub.s32 %s26, 1
      %p568 = scmp.lt.s32.totalorder %s31, 1
      %s569 = scalar_select %p568, %s31, 1
      %s570 = smul.addr %s569, 4
      %s571 = smul.addr %s570, 8
      %s572 = scalar_lea.vmem %s0, %s571
      %p573 = pneg %p52
      %p574 = pneg %p49
      %p575 = pneg %p73
      %p576 = pneg %p70
      %p577 = pneg %p94
      %p578 = pneg %p91
      %p579 = pneg %p115
      %p580 = pneg %p112
      %p581 = pneg %p136
      %p582 = pneg %p133
      %p583 = pneg %p157
      %p584 = pneg %p154
      %p585 = pneg %p178
      %p586 = pneg %p175
      %p587 = pneg %p199
      %p588 = pneg %p196
      %p589 = pneg %p220
      %p590 = pneg %p217
      %p591 = pneg %p241
      %p592 = pneg %p238
      %p593 = pneg %p262
      %p594 = pneg %p259
      %p595 = pneg %p283
      %p596 = pneg %p280
      %p597 = pneg %p304
      %p598 = pneg %p301
      %p599 = pneg %p325
      %p600 = pneg %p322
      %p601 = pneg %p346
      %p602 = pneg %p343
      %p603 = pneg %p367
      %p604 = pneg %p364
      %p605 = pneg %p388
      %p606 = pneg %p385
      %p607 = pneg %p409
      %p608 = pneg %p406
      %p609 = pneg %p430
      %p610 = pneg %p427
      %p611 = pneg %p451
      %p612 = pneg %p448
      %p613 = pneg %p477
      %p614 = pneg %p474
      %p615 = scmp.lt.s32.totalorder %s31, 1
      %s616 = scalar_select %p615, %s31, 1
      %s617 = smul.addr %s616, 2
      %s618 = smul.addr %s617, 8
      %s619 = scalar_lea.vmem %s20, %s618
      %p620 = scmp.lt.s32.totalorder %s31, 1
      %s621 = scalar_select %p620, %s31, 1
      %s622 = smul.addr %s621, 4
      %s623 = smul.addr %s622, 8
      %s624 = scalar_lea.vmem %s0, %s623
      %p625 = scmp.lt.s32.totalorder %s31, 1
      %s626 = scalar_select %p625, %s31, 1
      %s627 = smul.addr %s626, 2
      %s628 = smul.addr %s627, 8
      %s629 = scalar_lea.vmem %s20, %s628
      %v631 = vld [vmem:[%s624] sm:$0xff]
      %v632 = vld [vmem:[%s624 + $0x8] sm:$0xff]
      %v633 = vld [vmem:[%s624 + $0x10] sm:$0xff]
      %v634 = vld [vmem:[%s624 + $0x18] sm:$0xff]
      %v635 = vld [vmem:[%s1] sm:$0xf]
      %v636 = vld [vmem:[%s1 + $0x4] sm:$0xf]
      %v637 = vld [vmem:[%s1 + $0x8] sm:$0xf]
      %v638 = vld [vmem:[%s1 + $0xc] sm:$0xf]
      %v639 = vld [vmem:[%s1 + $0x10] sm:$0xf]
      %v640 = vld [vmem:[%s1 + $0x14] sm:$0xf]
      %v641 = vld [vmem:[%s1 + $0x18] sm:$0xf]
      %v642 = vld [vmem:[%s1 + $0x1c] sm:$0xf]
      %v643 = vld [vmem:[%s1 + $0x20] sm:$0xf]
      %v644 = vld [vmem:[%s1 + $0x24] sm:$0xf]
      %v645 = vld [vmem:[%s1 + $0x28] sm:$0xf]
      %v646 = vld [vmem:[%s1 + $0x2c] sm:$0xf]
      %v647 = vld [vmem:[%s1 + $0x30] sm:$0xf]
      %v648 = vld [vmem:[%s1 + $0x34] sm:$0xf]
      %v649 = vld [vmem:[%s1 + $0x38] sm:$0xf]
      %v650 = vld [vmem:[%s1 + $0x3c] sm:$0xf]
      %v651 = vld [vmem:[%s1 + $0x40] sm:$0xf]
      %v652 = vld [vmem:[%s1 + $0x44] sm:$0xf]
      %v653 = vld [vmem:[%s1 + $0x48] sm:$0xf]
      %v654 = vld [vmem:[%s1 + $0x4c] sm:$0xf]
      %v655 = vld [vmem:[%s1 + $0x50] sm:$0xf]
      %v656 = vld [vmem:[%s1 + $0x54] sm:$0xf]
      %v657 = vld [vmem:[%s1 + $0x58] sm:$0xf]
      %v658 = vld [vmem:[%s1 + $0x5c] sm:$0xf]
      %v659 = vpack.c.bf16 %v633, %v631
      %v660 = vpack.c.bf16 %v634, %v632
      %v661 = vld [vmem:[%s2] sm:$0x1]
      %v663 = vlaneseq
      %v664 = vshrl.u32 %v663, 7
      %v665 = vsub.s32 0, %v664
      %v666 = vrot.slane %v661, %v665
      %v692 = vunpack.c.l.b16 %v635
      %v693 = vunpack.c.l.b16 %v636
      %v694 = vunpack.c.l.b16 %v637
      %v695 = vunpack.c.l.b16 %v638
      %v696 = vunpack.c.l.b16 %v639
      %v697 = vunpack.c.l.b16 %v640
      %v698 = vunpack.c.l.b16 %v641
      %v699 = vunpack.c.l.b16 %v642
      %v700 = vunpack.c.l.b16 %v643
      %v701 = vunpack.c.l.b16 %v644
      %v702 = vunpack.c.l.b16 %v645
      %v703 = vunpack.c.l.b16 %v646
      %v704 = vunpack.c.l.b16 %v647
      %v705 = vunpack.c.l.b16 %v648
      %v706 = vunpack.c.l.b16 %v649
      %v707 = vunpack.c.l.b16 %v650
      %v708 = vunpack.c.l.b16 %v651
      %v709 = vunpack.c.l.b16 %v652
      %v710 = vunpack.c.l.b16 %v653
      %v711 = vunpack.c.l.b16 %v654
      %v712 = vunpack.c.l.b16 %v655
      %v713 = vunpack.c.l.b16 %v656
      %v714 = vunpack.c.l.b16 %v657
      %v715 = vunpack.c.l.b16 %v658
      %v716 = vpack.c.b16 %v693, %v692
      %v717 = vpack.c.b16 %v695, %v694
      %v718 = vpack.c.b16 %v697, %v696
      %v719 = vpack.c.b16 %v699, %v698
      %v720 = vpack.c.b16 %v701, %v700
      %v721 = vpack.c.b16 %v703, %v702
      %v722 = vpack.c.b16 %v705, %v704
      %v723 = vpack.c.b16 %v707, %v706
      %v724 = vpack.c.b16 %v709, %v708
      %v725 = vpack.c.b16 %v711, %v710
      %v726 = vpack.c.b16 %v713, %v712
      %v727 = vpack.c.b16 %v715, %v714
      %vm740 = vcmask 523264
      %v742 = vsel %vm740, %v660, 0
      %744 = vmatprep.subr.bf16.mxu0 0
      %745 = vmatpush1.bf16.msra.mxu0 %v716
      %746 = vmatprep.subr.bf16.mxu0 0
      %747 = vmatpush1.bf16.msra.mxu0 %v717
      %748 = vmatprep.subr.bf16.mxu0 0
      %749 = vmatpush1.bf16.msra.mxu0 %v718
      %750 = vmatprep.subr.bf16.mxu0 0
      %751 = vmatpush1.bf16.msra.mxu0 %v719
      %752 = vmatprep.subr.bf16.mxu0 0
      %753 = vmatpush1.bf16.msra.mxu0 %v720
      %754 = vmatprep.subr.bf16.mxu0 0
      %755 = vmatpush1.bf16.msra.mxu0 %v721
      %756 = vmatprep.subr.bf16.mxu0 0
      %757 = vmatpush1.bf16.msra.mxu0 %v722
      %758 = vmatprep.subr.bf16.mxu0 0
      %759 = vmatpush1.bf16.msra.mxu0 %v723
      %760 = vmatprep.subr.bf16.mxu0 0
      %761 = vmatpush1.bf16.msra.mxu0 %v724
      %762 = vmatprep.subr.bf16.mxu0 0
      %763 = vmatpush1.bf16.msra.mxu0 %v725
      %764 = vmatprep.subr.bf16.mxu0 0
      %765 = vmatpush1.bf16.msra.mxu0 %v726
      %766 = vmatprep.subr.bf16.mxu0 0
      %767 = vmatpush1.bf16.msra.mxu0 %v727
      %768 = vmatprep.subr.bf16.mxu0 0
      %769 = vmatpush1.bf16.msra.mxu0 0
      %770 = vmatprep.subr.bf16.mxu0 0
      %771 = vmatpush1.bf16.msra.mxu0 0
      %772 = vmatprep.subr.bf16.mxu0 0
      %773 = vmatpush1.bf16.msra.mxu0 0
      %774 = vmatprep.subr.bf16.mxu0 0
      %775 = vmatpush1.bf16.msra.mxu0 0
      %776 = vmatprep.mubr.bf16.mxu0 %v742
      %777 = vmatmul.mubr.bf16.gmra.mrb[0].mxu0 %v659
      %v778 = vpop.f32.mrb[0].mxu0
      %v779 = vadd.f32 %v666, %v778
      %v780 = vpop.f32.mrb[0].mxu0
      %v781 = vpop.f32.mrb[0].mxu0
      %v782 = vadd.f32 %v666, %v781
      %v783 = vpop.f32.mrb[0].mxu0
      %784 = vdwg.mxu0
      %v785 = vld [vmem:[%s3] sm:$0xff]
      %v786 = vld [vmem:[%s3 + $0x8] sm:$0xff]
      %v787 = vadd.f32 %v779, %v785
      %v788 = vadd.f32 %v782, %v786
      %v789 = vld [vmem:[%s4] sm:$0x1]
      %v790 = vld [vmem:[%s5] sm:$0x1]
      %vm791 = vcmask 261120
      %v792 = vsel %vm791, %v787, 0.0
      %793 = vadd.xlane.f32.xlu0 %v792
      %v794 = vpop.xlane.xlu0 %793
      %v795 = vsel %vm791, %v788, 0.0
      %796 = vadd.xlane.f32.xlu0 %v795
      %v797 = vpop.xlane.xlu0 %796
      %v798 = vrcp.pop 32.0
      %v799 = vmul.f32 %v794, %v798
      %v800 = vmul.f32 %v797, %v798
      %v801 = vsub.f32 %v787, %v799
      %v802 = vsub.f32 %v788, %v800
      %v803 = vmul.f32 %v801, %v801
      %v804 = vmul.f32 %v802, %v802
      %v805 = vsel %vm791, %v803, 0.0
      %806 = vadd.xlane.f32.xlu0 %v805
      %v807 = vpop.xlane.xlu0 %806
      %v808 = vsel %vm791, %v804, 0.0
      %809 = vadd.xlane.f32.xlu0 %v808
      %v810 = vpop.xlane.xlu0 %809
      %v811 = vmul.f32 %v807, %v798
      %v812 = vmul.f32 %v810, %v798
      %v813 = vadd.f32 %v811, 1e-06
      %v814 = vadd.f32 %v812, 1e-06
      %v815 = vrsqrt.pop %v813
      %v816 = vrsqrt.pop %v814
      %v817 = vmul.f32 %v801, %v815
      %v818 = vmul.f32 %v802, %v816
      %v820 = vlaneseq
      %v821 = vshrl.u32 %v820, 7
      %v822 = vsub.s32 0, %v821
      %v823 = vrot.slane %v789, %v822
      %v825 = vmul.f32 %v817, %v823
      %v826 = vmul.f32 %v818, %v823
      %v828 = vlaneseq
      %v829 = vshrl.u32 %v828, 7
      %v830 = vsub.s32 0, %v829
      %v831 = vrot.slane %v790, %v830
      %v833 = vadd.f32 %v825, %v831
      %v834 = vadd.f32 %v826, %v831
      %v835 = vld [vmem:[%s6] sm:$0xf]
      %v836 = vld [vmem:[%s6 + $0x4] sm:$0xf]
      %v837 = vld [vmem:[%s6 + $0x8] sm:$0xf]
      %v838 = vld [vmem:[%s6 + $0xc] sm:$0xf]
      %v839 = vpack.c.bf16 %v834, %v833
      %v840 = vld [vmem:[%s7] sm:$0x1]
      %v842 = vlaneseq
      %v843 = vshrl.u32 %v842, 7
      %v844 = vsub.s32 0, %v843
      %v845 = vrot.slane %v840, %v844
      %v851 = vunpack.c.l.b16 %v835
      %v852 = vunpack.c.l.b16 %v836
      %v853 = vunpack.c.l.b16 %v837
      %v854 = vunpack.c.l.b16 %v838
      %v855 = vpack.c.b16 %v852, %v851
      %v856 = vpack.c.b16 %v854, %v853
      %v860 = vsel %vm791, %v839, 0
      %862 = vmatprep.subr.bf16.mxu0 0
      %863 = vmatpush1.bf16.msra.mxu0 %v855
      %864 = vmatprep.subr.bf16.mxu0 0
      %865 = vmatpush1.bf16.msra.mxu0 %v856
      %866 = vmatprep.subr.bf16.mxu0 0
      %867 = vmatpush1.bf16.msra.mxu0 0
      %868 = vmatprep.subr.bf16.mxu0 0
      %869 = vmatpush1.bf16.msra.mxu0 0
      %870 = vmatprep.subr.bf16.mxu0 0
      %871 = vmatpush1.bf16.msra.mxu0 0
      %872 = vmatprep.subr.bf16.mxu0 0
      %873 = vmatpush1.bf16.msra.mxu0 0
      %874 = vmatprep.subr.bf16.mxu0 0
      %875 = vmatpush1.bf16.msra.mxu0 0
      %876 = vmatprep.subr.bf16.mxu0 0
      %877 = vmatpush1.bf16.msra.mxu0 0
      %878 = vmatprep.subr.bf16.mxu0 0
      %879 = vmatpush1.bf16.msra.mxu0 0
      %880 = vmatprep.subr.bf16.mxu0 0
      %881 = vmatpush1.bf16.msra.mxu0 0
      %882 = vmatprep.subr.bf16.mxu0 0
      %883 = vmatpush1.bf16.msra.mxu0 0
      %884 = vmatprep.subr.bf16.mxu0 0
      %885 = vmatpush1.bf16.msra.mxu0 0
      %886 = vmatprep.subr.bf16.mxu0 0
      %887 = vmatpush1.bf16.msra.mxu0 0
      %888 = vmatprep.subr.bf16.mxu0 0
      %889 = vmatpush1.bf16.msra.mxu0 0
      %890 = vmatprep.subr.bf16.mxu0 0
      %891 = vmatpush1.bf16.msra.mxu0 0
      %892 = vmatprep.subr.bf16.mxu0 0
      %893 = vmatpush1.bf16.msra.mxu0 0
      %894 = vmatprep.mubr.bf16.mxu0 0
      %895 = vmatmul.mubr.bf16.gmra.mrb[0].mxu0 %v860
      %v896 = vpop.f32.mrb[0].mxu0
      %v897 = vadd.f32 %v845, %v896
      %v898 = vpop.f32.mrb[0].mxu0
      %v899 = vpop.f32.mrb[0].mxu0
      %v900 = vadd.f32 %v845, %v899
      %v901 = vpop.f32.mrb[0].mxu0
      %902 = vdwg.mxu0
      %v903 = vld [vmem:[%s8] sm:$0xf]
      %v904 = vld [vmem:[%s8 + $0x4] sm:$0xf]
      %v905 = vld [vmem:[%s8 + $0x8] sm:$0xf]
      %v906 = vld [vmem:[%s8 + $0xc] sm:$0xf]
      %v907 = vld [vmem:[%s9] sm:$0x1]
      %v908 = vpack.c.bf16 %v900, %v897
      %910 = vrot.lane.b32.xlu0 %v908, 96
      %v911 = vpop.permute.xlu0 %910
      %vm912 = vcmask 130048
      %v914 = vsel %vm912, %v908, 0
      %v917 = vsel %vm912, %v911, 0
      %919 = vmatprep.subr.bf16.mxu0 0
      %920 = vmatpush1.bf16.xpose.msra.mxu0 %v917
      %921 = vmatprep.subr.bf16.mxu0 0
      %922 = vmatpush1.bf16.xpose.msra.mxu0 0
      %923 = vmatprep.subr.bf16.mxu0 0
      %924 = vmatpush1.bf16.xpose.msra.mxu0 0
      %925 = vmatprep.subr.bf16.mxu0 0
      %926 = vmatpush1.bf16.xpose.msra.mxu0 0
      %927 = vmatprep.subr.bf16.mxu0 0
      %928 = vmatpush1.bf16.xpose.msra.mxu0 0
      %929 = vmatprep.subr.bf16.mxu0 0
      %930 = vmatpush1.bf16.xpose.msra.mxu0 0
      %931 = vmatprep.subr.bf16.mxu0 0
      %932 = vmatpush1.bf16.xpose.msra.mxu0 0
      %933 = vmatprep.subr.bf16.mxu0 0
      %934 = vmatpush1.bf16.xpose.msra.mxu0 0
      %935 = vmatprep.subr.bf16.mxu0 0
      %936 = vmatpush1.bf16.xpose.msra.mxu0 0
      %937 = vmatprep.subr.bf16.mxu0 0
      %938 = vmatpush1.bf16.xpose.msra.mxu0 0
      %939 = vmatprep.subr.bf16.mxu0 0
      %940 = vmatpush1.bf16.xpose.msra.mxu0 0
      %941 = vmatprep.subr.bf16.mxu0 0
      %942 = vmatpush1.bf16.xpose.msra.mxu0 0
      %943 = vmatprep.subr.bf16.mxu0 0
      %944 = vmatpush1.bf16.xpose.msra.mxu0 0
      %945 = vmatprep.subr.bf16.mxu0 0
      %946 = vmatpush1.bf16.xpose.msra.mxu0 0
      %947 = vmatprep.subr.bf16.mxu0 0
      %948 = vmatpush1.bf16.xpose.msra.mxu0 0
      %949 = vmatprep.subr.bf16.mxu0 0
      %950 = vmatpush1.bf16.xpose.msra.mxu0 0
      %951 = vmatprep.mubr.bf16.mxu0 0
      %952 = vmatmul.mubr.bf16.gmra.mrb[0].mxu0 %v914
      %v953 = vpop.f32.mrb[0].mxu0
      %v954 = vadd.f32 0.0, %v953
      %v955 = vpop.f32.mrb[0].mxu0
      %v956 = vpop.f32.mrb[0].mxu0
      %v957 = vadd.f32 0.0, %v956
      %v958 = vpop.f32.mrb[0].mxu0
      %959 = vdwg.mxu0
      %v960 = vmul.f32 %v954, 0.25
      %v961 = vmul.f32 %v957, 0.25
      %v962 = vsel %vm912, %v960, -inf
      %963 = vmax.xlane.f32.xlu0 %v962
      %v964 = vpop.xlane.xlu0 %963
      %v965 = vsel %vm912, %v961, -inf
      %966 = vmax.xlane.f32.xlu0 %v965
      %v967 = vpop.xlane.xlu0 %966
      %v968 = vsub.f32 %v960, %v964
      %v969 = vsub.f32 %v961, %v967
      %v970 = vmul.f32 %v968, 1.442695
      %v971 = vpow.pop %v970
      %v972 = vmul.f32 %v969, 1.442695
      %v973 = vpow.pop %v972
      %v974 = vsel %vm912, %v971, 0.0
      %975 = vadd.xlane.f32.xlu0 %v974
      %v976 = vpop.xlane.xlu0 %975
      %v977 = vsel %vm912, %v973, 0.0
      %978 = vadd.xlane.f32.xlu0 %v977
      %v979 = vpop.xlane.xlu0 %978
      %v980 = vrcp.pop %v976
      %v981 = vrcp.pop %v979
      %v982 = vmul.f32 %v971, %v980
      %v983 = vmul.f32 %v973, %v981
      %v984 = vpack.c.bf16 %v983, %v982
      %985 = vrot.lane.b32.xlu0 %v908, 64
      %v986 = vpop.permute.xlu0 %985
      %v989 = vsel %vm912, %v984, 0
      %991 = vmatprep.subr.bf16.mxu0 0
      %992 = vmatpush1.bf16.msra.mxu0 %v986
      %993 = vmatprep.subr.bf16.mxu0 0
      %994 = vmatpush1.bf16.msra.mxu0 0
      %995 = vmatprep.subr.bf16.mxu0 0
      %996 = vmatpush1.bf16.msra.mxu0 0
      %997 = vmatprep.subr.bf16.mxu0 0
      %998 = vmatpush1.bf16.msra.mxu0 0
      %999 = vmatprep.subr.bf16.mxu0 0
      %1000 = vmatpush1.bf16.msra.mxu0 0
      %1001 = vmatprep.subr.bf16.mxu0 0
      %1002 = vmatpush1.bf16.msra.mxu0 0
      %1003 = vmatprep.subr.bf16.mxu0 0
      %1004 = vmatpush1.bf16.msra.mxu0 0
      %1005 = vmatprep.subr.bf16.mxu0 0
      %1006 = vmatpush1.bf16.msra.mxu0 0
      %1007 = vmatprep.subr.bf16.mxu0 0
      %1008 = vmatpush1.bf16.msra.mxu0 0
      %1009 = vmatprep.subr.bf16.mxu0 0
      %1010 = vmatpush1.bf16.msra.mxu0 0
      %1011 = vmatprep.subr.bf16.mxu0 0
      %1012 = vmatpush1.bf16.msra.mxu0 0
      %1013 = vmatprep.subr.bf16.mxu0 0
      %1014 = vmatpush1.bf16.msra.mxu0 0
      %1015 = vmatprep.subr.bf16.mxu0 0
      %1016 = vmatpush1.bf16.msra.mxu0 0
      %1017 = vmatprep.subr.bf16.mxu0 0
      %1018 = vmatpush1.bf16.msra.mxu0 0
      %1019 = vmatprep.subr.bf16.mxu0 0
      %1020 = vmatpush1.bf16.msra.mxu0 0
      %1021 = vmatprep.subr.bf16.mxu0 0
      %1022 = vmatpush1.bf16.msra.mxu0 0
      %1023 = vmatprep.mubr.bf16.mxu0 0
      %1024 = vmatmul.mubr.bf16.gmra.mrb[0].mxu0 %v989
      %v1025 = vpop.f32.mrb[0].mxu0
      %v1026 = vadd.f32 0.0, %v1025
      %v1027 = vpop.f32.mrb[0].mxu0
      %v1028 = vpop.f32.mrb[0].mxu0
      %v1029 = vadd.f32 0.0, %v1028
      %v1030 = vpop.f32.mrb[0].mxu0
      %1031 = vdwg.mxu0
      %v1032 = vpack.c.bf16 %v1029, %v1026
      %v1035 = vunpack.c.l.b16 %v903
      %v1036 = vunpack.c.l.b16 %v904
      %v1037 = vpack.c.b16 %v1036, %v1035
      %v1040 = vsel %vm912, %v1032, 0
      %1042 = vmatprep.subr.bf16.mxu0 0
      %1043 = vmatpush1.bf16.msra.mxu0 %v1037
      %1044 = vmatprep.subr.bf16.mxu0 0
      %1045 = vmatpush1.bf16.msra.mxu0 0
      %1046 = vmatprep.subr.bf16.mxu0 0
      %1047 = vmatpush1.bf16.msra.mxu0 0
      %1048 = vmatprep.subr.bf16.mxu0 0
      %1049 = vmatpush1.bf16.msra.mxu0 0
      %1050 = vmatprep.subr.bf16.mxu0 0
      %1051 = vmatpush1.bf16.msra.mxu0 0
      %1052 = vmatprep.subr.bf16.mxu0 0
      %1053 = vmatpush1.bf16.msra.mxu0 0
      %1054 = vmatprep.subr.bf16.mxu0 0
      %1055 = vmatpush1.bf16.msra.mxu0 0
      %1056 = vmatprep.subr.bf16.mxu0 0
      %1057 = vmatpush1.bf16.msra.mxu0 0
      %1058 = vmatprep.subr.bf16.mxu0 0
      %1059 = vmatpush1.bf16.msra.mxu0 0
      %1060 = vmatprep.subr.bf16.mxu0 0
      %1061 = vmatpush1.bf16.msra.mxu0 0
      %1062 = vmatprep.subr.bf16.mxu0 0
      %1063 = vmatpush1.bf16.msra.mxu0 0
      %1064 = vmatprep.subr.bf16.mxu0 0
      %1065 = vmatpush1.bf16.msra.mxu0 0
      %1066 = vmatprep.subr.bf16.mxu0 0
      %1067 = vmatpush1.bf16.msra.mxu0 0
      %1068 = vmatprep.subr.bf16.mxu0 0
      %1069 = vmatpush1.bf16.msra.mxu0 0
      %1070 = vmatprep.subr.bf16.mxu0 0
      %1071 = vmatpush1.bf16.msra.mxu0 0
      %1072 = vmatprep.subr.bf16.mxu0 0
      %1073 = vmatpush1.bf16.msra.mxu0 0
      %1074 = vmatprep.mubr.bf16.mxu0 0
      %1075 = vmatmul.mubr.bf16.gmra.mrb[0].mxu0 %v1040
      %v1076 = vpop.f32.mrb[0].mxu0
      %v1077 = vadd.f32 0.0, %v1076
      %v1078 = vpop.f32.mrb[0].mxu0
      %v1079 = vpop.f32.mrb[0].mxu0
      %v1080 = vadd.f32 0.0, %v1079
      %v1081 = vpop.f32.mrb[0].mxu0
      %1082 = vdwg.mxu0
      %v1084 = vlaneseq
      %v1085 = vshrl.u32 %v1084, 7
      %v1086 = vsub.s32 0, %v1085
      %v1087 = vrot.slane %v907, %v1086
      %v1089 = vadd.f32 %v1087, %v1077
      %v1090 = vadd.f32 %v1087, %v1080
      %1091 = vrot.lane.b32.xlu0 %v908, 112
      %v1092 = vpop.permute.xlu0 %1091
      %1093 = vrot.lane.b32.xlu0 %v908, 80
      %v1094 = vpop.permute.xlu0 %1093
      %v1096 = vsel %vm912, %v1092, 0
      %v1099 = vsel %vm912, %v1094, 0
      %1101 = vmatprep.subr.bf16.mxu0 0
      %1102 = vmatpush1.bf16.xpose.msra.mxu0 %v1099
      %1103 = vmatprep.subr.bf16.mxu0 0
      %1104 = vmatpush1.bf16.xpose.msra.mxu0 0
      %1105 = vmatprep.subr.bf16.mxu0 0
      %1106 = vmatpush1.bf16.xpose.msra.mxu0 0
      %1107 = vmatprep.subr.bf16.mxu0 0
      %1108 = vmatpush1.bf16.xpose.msra.mxu0 0
      %1109 = vmatprep.subr.bf16.mxu0 0
      %1110 = vmatpush1.bf16.xpose.msra.mxu0 0
      %1111 = vmatprep.subr.bf16.mxu0 0
      %1112 = vmatpush1.bf16.xpose.msra.mxu0 0
      %1113 = vmatprep.subr.bf16.mxu0 0
      %1114 = vmatpush1.bf16.xpose.msra.mxu0 0
      %1115 = vmatprep.subr.bf16.mxu0 0
      %1116 = vmatpush1.bf16.xpose.msra.mxu0 0
      %1117 = vmatprep.subr.bf16.mxu0 0
      %1118 = vmatpush1.bf16.xpose.msra.mxu0 0
      %1119 = vmatprep.subr.bf16.mxu0 0
      %1120 = vmatpush1.bf16.xpose.msra.mxu0 0
      %1121 = vmatprep.subr.bf16.mxu0 0
      %1122 = vmatpush1.bf16.xpose.msra.mxu0 0
      %1123 = vmatprep.subr.bf16.mxu0 0
      %1124 = vmatpush1.bf16.xpose.msra.mxu0 0
      %1125 = vmatprep.subr.bf16.mxu0 0
      %1126 = vmatpush1.bf16.xpose.msra.mxu0 0
      %1127 = vmatprep.subr.bf16.mxu0 0
      %1128 = vmatpush1.bf16.xpose.msra.mxu0 0
      %1129 = vmatprep.subr.bf16.mxu0 0
      %1130 = vmatpush1.bf16.xpose.msra.mxu0 0
      %1131 = vmatprep.subr.bf16.mxu0 0
      %1132 = vmatpush1.bf16.xpose.msra.mxu0 0
      %1133 = vmatprep.mubr.bf16.mxu0 0
      %1134 = vmatmul.mubr.bf16.gmra.mrb[0].mxu0 %v1096
      %v1135 = vpop.f32.mrb[0].mxu0
      %v1136 = vadd.f32 0.0, %v1135
      %v1137 = vpop.f32.mrb[0].mxu0
      %v1138 = vpop.f32.mrb[0].mxu0
      %v1139 = vadd.f32 0.0, %v1138
      %v1140 = vpop.f32.mrb[0].mxu0
      %1141 = vdwg.mxu0
      %v1142 = vmul.f32 %v1136, 0.25
      %v1143 = vmul.f32 %v1139, 0.25
      %v1144 = vsel %vm912, %v1142, -inf
      %1145 = vmax.xlane.f32.xlu0 %v1144
      %v1146 = vpop.xlane.xlu0 %1145
      %v1147 = vsel %vm912, %v1143, -inf
      %1148 = vmax.xlane.f32.xlu0 %v1147
      %v1149 = vpop.xlane.xlu0 %1148
      %v1150 = vsub.f32 %v1142, %v1146
      %v1151 = vsub.f32 %v1143, %v1149
      %v1152 = vmul.f32 %v1150, 1.442695
      %v1153 = vpow.pop %v1152
      %v1154 = vmul.f32 %v1151, 1.442695
      %v1155 = vpow.pop %v1154
      %v1156 = vsel %vm912, %v1153, 0.0
      %1157 = vadd.xlane.f32.xlu0 %v1156
      %v1158 = vpop.xlane.xlu0 %1157
      %v1159 = vsel %vm912, %v1155, 0.0
      %1160 = vadd.xlane.f32.xlu0 %v1159
      %v1161 = vpop.xlane.xlu0 %1160
      %v1162 = vrcp.pop %v1158
      %v1163 = vrcp.pop %v1161
      %v1164 = vmul.f32 %v1153, %v1162
      %v1165 = vmul.f32 %v1155, %v1163
      %v1166 = vpack.c.bf16 %v1165, %v1164
      %1167 = vrot.lane.b32.xlu0 %v908, 48
      %v1168 = vpop.permute.xlu0 %1167
      %v1171 = vsel %vm912, %v1166, 0
      %1173 = vmatprep.subr.bf16.mxu0 0
      %1174 = vmatpush1.bf16.msra.mxu0 %v1168
      %1175 = vmatprep.subr.bf16.mxu0 0
      %1176 = vmatpush1.bf16.msra.mxu0 0
      %1177 = vmatprep.subr.bf16.mxu0 0
      %1178 = vmatpush1.bf16.msra.mxu0 0
      %1179 = vmatprep.subr.bf16.mxu0 0
      %1180 = vmatpush1.bf16.msra.mxu0 0
      %1181 = vmatprep.subr.bf16.mxu0 0
      %1182 = vmatpush1.bf16.msra.mxu0 0
      %1183 = vmatprep.subr.bf16.mxu0 0
      %1184 = vmatpush1.bf16.msra.mxu0 0
      %1185 = vmatprep.subr.bf16.mxu0 0
      %1186 = vmatpush1.bf16.msra.mxu0 0
      %1187 = vmatprep.subr.bf16.mxu0 0
      %1188 = vmatpush1.bf16.msra.mxu0 0
      %1189 = vmatprep.subr.bf16.mxu0 0
      %1190 = vmatpush1.bf16.msra.mxu0 0
      %1191 = vmatprep.subr.bf16.mxu0 0
      %1192 = vmatpush1.bf16.msra.mxu0 0
      %1193 = vmatprep.subr.bf16.mxu0 0
      %1194 = vmatpush1.bf16.msra.mxu0 0
      %1195 = vmatprep.subr.bf16.mxu0 0
      %1196 = vmatpush1.bf16.msra.mxu0 0
      %1197 = vmatprep.subr.bf16.mxu0 0
      %1198 = vmatpush1.bf16.msra.mxu0 0
      %1199 = vmatprep.subr.bf16.mxu0 0
      %1200 = vmatpush1.bf16.msra.mxu0 0
      %1201 = vmatprep.subr.bf16.mxu0 0
      %1202 = vmatpush1.bf16.msra.mxu0 0
      %1203 = vmatprep.subr.bf16.mxu0 0
      %1204 = vmatpush1.bf16.msra.mxu0 0
      %1205 = vmatprep.mubr.bf16.mxu0 0
      %1206 = vmatmul.mubr.bf16.gmra.mrb[0].mxu0 %v1171
      %v1207 = vpop.f32.mrb[0].mxu0
      %v1208 = vadd.f32 0.0, %v1207
      %v1209 = vpop.f32.mrb[0].mxu0
      %v1210 = vpop.f32.mrb[0].mxu0
      %v1211 = vadd.f32 0.0, %v1210
      %v1212 = vpop.f32.mrb[0].mxu0
      %1213 = vdwg.mxu0
      %v1214 = vpack.c.bf16 %v1211, %v1208
      %v1217 = vunpack.c.l.b16 %v905
      %v1218 = vunpack.c.l.b16 %v906
      %v1219 = vpack.c.b16 %v1218, %v1217
      %v1222 = vsel %vm912, %v1214, 0
      %1224 = vmatprep.subr.bf16.mxu0 0
      %1225 = vmatpush1.bf16.msra.mxu0 %v1219
      %1226 = vmatprep.subr.bf16.mxu0 0
      %1227 = vmatpush1.bf16.msra.mxu0 0
      %1228 = vmatprep.subr.bf16.mxu0 0
      %1229 = vmatpush1.bf16.msra.mxu0 0
      %1230 = vmatprep.subr.bf16.mxu0 0
      %1231 = vmatpush1.bf16.msra.mxu0 0
      %1232 = vmatprep.subr.bf16.mxu0 0
      %1233 = vmatpush1.bf16.msra.mxu0 0
      %1234 = vmatprep.subr.bf16.mxu0 0
      %1235 = vmatpush1.bf16.msra.mxu0 0
      %1236 = vmatprep.subr.bf16.mxu0 0
      %1237 = vmatpush1.bf16.msra.mxu0 0
      %1238 = vmatprep.subr.bf16.mxu0 0
      %1239 = vmatpush1.bf16.msra.mxu0 0
      %1240 = vmatprep.subr.bf16.mxu0 0
      %1241 = vmatpush1.bf16.msra.mxu0 0
      %1242 = vmatprep.subr.bf16.mxu0 0
      %1243 = vmatpush1.bf16.msra.mxu0 0
      %1244 = vmatprep.subr.bf16.mxu0 0
      %1245 = vmatpush1.bf16.msra.mxu0 0
      %1246 = vmatprep.subr.bf16.mxu0 0
      %1247 = vmatpush1.bf16.msra.mxu0 0
      %1248 = vmatprep.subr.bf16.mxu0 0
      %1249 = vmatpush1.bf16.msra.mxu0 0
      %1250 = vmatprep.subr.bf16.mxu0 0
      %1251 = vmatpush1.bf16.msra.mxu0 0
      %1252 = vmatprep.subr.bf16.mxu0 0
      %1253 = vmatpush1.bf16.msra.mxu0 0
      %1254 = vmatprep.subr.bf16.mxu0 0
      %1255 = vmatpush1.bf16.msra.mxu0 0
      %1256 = vmatprep.mubr.bf16.mxu0 0
      %1257 = vmatmul.mubr.bf16.gmra.mrb[0].mxu0 %v1222
      %v1258 = vpop.f32.mrb[0].mxu0
      %v1259 = vadd.f32 0.0, %v1258
      %v1260 = vpop.f32.mrb[0].mxu0
      %v1261 = vpop.f32.mrb[0].mxu0
      %v1262 = vadd.f32 0.0, %v1261
      %v1263 = vpop.f32.mrb[0].mxu0
      %1264 = vdwg.mxu0
      %v1265 = vadd.f32 %v1089, %v1259
      %v1266 = vadd.f32 %v1090, %v1262
      %v1267 = vadd.f32 %v787, %v1265
      %v1268 = vadd.f32 %v788, %v1266
      %v1269 = vld [vmem:[%s10] sm:$0x1]
      %v1270 = vld [vmem:[%s11] sm:$0x1]
      %v1271 = vsel %vm791, %v1267, 0.0
      %1272 = vadd.xlane.f32.xlu0 %v1271
      %v1273 = vpop.xlane.xlu0 %1272
      %v1274 = vsel %vm791, %v1268, 0.0
      %1275 = vadd.xlane.f32.xlu0 %v1274
      %v1276 = vpop.xlane.xlu0 %1275
      %v1277 = vmul.f32 %v1273, %v798
      %v1278 = vmul.f32 %v1276, %v798
      %v1279 = vsub.f32 %v1267, %v1277
      %v1280 = vsub.f32 %v1268, %v1278
      %v1281 = vmul.f32 %v1279, %v1279
      %v1282 = vmul.f32 %v1280, %v1280
      %v1283 = vsel %vm791, %v1281, 0.0
      %1284 = vadd.xlane.f32.xlu0 %v1283
      %v1285 = vpop.xlane.xlu0 %1284
      %v1286 = vsel %vm791, %v1282, 0.0
      %1287 = vadd.xlane.f32.xlu0 %v1286
      %v1288 = vpop.xlane.xlu0 %1287
      %v1289 = vmul.f32 %v1285, %v798
      %v1290 = vmul.f32 %v1288, %v798
      %v1291 = vadd.f32 %v1289, 1e-06
      %v1292 = vadd.f32 %v1290, 1e-06
      %v1293 = vrsqrt.pop %v1291
      %v1294 = vrsqrt.pop %v1292
      %v1295 = vmul.f32 %v1279, %v1293
      %v1296 = vmul.f32 %v1280, %v1294
      %v1298 = vlaneseq
      %v1299 = vshrl.u32 %v1298, 7
      %v1300 = vsub.s32 0, %v1299
      %v1301 = vrot.slane %v1269, %v1300
      %v1303 = vmul.f32 %v1295, %v1301
      %v1304 = vmul.f32 %v1296, %v1301
      %v1306 = vlaneseq
      %v1307 = vshrl.u32 %v1306, 7
      %v1308 = vsub.s32 0, %v1307
      %v1309 = vrot.slane %v1270, %v1308
      %v1311 = vadd.f32 %v1303, %v1309
      %v1312 = vadd.f32 %v1304, %v1309
      %v1313 = vld [vmem:[%s12] sm:$0xf]
      %v1314 = vld [vmem:[%s12 + $0x4] sm:$0xf]
      %v1315 = vld [vmem:[%s12 + $0x8] sm:$0xf]
      %v1316 = vld [vmem:[%s12 + $0xc] sm:$0xf]
      %v1317 = vpack.c.bf16 %v1312, %v1311
      %v1318 = vld [vmem:[%s13] sm:$0x1]
      %v1320 = vlaneseq
      %v1321 = vshrl.u32 %v1320, 7
      %v1322 = vsub.s32 0, %v1321
      %v1323 = vrot.slane %v1318, %v1322
      %v1329 = vunpack.c.l.b16 %v1313
      %v1330 = vunpack.c.l.b16 %v1314
      %v1331 = vunpack.c.l.b16 %v1315
      %v1332 = vunpack.c.l.b16 %v1316
      %v1333 = vpack.c.b16 %v1330, %v1329
      %v1334 = vpack.c.b16 %v1332, %v1331
      %v1338 = vsel %vm791, %v1317, 0
      %1340 = vmatprep.subr.bf16.mxu0 0
      %1341 = vmatpush1.bf16.msra.mxu0 %v1333
      %1342 = vmatprep.subr.bf16.mxu0 0
      %1343 = vmatpush1.bf16.msra.mxu0 %v1334
      %1344 = vmatprep.subr.bf16.mxu0 0
      %1345 = vmatpush1.bf16.msra.mxu0 0
      %1346 = vmatprep.subr.bf16.mxu0 0
      %1347 = vmatpush1.bf16.msra.mxu0 0
      %1348 = vmatprep.subr.bf16.mxu0 0
      %1349 = vmatpush1.bf16.msra.mxu0 0
      %1350 = vmatprep.subr.bf16.mxu0 0
      %1351 = vmatpush1.bf16.msra.mxu0 0
      %1352 = vmatprep.subr.bf16.mxu0 0
      %1353 = vmatpush1.bf16.msra.mxu0 0
      %1354 = vmatprep.subr.bf16.mxu0 0
      %1355 = vmatpush1.bf16.msra.mxu0 0
      %1356 = vmatprep.subr.bf16.mxu0 0
      %1357 = vmatpush1.bf16.msra.mxu0 0
      %1358 = vmatprep.subr.bf16.mxu0 0
      %1359 = vmatpush1.bf16.msra.mxu0 0
      %1360 = vmatprep.subr.bf16.mxu0 0
      %1361 = vmatpush1.bf16.msra.mxu0 0
      %1362 = vmatprep.subr.bf16.mxu0 0
      %1363 = vmatpush1.bf16.msra.mxu0 0
      %1364 = vmatprep.subr.bf16.mxu0 0
      %1365 = vmatpush1.bf16.msra.mxu0 0
      %1366 = vmatprep.subr.bf16.mxu0 0
      %1367 = vmatpush1.bf16.msra.mxu0 0
      %1368 = vmatprep.subr.bf16.mxu0 0
      %1369 = vmatpush1.bf16.msra.mxu0 0
      %1370 = vmatprep.subr.bf16.mxu0 0
      %1371 = vmatpush1.bf16.msra.mxu0 0
      %1372 = vmatprep.mubr.bf16.mxu0 0
      %1373 = vmatmul.mubr.bf16.gmra.mrb[0].mxu0 %v1338
      %v1374 = vpop.f32.mrb[0].mxu0
      %v1375 = vadd.f32 %v1323, %v1374
      %v1376 = vpop.f32.mrb[0].mxu0
      %v1377 = vpop.f32.mrb[0].mxu0
      %v1378 = vadd.f32 %v1323, %v1377
      %v1379 = vpop.f32.mrb[0].mxu0
      %1380 = vdwg.mxu0
      %v1381 = vmul.f32 %v1375, 0.5
      %v1382 = vmul.f32 %v1378, 0.5
      %v1383 = vmul.f32 %v1375, 0.044715
      %v1384 = vmul.f32 %v1378, 0.044715
      %v1385 = vmul.f32 %v1383, %v1375
      %v1386 = vmul.f32 %v1384, %v1378
      %v1387 = vmul.f32 %v1385, %v1375
      %v1388 = vmul.f32 %v1386, %v1378
      %v1389 = vadd.f32 %v1375, %v1387
      %v1390 = vadd.f32 %v1378, %v1388
      %v1391 = vmul.f32 %v1389, 0.7978846
      %v1392 = vmul.f32 %v1390, 0.7978846
      %v1393 = vtanh.pop %v1391
      %v1394 = vtanh.pop %v1392
      %v1395 = vadd.f32 %v1393, 1.0
      %v1396 = vadd.f32 %v1394, 1.0
      %v1397 = vmul.f32 %v1381, %v1395
      %v1398 = vmul.f32 %v1382, %v1396
      %v1399 = vld [vmem:[%s14] sm:$0xf]
      %v1400 = vld [vmem:[%s14 + $0x4] sm:$0xf]
      %v1401 = vld [vmem:[%s14 + $0x8] sm:$0xf]
      %v1402 = vld [vmem:[%s14 + $0xc] sm:$0xf]
      %v1403 = vld [vmem:[%s14 + $0x10] sm:$0xf]
      %v1404 = vld [vmem:[%s14 + $0x14] sm:$0xf]
      %v1405 = vld [vmem:[%s14 + $0x18] sm:$0xf]
      %v1406 = vld [vmem:[%s14 + $0x1c] sm:$0xf]
      %v1407 = vpack.c.bf16 %v1398, %v1397
      %v1408 = vld [vmem:[%s15] sm:$0x1]
      %v1410 = vlaneseq
      %v1411 = vshrl.u32 %v1410, 7
      %v1412 = vsub.s32 0, %v1411
      %v1413 = vrot.slane %v1408, %v1412
      %v1423 = vunpack.c.l.b16 %v1399
      %v1424 = vunpack.c.l.b16 %v1400
      %v1425 = vunpack.c.l.b16 %v1401
      %v1426 = vunpack.c.l.b16 %v1402
      %v1427 = vunpack.c.l.b16 %v1403
      %v1428 = vunpack.c.l.b16 %v1404
      %v1429 = vunpack.c.l.b16 %v1405
      %v1430 = vunpack.c.l.b16 %v1406
      %v1431 = vpack.c.b16 %v1424, %v1423
      %v1432 = vpack.c.b16 %v1426, %v1425
      %v1433 = vpack.c.b16 %v1428, %v1427
      %v1434 = vpack.c.b16 %v1430, %v1429
      %v1440 = vsel %vm740, %v1407, 0
      %1442 = vmatprep.subr.bf16.mxu0 0
      %1443 = vmatpush1.bf16.msra.mxu0 %v1431
      %1444 = vmatprep.subr.bf16.mxu0 0
      %1445 = vmatpush1.bf16.msra.mxu0 %v1432
      %1446 = vmatprep.subr.bf16.mxu0 0
      %1447 = vmatpush1.bf16.msra.mxu0 %v1433
      %1448 = vmatprep.subr.bf16.mxu0 0
      %1449 = vmatpush1.bf16.msra.mxu0 %v1434
      %1450 = vmatprep.subr.bf16.mxu0 0
      %1451 = vmatpush1.bf16.msra.mxu0 0
      %1452 = vmatprep.subr.bf16.mxu0 0
      %1453 = vmatpush1.bf16.msra.mxu0 0
      %1454 = vmatprep.subr.bf16.mxu0 0
      %1455 = vmatpush1.bf16.msra.mxu0 0
      %1456 = vmatprep.subr.bf16.mxu0 0
      %1457 = vmatpush1.bf16.msra.mxu0 0
      %1458 = vmatprep.subr.bf16.mxu0 0
      %1459 = vmatpush1.bf16.msra.mxu0 0
      %1460 = vmatprep.subr.bf16.mxu0 0
      %1461 = vmatpush1.bf16.msra.mxu0 0
      %1462 = vmatprep.subr.bf16.mxu0 0
      %1463 = vmatpush1.bf16.msra.mxu0 0
      %1464 = vmatprep.subr.bf16.mxu0 0
      %1465 = vmatpush1.bf16.msra.mxu0 0
      %1466 = vmatprep.subr.bf16.mxu0 0
      %1467 = vmatpush1.bf16.msra.mxu0 0
      %1468 = vmatprep.subr.bf16.mxu0 0
      %1469 = vmatpush1.bf16.msra.mxu0 0
      %1470 = vmatprep.subr.bf16.mxu0 0
      %1471 = vmatpush1.bf16.msra.mxu0 0
      %1472 = vmatprep.subr.bf16.mxu0 0
      %1473 = vmatpush1.bf16.msra.mxu0 0
      %1474 = vmatprep.mubr.bf16.mxu0 0
      %1475 = vmatmul.mubr.bf16.gmra.mrb[0].mxu0 %v1440
      %v1476 = vpop.f32.mrb[0].mxu0
      %v1477 = vadd.f32 %v1413, %v1476
      %v1478 = vpop.f32.mrb[0].mxu0
      %v1479 = vpop.f32.mrb[0].mxu0
      %v1480 = vadd.f32 %v1413, %v1479
      %v1481 = vpop.f32.mrb[0].mxu0
      %1482 = vdwg.mxu0
      %v1483 = vadd.f32 %v1267, %v1477
      %v1484 = vadd.f32 %v1268, %v1480
      %v1485 = vld [vmem:[%s16] sm:$0xf]
      %v1486 = vld [vmem:[%s16 + $0x4] sm:$0xf]
      %v1487 = vld [vmem:[%s16 + $0x8] sm:$0xf]
      %v1488 = vld [vmem:[%s16 + $0xc] sm:$0xf]
      %v1489 = vpack.c.bf16 %v1484, %v1483
      %v1490 = vld [vmem:[%s17] sm:$0x1]
      %v1492 = vlaneseq
      %v1493 = vshrl.u32 %v1492, 7
      %v1494 = vsub.s32 0, %v1493
      %v1495 = vrot.slane %v1490, %v1494
      %v1501 = vunpack.c.l.b16 %v1485
      %v1502 = vunpack.c.l.b16 %v1486
      %v1503 = vunpack.c.l.b16 %v1487
      %v1504 = vunpack.c.l.b16 %v1488
      %v1505 = vpack.c.b16 %v1502, %v1501
      %v1506 = vpack.c.b16 %v1504, %v1503
      %v1510 = vsel %vm791, %v1489, 0
      %1512 = vmatprep.subr.bf16.mxu0 0
      %1513 = vmatpush1.bf16.msra.mxu0 %v1505
      %1514 = vmatprep.subr.bf16.mxu0 0
      %1515 = vmatpush1.bf16.msra.mxu0 %v1506
      %1516 = vmatprep.subr.bf16.mxu0 0
      %1517 = vmatpush1.bf16.msra.mxu0 0
      %1518 = vmatprep.subr.bf16.mxu0 0
      %1519 = vmatpush1.bf16.msra.mxu0 0
      %1520 = vmatprep.subr.bf16.mxu0 0
      %1521 = vmatpush1.bf16.msra.mxu0 0
      %1522 = vmatprep.subr.bf16.mxu0 0
      %1523 = vmatpush1.bf16.msra.mxu0 0
      %1524 = vmatprep.subr.bf16.mxu0 0
      %1525 = vmatpush1.bf16.msra.mxu0 0
      %1526 = vmatprep.subr.bf16.mxu0 0
      %1527 = vmatpush1.bf16.msra.mxu0 0
      %1528 = vmatprep.subr.bf16.mxu0 0
      %1529 = vmatpush1.bf16.msra.mxu0 0
      %1530 = vmatprep.subr.bf16.mxu0 0
      %1531 = vmatpush1.bf16.msra.mxu0 0
      %1532 = vmatprep.subr.bf16.mxu0 0
      %1533 = vmatpush1.bf16.msra.mxu0 0
      %1534 = vmatprep.subr.bf16.mxu0 0
      %1535 = vmatpush1.bf16.msra.mxu0 0
      %1536 = vmatprep.subr.bf16.mxu0 0
      %1537 = vmatpush1.bf16.msra.mxu0 0
      %1538 = vmatprep.subr.bf16.mxu0 0
      %1539 = vmatpush1.bf16.msra.mxu0 0
      %1540 = vmatprep.subr.bf16.mxu0 0
      %1541 = vmatpush1.bf16.msra.mxu0 0
      %1542 = vmatprep.subr.bf16.mxu0 0
      %1543 = vmatpush1.bf16.msra.mxu0 0
      %1544 = vmatprep.mubr.bf16.mxu0 0
      %1545 = vmatmul.mubr.bf16.gmra.mrb[0].mxu0 %v1510
      %v1546 = vpop.f32.mrb[0].mxu0
      %v1547 = vadd.f32 %v1495, %v1546
      %v1548 = vpop.f32.mrb[0].mxu0
      %v1549 = vpop.f32.mrb[0].mxu0
      %v1550 = vadd.f32 %v1495, %v1549
      %v1551 = vpop.f32.mrb[0].mxu0
      %1552 = vdwg.mxu0
      %v1553 = vld [vmem:[%s18] sm:$0x1]
      %v1554 = vld [vmem:[%s19] sm:$0x1]
      %v1555 = vsel %vm912, %v1547, 0.0
      %1556 = vadd.xlane.f32.xlu0 %v1555
      %v1557 = vpop.xlane.xlu0 %1556
      %v1558 = vsel %vm912, %v1550, 0.0
      %1559 = vadd.xlane.f32.xlu0 %v1558
      %v1560 = vpop.xlane.xlu0 %1559
      %v1561 = vrcp.pop 16.0
      %v1562 = vmul.f32 %v1557, %v1561
      %v1563 = vmul.f32 %v1560, %v1561
      %v1564 = vsub.f32 %v1547, %v1562
      %v1565 = vsub.f32 %v1550, %v1563
      %v1566 = vmul.f32 %v1564, %v1564
      %v1567 = vmul.f32 %v1565, %v1565
      %v1568 = vsel %vm912, %v1566, 0.0
      %1569 = vadd.xlane.f32.xlu0 %v1568
      %v1570 = vpop.xlane.xlu0 %1569
      %v1571 = vsel %vm912, %v1567, 0.0
      %1572 = vadd.xlane.f32.xlu0 %v1571
      %v1573 = vpop.xlane.xlu0 %1572
      %v1574 = vmul.f32 %v1570, %v1561
      %v1575 = vmul.f32 %v1573, %v1561
      %v1576 = vadd.f32 %v1574, 1e-06
      %v1577 = vadd.f32 %v1575, 1e-06
      %v1578 = vrsqrt.pop %v1576
      %v1579 = vrsqrt.pop %v1577
      %v1580 = vmul.f32 %v1564, %v1578
      %v1581 = vmul.f32 %v1565, %v1579
      %v1583 = vlaneseq
      %v1584 = vshrl.u32 %v1583, 7
      %v1585 = vsub.s32 0, %v1584
      %v1586 = vrot.slane %v1553, %v1585
      %v1588 = vmul.f32 %v1580, %v1586
      %v1589 = vmul.f32 %v1581, %v1586
      %v1591 = vlaneseq
      %v1592 = vshrl.u32 %v1591, 7
      %v1593 = vsub.s32 0, %v1592
      %v1594 = vrot.slane %v1554, %v1593
      %v1596 = vadd.f32 %v1588, %v1594
      %v1597 = vadd.f32 %v1589, %v1594
      %1598 = vst.msk [vmem:[%s629] sm:$0xff] %vm912, %v1596
      %1599 = vst.msk [vmem:[%s629 + $0x8] sm:$0xff] %vm912, %v1597
      %p1600 = scmp.lt.s32.totalorder %s31, 1
      %s1601 = scalar_select %p1600, %s31, 1
      %s1602 = smul.addr %s1601, 2
      %s1603 = smul.addr %s1602, 8
      %s1604 = scalar_lea.vmem %s20, %s1603
      // Predicated region
      $region101: #{medsam_forward.3} parent=99 // pred_check
        %p1605 = pneg %p474
      $region102: #{medsam_forward.3} parent=99 // pred_check_branch
        %1607 = sbr.rel (%p1605) target = $region104
      $region103: #{medsam_forward.3} parent=99 // pred_region
        _
      $region104: #{medsam_forward.3} parent=99 // pred_fallthru
        _
    $region100: #{medsam_forward.3} parent=5 // pred_fallthru
      _
    %p1608 = scmp.le.s32.totalorder 2, %s26
    // Predicated region
    $region105: #{medsam_forward.3} parent=5 // pred_check
      %p1609 = pneg %p1608
    $region106: #{medsam_forward.3} parent=5 // pred_check_branch
      %1611 = sbr.rel (%p1609) target = $region108
    $region107: #{medsam_forward.3} parent=5 // pred_region
      %s1612 = ssub.s32 %s26, 2
      // Predicated region
      $region109: #{medsam_forward.3} parent=107 // pred_check
        %p1613 = pneg %p480
      $region110: #{medsam_forward.3} parent=107 // pred_check_branch
        %1615 = sbr.rel (%p1613) target = $region112
      $region111: #{medsam_forward.3} parent=107 // pred_region
        %p1616 = scmp.lt.s32.totalorder %s32, 1
        %s1617 = scalar_select %p1616, %s32, 1
        %s1618 = smul.addr %s1617, 2
        %s1619 = smul.addr %s1618, 8
        %s1620 = scalar_lea.vmem %s20, %s1619
      $region112: #{medsam_forward.3} parent=107 // pred_fallthru
        _
    $region108: #{medsam_forward.3} parent=5 // pred_fallthru
      _
  $region6: #{medsam_forward.3} parent=0 // loop_footer
    %s30 = sadd.s32 1, %s26
  $region7: #{medsam_forward.3} parent=0 // loop_footer_branch
    %25 = sbr.rel target = $region3
  $region8: #{medsam_forward.3} parent=0 // loop_exit
    _

// kernel: medsam_forward.5
$region0: #{medsam_forward.5}
  #allocation0 [shape = 'u32[]', space=smem, size = 0x4, offset = 0x4, fixed_abs, tag = 'smem constant byte address 0x4 - core index']
  #allocation1 [shape = 'u32[144,128]{1,0:T(1,128)}', space=vmem, size = 0x12000, scoped, tag = 'internal scratch']
  %s0 = inlined_call_operand.vmem [shape: f32[2,16,16], index: 0, kind: input, shape index: {}]
  %s1 = inlined_call_operand.vmem [shape: f32[32,16], index: 1, kind: input, shape index: {}]
  %s2 = inlined_call_operand.vmem [shape: f32[16,32], index: 2, kind: input, shape index: {}]
  %s3 = inlined_call_operand.hbm [shape: f32[2,32,32], index: 3, kind: output, shape index: {}]
  %s4 = sld [smem:[#allocation0]]
  $region45: #{medsam_forward.5} parent=0
    _
  %s6 = ssub.s32 1, %s4
  %s7 = scalar_select 0, %s6, %s4
  $region1: #{medsam_forward.5} parent=0
    #allocation2 [shape = 'u8[32768]{0}', space=vmem, size = 0x8000, scoped, tag = 'output window, operand 0']
    #allocation3 [shape = 's32[2]{0}', space=sflag, size = 0x8, scoped, tag = 'scoped memory for medsam_forward.5']
    %8 = vsyncpa [#allocation3], 0
    %s9 = scalar_lea.sflag [#allocation3], 1
    %10 = vsyncpa %s9, 0
    loop: start=0, step=1, limit=4
    $region2: #{medsam_forward.5} parent=1 // loop_pre_header
      _
    $region3: #{medsam_forward.5} parent=1 // loop_header
      %s12 = sphi 0, %s16
      %p13 = scmp.ge.s32.totalorder %s12, 4
      %s22 = sphi 0, %s24
      %s25 = sphi 0, %s22
      %s26 = sphi 0, %s25
      %s42 = sphi 0, %s26
      %s46 = sphi 0, %s46
      %s48 = sphi 0, %s46
      %s49 = sphi 0, %s48
      %s63 = sphi 0, %s49
      %s67 = sphi 0, %s67
      %s69 = sphi 0, %s67
      %s70 = sphi 0, %s69
      %s84 = sphi 0, %s70
      %s90 = sphi 0, %s92
      %s93 = sphi 0, %s90
      %s94 = sphi 0, %s93
      %s110 = sphi 0, %s94
    $region4: #{medsam_forward.5} parent=1 // loop_header_branch
      %15 = sbr.rel (%p13) target = $region8
    $region5: #{medsam_forward.5} parent=1 // loop_body
      %s17 = ssub.s32 %s12, 1
      %s18 = ssub.s32 %s12, 2
      %s19 = sadd.s32 %s12, 1
      %s20 = ssub.s32 %s12, %s19
      %p21 = scmp.eq.s32.totalorder %s20, 0
      %s23 = sadd.s32 %s22, 1
      %s24 = scalar_select %p21, %s22, %s23
      %p27 = pneg %p21
      %p28 = scmp.eq.s32.totalorder %s12, 1
      %p29 = por %p27, %p28
      %p30 = scmp.ne.s32.totalorder %s22, %s25
      %p31 = scmp.eq.s32.totalorder %s12, 0
      %p32 = por %p30, %p31
      %p33 = scmp.ne.s32.totalorder %s22, %s25
      %p34 = scmp.eq.s32.totalorder %s17, 1
      %p35 = por %p33, %p34
      %p36 = scmp.ne.s32.totalorder %s25, %s26
      %p37 = scmp.eq.s32.totalorder %s17, 0
      %p38 = por %p36, %p37
      %p39 = scmp.ne.s32.totalorder %s25, %s26
      %p40 = scmp.eq.s32.totalorder %s18, 1
      %p41 = por %p39, %p40
      %p43 = scmp.ne.s32.totalorder %s26, %s42
      %p44 = scmp.eq.s32.totalorder %s18, 0
      %p45 = por %p43, %p44
      %s47 = sadd.s32 %s46, 1
      %p50 = scmp.eq.s32.totalorder %s12, 1
      %p51 = scmp.ne.s32.totalorder %s46, %s48
      %p52 = scmp.eq.s32.totalorder %s12, 0
      %p53 = por %p51, %p52
      %p54 = scmp.ne.s32.totalorder %s46, %s48
      %p55 = scmp.eq.s32.totalorder %s17, 1
      %p56 = por %p54, %p55
      %p57 = scmp.ne.s32.totalorder %s48, %s49
      %p58 = scmp.eq.s32.totalorder %s17, 0
      %p59 = por %p57, %p58
      %p60 = scmp.ne.s32.totalorder %s48, %s49
      %p61 = scmp.eq.s32.totalorder %s18, 1
      %p62 = por %p60, %p61
      %p64 = scmp.ne.s32.totalorder %s49, %s63
      %p65 = scmp.eq.s32.totalorder %s18, 0
      %p66 = por %p64, %p65
      %s68 = sadd.s32 %s67, 1
      %p71 = scmp.eq.s32.totalorder %s12, 1
      %p72 = scmp.ne.s32.totalorder %s67, %s69
      %p73 = scmp.eq.s32.totalorder %s12, 0
      %p74 = por %p72, %p73
      %p75 = scmp.ne.s32.totalorder %s67, %s69
      %p76 = scmp.eq.s32.totalorder %s17, 1
      %p77 = por %p75, %p76
      %p78 = scmp.ne.s32.totalorder %s69, %s70
      %p79 = scmp.eq.s32.totalorder %s17, 0
      %p80 = por %p78, %p79
      %p81 = scmp.ne.s32.totalorder %s69, %s70
      %p82 = scmp.eq.s32.totalorder %s18, 1
      %p83 = por %p81, %p82
      %p85 = scmp.ne.s32.totalorder %s70, %s84
      %p86 = scmp.eq.s32.totalorder %s18, 0
      %p87 = por %p85, %p86
      %s88 = ssub.s32 %s12, %s19
      %p89 = scmp.eq.s32.totalorder %s88, 0
      %s91 = sadd.s32 %s90, 1
      %s92 = scalar_select %p89, %s90, %s91
      %p95 = pneg %p89
      %p96 = scmp.eq.s32.totalorder %s12, 1
      %p97 = por %p95, %p96
      %p98 = scmp.ne.s32.totalorder %s90, %s93
      %p99 = scmp.eq.s32.totalorder %s12, 0
      %p100 = por %p98, %p99
      %p101 = scmp.ne.s32.totalorder %s90, %s93
      %p102 = scmp.eq.s32.totalorder %s17, 1
      %p103 = por %p101, %p102
      %p104 = scmp.ne.s32.totalorder %s93, %s94
      %p105 = scmp.eq.s32.totalorder %s17, 0
      %p106 = por %p104, %p105
      %p107 = scmp.ne.s32.totalorder %s93, %s94
      %p108 = scmp.eq.s32.totalorder %s18, 1
      %p109 = por %p107, %p108
      %p111 = scmp.ne.s32.totalorder %s94, %s110
      %p112 = scmp.eq.s32.totalorder %s18, 0
      %p113 = por %p111, %p112
      %p114 = scmp.le.s32.totalorder 1, %s12
      %p115 = scmp.lt.s32.totalorder %s12, 3
      %p116 = pnand %p114, %p115
      %p117 = pneg %p116
      // Predicated region
      $region9: #{medsam_forward.5} parent=5 // pred_check
        _
      $region10: #{medsam_forward.5} parent=5 // pred_check_branch
        %119 = sbr.rel (%p116) target = $region12
      $region11: #{medsam_forward.5} parent=5 // pred_region
        %s120 = ssub.s32 %s12, 1
        // Predicated region
        $region13: #{medsam_forward.5} parent=11 // pred_check
          %p121 = pneg %p59
        $region14: #{medsam_forward.5} parent=11 // pred_check_branch
          %123 = sbr.rel (%p121) target = $region16
        $region15: #{medsam_forward.5} parent=11 // pred_region
          _
        $region16: #{medsam_forward.5} parent=11 // pred_fallthru
          _
        // Predicated region
        $region17: #{medsam_forward.5} parent=11 // pred_check
          %p124 = pneg %p80
        $region18: #{medsam_forward.5} parent=11 // pred_check_branch
          %126 = sbr.rel (%p124) target = $region20
        $region19: #{medsam_forward.5} parent=11 // pred_region
          _
        $region20: #{medsam_forward.5} parent=11 // pred_fallthru
          _
      $region12: #{medsam_forward.5} parent=5 // pred_fallthru
        _
      %p127 = scmp.lt.s32.totalorder %s12, 2
      // Predicated region
      $region21: #{medsam_forward.5} parent=5 // pred_check
        %p128 = pneg %p127
      $region22: #{medsam_forward.5} parent=5 // pred_check_branch
        %130 = sbr.rel (%p128) target = $region24
      $region23: #{medsam_forward.5} parent=5 // pred_region
        // Predicated region
        $region25: #{medsam_forward.5} parent=23 // pred_check
          %p131 = pneg %p32
        $region26: #{medsam_forward.5} parent=23 // pred_check_branch
          %133 = sbr.rel (%p131) target = $region28
        $region27: #{medsam_forward.5} parent=23 // pred_region
          %p134 = scmp.lt.s32.totalorder %s12, 1
          %s135 = scalar_select %p134, %s12, 1
          %s136 = smul.addr %s135, 2
          %s137 = smul.addr %s136, 8
          %s138 = scalar_lea.vmem %s0, %s137
        $region28: #{medsam_forward.5} parent=23 // pred_fallthru
          _
      $region24: #{medsam_forward.5} parent=5 // pred_fallthru
        _
      %p139 = scmp.le.s32.totalorder 1, %s12
      %p140 = scmp.lt.s32.totalorder %s12, 3
      %p141 = pnand %p139, %p140
      %p142 = pneg %p141
      // Predicated region
      $region29: #{medsam_forward.5} parent=5 // pred_check
        _
      $region30: #{medsam_forward.5} parent=5 // pred_check_branch
        %144 = sbr.rel (%p141) target = $region32
      $region31: #{medsam_forward.5} parent=5 // pred_region
        %s145 = ssub.s32 %s12, 1
        %p146 = scmp.lt.s32.totalorder %s17, 1
        %s147 = scalar_select %p146, %s17, 1
        %s148 = smul.addr %s147, 2
        %s149 = smul.addr %s148, 8
        %s150 = scalar_lea.vmem %s0, %s149
        %p151 = pneg %p38
        %p152 = pneg %p35
        %p153 = pneg %p59
        %p154 = pneg %p56
        %p155 = pneg %p80
        %p156 = pneg %p77
        %p157 = pneg %p106
        %p158 = pneg %p103
        %s159 = sand.u32 %s93, 1
        %s160 = scalar_lea.sflag [#allocation3], %s159
        %s161 = sand.u32 %s93, 1
        %s162 = smul.addr %s161, 32
        %s163 = scalar_lea.vmem [#allocation2], %s162
        %p164 = scmp.lt.s32.totalorder %s17, 1
        %s165 = scalar_select %p164, %s17, 1
        %s166 = smul.addr %s165, 2
        %s167 = smul.addr %s166, 8
        %s168 = scalar_lea.vmem %s0, %s167
        %v169 = vld [vmem:[%s1] sm:$0xff]
        %v170 = vld [vmem:[%s1 + $0x8] sm:$0xff]
        %v171 = vld [vmem:[%s1 + $0x10] sm:$0xff]
        %v172 = vld [vmem:[%s1 + $0x18] sm:$0xff]
        %v173 = vld [vmem:[%s168] sm:$0xff]
        %v174 = vld [vmem:[%s168 + $0x8] sm:$0xff]
        %vm175 = vcmask 130048
        %v177 = vsel %vm175, %v169, 0
        %v180 = vsel %vm175, %v170, 0
        %v183 = vsel %vm175, %v171, 0
        %v186 = vsel %vm175, %v172, 0
        %188 = vmatprep.subr.mxu0 0.0
        %189 = vmatpush1.msra.mxu0 %v173
        %190 = vmatprep.subr.mxu0 0.0
        %191 = vmatpush1.msra.mxu0 %v174
        %192 = vmatprep.subr.mxu0 0.0
        %193 = vmatpush1.msra.mxu0 0.0
        %194 = vmatprep.subr.mxu0 0.0
        %195 = vmatpush1.msra.mxu0 0.0
        %196 = vmatprep.subr.mxu0 0.0
        %197 = vmatpush1.msra.mxu0 0.0
        %198 = vmatprep.subr.mxu0 0.0
        %199 = vmatpush1.msra.mxu0 0.0
        %200 = vmatprep.subr.mxu0 0.0
        %201 = vmatpush1.msra.mxu0 0.0
        %202 = vmatprep.subr.mxu0 0.0
        %203 = vmatpush1.msra.mxu0 0.0
        %204 = vmatprep.subr.mxu0 0.0
        %205 = vmatpush1.msra.mxu0 0.0
        %206 = vmatprep.subr.mxu0 0.0
        %207 = vmatpush1.msra.mxu0 0.0
        %208 = vmatprep.subr.mxu0 0.0
        %209 = vmatpush1.msra.mxu0 0.0
        %210 = vmatprep.subr.mxu0 0.0
        %211 = vmatpush1.msra.mxu0 0.0
        %212 = vmatprep.subr.mxu0 0.0
        %213 = vmatpush1.msra.mxu0 0.0
        %214 = vmatprep.subr.mxu0 0.0
        %215 = vmatpush1.msra.mxu0 0.0
        %216 = vmatprep.subr.mxu0 0.0
        %217 = vmatpush1.msra.mxu0 0.0
        %218 = vmatprep.subr.mxu0 0.0
        %219 = vmatpush1.msra.mxu0 0.0
        %220 = vmatprep.subr.mxu0 0.0
        %221 = vmatpush1.msra.mxu0 0.0
        %222 = vmatprep.subr.mxu0 0.0
        %223 = vmatpush1.msra.mxu0 0.0
        %224 = vmatprep.subr.mxu0 0.0
        %225 = vmatpush1.msra.mxu0 0.0
        %226 = vmatprep.subr.mxu0 0.0
        %227 = vmatpush1.msra.mxu0 0.0
        %228 = vmatprep.subr.mxu0 0.0
        %229 = vmatpush1.msra.mxu0 0.0
        %230 = vmatprep.subr.mxu0 0.0
        %231 = vmatpush1.msra.mxu0 0.0
        %232 = vmatprep.subr.mxu0 0.0
        %233 = vmatpush1.msra.mxu0 0.0
        %234 = vmatprep.subr.mxu0 0.0
        %235 = vmatpush1.msra.mxu0 0.0
        %236 = vmatprep.subr.mxu0 0.0
        %237 = vmatpush1.msra.mxu0 0.0
        %238 = vmatprep.subr.mxu0 0.0
        %239 = vmatpush1.msra.mxu0 0.0
        %240 = vmatprep.subr.mxu0 0.0
        %241 = vmatpush1.msra.mxu0 0.0
        %242 = vmatprep.subr.mxu0 0.0
        %243 = vmatpush1.msra.mxu0 0.0
        %244 = vmatprep.subr.mxu0 0.0
        %245 = vmatpush1.msra.mxu0 0.0
        %246 = vmatprep.subr.mxu0 0.0
        %247 = vmatpush1.msra.mxu0 0.0
        %248 = vmatprep.subr.mxu0 0.0
        %249 = vmatpush1.msra.mxu0 0.0
        %250 = vmatprep.subr.mxu0 0.0
        %251 = vmatpush1.msra.mxu0 0.0
        %252 = vmatprep.mubr.f32.mxu0 0.0
        %253 = vmatmul.mubr.f32.gmra.mrb[0].mxu0 %v177
        %v254 = vpop.f32.mrb[0].mxu0
        %v255 = vadd.f32 0.0, %v254
        %v256 = vpop.f32.mrb[0].mxu0
        %257 = vmatprep.mubr.f32.mxu0 0.0
        %258 = vmatmul.mubr.f32.gmra.mrb[0].mxu0 %v180
        %v259 = vpop.f32.mrb[0].mxu0
        %v260 = vadd.f32 0.0, %v259
        %v261 = vpop.f32.mrb[0].mxu0
        %262 = vmatprep.mubr.f32.mxu0 0.0
        %263 = vmatmul.mubr.f32.gmra.mrb[0].mxu0 %v183
        %v264 = vpop.f32.mrb[0].mxu0
        %v265 = vadd.f32 0.0, %v264
        %v266 = vpop.f32.mrb[0].mxu0
        %267 = vmatprep.mubr.f32.mxu0 0.0
        %268 = vmatmul.mubr.f32.gmra.mrb[0].mxu0 %v186
        %v269 = vpop.f32.mrb[0].mxu0
        %v270 = vadd.f32 0.0, %v269
        %v271 = vpop.f32.mrb[0].mxu0
        %272 = vdwg.mxu0
        %v273 = vld [vmem:[%s2] sm:$0xff]
        %v274 = vld [vmem:[%s2 + $0x8] sm:$0xff]
        %v276 = vsel %vm175, %v255, 0
        %v279 = vsel %vm175, %v260, 0
        %v282 = vsel %vm175, %v265, 0
        %v285 = vsel %vm175, %v270, 0
        %287 = vmatprep.subr.mxu0 0.0
        %288 = vmatpush1.msra.mxu0 %v273
        %289 = vmatprep.subr.mxu0 0.0
        %290 = vmatpush1.msra.mxu0 %v274
        %291 = vmatprep.subr.mxu0 0.0
        %292 = vmatpush1.msra.mxu0 0.0
        %293 = vmatprep.subr.mxu0 0.0
        %294 = vmatpush1.msra.mxu0 0.0
        %295 = vmatprep.subr.mxu0 0.0
        %296 = vmatpush1.msra.mxu0 0.0
        %297 = vmatprep.subr.mxu0 0.0
        %298 = vmatpush1.msra.mxu0 0.0
        %299 = vmatprep.subr.mxu0 0.0
        %300 = vmatpush1.msra.mxu0 0.0
        %301 = vmatprep.subr.mxu0 0.0
        %302 = vmatpush1.msra.mxu0 0.0
        %303 = vmatprep.subr.mxu0 0.0
        %304 = vmatpush1.msra.mxu0 0.0
        %305 = vmatprep.subr.mxu0 0.0
        %306 = vmatpush1.msra.mxu0 0.0
        %307 = vmatprep.subr.mxu0 0.0
        %308 = vmatpush1.msra.mxu0 0.0
        %309 = vmatprep.subr.mxu0 0.0
        %310 = vmatpush1.msra.mxu0 0.0
        %311 = vmatprep.subr.mxu0 0.0
        %312 = vmatpush1.msra.mxu0 0.0
        %313 = vmatprep.subr.mxu0 0.0
        %314 = vmatpush1.msra.mxu0 0.0
        %315 = vmatprep.subr.mxu0 0.0
        %316 = vmatpush1.msra.mxu0 0.0
        %317 = vmatprep.subr.mxu0 0.0
        %318 = vmatpush1.msra.mxu0 0.0
        %319 = vmatprep.subr.mxu0 0.0
        %320 = vmatpush1.msra.mxu0 0.0
        %321 = vmatprep.subr.mxu0 0.0
        %322 = vmatpush1.msra.mxu0 0.0
        %323 = vmatprep.subr.mxu0 0.0
        %324 = vmatpush1.msra.mxu0 0.0
        %325 = vmatprep.subr.mxu0 0.0
        %326 = vmatpush1.msra.mxu0 0.0
        %327 = vmatprep.subr.mxu0 0.0
        %328 = vmatpush1.msra.mxu0 0.0
        %329 = vmatprep.subr.mxu0 0.0
        %330 = vmatpush1.msra.mxu0 0.0
        %331 = vmatprep.subr.mxu0 0.0
        %332 = vmatpush1.msra.mxu0 0.0
        %333 = vmatprep.subr.mxu0 0.0
        %334 = vmatpush1.msra.mxu0 0.0
        %335 = vmatprep.subr.mxu0 0.0
        %336 = vmatpush1.msra.mxu0 0.0
        %337 = vmatprep.subr.mxu0 0.0
        %338 = vmatpush1.msra.mxu0 0.0
        %339 = vmatprep.subr.mxu0 0.0
        %340 = vmatpush1.msra.mxu0 0.0
        %341 = vmatprep.subr.mxu0 0.0
        %342 = vmatpush1.msra.mxu0 0.0
        %343 = vmatprep.subr.mxu0 0.0
        %344 = vmatpush1.msra.mxu0 0.0
        %345 = vmatprep.subr.mxu0 0.0
        %346 = vmatpush1.msra.mxu0 0.0
        %347 = vmatprep.subr.mxu0 0.0
        %348 = vmatpush1.msra.mxu0 0.0
        %349 = vmatprep.subr.mxu0 0.0
        %350 = vmatpush1.msra.mxu0 0.0
        %351 = vmatprep.mubr.f32.mxu0 0.0
        %352 = vmatmul.mubr.f32.gmra.mrb[0].mxu0 %v276
        %v353 = vpop.f32.mrb[0].mxu0
        %v354 = vadd.f32 0.0, %v353
        %v355 = vpop.f32.mrb[0].mxu0
        %356 = vmatprep.mubr.f32.mxu0 0.0
        %357 = vmatmul.mubr.f32.gmra.mrb[0].mxu0 %v279
        %v358 = vpop.f32.mrb[0].mxu0
        %v359 = vadd.f32 0.0, %v358
        %v360 = vpop.f32.mrb[0].mxu0
        %361 = vmatprep.mubr.f32.mxu0 0.0
        %362 = vmatmul.mubr.f32.gmra.mrb[0].mxu0 %v282
        %v363 = vpop.f32.mrb[0].mxu0
        %v364 = vadd.f32 0.0, %v363
        %v365 = vpop.f32.mrb[0].mxu0
        %366 = vmatprep.mubr.f32.mxu0 0.0
        %367 = vmatmul.mubr.f32.gmra.mrb[0].mxu0 %v285
        %v368 = vpop.f32.mrb[0].mxu0
        %v369 = vadd.f32 0.0, %v368
        %v370 = vpop.f32.mrb[0].mxu0
        %371 = vdwg.mxu0
        %vm372 = vcmask 261120
        %373 = vst.msk [vmem:[%s163] sm:$0xff] %vm372, %v354
        %374 = vst.msk [vmem:[%s163 + $0x8] sm:$0xff] %vm372, %v359
        %375 = vst.msk [vmem:[%s163 + $0x10] sm:$0xff] %vm372, %v364
        %376 = vst.msk [vmem:[%s163 + $0x18] sm:$0xff] %vm372, %v369
        %s377 = sand.u32 %s93, 1
        %s378 = scalar_lea.sflag [#allocation3], %s377
        %s379 = sand.u32 %s93, 1
        %s380 = smul.addr %s379, 32
        %s381 = scalar_lea.vmem [#allocation2], %s380
        // Predicated region
        $region33: #{medsam_forward.5} parent=31 // pred_check
          %p382 = pneg %p103
        $region34: #{medsam_forward.5} parent=31 // pred_check_branch
          %384 = sbr.rel (%p382) target = $region36
        $region35: #{medsam_forward.5} parent=31 // pred_region
          %s386 = ssub.s32 512, 512
          %387 = vsyncadd %s378, %s386
          %s388 = smul.addr %s17, 4
          %s389 = smul.addr %s388, 128
          %s390 = scalar_lea.hbm %s3, %s389
          %s391 = sshll.u32 %s381, 4
          %s392 = int_to_ptr.vmem [resolvable:$true] %s391
          %397 = dma.vmem_to_hbm [thread:$0]  %s392, 512, %s390, %s378, 128, 128, 8
        $region36: #{medsam_forward.5} parent=31 // pred_fallthru
          _
      $region32: #{medsam_forward.5} parent=5 // pred_fallthru
        _
      %p398 = scmp.le.s32.totalorder 2, %s12
      // Predicated region
      $region37: #{medsam_forward.5} parent=5 // pred_check
        %p399 = pneg %p398
      $region38: #{medsam_forward.5} parent=5 // pred_check_branch
        %401 = sbr.rel (%p399) target = $region40
      $region39: #{medsam_forward.5} parent=5 // pred_region
        %s402 = ssub.s32 %s12, 2
        // Predicated region
        $region41: #{medsam_forward.5} parent=39 // pred_check
          %p403 = pneg %p109
        $region42: #{medsam_forward.5} parent=39 // pred_check_branch
          %405 = sbr.rel (%p403) target = $region44
        $region43: #{medsam_forward.5} parent=39 // pred_region
          %s406 = sand.u32 %s94, 1
          %s407 = scalar_lea.sflag [#allocation3], %s406
          %s408 = sand.u32 %s94, 1
          %s409 = smul.addr %s408, 32
          %s410 = scalar_lea.vmem [#allocation2], %s409
          %411 = dma.done %s407, 512
        $region44: #{medsam_forward.5} parent=39 // pred_fallthru
          _
      $region40: #{medsam_forward.5} parent=5 // pred_fallthru
        _
    $region6: #{medsam_forward.5} parent=1 // loop_footer
      %s16 = sadd.s32 1, %s12
    $region7: #{medsam_forward.5} parent=1 // loop_footer_branch
      %11 = sbr.rel target = $region3
    $region8: #{medsam_forward.5} parent=1 // loop_exit
      _
    %412 = vsyncpa [#allocation3], 1
    %s413 = scalar_lea.sflag [#allocation3], 1
    %414 = vsyncpa %s413, 1

// kernel: medsam_forward.4
$region0: #{medsam_forward.4}
  #allocation0 [shape = 'u32[]', space=smem, size = 0x4, offset = 0x4, fixed_abs, tag = 'smem constant byte address 0x4 - core index']
  #allocation1 [shape = 'u32[144,128]{1,0:T(1,128)}', space=vmem, size = 0x12000, scoped, tag = 'internal scratch']
  %s0 = inlined_call_operand.smem [shape: u32[34], index: -1, kind: input, shape index: {}]
  %s1 = sld [smem:[%s0]]
  %s2 = scalar_lea.smem %s0, 1
  %s3 = sld [smem:[%s2]]
  %s4 = scalar_lea.smem %s0, 2
  %s5 = sld [smem:[%s4]]
  %s6 = scalar_lea.smem %s0, 3
  %s7 = sld [smem:[%s6]]
  %s8 = scalar_lea.smem %s0, 4
  %s9 = sld [smem:[%s8]]
  %s10 = scalar_lea.smem %s0, 5
  %s11 = sld [smem:[%s10]]
  %s12 = scalar_lea.smem %s0, 6
  %s13 = sld [smem:[%s12]]
  %s14 = scalar_lea.smem %s0, 7
  %s15 = sld [smem:[%s14]]
  %s16 = scalar_lea.smem %s0, 8
  %s17 = sld [smem:[%s16]]
  %s18 = scalar_lea.smem %s0, 9
  %s19 = sld [smem:[%s18]]
  %s20 = scalar_lea.smem %s0, 10
  %s21 = sld [smem:[%s20]]
  %s22 = scalar_lea.smem %s0, 11
  %s23 = sld [smem:[%s22]]
  %s24 = scalar_lea.smem %s0, 12
  %s25 = sld [smem:[%s24]]
  %s26 = scalar_lea.smem %s0, 13
  %s27 = sld [smem:[%s26]]
  %s28 = scalar_lea.smem %s0, 14
  %s29 = sld [smem:[%s28]]
  %s30 = scalar_lea.smem %s0, 15
  %s31 = sld [smem:[%s30]]
  %s32 = scalar_lea.smem %s0, 16
  %s33 = sld [smem:[%s32]]
  %s34 = scalar_lea.smem %s0, 17
  %s35 = sld [smem:[%s34]]
  %s36 = scalar_lea.smem %s0, 18
  %s37 = sld [smem:[%s36]]
  %s38 = scalar_lea.smem %s0, 19
  %s39 = sld [smem:[%s38]]
  %s40 = scalar_lea.smem %s0, 20
  %s41 = sld [smem:[%s40]]
  %s42 = scalar_lea.smem %s0, 21
  %s43 = sld [smem:[%s42]]
  %s44 = scalar_lea.smem %s0, 22
  %s45 = sld [smem:[%s44]]
  %s46 = scalar_lea.smem %s0, 23
  %s47 = sld [smem:[%s46]]
  %s48 = scalar_lea.smem %s0, 24
  %s49 = sld [smem:[%s48]]
  %s50 = scalar_lea.smem %s0, 25
  %s51 = sld [smem:[%s50]]
  %s52 = scalar_lea.smem %s0, 26
  %s53 = sld [smem:[%s52]]
  %s54 = scalar_lea.smem %s0, 27
  %s55 = sld [smem:[%s54]]
  %s56 = scalar_lea.smem %s0, 28
  %s57 = sld [smem:[%s56]]
  %s58 = scalar_lea.smem %s0, 29
  %s59 = sld [smem:[%s58]]
  %s60 = scalar_lea.smem %s0, 30
  %s61 = sld [smem:[%s60]]
  %s62 = scalar_lea.smem %s0, 31
  %s63 = sld [smem:[%s62]]
  %s64 = scalar_lea.smem %s0, 32
  %s65 = sld [smem:[%s64]]
  %s66 = scalar_lea.smem %s0, 33
  %s67 = sld [smem:[%s66]]
  %s68 = sld [smem:[#allocation0]]
  $region193: #{medsam_forward.4} parent=0
    _
  %s70 = ssub.s32 1, %s68
  %s71 = scalar_select 0, %s70, %s68
  $region1: #{medsam_forward.4} parent=0
    #allocation2 [shape = 'u8[512]{0}', space=vmem, size = 0x400, scoped, tag = 'input window, operand 19, single buffered']
    #allocation3 [shape = 's32[2]{0}', space=sflag, size = 0x8, scoped, tag = 'scoped memory for medsam_forward.4']
    #allocation4 [shape = 'u8[512]{0}', space=vmem, size = 0x400, scoped, tag = 'input window, operand 20, single buffered']
    #allocation5 [shape = 's32[1]{0}', space=sflag, size = 0x4, scoped, tag = 'scoped memory for medsam_forward.4']
    #allocation6 [shape = 'u8[512]{0}', space=vmem, size = 0x400, scoped, tag = 'input window, operand 21, single buffered']
    #allocation7 [shape = 'u8[512]{0}', space=vmem, size = 0x400, scoped, tag = 'input window, operand 24, single buffered']
    #allocation8 [shape = 's32[1]{0}', space=sflag, size = 0x4, scoped, tag = 'scoped memory for medsam_forward.4']
    #allocation9 [shape = 'u8[512]{0}', space=vmem, size = 0x400, scoped, tag = 'input window, operand 26, single buffered']
    #allocation10 [shape = 'u8[512]{0}', space=vmem, size = 0x400, scoped, tag = 'input window, operand 28, single buffered']
    #allocation11 [shape = 's32[1]{0}', space=sflag, size = 0x4, scoped, tag = 'scoped memory for medsam_forward.4']
    #allocation12 [shape = 'u8[512]{0}', space=vmem, size = 0x400, scoped, tag = 'input window, operand 30, single buffered']
    %72 = vsyncpa [#allocation3], 0
    %73 = vsyncpa [#allocation5], 0
    %74 = vsyncpa [#allocation8], 0
    %75 = vsyncpa [#allocation11], 0
    loop: start=0, step=1, limit=4
    $region2: #{medsam_forward.4} parent=1 // loop_pre_header
      _
    $region3: #{medsam_forward.4} parent=1 // loop_header
      %s77 = sphi 0, %s81
      %p78 = scmp.ge.s32.totalorder %s77, 4
      %s87 = sphi 0, %s89
      %s90 = sphi 0, %s87
      %s91 = sphi 0, %s90
      %s107 = sphi 0, %s91
      %s113 = sphi 0, %s115
      %s116 = sphi 0, %s113
      %s117 = sphi 0, %s116
      %s133 = sphi 0, %s117
      %s137 = sphi 0, %s137
      %s139 = sphi 0, %s137
      %s140 = sphi 0, %s139
      %s154 = sphi 0, %s140
      %s158 = sphi 0, %s158
      %s160 = sphi 0, %s158
      %s161 = sphi 0, %s160
      %s175 = sphi 0, %s161
      %s179 = sphi 0, %s179
      %s181 = sphi 0, %s179
      %s182 = sphi 0, %s181
      %s196 = sphi 0, %s182
      %s200 = sphi 0, %s200
      %s202 = sphi 0, %s200
      %s203 = sphi 0, %s202
      %s217 = sphi 0, %s203
      %s221 = sphi 0, %s221
      %s223 = sphi 0, %s221
      %s224 = sphi 0, %s223
      %s238 = sphi 0, %s224
      %s242 = sphi 0, %s242
      %s244 = sphi 0, %s242
      %s245 = sphi 0, %s244
      %s259 = sphi 0, %s245
      %s263 = sphi 0, %s263
      %s265 = sphi 0, %s263
      %s266 = sphi 0, %s265
      %s280 = sphi 0, %s266
      %s284 = sphi 0, %s284
      %s286 = sphi 0, %s284
      %s287 = sphi 0, %s286
      %s301 = sphi 0, %s287
      %s305 = sphi 0, %s305
      %s307 = sphi 0, %s305
      %s308 = sphi 0, %s307
      %s322 = sphi 0, %s308
      %s326 = sphi 0, %s326
      %s328 = sphi 0, %s326
      %s329 = sphi 0, %s328
      %s343 = sphi 0, %s329
      %s347 = sphi 0, %s347
      %s349 = sphi 0, %s347
      %s350 = sphi 0, %s349
      %s364 = sphi 0, %s350
      %s368 = sphi 0, %s368
      %s370 = sphi 0, %s368
      %s371 = sphi 0, %s370
      %s385 = sphi 0, %s371
      %s389 = sphi 0, %s389
      %s391 = sphi 0, %s389
      %s392 = sphi 0, %s391
      %s406 = sphi 0, %s392
      %s410 = sphi 0, %s410
      %s412 = sphi 0, %s410
      %s413 = sphi 0, %s412
      %s427 = sphi 0, %s413
      %s431 = sphi 0, %s431
      %s433 = sphi 0, %s431
      %s434 = sphi 0, %s433
      %s448 = sphi 0, %s434
      %s452 = sphi 0, %s452
      %s454 = sphi 0, %s452
      %s455 = sphi 0, %s454
      %s469 = sphi 0, %s455
      %s473 = sphi 0, %s473
      %s475 = sphi 0, %s473
      %s476 = sphi 0, %s475
      %s490 = sphi 0, %s476
      %s494 = sphi 0, %s494
      %s496 = sphi 0, %s494
      %s497 = sphi 0, %s496
      %s511 = sphi 0, %s497
      %s515 = sphi 0, %s515
      %s517 = sphi 0, %s515
      %s518 = sphi 0, %s517
      %s532 = sphi 0, %s518
      %s536 = sphi 0, %s536
      %s538 = sphi 0, %s536
      %s539 = sphi 0, %s538
      %s553 = sphi 0, %s539
      %s557 = sphi 0, %s557
      %s559 = sphi 0, %s557
      %s560 = sphi 0, %s559
      %s574 = sphi 0, %s560
      %s578 = sphi 0, %s578
      %s580 = sphi 0, %s578
      %s581 = sphi 0, %s580
      %s595 = sphi 0, %s581
      %s599 = sphi 0, %s599
      %s601 = sphi 0, %s599
      %s602 = sphi 0, %s601
      %s616 = sphi 0, %s602
      %s620 = sphi 0, %s620
      %s622 = sphi 0, %s620
      %s623 = sphi 0, %s622
      %s637 = sphi 0, %s623
      %s641 = sphi 0, %s641
      %s643 = sphi 0, %s641
      %s644 = sphi 0, %s643
      %s658 = sphi 0, %s644
      %s662 = sphi 0, %s662
      %s664 = sphi 0, %s662
      %s665 = sphi 0, %s664
      %s679 = sphi 0, %s665
      %s683 = sphi 0, %s683
      %s685 = sphi 0, %s683
      %s686 = sphi 0, %s685
      %s700 = sphi 0, %s686
      %s704 = sphi 0, %s704
      %s706 = sphi 0, %s704
      %s707 = sphi 0, %s706
      %s721 = sphi 0, %s707
      %s725 = sphi 0, %s725
      %s727 = sphi 0, %s725
      %s728 = sphi 0, %s727
      %s742 = sphi 0, %s728
      %s746 = sphi 0, %s746
      %s748 = sphi 0, %s746
      %s749 = sphi 0, %s748
      %s763 = sphi 0, %s749
      %s767 = sphi 0, %s767
      %s769 = sphi 0, %s767
      %s770 = sphi 0, %s769
      %s784 = sphi 0, %s770
      %s790 = sphi 0, %s792
      %s793 = sphi 0, %s790
      %s794 = sphi 0, %s793
      %s810 = sphi 0, %s794
    $region4: #{medsam_forward.4} parent=1 // loop_header_branch
      %80 = sbr.rel (%p78) target = $region8
    $region5: #{medsam_forward.4} parent=1 // loop_body
      %s82 = ssub.s32 %s77, 1
      %s83 = ssub.s32 %s77, 2
      %s84 = sadd.s32 %s77, 1
      %s85 = ssub.s32 %s77, %s84
      %p86 = scmp.eq.s32.totalorder %s85, 0
      %s88 = sadd.s32 %s87, 1
      %s89 = scalar_select %p86, %s87, %s88
      %p92 = pneg %p86
      %p93 = scmp.eq.s32.totalorder %s77, 1
      %p94 = por %p92, %p93
      %p95 = scmp.ne.s32.totalorder %s87, %s90
      %p96 = scmp.eq.s32.totalorder %s77, 0
      %p97 = por %p95, %p96
      %p98 = scmp.ne.s32.totalorder %s87, %s90
      %p99 = scmp.eq.s32.totalorder %s82, 1
      %p100 = por %p98, %p99
      %p101 = scmp.ne.s32.totalorder %s90, %s91
      %p102 = scmp.eq.s32.totalorder %s82, 0
      %p103 = por %p101, %p102
      %p104 = scmp.ne.s32.totalorder %s90, %s91
      %p105 = scmp.eq.s32.totalorder %s83, 1
      %p106 = por %p104, %p105
      %p108 = scmp.ne.s32.totalorder %s91, %s107
      %p109 = scmp.eq.s32.totalorder %s83, 0
      %p110 = por %p108, %p109
      %s111 = ssub.s32 %s77, %s84
      %p112 = scmp.eq.s32.totalorder %s111, 0
      %s114 = sadd.s32 %s113, 1
      %s115 = scalar_select %p112, %s113, %s114
      %p118 = pneg %p112
      %p119 = scmp.eq.s32.totalorder %s77, 1
      %p120 = por %p118, %p119
      %p121 = scmp.ne.s32.totalorder %s113, %s116
      %p122 = scmp.eq.s32.totalorder %s77, 0
      %p123 = por %p121, %p122
      %p124 = scmp.ne.s32.totalorder %s113, %s116
      %p125 = scmp.eq.s32.totalorder %s82, 1
      %p126 = por %p124, %p125
      %p127 = scmp.ne.s32.totalorder %s116, %s117
      %p128 = scmp.eq.s32.totalorder %s82, 0
      %p129 = por %p127, %p128
      %p130 = scmp.ne.s32.totalorder %s116, %s117
      %p131 = scmp.eq.s32.totalorder %s83, 1
      %p132 = por %p130, %p131
      %p134 = scmp.ne.s32.totalorder %s117, %s133
      %p135 = scmp.eq.s32.totalorder %s83, 0
      %p136 = por %p134, %p135
      %s138 = sadd.s32 %s137, 1
      %p141 = scmp.eq.s32.totalorder %s77, 1
      %p142 = scmp.ne.s32.totalorder %s137, %s139
      %p143 = scmp.eq.s32.totalorder %s77, 0
      %p144 = por %p142, %p143
      %p145 = scmp.ne.s32.totalorder %s137, %s139
      %p146 = scmp.eq.s32.totalorder %s82, 1
      %p147 = por %p145, %p146
      %p148 = scmp.ne.s32.totalorder %s139, %s140
      %p149 = scmp.eq.s32.totalorder %s82, 0
      %p150 = por %p148, %p149
      %p151 = scmp.ne.s32.totalorder %s139, %s140
      %p152 = scmp.eq.s32.totalorder %s83, 1
      %p153 = por %p151, %p152
      %p155 = scmp.ne.s32.totalorder %s140, %s154
      %p156 = scmp.eq.s32.totalorder %s83, 0
      %p157 = por %p155, %p156
      %s159 = sadd.s32 %s158, 1
      %p162 = scmp.eq.s32.totalorder %s77, 1
      %p163 = scmp.ne.s32.totalorder %s158, %s160
      %p164 = scmp.eq.s32.totalorder %s77, 0
      %p165 = por %p163, %p164
      %p166 = scmp.ne.s32.totalorder %s158, %s160
      %p167 = scmp.eq.s32.totalorder %s82, 1
      %p168 = por %p166, %p167
      %p169 = scmp.ne.s32.totalorder %s160, %s161
      %p170 = scmp.eq.s32.totalorder %s82, 0
      %p171 = por %p169, %p170
      %p172 = scmp.ne.s32.totalorder %s160, %s161
      %p173 = scmp.eq.s32.totalorder %s83, 1
      %p174 = por %p172, %p173
      %p176 = scmp.ne.s32.totalorder %s161, %s175
      %p177 = scmp.eq.s32.totalorder %s83, 0
      %p178 = por %p176, %p177
      %s180 = sadd.s32 %s179, 1
      %p183 = scmp.eq.s32.totalorder %s77, 1
      %p184 = scmp.ne.s32.totalorder %s179, %s181
      %p185 = scmp.eq.s32.totalorder %s77, 0
      %p186 = por %p184, %p185
      %p187 = scmp.ne.s32.totalorder %s179, %s181
      %p188 = scmp.eq.s32.totalorder %s82, 1
      %p189 = por %p187, %p188
      %p190 = scmp.ne.s32.totalorder %s181, %s182
      %p191 = scmp.eq.s32.totalorder %s82, 0
      %p192 = por %p190, %p191
      %p193 = scmp.ne.s32.totalorder %s181, %s182
      %p194 = scmp.eq.s32.totalorder %s83, 1
      %p195 = por %p193, %p194
      %p197 = scmp.ne.s32.totalorder %s182, %s196
      %p198 = scmp.eq.s32.totalorder %s83, 0
      %p199 = por %p197, %p198
      %s201 = sadd.s32 %s200, 1
      %p204 = scmp.eq.s32.totalorder %s77, 1
      %p205 = scmp.ne.s32.totalorder %s200, %s202
      %p206 = scmp.eq.s32.totalorder %s77, 0
      %p207 = por %p205, %p206
      %p208 = scmp.ne.s32.totalorder %s200, %s202
      %p209 = scmp.eq.s32.totalorder %s82, 1
      %p210 = por %p208, %p209
      %p211 = scmp.ne.s32.totalorder %s202, %s203
      %p212 = scmp.eq.s32.totalorder %s82, 0
      %p213 = por %p211, %p212
      %p214 = scmp.ne.s32.totalorder %s202, %s203
      %p215 = scmp.eq.s32.totalorder %s83, 1
      %p216 = por %p214, %p215
      %p218 = scmp.ne.s32.totalorder %s203, %s217
      %p219 = scmp.eq.s32.totalorder %s83, 0
      %p220 = por %p218, %p219
      %s222 = sadd.s32 %s221, 1
      %p225 = scmp.eq.s32.totalorder %s77, 1
      %p226 = scmp.ne.s32.totalorder %s221, %s223
      %p227 = scmp.eq.s32.totalorder %s77, 0
      %p228 = por %p226, %p227
      %p229 = scmp.ne.s32.totalorder %s221, %s223
      %p230 = scmp.eq.s32.totalorder %s82, 1
      %p231 = por %p229, %p230
      %p232 = scmp.ne.s32.totalorder %s223, %s224
      %p233 = scmp.eq.s32.totalorder %s82, 0
      %p234 = por %p232, %p233
      %p235 = scmp.ne.s32.totalorder %s223, %s224
      %p236 = scmp.eq.s32.totalorder %s83, 1
      %p237 = por %p235, %p236
      %p239 = scmp.ne.s32.totalorder %s224, %s238
      %p240 = scmp.eq.s32.totalorder %s83, 0
      %p241 = por %p239, %p240
      %s243 = sadd.s32 %s242, 1
      %p246 = scmp.eq.s32.totalorder %s77, 1
      %p247 = scmp.ne.s32.totalorder %s242, %s244
      %p248 = scmp.eq.s32.totalorder %s77, 0
      %p249 = por %p247, %p248
      %p250 = scmp.ne.s32.totalorder %s242, %s244
      %p251 = scmp.eq.s32.totalorder %s82, 1
      %p252 = por %p250, %p251
      %p253 = scmp.ne.s32.totalorder %s244, %s245
      %p254 = scmp.eq.s32.totalorder %s82, 0
      %p255 = por %p253, %p254
      %p256 = scmp.ne.s32.totalorder %s244, %s245
      %p257 = scmp.eq.s32.totalorder %s83, 1
      %p258 = por %p256, %p257
      %p260 = scmp.ne.s32.totalorder %s245, %s259
      %p261 = scmp.eq.s32.totalorder %s83, 0
      %p262 = por %p260, %p261
      %s264 = sadd.s32 %s263, 1
      %p267 = scmp.eq.s32.totalorder %s77, 1
      %p268 = scmp.ne.s32.totalorder %s263, %s265
      %p269 = scmp.eq.s32.totalorder %s77, 0
      %p270 = por %p268, %p269
      %p271 = scmp.ne.s32.totalorder %s263, %s265
      %p272 = scmp.eq.s32.totalorder %s82, 1
      %p273 = por %p271, %p272
      %p274 = scmp.ne.s32.totalorder %s265, %s266
      %p275 = scmp.eq.s32.totalorder %s82, 0
      %p276 = por %p274, %p275
      %p277 = scmp.ne.s32.totalorder %s265, %s266
      %p278 = scmp.eq.s32.totalorder %s83, 1
      %p279 = por %p277, %p278
      %p281 = scmp.ne.s32.totalorder %s266, %s280
      %p282 = scmp.eq.s32.totalorder %s83, 0
      %p283 = por %p281, %p282
      %s285 = sadd.s32 %s284, 1
      %p288 = scmp.eq.s32.totalorder %s77, 1
      %p289 = scmp.ne.s32.totalorder %s284, %s286
      %p290 = scmp.eq.s32.totalorder %s77, 0
      %p291 = por %p289, %p290
      %p292 = scmp.ne.s32.totalorder %s284, %s286
      %p293 = scmp.eq.s32.totalorder %s82, 1
      %p294 = por %p292, %p293
      %p295 = scmp.ne.s32.totalorder %s286, %s287
      %p296 = scmp.eq.s32.totalorder %s82, 0
      %p297 = por %p295, %p296
      %p298 = scmp.ne.s32.totalorder %s286, %s287
      %p299 = scmp.eq.s32.totalorder %s83, 1
      %p300 = por %p298, %p299
      %p302 = scmp.ne.s32.totalorder %s287, %s301
      %p303 = scmp.eq.s32.totalorder %s83, 0
      %p304 = por %p302, %p303
      %s306 = sadd.s32 %s305, 1
      %p309 = scmp.eq.s32.totalorder %s77, 1
      %p310 = scmp.ne.s32.totalorder %s305, %s307
      %p311 = scmp.eq.s32.totalorder %s77, 0
      %p312 = por %p310, %p311
      %p313 = scmp.ne.s32.totalorder %s305, %s307
      %p314 = scmp.eq.s32.totalorder %s82, 1
      %p315 = por %p313, %p314
      %p316 = scmp.ne.s32.totalorder %s307, %s308
      %p317 = scmp.eq.s32.totalorder %s82, 0
      %p318 = por %p316, %p317
      %p319 = scmp.ne.s32.totalorder %s307, %s308
      %p320 = scmp.eq.s32.totalorder %s83, 1
      %p321 = por %p319, %p320
      %p323 = scmp.ne.s32.totalorder %s308, %s322
      %p324 = scmp.eq.s32.totalorder %s83, 0
      %p325 = por %p323, %p324
      %s327 = sadd.s32 %s326, 1
      %p330 = scmp.eq.s32.totalorder %s77, 1
      %p331 = scmp.ne.s32.totalorder %s326, %s328
      %p332 = scmp.eq.s32.totalorder %s77, 0
      %p333 = por %p331, %p332
      %p334 = scmp.ne.s32.totalorder %s326, %s328
      %p335 = scmp.eq.s32.totalorder %s82, 1
      %p336 = por %p334, %p335
      %p337 = scmp.ne.s32.totalorder %s328, %s329
      %p338 = scmp.eq.s32.totalorder %s82, 0
      %p339 = por %p337, %p338
      %p340 = scmp.ne.s32.totalorder %s328, %s329
      %p341 = scmp.eq.s32.totalorder %s83, 1
      %p342 = por %p340, %p341
      %p344 = scmp.ne.s32.totalorder %s329, %s343
      %p345 = scmp.eq.s32.totalorder %s83, 0
      %p346 = por %p344, %p345
      %s348 = sadd.s32 %s347, 1
      %p351 = scmp.eq.s32.totalorder %s77, 1
      %p352 = scmp.ne.s32.totalorder %s347, %s349
      %p353 = scmp.eq.s32.totalorder %s77, 0
      %p354 = por %p352, %p353
      %p355 = scmp.ne.s32.totalorder %s347, %s349
      %p356 = scmp.eq.s32.totalorder %s82, 1
      %p357 = por %p355, %p356
      %p358 = scmp.ne.s32.totalorder %s349, %s350
      %p359 = scmp.eq.s32.totalorder %s82, 0
      %p360 = por %p358, %p359
      %p361 = scmp.ne.s32.totalorder %s349, %s350
      %p362 = scmp.eq.s32.totalorder %s83, 1
      %p363 = por %p361, %p362
      %p365 = scmp.ne.s32.totalorder %s350, %s364
      %p366 = scmp.eq.s32.totalorder %s83, 0
      %p367 = por %p365, %p366
      %s369 = sadd.s32 %s368, 1
      %p372 = scmp.eq.s32.totalorder %s77, 1
      %p373 = scmp.ne.s32.totalorder %s368, %s370
      %p374 = scmp.eq.s32.totalorder %s77, 0
      %p375 = por %p373, %p374
      %p376 = scmp.ne.s32.totalorder %s368, %s370
      %p377 = scmp.eq.s32.totalorder %s82, 1
      %p378 = por %p376, %p377
      %p379 = scmp.ne.s32.totalorder %s370, %s371
      %p380 = scmp.eq.s32.totalorder %s82, 0
      %p381 = por %p379, %p380
      %p382 = scmp.ne.s32.totalorder %s370, %s371
      %p383 = scmp.eq.s32.totalorder %s83, 1
      %p384 = por %p382, %p383
      %p386 = scmp.ne.s32.totalorder %s371, %s385
      %p387 = scmp.eq.s32.totalorder %s83, 0
      %p388 = por %p386, %p387
      %s390 = sadd.s32 %s389, 1
      %p393 = scmp.eq.s32.totalorder %s77, 1
      %p394 = scmp.ne.s32.totalorder %s389, %s391
      %p395 = scmp.eq.s32.totalorder %s77, 0
      %p396 = por %p394, %p395
      %p397 = scmp.ne.s32.totalorder %s389, %s391
      %p398 = scmp.eq.s32.totalorder %s82, 1
      %p399 = por %p397, %p398
      %p400 = scmp.ne.s32.totalorder %s391, %s392
      %p401 = scmp.eq.s32.totalorder %s82, 0
      %p402 = por %p400, %p401
      %p403 = scmp.ne.s32.totalorder %s391, %s392
      %p404 = scmp.eq.s32.totalorder %s83, 1
      %p405 = por %p403, %p404
      %p407 = scmp.ne.s32.totalorder %s392, %s406
      %p408 = scmp.eq.s32.totalorder %s83, 0
      %p409 = por %p407, %p408
      %s411 = sadd.s32 %s410, 1
      %p414 = scmp.eq.s32.totalorder %s77, 1
      %p415 = scmp.ne.s32.totalorder %s410, %s412
      %p416 = scmp.eq.s32.totalorder %s77, 0
      %p417 = por %p415, %p416
      %p418 = scmp.ne.s32.totalorder %s410, %s412
      %p419 = scmp.eq.s32.totalorder %s82, 1
      %p420 = por %p418, %p419
      %p421 = scmp.ne.s32.totalorder %s412, %s413
      %p422 = scmp.eq.s32.totalorder %s82, 0
      %p423 = por %p421, %p422
      %p424 = scmp.ne.s32.totalorder %s412, %s413
      %p425 = scmp.eq.s32.totalorder %s83, 1
      %p426 = por %p424, %p425
      %p428 = scmp.ne.s32.totalorder %s413, %s427
      %p429 = scmp.eq.s32.totalorder %s83, 0
      %p430 = por %p428, %p429
      %s432 = sadd.s32 %s431, 1
      %p435 = scmp.eq.s32.totalorder %s77, 1
      %p436 = scmp.ne.s32.totalorder %s431, %s433
      %p437 = scmp.eq.s32.totalorder %s77, 0
      %p438 = por %p436, %p437
      %p439 = scmp.ne.s32.totalorder %s431, %s433
      %p440 = scmp.eq.s32.totalorder %s82, 1
      %p441 = por %p439, %p440
      %p442 = scmp.ne.s32.totalorder %s433, %s434
      %p443 = scmp.eq.s32.totalorder %s82, 0
      %p444 = por %p442, %p443
      %p445 = scmp.ne.s32.totalorder %s433, %s434
      %p446 = scmp.eq.s32.totalorder %s83, 1
      %p447 = por %p445, %p446
      %p449 = scmp.ne.s32.totalorder %s434, %s448
      %p450 = scmp.eq.s32.totalorder %s83, 0
      %p451 = por %p449, %p450
      %s453 = sadd.s32 %s452, 1
      %p456 = scmp.eq.s32.totalorder %s77, 1
      %p457 = scmp.ne.s32.totalorder %s452, %s454
      %p458 = scmp.eq.s32.totalorder %s77, 0
      %p459 = por %p457, %p458
      %p460 = scmp.ne.s32.totalorder %s452, %s454
      %p461 = scmp.eq.s32.totalorder %s82, 1
      %p462 = por %p460, %p461
      %p463 = scmp.ne.s32.totalorder %s454, %s455
      %p464 = scmp.eq.s32.totalorder %s82, 0
      %p465 = por %p463, %p464
      %p466 = scmp.ne.s32.totalorder %s454, %s455
      %p467 = scmp.eq.s32.totalorder %s83, 1
      %p468 = por %p466, %p467
      %p470 = scmp.ne.s32.totalorder %s455, %s469
      %p471 = scmp.eq.s32.totalorder %s83, 0
      %p472 = por %p470, %p471
      %s474 = sadd.s32 %s473, 1
      %p477 = scmp.eq.s32.totalorder %s77, 1
      %p478 = scmp.ne.s32.totalorder %s473, %s475
      %p479 = scmp.eq.s32.totalorder %s77, 0
      %p480 = por %p478, %p479
      %p481 = scmp.ne.s32.totalorder %s473, %s475
      %p482 = scmp.eq.s32.totalorder %s82, 1
      %p483 = por %p481, %p482
      %p484 = scmp.ne.s32.totalorder %s475, %s476
      %p485 = scmp.eq.s32.totalorder %s82, 0
      %p486 = por %p484, %p485
      %p487 = scmp.ne.s32.totalorder %s475, %s476
      %p488 = scmp.eq.s32.totalorder %s83, 1
      %p489 = por %p487, %p488
      %p491 = scmp.ne.s32.totalorder %s476, %s490
      %p492 = scmp.eq.s32.totalorder %s83, 0
      %p493 = por %p491, %p492
      %s495 = sadd.s32 %s494, 1
      %p498 = scmp.eq.s32.totalorder %s77, 1
      %p499 = scmp.ne.s32.totalorder %s494, %s496
      %p500 = scmp.eq.s32.totalorder %s77, 0
      %p501 = por %p499, %p500
      %p502 = scmp.ne.s32.totalorder %s494, %s496
      %p503 = scmp.eq.s32.totalorder %s82, 1
      %p504 = por %p502, %p503
      %p505 = scmp.ne.s32.totalorder %s496, %s497
      %p506 = scmp.eq.s32.totalorder %s82, 0
      %p507 = por %p505, %p506
      %p508 = scmp.ne.s32.totalorder %s496, %s497
      %p509 = scmp.eq.s32.totalorder %s83, 1
      %p510 = por %p508, %p509
      %p512 = scmp.ne.s32.totalorder %s497, %s511
      %p513 = scmp.eq.s32.totalorder %s83, 0
      %p514 = por %p512, %p513
      %s516 = sadd.s32 %s515, 1
      %p519 = scmp.eq.s32.totalorder %s77, 1
      %p520 = scmp.ne.s32.totalorder %s515, %s517
      %p521 = scmp.eq.s32.totalorder %s77, 0
      %p522 = por %p520, %p521
      %p523 = scmp.ne.s32.totalorder %s515, %s517
      %p524 = scmp.eq.s32.totalorder %s82, 1
      %p525 = por %p523, %p524
      %p526 = scmp.ne.s32.totalorder %s517, %s518
      %p527 = scmp.eq.s32.totalorder %s82, 0
      %p528 = por %p526, %p527
      %p529 = scmp.ne.s32.totalorder %s517, %s518
      %p530 = scmp.eq.s32.totalorder %s83, 1
      %p531 = por %p529, %p530
      %p533 = scmp.ne.s32.totalorder %s518, %s532
      %p534 = scmp.eq.s32.totalorder %s83, 0
      %p535 = por %p533, %p534
      %s537 = sadd.s32 %s536, 1
      %p540 = scmp.eq.s32.totalorder %s77, 1
      %p541 = scmp.ne.s32.totalorder %s536, %s538
      %p542 = scmp.eq.s32.totalorder %s77, 0
      %p543 = por %p541, %p542
      %p544 = scmp.ne.s32.totalorder %s536, %s538
      %p545 = scmp.eq.s32.totalorder %s82, 1
      %p546 = por %p544, %p545
      %p547 = scmp.ne.s32.totalorder %s538, %s539
      %p548 = scmp.eq.s32.totalorder %s82, 0
      %p549 = por %p547, %p548
      %p550 = scmp.ne.s32.totalorder %s538, %s539
      %p551 = scmp.eq.s32.totalorder %s83, 1
      %p552 = por %p550, %p551
      %p554 = scmp.ne.s32.totalorder %s539, %s553
      %p555 = scmp.eq.s32.totalorder %s83, 0
      %p556 = por %p554, %p555
      %s558 = sadd.s32 %s557, 1
      %p561 = scmp.eq.s32.totalorder %s77, 1
      %p562 = scmp.ne.s32.totalorder %s557, %s559
      %p563 = scmp.eq.s32.totalorder %s77, 0
      %p564 = por %p562, %p563
      %p565 = scmp.ne.s32.totalorder %s557, %s559
      %p566 = scmp.eq.s32.totalorder %s82, 1
      %p567 = por %p565, %p566
      %p568 = scmp.ne.s32.totalorder %s559, %s560
      %p569 = scmp.eq.s32.totalorder %s82, 0
      %p570 = por %p568, %p569
      %p571 = scmp.ne.s32.totalorder %s559, %s560
      %p572 = scmp.eq.s32.totalorder %s83, 1
      %p573 = por %p571, %p572
      %p575 = scmp.ne.s32.totalorder %s560, %s574
      %p576 = scmp.eq.s32.totalorder %s83, 0
      %p577 = por %p575, %p576
      %s579 = sadd.s32 %s578, 1
      %p582 = scmp.eq.s32.totalorder %s77, 1
      %p583 = scmp.ne.s32.totalorder %s578, %s580
      %p584 = scmp.eq.s32.totalorder %s77, 0
      %p585 = por %p583, %p584
      %p586 = scmp.ne.s32.totalorder %s578, %s580
      %p587 = scmp.eq.s32.totalorder %s82, 1
      %p588 = por %p586, %p587
      %p589 = scmp.ne.s32.totalorder %s580, %s581
      %p590 = scmp.eq.s32.totalorder %s82, 0
      %p591 = por %p589, %p590
      %p592 = scmp.ne.s32.totalorder %s580, %s581
      %p593 = scmp.eq.s32.totalorder %s83, 1
      %p594 = por %p592, %p593
      %p596 = scmp.ne.s32.totalorder %s581, %s595
      %p597 = scmp.eq.s32.totalorder %s83, 0
      %p598 = por %p596, %p597
      %s600 = sadd.s32 %s599, 1
      %p603 = scmp.eq.s32.totalorder %s77, 1
      %p604 = scmp.ne.s32.totalorder %s599, %s601
      %p605 = scmp.eq.s32.totalorder %s77, 0
      %p606 = por %p604, %p605
      %p607 = scmp.ne.s32.totalorder %s599, %s601
      %p608 = scmp.eq.s32.totalorder %s82, 1
      %p609 = por %p607, %p608
      %p610 = scmp.ne.s32.totalorder %s601, %s602
      %p611 = scmp.eq.s32.totalorder %s82, 0
      %p612 = por %p610, %p611
      %p613 = scmp.ne.s32.totalorder %s601, %s602
      %p614 = scmp.eq.s32.totalorder %s83, 1
      %p615 = por %p613, %p614
      %p617 = scmp.ne.s32.totalorder %s602, %s616
      %p618 = scmp.eq.s32.totalorder %s83, 0
      %p619 = por %p617, %p618
      %s621 = sadd.s32 %s620, 1
      %p624 = scmp.eq.s32.totalorder %s77, 1
      %p625 = scmp.ne.s32.totalorder %s620, %s622
      %p626 = scmp.eq.s32.totalorder %s77, 0
      %p627 = por %p625, %p626
      %p628 = scmp.ne.s32.totalorder %s620, %s622
      %p629 = scmp.eq.s32.totalorder %s82, 1
      %p630 = por %p628, %p629
      %p631 = scmp.ne.s32.totalorder %s622, %s623
      %p632 = scmp.eq.s32.totalorder %s82, 0
      %p633 = por %p631, %p632
      %p634 = scmp.ne.s32.totalorder %s622, %s623
      %p635 = scmp.eq.s32.totalorder %s83, 1
      %p636 = por %p634, %p635
      %p638 = scmp.ne.s32.totalorder %s623, %s637
      %p639 = scmp.eq.s32.totalorder %s83, 0
      %p640 = por %p638, %p639
      %s642 = sadd.s32 %s641, 1
      %p645 = scmp.eq.s32.totalorder %s77, 1
      %p646 = scmp.ne.s32.totalorder %s641, %s643
      %p647 = scmp.eq.s32.totalorder %s77, 0
      %p648 = por %p646, %p647
      %p649 = scmp.ne.s32.totalorder %s641, %s643
      %p650 = scmp.eq.s32.totalorder %s82, 1
      %p651 = por %p649, %p650
      %p652 = scmp.ne.s32.totalorder %s643, %s644
      %p653 = scmp.eq.s32.totalorder %s82, 0
      %p654 = por %p652, %p653
      %p655 = scmp.ne.s32.totalorder %s643, %s644
      %p656 = scmp.eq.s32.totalorder %s83, 1
      %p657 = por %p655, %p656
      %p659 = scmp.ne.s32.totalorder %s644, %s658
      %p660 = scmp.eq.s32.totalorder %s83, 0
      %p661 = por %p659, %p660
      %s663 = sadd.s32 %s662, 1
      %p666 = scmp.eq.s32.totalorder %s77, 1
      %p667 = scmp.ne.s32.totalorder %s662, %s664
      %p668 = scmp.eq.s32.totalorder %s77, 0
      %p669 = por %p667, %p668
      %p670 = scmp.ne.s32.totalorder %s662, %s664
      %p671 = scmp.eq.s32.totalorder %s82, 1
      %p672 = por %p670, %p671
      %p673 = scmp.ne.s32.totalorder %s664, %s665
      %p674 = scmp.eq.s32.totalorder %s82, 0
      %p675 = por %p673, %p674
      %p676 = scmp.ne.s32.totalorder %s664, %s665
      %p677 = scmp.eq.s32.totalorder %s83, 1
      %p678 = por %p676, %p677
      %p680 = scmp.ne.s32.totalorder %s665, %s679
      %p681 = scmp.eq.s32.totalorder %s83, 0
      %p682 = por %p680, %p681
      %s684 = sadd.s32 %s683, 1
      %p687 = scmp.eq.s32.totalorder %s77, 1
      %p688 = scmp.ne.s32.totalorder %s683, %s685
      %p689 = scmp.eq.s32.totalorder %s77, 0
      %p690 = por %p688, %p689
      %p691 = scmp.ne.s32.totalorder %s683, %s685
      %p692 = scmp.eq.s32.totalorder %s82, 1
      %p693 = por %p691, %p692
      %p694 = scmp.ne.s32.totalorder %s685, %s686
      %p695 = scmp.eq.s32.totalorder %s82, 0
      %p696 = por %p694, %p695
      %p697 = scmp.ne.s32.totalorder %s685, %s686
      %p698 = scmp.eq.s32.totalorder %s83, 1
      %p699 = por %p697, %p698
      %p701 = scmp.ne.s32.totalorder %s686, %s700
      %p702 = scmp.eq.s32.totalorder %s83, 0
      %p703 = por %p701, %p702
      %s705 = sadd.s32 %s704, 1
      %p708 = scmp.eq.s32.totalorder %s77, 1
      %p709 = scmp.ne.s32.totalorder %s704, %s706
      %p710 = scmp.eq.s32.totalorder %s77, 0
      %p711 = por %p709, %p710
      %p712 = scmp.ne.s32.totalorder %s704, %s706
      %p713 = scmp.eq.s32.totalorder %s82, 1
      %p714 = por %p712, %p713
      %p715 = scmp.ne.s32.totalorder %s706, %s707
      %p716 = scmp.eq.s32.totalorder %s82, 0
      %p717 = por %p715, %p716
      %p718 = scmp.ne.s32.totalorder %s706, %s707
      %p719 = scmp.eq.s32.totalorder %s83, 1
      %p720 = por %p718, %p719
      %p722 = scmp.ne.s32.totalorder %s707, %s721
      %p723 = scmp.eq.s32.totalorder %s83, 0
      %p724 = por %p722, %p723
      %s726 = sadd.s32 %s725, 1
      %p729 = scmp.eq.s32.totalorder %s77, 1
      %p730 = scmp.ne.s32.totalorder %s725, %s727
      %p731 = scmp.eq.s32.totalorder %s77, 0
      %p732 = por %p730, %p731
      %p733 = scmp.ne.s32.totalorder %s725, %s727
      %p734 = scmp.eq.s32.totalorder %s82, 1
      %p735 = por %p733, %p734
      %p736 = scmp.ne.s32.totalorder %s727, %s728
      %p737 = scmp.eq.s32.totalorder %s82, 0
      %p738 = por %p736, %p737
      %p739 = scmp.ne.s32.totalorder %s727, %s728
      %p740 = scmp.eq.s32.totalorder %s83, 1
      %p741 = por %p739, %p740
      %p743 = scmp.ne.s32.totalorder %s728, %s742
      %p744 = scmp.eq.s32.totalorder %s83, 0
      %p745 = por %p743, %p744
      %s747 = sadd.s32 %s746, 1
      %p750 = scmp.eq.s32.totalorder %s77, 1
      %p751 = scmp.ne.s32.totalorder %s746, %s748
      %p752 = scmp.eq.s32.totalorder %s77, 0
      %p753 = por %p751, %p752
      %p754 = scmp.ne.s32.totalorder %s746, %s748
      %p755 = scmp.eq.s32.totalorder %s82, 1
      %p756 = por %p754, %p755
      %p757 = scmp.ne.s32.totalorder %s748, %s749
      %p758 = scmp.eq.s32.totalorder %s82, 0
      %p759 = por %p757, %p758
      %p760 = scmp.ne.s32.totalorder %s748, %s749
      %p761 = scmp.eq.s32.totalorder %s83, 1
      %p762 = por %p760, %p761
      %p764 = scmp.ne.s32.totalorder %s749, %s763
      %p765 = scmp.eq.s32.totalorder %s83, 0
      %p766 = por %p764, %p765
      %s768 = sadd.s32 %s767, 1
      %p771 = scmp.eq.s32.totalorder %s77, 1
      %p772 = scmp.ne.s32.totalorder %s767, %s769
      %p773 = scmp.eq.s32.totalorder %s77, 0
      %p774 = por %p772, %p773
      %p775 = scmp.ne.s32.totalorder %s767, %s769
      %p776 = scmp.eq.s32.totalorder %s82, 1
      %p777 = por %p775, %p776
      %p778 = scmp.ne.s32.totalorder %s769, %s770
      %p779 = scmp.eq.s32.totalorder %s82, 0
      %p780 = por %p778, %p779
      %p781 = scmp.ne.s32.totalorder %s769, %s770
      %p782 = scmp.eq.s32.totalorder %s83, 1
      %p783 = por %p781, %p782
      %p785 = scmp.ne.s32.totalorder %s770, %s784
      %p786 = scmp.eq.s32.totalorder %s83, 0
      %p787 = por %p785, %p786
      %s788 = ssub.s32 %s77, %s84
      %p789 = scmp.eq.s32.totalorder %s788, 0
      %s791 = sadd.s32 %s790, 1
      %s792 = scalar_select %p789, %s790, %s791
      %p795 = pneg %p789
      %p796 = scmp.eq.s32.totalorder %s77, 1
      %p797 = por %p795, %p796
      %p798 = scmp.ne.s32.totalorder %s790, %s793
      %p799 = scmp.eq.s32.totalorder %s77, 0
      %p800 = por %p798, %p799
      %p801 = scmp.ne.s32.totalorder %s790, %s793
      %p802 = scmp.eq.s32.totalorder %s82, 1
      %p803 = por %p801, %p802
      %p804 = scmp.ne.s32.totalorder %s793, %s794
      %p805 = scmp.eq.s32.totalorder %s82, 0
      %p806 = por %p804, %p805
      %p807 = scmp.ne.s32.totalorder %s793, %s794
      %p808 = scmp.eq.s32.totalorder %s83, 1
      %p809 = por %p807, %p808
      %p811 = scmp.ne.s32.totalorder %s794, %s810
      %p812 = scmp.eq.s32.totalorder %s83, 0
      %p813 = por %p811, %p812
      %p814 = scmp.le.s32.totalorder 1, %s77
      %p815 = scmp.lt.s32.totalorder %s77, 3
      %p816 = pnand %p814, %p815
      %p817 = pneg %p816
      // Predicated region
      $region9: #{medsam_forward.4} parent=5 // pred_check
        _
      $region10: #{medsam_forward.4} parent=5 // pred_check_branch
        %819 = sbr.rel (%p816) target = $region12
      $region11: #{medsam_forward.4} parent=5 // pred_region
        %s820 = ssub.s32 %s77, 1
        // Predicated region
        $region13: #{medsam_forward.4} parent=11 // pred_check
          %p821 = pneg %p150
        $region14: #{medsam_forward.4} parent=11 // pred_check_branch
          %823 = sbr.rel (%p821) target = $region16
        $region15: #{medsam_forward.4} parent=11 // pred_region
          _
        $region16: #{medsam_forward.4} parent=11 // pred_fallthru
          _
        // Predicated region
        $region17: #{medsam_forward.4} parent=11 // pred_check
          %p824 = pneg %p171
        $region18: #{medsam_forward.4} parent=11 // pred_check_branch
          %826 = sbr.rel (%p824) target = $region20
        $region19: #{medsam_forward.4} parent=11 // pred_region
          _
        $region20: #{medsam_forward.4} parent=11 // pred_fallthru
          _
        // Predicated region
        $region21: #{medsam_forward.4} parent=11 // pred_check
          %p827 = pneg %p192
        $region22: #{medsam_forward.4} parent=11 // pred_check_branch
          %829 = sbr.rel (%p827) target = $region24
        $region23: #{medsam_forward.4} parent=11 // pred_region
          _
        $region24: #{medsam_forward.4} parent=11 // pred_fallthru
          _
        // Predicated region
        $region25: #{medsam_forward.4} parent=11 // pred_check
          %p830 = pneg %p213
        $region26: #{medsam_forward.4} parent=11 // pred_check_branch
          %832 = sbr.rel (%p830) target = $region28
        $region27: #{medsam_forward.4} parent=11 // pred_region
          _
        $region28: #{medsam_forward.4} parent=11 // pred_fallthru
          _
        // Predicated region
        $region29: #{medsam_forward.4} parent=11 // pred_check
          %p833 = pneg %p234
        $region30: #{medsam_forward.4} parent=11 // pred_check_branch
          %835 = sbr.rel (%p833) target = $region32
        $region31: #{medsam_forward.4} parent=11 // pred_region
          _
        $region32: #{medsam_forward.4} parent=11 // pred_fallthru
          _
        // Predicated region
        $region33: #{medsam_forward.4} parent=11 // pred_check
          %p836 = pneg %p255
        $region34: #{medsam_forward.4} parent=11 // pred_check_branch
          %838 = sbr.rel (%p836) target = $region36
        $region35: #{medsam_forward.4} parent=11 // pred_region
          _
        $region36: #{medsam_forward.4} parent=11 // pred_fallthru
          _
        // Predicated region
        $region37: #{medsam_forward.4} parent=11 // pred_check
          %p839 = pneg %p276
        $region38: #{medsam_forward.4} parent=11 // pred_check_branch
          %841 = sbr.rel (%p839) target = $region40
        $region39: #{medsam_forward.4} parent=11 // pred_region
          _
        $region40: #{medsam_forward.4} parent=11 // pred_fallthru
          _
        // Predicated region
        $region41: #{medsam_forward.4} parent=11 // pred_check
          %p842 = pneg %p297
        $region42: #{medsam_forward.4} parent=11 // pred_check_branch
          %844 = sbr.rel (%p842) target = $region44
        $region43: #{medsam_forward.4} parent=11 // pred_region
          _
        $region44: #{medsam_forward.4} parent=11 // pred_fallthru
          _
        // Predicated region
        $region45: #{medsam_forward.4} parent=11 // pred_check
          %p845 = pneg %p318
        $region46: #{medsam_forward.4} parent=11 // pred_check_branch
          %847 = sbr.rel (%p845) target = $region48
        $region47: #{medsam_forward.4} parent=11 // pred_region
          _
        $region48: #{medsam_forward.4} parent=11 // pred_fallthru
          _
        // Predicated region
        $region49: #{medsam_forward.4} parent=11 // pred_check
          %p848 = pneg %p339
        $region50: #{medsam_forward.4} parent=11 // pred_check_branch
          %850 = sbr.rel (%p848) target = $region52
        $region51: #{medsam_forward.4} parent=11 // pred_region
          _
        $region52: #{medsam_forward.4} parent=11 // pred_fallthru
          _
        // Predicated region
        $region53: #{medsam_forward.4} parent=11 // pred_check
          %p851 = pneg %p360
        $region54: #{medsam_forward.4} parent=11 // pred_check_branch
          %853 = sbr.rel (%p851) target = $region56
        $region55: #{medsam_forward.4} parent=11 // pred_region
          _
        $region56: #{medsam_forward.4} parent=11 // pred_fallthru
          _
        // Predicated region
        $region57: #{medsam_forward.4} parent=11 // pred_check
          %p854 = pneg %p381
        $region58: #{medsam_forward.4} parent=11 // pred_check_branch
          %856 = sbr.rel (%p854) target = $region60
        $region59: #{medsam_forward.4} parent=11 // pred_region
          _
        $region60: #{medsam_forward.4} parent=11 // pred_fallthru
          _
        // Predicated region
        $region61: #{medsam_forward.4} parent=11 // pred_check
          %p857 = pneg %p402
        $region62: #{medsam_forward.4} parent=11 // pred_check_branch
          %859 = sbr.rel (%p857) target = $region64
        $region63: #{medsam_forward.4} parent=11 // pred_region
          _
        $region64: #{medsam_forward.4} parent=11 // pred_fallthru
          _
        // Predicated region
        $region65: #{medsam_forward.4} parent=11 // pred_check
          %p860 = pneg %p423
        $region66: #{medsam_forward.4} parent=11 // pred_check_branch
          %862 = sbr.rel (%p860) target = $region68
        $region67: #{medsam_forward.4} parent=11 // pred_region
          _
        $region68: #{medsam_forward.4} parent=11 // pred_fallthru
          _
        // Predicated region
        $region69: #{medsam_forward.4} parent=11 // pred_check
          %p863 = pneg %p444
        $region70: #{medsam_forward.4} parent=11 // pred_check_branch
          %865 = sbr.rel (%p863) target = $region72
        $region71: #{medsam_forward.4} parent=11 // pred_region
          _
        $region72: #{medsam_forward.4} parent=11 // pred_fallthru
          _
        // Predicated region
        $region73: #{medsam_forward.4} parent=11 // pred_check
          %p866 = pneg %p465
        $region74: #{medsam_forward.4} parent=11 // pred_check_branch
          %868 = sbr.rel (%p866) target = $region76
        $region75: #{medsam_forward.4} parent=11 // pred_region
          _
        $region76: #{medsam_forward.4} parent=11 // pred_fallthru
          _
        // Predicated region
        $region77: #{medsam_forward.4} parent=11 // pred_check
          %p869 = pneg %p486
        $region78: #{medsam_forward.4} parent=11 // pred_check_branch
          %871 = sbr.rel (%p869) target = $region80
        $region79: #{medsam_forward.4} parent=11 // pred_region
          _
        $region80: #{medsam_forward.4} parent=11 // pred_fallthru
          _
        // Predicated region
        $region81: #{medsam_forward.4} parent=11 // pred_check
          %p872 = pneg %p507
        $region82: #{medsam_forward.4} parent=11 // pred_check_branch
          %874 = sbr.rel (%p872) target = $region84
        $region83: #{medsam_forward.4} parent=11 // pred_region
          %s876 = ssub.s32 16, 16
          %877 = vsyncadd [#allocation3], %s876
          %s879 = sshll.u32 [#allocation2], 4
          %s880 = int_to_ptr.vmem [resolvable:$true] %s879
          %882 = dma.hbm_to_vmem [thread:$0]  %s39, 16, %s880, [#allocation3]
        $region84: #{medsam_forward.4} parent=11 // pred_fallthru
          _
        // Predicated region
        $region85: #{medsam_forward.4} parent=11 // pred_check
          %p883 = pneg %p528
        $region86: #{medsam_forward.4} parent=11 // pred_check_branch
          %885 = sbr.rel (%p883) target = $region88
        $region87: #{medsam_forward.4} parent=11 // pred_region
          %s887 = ssub.s32 16, 16
          %888 = vsyncadd [#allocation5], %s887
          %s890 = sshll.u32 [#allocation4], 4
          %s891 = int_to_ptr.vmem [resolvable:$true] %s890
          %893 = dma.hbm_to_vmem [thread:$0]  %s41, 16, %s891, [#allocation5]
        $region88: #{medsam_forward.4} parent=11 // pred_fallthru
          _
        // Predicated region
        $region89: #{medsam_forward.4} parent=11 // pred_check
          %p894 = pneg %p549
        $region90: #{medsam_forward.4} parent=11 // pred_check_branch
          %896 = sbr.rel (%p894) target = $region92
        $region91: #{medsam_forward.4} parent=11 // pred_region
          %s898 = ssub.s32 16, 16
          %899 = vsyncadd [#allocation5], %s898
          %s901 = sshll.u32 [#allocation6], 4
          %s902 = int_to_ptr.vmem [resolvable:$true] %s901
          %904 = dma.hbm_to_vmem [thread:$0]  %s43, 16, %s902, [#allocation5]
        $region92: #{medsam_forward.4} parent=11 // pred_fallthru
          _
        // Predicated region
        $region93: #{medsam_forward.4} parent=11 // pred_check
          %p905 = pneg %p570
        $region94: #{medsam_forward.4} parent=11 // pred_check_branch
          %907 = sbr.rel (%p905) target = $region96
        $region95: #{medsam_forward.4} parent=11 // pred_region
          _
        $region96: #{medsam_forward.4} parent=11 // pred_fallthru
          _
        // Predicated region
        $region97: #{medsam_forward.4} parent=11 // pred_check
          %p908 = pneg %p591
        $region98: #{medsam_forward.4} parent=11 // pred_check_branch
          %910 = sbr.rel (%p908) target = $region100
        $region99: #{medsam_forward.4} parent=11 // pred_region
          _
        $region100: #{medsam_forward.4} parent=11 // pred_fallthru
          _
        // Predicated region
        $region101: #{medsam_forward.4} parent=11 // pred_check
          %p911 = pneg %p612
        $region102: #{medsam_forward.4} parent=11 // pred_check_branch
          %913 = sbr.rel (%p911) target = $region104
        $region103: #{medsam_forward.4} parent=11 // pred_region
          %s915 = ssub.s32 16, 16
          %916 = vsyncadd [#allocation8], %s915
          %s918 = sshll.u32 [#allocation7], 4
          %s919 = int_to_ptr.vmem [resolvable:$true] %s918
          %921 = dma.hbm_to_vmem [thread:$0]  %s49, 16, %s919, [#allocation8]
        $region104: #{medsam_forward.4} parent=11 // pred_fallthru
          _
        // Predicated region
        $region105: #{medsam_forward.4} parent=11 // pred_check
          %p922 = pneg %p633
        $region106: #{medsam_forward.4} parent=11 // pred_check_branch
          %924 = sbr.rel (%p922) target = $region108
        $region107: #{medsam_forward.4} parent=11 // pred_region
          _
        $region108: #{medsam_forward.4} parent=11 // pred_fallthru
          _
        // Predicated region
        $region109: #{medsam_forward.4} parent=11 // pred_check
          %p925 = pneg %p654
        $region110: #{medsam_forward.4} parent=11 // pred_check_branch
          %927 = sbr.rel (%p925) target = $region112
        $region111: #{medsam_forward.4} parent=11 // pred_region
          %s929 = ssub.s32 16, 16
          %930 = vsyncadd [#allocation8], %s929
          %s932 = sshll.u32 [#allocation9], 4
          %s933 = int_to_ptr.vmem [resolvable:$true] %s932
          %935 = dma.hbm_to_vmem [thread:$0]  %s53, 16, %s933, [#allocation8]
        $region112: #{medsam_forward.4} parent=11 // pred_fallthru
          _
        // Predicated region
        $region113: #{medsam_forward.4} parent=11 // pred_check
          %p936 = pneg %p675
        $region114: #{medsam_forward.4} parent=11 // pred_check_branch
          %938 = sbr.rel (%p936) target = $region116
        $region115: #{medsam_forward.4} parent=11 // pred_region
          _
        $region116: #{medsam_forward.4} parent=11 // pred_fallthru
          _
        // Predicated region
        $region117: #{medsam_forward.4} parent=11 // pred_check
          %p939 = pneg %p696
        $region118: #{medsam_forward.4} parent=11 // pred_check_branch
          %941 = sbr.rel (%p939) target = $region120
        $region119: #{medsam_forward.4} parent=11 // pred_region
          %s943 = ssub.s32 16, 16
          %944 = vsyncadd [#allocation11], %s943
          %s946 = sshll.u32 [#allocation10], 4
          %s947 = int_to_ptr.vmem [resolvable:$true] %s946
          %949 = dma.hbm_to_vmem [thread:$0]  %s57, 16, %s947, [#allocation11]
        $region120: #{medsam_forward.4} parent=11 // pred_fallthru
          _
        // Predicated region
        $region121: #{medsam_forward.4} parent=11 // pred_check
          %p950 = pneg %p717
        $region122: #{medsam_forward.4} parent=11 // pred_check_branch
          %952 = sbr.rel (%p950) target = $region124
        $region123: #{medsam_forward.4} parent=11 // pred_region
          _
        $region124: #{medsam_forward.4} parent=11 // pred_fallthru
          _
        // Predicated region
        $region125: #{medsam_forward.4} parent=11 // pred_check
          %p953 = pneg %p738
        $region126: #{medsam_forward.4} parent=11 // pred_check_branch
          %955 = sbr.rel (%p953) target = $region128
        $region127: #{medsam_forward.4} parent=11 // pred_region
          %s957 = ssub.s32 16, 16
          %958 = vsyncadd [#allocation11], %s957
          %s960 = sshll.u32 [#allocation12], 4
          %s961 = int_to_ptr.vmem [resolvable:$true] %s960
          %963 = dma.hbm_to_vmem [thread:$0]  %s61, 16, %s961, [#allocation11]
        $region128: #{medsam_forward.4} parent=11 // pred_fallthru
          _
        // Predicated region
        $region129: #{medsam_forward.4} parent=11 // pred_check
          %p964 = pneg %p759
        $region130: #{medsam_forward.4} parent=11 // pred_check_branch
          %966 = sbr.rel (%p964) target = $region132
        $region131: #{medsam_forward.4} parent=11 // pred_region
          _
        $region132: #{medsam_forward.4} parent=11 // pred_fallthru
          _
        // Predicated region
        $region133: #{medsam_forward.4} parent=11 // pred_check
          %p967 = pneg %p780
        $region134: #{medsam_forward.4} parent=11 // pred_check_branch
          %969 = sbr.rel (%p967) target = $region136
        $region135: #{medsam_forward.4} parent=11 // pred_region
          _
        $region136: #{medsam_forward.4} parent=11 // pred_fallthru
          _
      $region12: #{medsam_forward.4} parent=5 // pred_fallthru
        _
      %p970 = scmp.lt.s32.totalorder %s77, 2
      // Predicated region
      $region137: #{medsam_forward.4} parent=5 // pred_check
        %p971 = pneg %p970
      $region138: #{medsam_forward.4} parent=5 // pred_check_branch
        %973 = sbr.rel (%p971) target = $region140
      $region139: #{medsam_forward.4} parent=5 // pred_region
        // Predicated region
        $region141: #{medsam_forward.4} parent=139 // pred_check
          %p974 = pneg %p97
        $region142: #{medsam_forward.4} parent=139 // pred_check_branch
          %976 = sbr.rel (%p974) target = $region144
        $region143: #{medsam_forward.4} parent=139 // pred_region
          %p977 = scmp.lt.s32.totalorder %s77, 1
          %s978 = scalar_select %p977, %s77, 1
          %s979 = smul.addr %s978, 8
          %s980 = scalar_lea.vmem %s1, %s979
        $region144: #{medsam_forward.4} parent=139 // pred_fallthru
          _
        // Predicated region
        $region145: #{medsam_forward.4} parent=139 // pred_check
          %p981 = pneg %p123
        $region146: #{medsam_forward.4} parent=139 // pred_check_branch
          %983 = sbr.rel (%p981) target = $region148
        $region147: #{medsam_forward.4} parent=139 // pred_region
          %p984 = scmp.lt.s32.totalorder %s77, 1
          %s985 = scalar_select %p984, %s77, 1
          %s986 = smul.addr %s985, 2
          %s987 = smul.addr %s986, 8
          %s988 = scalar_lea.vmem %s3, %s987
        $region148: #{medsam_forward.4} parent=139 // pred_fallthru
          _
      $region140: #{medsam_forward.4} parent=5 // pred_fallthru
        _
      %p989 = scmp.le.s32.totalorder 1, %s77
      %p990 = scmp.lt.s32.totalorder %s77, 3
      %p991 = pnand %p989, %p990
      %p992 = pneg %p991
      // Predicated region
      $region149: #{medsam_forward.4} parent=5 // pred_check
        _
      $region150: #{medsam_forward.4} parent=5 // pred_check_branch
        %994 = sbr.rel (%p991) target = $region152
      $region151: #{medsam_forward.4} parent=5 // pred_region
        %s995 = ssub.s32 %s77, 1
        // Predicated region
        $region153: #{medsam_forward.4} parent=151 // pred_check
          %p996 = pneg %p507
        $region154: #{medsam_forward.4} parent=151 // pred_check_branch
          %998 = sbr.rel (%p996) target = $region156
        $region155: #{medsam_forward.4} parent=151 // pred_region
          %999 = dma.done [#allocation3], 16
        $region156: #{medsam_forward.4} parent=151 // pred_fallthru
          _
        // Predicated region
        $region157: #{medsam_forward.4} parent=151 // pred_check
          %p1000 = pneg %p528
        $region158: #{medsam_forward.4} parent=151 // pred_check_branch
          %1002 = sbr.rel (%p1000) target = $region160
        $region159: #{medsam_forward.4} parent=151 // pred_region
          %1003 = dma.done [#allocation5], 16
        $region160: #{medsam_forward.4} parent=151 // pred_fallthru
          _
        // Predicated region
        $region161: #{medsam_forward.4} parent=151 // pred_check
          %p1004 = pneg %p549
        $region162: #{medsam_forward.4} parent=151 // pred_check_branch
          %1006 = sbr.rel (%p1004) target = $region164
        $region163: #{medsam_forward.4} parent=151 // pred_region
          %1007 = dma.done [#allocation5], 16
        $region164: #{medsam_forward.4} parent=151 // pred_fallthru
          _
        // Predicated region
        $region165: #{medsam_forward.4} parent=151 // pred_check
          %p1008 = pneg %p612
        $region166: #{medsam_forward.4} parent=151 // pred_check_branch
          %1010 = sbr.rel (%p1008) target = $region168
        $region167: #{medsam_forward.4} parent=151 // pred_region
          %1011 = dma.done [#allocation8], 16
        $region168: #{medsam_forward.4} parent=151 // pred_fallthru
          _
        // Predicated region
        $region169: #{medsam_forward.4} parent=151 // pred_check
          %p1012 = pneg %p654
        $region170: #{medsam_forward.4} parent=151 // pred_check_branch
          %1014 = sbr.rel (%p1012) target = $region172
        $region171: #{medsam_forward.4} parent=151 // pred_region
          %1015 = dma.done [#allocation8], 16
        $region172: #{medsam_forward.4} parent=151 // pred_fallthru
          _
        // Predicated region
        $region173: #{medsam_forward.4} parent=151 // pred_check
          %p1016 = pneg %p696
        $region174: #{medsam_forward.4} parent=151 // pred_check_branch
          %1018 = sbr.rel (%p1016) target = $region176
        $region175: #{medsam_forward.4} parent=151 // pred_region
          %1019 = dma.done [#allocation11], 16
        $region176: #{medsam_forward.4} parent=151 // pred_fallthru
          _
        // Predicated region
        $region177: #{medsam_forward.4} parent=151 // pred_check
          %p1020 = pneg %p738
        $region178: #{medsam_forward.4} parent=151 // pred_check_branch
          %1022 = sbr.rel (%p1020) target = $region180
        $region179: #{medsam_forward.4} parent=151 // pred_region
          %1023 = dma.done [#allocation11], 16
        $region180: #{medsam_forward.4} parent=151 // pred_fallthru
          _
        %p1024 = scmp.lt.s32.totalorder %s82, 1
        %s1025 = scalar_select %p1024, %s82, 1
        %s1026 = smul.addr %s1025, 8
        %s1027 = scalar_lea.vmem %s1, %s1026
        %p1028 = pneg %p103
        %p1029 = pneg %p100
        %p1030 = scmp.lt.s32.totalorder %s82, 1
        %s1031 = scalar_select %p1030, %s82, 1
        %s1032 = smul.addr %s1031, 2
        %s1033 = smul.addr %s1032, 8
        %s1034 = scalar_lea.vmem %s3, %s1033
        %p1035 = pneg %p129
        %p1036 = pneg %p126
        %p1037 = pneg %p150
        %p1038 = pneg %p147
        %p1039 = pneg %p171
        %p1040 = pneg %p168
        %p1041 = pneg %p192
        %p1042 = pneg %p189
        %p1043 = pneg %p213
        %p1044 = pneg %p210
        %p1045 = pneg %p234
        %p1046 = pneg %p231
        %p1047 = pneg %p255
        %p1048 = pneg %p252
        %p1049 = pneg %p276
        %p1050 = pneg %p273
        %p1051 = pneg %p297
        %p1052 = pneg %p294
        %p1053 = pneg %p318
        %p1054 = pneg %p315
        %p1055 = pneg %p339
        %p1056 = pneg %p336
        %p1057 = pneg %p360
        %p1058 = pneg %p357
        %p1059 = pneg %p381
        %p1060 = pneg %p378
        %p1061 = pneg %p402
        %p1062 = pneg %p399
        %p1063 = pneg %p423
        %p1064 = pneg %p420
        %p1065 = pneg %p444
        %p1066 = pneg %p441
        %p1067 = pneg %p465
        %p1068 = pneg %p462
        %p1069 = pneg %p486
        %p1070 = pneg %p483
        %p1071 = pneg %p507
        %p1072 = pneg %p504
        %p1073 = pneg %p528
        %p1074 = pneg %p525
        %p1075 = pneg %p549
        %p1076 = pneg %p546
        %p1077 = pneg %p570
        %p1078 = pneg %p567
        %p1079 = pneg %p591
        %p1080 = pneg %p588
        %p1081 = pneg %p612
        %p1082 = pneg %p609
        %p1083 = pneg %p633
        %p1084 = pneg %p630
        %p1085 = pneg %p654
        %p1086 = pneg %p651
        %p1087 = pneg %p675
        %p1088 = pneg %p672
        %p1089 = pneg %p696
        %p1090 = pneg %p693
        %p1091 = pneg %p717
        %p1092 = pneg %p714
        %p1093 = pneg %p738
        %p1094 = pneg %p735
        %p1095 = pneg %p759
        %p1096 = pneg %p756
        %p1097 = pneg %p780
        %p1098 = pneg %p777
        %p1099 = pneg %p806
        %p1100 = pneg %p803
        %p1101 = scmp.lt.s32.totalorder %s82, 1
        %s1102 = scalar_select %p1101, %s82, 1
        %s1103 = smul.addr %s1102, 2
        %s1104 = smul.addr %s1103, 8
        %s1105 = scalar_lea.vmem %s67, %s1104
        %p1106 = scmp.lt.s32.totalorder %s82, 1
        %s1107 = scalar_select %p1106, %s82, 1
        %s1108 = smul.addr %s1107, 8
        %s1109 = scalar_lea.vmem %s1, %s1108
        %p1110 = scmp.lt.s32.totalorder %s82, 1
        %s1111 = scalar_select %p1110, %s82, 1
        %s1112 = smul.addr %s1111, 2
        %s1113 = smul.addr %s1112, 8
        %s1114 = scalar_lea.vmem %s3, %s1113
        %p1115 = scmp.lt.s32.totalorder %s82, 1
        %s1116 = scalar_select %p1115, %s82, 1
        %s1117 = smul.addr %s1116, 2
        %s1118 = smul.addr %s1117, 8
        %s1119 = scalar_lea.vmem %s67, %s1118
        %v1121 = vld [vmem:[%s1109] sm:$0x7f]
        %v1122 = vld [vmem:[%s1114] sm:$0xff]
        %v1123 = vld [vmem:[%s1114 + $0x8] sm:$0xff]
        %v1124 = vld [vmem:[%s7] sm:$0x1]
        %v1126 = vlaneseq
        %v1127 = vshrl.u32 %v1126, 7
        %v1128 = vsub.s32 0, %v1127
        %v1129 = vrot.slane %v1124, %v1128
        %v1131 = vadd.f32 %v1122, %v1129
        %v1132 = vadd.f32 %v1123, %v1129
        %v1133 = vld [vmem:[%s5] sm:$0xff]
        %v1134 = vld [vmem:[%s5 + $0x8] sm:$0xff]
        %v1135 = vld [vmem:[%s9] sm:$0xf]
        %v1136 = vld [vmem:[%s9 + $0x4] sm:$0xf]
        %v1137 = vpack.c.bf16 %v1121, %v1121
        %v1138 = vld [vmem:[%s11] sm:$0x1]
        %v1140 = vlaneseq
        %v1141 = vshrl.u32 %v1140, 7
        %v1142 = vsub.s32 0, %v1141
        %v1143 = vrot.slane %v1138, %v1142
        %v1147 = vunpack.c.l.b16 %v1135
        %v1148 = vunpack.c.l.b16 %v1136
        %v1149 = vpack.c.b16 %v1148, %v1147
        %vm1151 = vcmask 130048
        %v1153 = vsel %vm1151, %v1137, 0
        %1155 = vmatprep.subr.bf16.mxu0 0
        %1156 = vmatpush1.bf16.msra.mxu0 %v1149
        %1157 = vmatprep.subr.bf16.mxu0 0
        %1158 = vmatpush1.bf16.msra.mxu0 0
        %1159 = vmatprep.subr.bf16.mxu0 0
        %1160 = vmatpush1.bf16.msra.mxu0 0
        %1161 = vmatprep.subr.bf16.mxu0 0
        %1162 = vmatpush1.bf16.msra.mxu0 0
        %1163 = vmatprep.subr.bf16.mxu0 0
        %1164 = vmatpush1.bf16.msra.mxu0 0
        %1165 = vmatprep.subr.bf16.mxu0 0
        %1166 = vmatpush1.bf16.msra.mxu0 0
        %1167 = vmatprep.subr.bf16.mxu0 0
        %1168 = vmatpush1.bf16.msra.mxu0 0
        %1169 = vmatprep.subr.bf16.mxu0 0
        %1170 = vmatpush1.bf16.msra.mxu0 0
        %1171 = vmatprep.subr.bf16.mxu0 0
        %1172 = vmatpush1.bf16.msra.mxu0 0
        %1173 = vmatprep.subr.bf16.mxu0 0
        %1174 = vmatpush1.bf16.msra.mxu0 0
        %1175 = vmatprep.subr.bf16.mxu0 0
        %1176 = vmatpush1.bf16.msra.mxu0 0
        %1177 = vmatprep.subr.bf16.mxu0 0
        %1178 = vmatpush1.bf16.msra.mxu0 0
        %1179 = vmatprep.subr.bf16.mxu0 0
        %1180 = vmatpush1.bf16.msra.mxu0 0
        %1181 = vmatprep.subr.bf16.mxu0 0
        %1182 = vmatpush1.bf16.msra.mxu0 0
        %1183 = vmatprep.subr.bf16.mxu0 0
        %1184 = vmatpush1.bf16.msra.mxu0 0
        %1185 = vmatprep.subr.bf16.mxu0 0
        %1186 = vmatpush1.bf16.msra.mxu0 0
        %1187 = vmatprep.mubr.bf16.mxu0 0
        %1188 = vmatmul.mubr.bf16.gmra.mrb[0].mxu0 %v1153
        %v1189 = vpop.f32.mrb[0].mxu0
        %v1190 = vadd.f32 %v1143, %v1189
        %v1191 = vpop.f32.mrb[0].mxu0
        %v1192 = vpop.f32.mrb[0].mxu0
        %v1193 = vpop.f32.mrb[0].mxu0
        %1194 = vdwg.mxu0
        %v1195 = vld [vmem:[%s13] sm:$0xf]
        %v1196 = vld [vmem:[%s13 + $0x4] sm:$0xf]
        %v1197 = vld [vmem:[%s15] sm:$0x1]
        %v1199 = vlaneseq
        %v1200 = vshrl.u32 %v1199, 7
        %v1201 = vsub.s32 0, %v1200
        %v1202 = vrot.slane %v1197, %v1201
        %v1206 = vunpack.c.l.b16 %v1195
        %v1207 = vunpack.c.l.b16 %v1196
        %v1208 = vpack.c.b16 %v1207, %v1206
        %1210 = vmatprep.subr.bf16.mxu0 0
        %1211 = vmatpush1.bf16.msra.mxu0 %v1208
        %1212 = vmatprep.subr.bf16.mxu0 0
        %1213 = vmatpush1.bf16.msra.mxu0 0
        %1214 = vmatprep.subr.bf16.mxu0 0
        %1215 = vmatpush1.bf16.msra.mxu0 0
        %1216 = vmatprep.subr.bf16.mxu0 0
        %1217 = vmatpush1.bf16.msra.mxu0 0
        %1218 = vmatprep.subr.bf16.mxu0 0
        %1219 = vmatpush1.bf16.msra.mxu0 0
        %1220 = vmatprep.subr.bf16.mxu0 0
        %1221 = vmatpush1.bf16.msra.mxu0 0
        %1222 = vmatprep.subr.bf16.mxu0 0
        %1223 = vmatpush1.bf16.msra.mxu0 0
        %1224 = vmatprep.subr.bf16.mxu0 0
        %1225 = vmatpush1.bf16.msra.mxu0 0
        %1226 = vmatprep.subr.bf16.mxu0 0
        %1227 = vmatpush1.bf16.msra.mxu0 0
        %1228 = vmatprep.subr.bf16.mxu0 0
        %1229 = vmatpush1.bf16.msra.mxu0 0
        %1230 = vmatprep.subr.bf16.mxu0 0
        %1231 = vmatpush1.bf16.msra.mxu0 0
        %1232 = vmatprep.subr.bf16.mxu0 0
        %1233 = vmatpush1.bf16.msra.mxu0 0
        %1234 = vmatprep.subr.bf16.mxu0 0
        %1235 = vmatpush1.bf16.msra.mxu0 0
        %1236 = vmatprep.subr.bf16.mxu0 0
        %1237 = vmatpush1.bf16.msra.mxu0 0
        %1238 = vmatprep.subr.bf16.mxu0 0
        %1239 = vmatpush1.bf16.msra.mxu0 0
        %1240 = vmatprep.subr.bf16.mxu0 0
        %1241 = vmatpush1.bf16.msra.mxu0 0
        %1242 = vmatprep.mubr.bf16.mxu0 0
        %1243 = vmatmul.mubr.bf16.gmra.mrb[0].mxu0 %v1153
        %v1244 = vpop.f32.mrb[0].mxu0
        %v1245 = vadd.f32 %v1202, %v1244
        %v1246 = vpop.f32.mrb[0].mxu0
        %v1247 = vpop.f32.mrb[0].mxu0
        %v1248 = vpop.f32.mrb[0].mxu0
        %1249 = vdwg.mxu0
        %v1250 = vld [vmem:[%s17] sm:$0xf]
        %v1251 = vld [vmem:[%s17 + $0x4] sm:$0xf]
        %v1252 = vld [vmem:[%s19] sm:$0x1]
        %v1254 = vlaneseq
        %v1255 = vshrl.u32 %v1254, 7
        %v1256 = vsub.s32 0, %v1255
        %v1257 = vrot.slane %v1252, %v1256
        %v1261 = vunpack.c.l.b16 %v1250
        %v1262 = vunpack.c.l.b16 %v1251
        %v1263 = vpack.c.b16 %v1262, %v1261
        %1265 = vmatprep.subr.bf16.mxu0 0
        %1266 = vmatpush1.bf16.msra.mxu0 %v1263
        %1267 = vmatprep.subr.bf16.mxu0 0
        %1268 = vmatpush1.bf16.msra.mxu0 0
        %1269 = vmatprep.subr.bf16.mxu0 0
        %1270 = vmatpush1.bf16.msra.mxu0 0
        %1271 = vmatprep.subr.bf16.mxu0 0
        %1272 = vmatpush1.bf16.msra.mxu0 0
        %1273 = vmatprep.subr.bf16.mxu0 0
        %1274 = vmatpush1.bf16.msra.mxu0 0
        %1275 = vmatprep.subr.bf16.mxu0 0
        %1276 = vmatpush1.bf16.msra.mxu0 0
        %1277 = vmatprep.subr.bf16.mxu0 0
        %1278 = vmatpush1.bf16.msra.mxu0 0
        %1279 = vmatprep.subr.bf16.mxu0 0
        %1280 = vmatpush1.bf16.msra.mxu0 0
        %1281 = vmatprep.subr.bf16.mxu0 0
        %1282 = vmatpush1.bf16.msra.mxu0 0
        %1283 = vmatprep.subr.bf16.mxu0 0
        %1284 = vmatpush1.bf16.msra.mxu0 0
        %1285 = vmatprep.subr.bf16.mxu0 0
        %1286 = vmatpush1.bf16.msra.mxu0 0
        %1287 = vmatprep.subr.bf16.mxu0 0
        %1288 = vmatpush1.bf16.msra.mxu0 0
        %1289 = vmatprep.subr.bf16.mxu0 0
        %1290 = vmatpush1.bf16.msra.mxu0 0
        %1291 = vmatprep.subr.bf16.mxu0 0
        %1292 = vmatpush1.bf16.msra.mxu0 0
        %1293 = vmatprep.subr.bf16.mxu0 0
        %1294 = vmatpush1.bf16.msra.mxu0 0
        %1295 = vmatprep.subr.bf16.mxu0 0
        %1296 = vmatpush1.bf16.msra.mxu0 0
        %1297 = vmatprep.mubr.bf16.mxu0 0
        %1298 = vmatmul.mubr.bf16.gmra.mrb[0].mxu0 %v1153
        %v1299 = vpop.f32.mrb[0].mxu0
        %v1300 = vadd.f32 %v1257, %v1299
        %v1301 = vpop.f32.mrb[0].mxu0
        %v1302 = vpop.f32.mrb[0].mxu0
        %v1303 = vpop.f32.mrb[0].mxu0
        %1304 = vdwg.mxu0
        %v1305 = vpack.c.bf16 %v1190, %v1190
        %v1306 = vpack.c.bf16 %v1245, %v1245
        %v1308 = vsel %vm1151, %v1305, 0
        %v1311 = vsel %vm1151, %v1306, 0
        %1313 = vmatprep.subr.bf16.mxu0 0
        %1314 = vmatpush1.bf16.xpose.msra.mxu0 %v1311
        %1315 = vmatprep.subr.bf16.mxu0 0
        %1316 = vmatpush1.bf16.xpose.msra.mxu0 0
        %1317 = vmatprep.subr.bf16.mxu0 0
        %1318 = vmatpush1.bf16.xpose.msra.mxu0 0
        %1319 = vmatprep.subr.bf16.mxu0 0
        %1320 = vmatpush1.bf16.xpose.msra.mxu0 0
        %1321 = vmatprep.subr.bf16.mxu0 0
        %1322 = vmatpush1.bf16.xpose.msra.mxu0 0
        %1323 = vmatprep.subr.bf16.mxu0 0
        %1324 = vmatpush1.bf16.xpose.msra.mxu0 0
        %1325 = vmatprep.subr.bf16.mxu0 0
        %1326 = vmatpush1.bf16.xpose.msra.mxu0 0
        %1327 = vmatprep.subr.bf16.mxu0 0
        %1328 = vmatpush1.bf16.xpose.msra.mxu0 0
        %1329 = vmatprep.subr.bf16.mxu0 0
        %1330 = vmatpush1.bf16.xpose.msra.mxu0 0
        %1331 = vmatprep.subr.bf16.mxu0 0
        %1332 = vmatpush1.bf16.xpose.msra.mxu0 0
        %1333 = vmatprep.subr.bf16.mxu0 0
        %1334 = vmatpush1.bf16.xpose.msra.mxu0 0
        %1335 = vmatprep.subr.bf16.mxu0 0
        %1336 = vmatpush1.bf16.xpose.msra.mxu0 0
        %1337 = vmatprep.subr.bf16.mxu0 0
        %1338 = vmatpush1.bf16.xpose.msra.mxu0 0
        %1339 = vmatprep.subr.bf16.mxu0 0
        %1340 = vmatpush1.bf16.xpose.msra.mxu0 0
        %1341 = vmatprep.subr.bf16.mxu0 0
        %1342 = vmatpush1.bf16.xpose.msra.mxu0 0
        %1343 = vmatprep.subr.bf16.mxu0 0
        %1344 = vmatpush1.bf16.xpose.msra.mxu0 0
        %1345 = vmatprep.mubr.bf16.mxu0 0
        %1346 = vmatmul.mubr.bf16.gmra.mrb[0].mxu0 %v1308
        %v1347 = vpop.f32.mrb[0].mxu0
        %v1348 = vadd.f32 0.0, %v1347
        %v1349 = vpop.f32.mrb[0].mxu0
        %v1350 = vpop.f32.mrb[0].mxu0
        %v1351 = vpop.f32.mrb[0].mxu0
        %1352 = vdwg.mxu0
        %v1353 = vmul.f32 %v1348, 0.25
        %vm1354 = vcmask 55296
        %v1355 = vsel %vm1354, %v1353, -inf
        %1356 = vmax.xlane.f32.xlu0 %v1355
        %v1357 = vpop.xlane.xlu0 %1356
        %v1358 = vsub.f32 %v1353, %v1357
        %v1359 = vmul.f32 %v1358, 1.442695
        %v1360 = vpow.pop %v1359
        %v1361 = vsel %vm1354, %v1360, 0.0
        %1362 = vadd.xlane.f32.xlu0 %v1361
        %v1363 = vpop.xlane.xlu0 %1362
        %v1364 = vrcp.pop %v1363
        %v1365 = vmul.f32 %v1360, %v1364
        %v1366 = vpack.c.bf16 %v1365, %v1365
        %v1367 = vpack.c.bf16 %v1300, %v1300
        %vm1368 = vcmask 56320
        %v1370 = vsel %vm1368, %v1366, 0
        %vm1372 = vcmask 1042432
        %vm1373 = vcmask 1043456
        %v1374 = vsel %vm1372, 4294967295, 65535
        %v1375 = vsel %vm1373, %v1374, 0
        %v1377 = vand.u32 %v1367, %v1375
        %1379 = vmatprep.subr.bf16.mxu0 0
        %1380 = vmatpush1.bf16.msra.mxu0 %v1377
        %1381 = vmatprep.subr.bf16.mxu0 0
        %1382 = vmatpush1.bf16.msra.mxu0 0
        %1383 = vmatprep.subr.bf16.mxu0 0
        %1384 = vmatpush1.bf16.msra.mxu0 0
        %1385 = vmatprep.subr.bf16.mxu0 0
        %1386 = vmatpush1.bf16.msra.mxu0 0
        %1387 = vmatprep.subr.bf16.mxu0 0
        %1388 = vmatpush1.bf16.msra.mxu0 0
        %1389 = vmatprep.subr.bf16.mxu0 0
        %1390 = vmatpush1.bf16.msra.mxu0 0
        %1391 = vmatprep.subr.bf16.mxu0 0
        %1392 = vmatpush1.bf16.msra.mxu0 0
        %1393 = vmatprep.subr.bf16.mxu0 0
        %1394 = vmatpush1.bf16.msra.mxu0 0
        %1395 = vmatprep.subr.bf16.mxu0 0
        %1396 = vmatpush1.bf16.msra.mxu0 0
        %1397 = vmatprep.subr.bf16.mxu0 0
        %1398 = vmatpush1.bf16.msra.mxu0 0
        %1399 = vmatprep.subr.bf16.mxu0 0
        %1400 = vmatpush1.bf16.msra.mxu0 0
        %1401 = vmatprep.subr.bf16.mxu0 0
        %1402 = vmatpush1.bf16.msra.mxu0 0
        %1403 = vmatprep.subr.bf16.mxu0 0
        %1404 = vmatpush1.bf16.msra.mxu0 0
        %1405 = vmatprep.subr.bf16.mxu0 0
        %1406 = vmatpush1.bf16.msra.mxu0 0
        %1407 = vmatprep.subr.bf16.mxu0 0
        %1408 = vmatpush1.bf16.msra.mxu0 0
        %1409 = vmatprep.subr.bf16.mxu0 0
        %1410 = vmatpush1.bf16.msra.mxu0 0
        %1411 = vmatprep.mubr.bf16.mxu0 0
        %1412 = vmatmul.mubr.bf16.gmra.mrb[0].mxu0 %v1370
        %v1413 = vpop.f32.mrb[0].mxu0
        %v1414 = vadd.f32 0.0, %v1413
        %v1415 = vpop.f32.mrb[0].mxu0
        %v1416 = vpop.f32.mrb[0].mxu0
        %v1417 = vpop.f32.mrb[0].mxu0
        %1418 = vdwg.mxu0
        %v1419 = vld [vmem:[%s21] sm:$0xf]
        %v1420 = vld [vmem:[%s21 + $0x4] sm:$0xf]
        %v1421 = vpack.c.bf16 %v1414, %v1414
        %v1422 = vld [vmem:[%s23] sm:$0x1]
        %v1424 = vlaneseq
        %v1425 = vshrl.u32 %v1424, 7
        %v1426 = vsub.s32 0, %v1425
        %v1427 = vrot.slane %v1422, %v1426
        %v1431 = vunpack.c.l.b16 %v1419
        %v1432 = vunpack.c.l.b16 %v1420
        %v1433 = vpack.c.b16 %v1432, %v1431
        %v1436 = vsel %vm1151, %v1421, 0
        %1438 = vmatprep.subr.bf16.mxu0 0
        %1439 = vmatpush1.bf16.msra.mxu0 %v1433
        %1440 = vmatprep.subr.bf16.mxu0 0
        %1441 = vmatpush1.bf16.msra.mxu0 0
        %1442 = vmatprep.subr.bf16.mxu0 0
        %1443 = vmatpush1.bf16.msra.mxu0 0
        %1444 = vmatprep.subr.bf16.mxu0 0
        %1445 = vmatpush1.bf16.msra.mxu0 0
        %1446 = vmatprep.subr.bf16.mxu0 0
        %1447 = vmatpush1.bf16.msra.mxu0 0
        %1448 = vmatprep.subr.bf16.mxu0 0
        %1449 = vmatpush1.bf16.msra.mxu0 0
        %1450 = vmatprep.subr.bf16.mxu0 0
        %1451 = vmatpush1.bf16.msra.mxu0 0
        %1452 = vmatprep.subr.bf16.mxu0 0
        %1453 = vmatpush1.bf16.msra.mxu0 0
        %1454 = vmatprep.subr.bf16.mxu0 0
        %1455 = vmatpush1.bf16.msra.mxu0 0
        %1456 = vmatprep.subr.bf16.mxu0 0
        %1457 = vmatpush1.bf16.msra.mxu0 0
        %1458 = vmatprep.subr.bf16.mxu0 0
        %1459 = vmatpush1.bf16.msra.mxu0 0
        %1460 = vmatprep.subr.bf16.mxu0 0
        %1461 = vmatpush1.bf16.msra.mxu0 0
        %1462 = vmatprep.subr.bf16.mxu0 0
        %1463 = vmatpush1.bf16.msra.mxu0 0
        %1464 = vmatprep.subr.bf16.mxu0 0
        %1465 = vmatpush1.bf16.msra.mxu0 0
        %1466 = vmatprep.subr.bf16.mxu0 0
        %1467 = vmatpush1.bf16.msra.mxu0 0
        %1468 = vmatprep.subr.bf16.mxu0 0
        %1469 = vmatpush1.bf16.msra.mxu0 0
        %1470 = vmatprep.mubr.bf16.mxu0 0
        %1471 = vmatmul.mubr.bf16.gmra.mrb[0].mxu0 %v1436
        %v1472 = vpop.f32.mrb[0].mxu0
        %v1473 = vadd.f32 %v1427, %v1472
        %v1474 = vpop.f32.mrb[0].mxu0
        %v1475 = vpop.f32.mrb[0].mxu0
        %v1476 = vpop.f32.mrb[0].mxu0
        %1477 = vdwg.mxu0
        %v1478 = vld [vmem:[%s25] sm:$0x1]
        %v1479 = vld [vmem:[%s27] sm:$0x1]
        %vm1480 = vcmask 129024
        %v1481 = vsel %vm1480, %v1473, 0.0
        %1482 = vadd.xlane.f32.xlu0 %v1481
        %v1483 = vpop.xlane.xlu0 %1482
        %v1484 = vrcp.pop 16.0
        %v1485 = vmul.f32 %v1483, %v1484
        %v1486 = vsub.f32 %v1473, %v1485
        %v1487 = vmul.f32 %v1486, %v1486
        %v1488 = vsel %vm1480, %v1487, 0.0
        %1489 = vadd.xlane.f32.xlu0 %v1488
        %v1490 = vpop.xlane.xlu0 %1489
        %v1491 = vmul.f32 %v1490, %v1484
        %v1492 = vadd.f32 %v1491, 1e-06
        %v1493 = vrsqrt.pop %v1492
        %v1494 = vmul.f32 %v1486, %v1493
        %v1496 = vlaneseq
        %v1497 = vshrl.u32 %v1496, 7
        %v1498 = vsub.s32 0, %v1497
        %v1499 = vrot.slane %v1478, %v1498
        %v1501 = vmul.f32 %v1494, %v1499
        %v1503 = vlaneseq
        %v1504 = vshrl.u32 %v1503, 7
        %v1505 = vsub.s32 0, %v1504
        %v1506 = vrot.slane %v1479, %v1505
        %v1508 = vadd.f32 %v1501, %v1506
        %v1509 = vadd.f32 %v1131, %v1133
        %v1510 = vadd.f32 %v1132, %v1134
        %v1511 = vadd.f32 %v1508, %v1121
        %s1512 = scalar_lea.vmem %s9, 8
        %v1513 = vld [vmem:[%s1512] sm:$0xf]
        %v1514 = vld [vmem:[%s1512 + $0x4] sm:$0xf]
        %v1515 = vpack.c.bf16 %v1511, %v1511
        %s1516 = scalar_lea.vmem %s11, 1
        %v1517 = vld [vmem:[%s1516] sm:$0x1]
        %v1519 = vlaneseq
        %v1520 = vshrl.u32 %v1519, 7
        %v1521 = vsub.s32 0, %v1520
        %v1522 = vrot.slane %v1517, %v1521
        %v1526 = vunpack.c.l.b16 %v1513
        %v1527 = vunpack.c.l.b16 %v1514
        %v1528 = vpack.c.b16 %v1527, %v1526
        %v1531 = vsel %vm1151, %v1515, 0
        %1533 = vmatprep.subr.bf16.mxu0 0
        %1534 = vmatpush1.bf16.msra.mxu0 %v1528
        %1535 = vmatprep.subr.bf16.mxu0 0
        %1536 = vmatpush1.bf16.msra.mxu0 0
        %1537 = vmatprep.subr.bf16.mxu0 0
        %1538 = vmatpush1.bf16.msra.mxu0 0
        %1539 = vmatprep.subr.bf16.mxu0 0
        %1540 = vmatpush1.bf16.msra.mxu0 0
        %1541 = vmatprep.subr.bf16.mxu0 0
        %1542 = vmatpush1.bf16.msra.mxu0 0
        %1543 = vmatprep.subr.bf16.mxu0 0
        %1544 = vmatpush1.bf16.msra.mxu0 0
        %1545 = vmatprep.subr.bf16.mxu0 0
        %1546 = vmatpush1.bf16.msra.mxu0 0
        %1547 = vmatprep.subr.bf16.mxu0 0
        %1548 = vmatpush1.bf16.msra.mxu0 0
        %1549 = vmatprep.subr.bf16.mxu0 0
        %1550 = vmatpush1.bf16.msra.mxu0 0
        %1551 = vmatprep.subr.bf16.mxu0 0
        %1552 = vmatpush1.bf16.msra.mxu0 0
        %1553 = vmatprep.subr.bf16.mxu0 0
        %1554 = vmatpush1.bf16.msra.mxu0 0
        %1555 = vmatprep.subr.bf16.mxu0 0
        %1556 = vmatpush1.bf16.msra.mxu0 0
        %1557 = vmatprep.subr.bf16.mxu0 0
        %1558 = vmatpush1.bf16.msra.mxu0 0
        %1559 = vmatprep.subr.bf16.mxu0 0
        %1560 = vmatpush1.bf16.msra.mxu0 0
        %1561 = vmatprep.subr.bf16.mxu0 0
        %1562 = vmatpush1.bf16.msra.mxu0 0
        %1563 = vmatprep.subr.bf16.mxu0 0
        %1564 = vmatpush1.bf16.msra.mxu0 0
        %1565 = vmatprep.mubr.bf16.mxu0 0
        %1566 = vmatmul.mubr.bf16.gmra.mrb[0].mxu0 %v1531
        %v1567 = vpop.f32.mrb[0].mxu0
        %v1568 = vadd.f32 %v1522, %v1567
        %v1569 = vpop.f32.mrb[0].mxu0
        %v1570 = vpop.f32.mrb[0].mxu0
        %v1571 = vpop.f32.mrb[0].mxu0
        %1572 = vdwg.mxu0
        %s1573 = scalar_lea.vmem %s13, 8
        %v1574 = vld [vmem:[%s1573] sm:$0xf]
        %v1575 = vld [vmem:[%s1573 + $0x4] sm:$0xf]
        %v1576 = vpack.c.bf16 %v1510, %v1509
        %s1577 = scalar_lea.vmem %s15, 1
        %v1578 = vld [vmem:[%s1577] sm:$0x1]
        %v1580 = vlaneseq
        %v1581 = vshrl.u32 %v1580, 7
        %v1582 = vsub.s32 0, %v1581
        %v1583 = vrot.slane %v1578, %v1582
        %v1587 = vunpack.c.l.b16 %v1574
        %v1588 = vunpack.c.l.b16 %v1575
        %v1589 = vpack.c.b16 %v1588, %v1587
        %v1592 = vsel %vm1151, %v1576, 0
        %1594 = vmatprep.subr.bf16.mxu0 0
        %1595 = vmatpush1.bf16.msra.mxu0 %v1589
        %1596 = vmatprep.subr.bf16.mxu0 0
        %1597 = vmatpush1.bf16.msra.mxu0 0
        %1598 = vmatprep.subr.bf16.mxu0 0
        %1599 = vmatpush1.bf16.msra.mxu0 0
        %1600 = vmatprep.subr.bf16.mxu0 0
        %1601 = vmatpush1.bf16.msra.mxu0 0
        %1602 = vmatprep.subr.bf16.mxu0 0
        %1603 = vmatpush1.bf16.msra.mxu0 0
        %1604 = vmatprep.subr.bf16.mxu0 0
        %1605 = vmatpush1.bf16.msra.mxu0 0
        %1606 = vmatprep.subr.bf16.mxu0 0
        %1607 = vmatpush1.bf16.msra.mxu0 0
        %1608 = vmatprep.subr.bf16.mxu0 0
        %1609 = vmatpush1.bf16.msra.mxu0 0
        %1610 = vmatprep.subr.bf16.mxu0 0
        %1611 = vmatpush1.bf16.msra.mxu0 0
        %1612 = vmatprep.subr.bf16.mxu0 0
        %1613 = vmatpush1.bf16.msra.mxu0 0
        %1614 = vmatprep.subr.bf16.mxu0 0
        %1615 = vmatpush1.bf16.msra.mxu0 0
        %1616 = vmatprep.subr.bf16.mxu0 0
        %1617 = vmatpush1.bf16.msra.mxu0 0
        %1618 = vmatprep.subr.bf16.mxu0 0
        %1619 = vmatpush1.bf16.msra.mxu0 0
        %1620 = vmatprep.subr.bf16.mxu0 0
        %1621 = vmatpush1.bf16.msra.mxu0 0
        %1622 = vmatprep.subr.bf16.mxu0 0
        %1623 = vmatpush1.bf16.msra.mxu0 0
        %1624 = vmatprep.subr.bf16.mxu0 0
        %1625 = vmatpush1.bf16.msra.mxu0 0
        %1626 = vmatprep.mubr.bf16.mxu0 0
        %1627 = vmatmul.mubr.bf16.gmra.mrb[0].mxu0 %v1592
        %v1628 = vpop.f32.mrb[0].mxu0
        %v1629 = vadd.f32 %v1583, %v1628
        %v1630 = vpop.f32.mrb[0].mxu0
        %v1631 = vpop.f32.mrb[0].mxu0
        %v1632 = vadd.f32 %v1583, %v1631
        %v1633 = vpop.f32.mrb[0].mxu0
        %1634 = vdwg.mxu0
        %s1635 = scalar_lea.vmem %s17, 8
        %v1636 = vld [vmem:[%s1635] sm:$0xf]
        %v1637 = vld [vmem:[%s1635 + $0x4] sm:$0xf]
        %v1638 = vpack.c.bf16 %v1132, %v1131
        %s1639 = scalar_lea.vmem %s19, 1
        %v1640 = vld [vmem:[%s1639] sm:$0x1]
        %v1642 = vlaneseq
        %v1643 = vshrl.u32 %v1642, 7
        %v1644 = vsub.s32 0, %v1643
        %v1645 = vrot.slane %v1640, %v1644
        %v1649 = vunpack.c.l.b16 %v1636
        %v1650 = vunpack.c.l.b16 %v1637
        %v1651 = vpack.c.b16 %v1650, %v1649
        %v1654 = vsel %vm1151, %v1638, 0
        %1656 = vmatprep.subr.bf16.mxu0 0
        %1657 = vmatpush1.bf16.msra.mxu0 %v1651
        %1658 = vmatprep.subr.bf16.mxu0 0
        %1659 = vmatpush1.bf16.msra.mxu0 0
        %1660 = vmatprep.subr.bf16.mxu0 0
        %1661 = vmatpush1.bf16.msra.mxu0 0
        %1662 = vmatprep.subr.bf16.mxu0 0
        %1663 = vmatpush1.bf16.msra.mxu0 0
        %1664 = vmatprep.subr.bf16.mxu0 0
        %1665 = vmatpush1.bf16.msra.mxu0 0
        %1666 = vmatprep.subr.bf16.mxu0 0
        %1667 = vmatpush1.bf16.msra.mxu0 0
        %1668 = vmatprep.subr.bf16.mxu0 0
        %1669 = vmatpush1.bf16.msra.mxu0 0
        %1670 = vmatprep.subr.bf16.mxu0 0
        %1671 = vmatpush1.bf16.msra.mxu0 0
        %1672 = vmatprep.subr.bf16.mxu0 0
        %1673 = vmatpush1.bf16.msra.mxu0 0
        %1674 = vmatprep.subr.bf16.mxu0 0
        %1675 = vmatpush1.bf16.msra.mxu0 0
        %1676 = vmatprep.subr.bf16.mxu0 0
        %1677 = vmatpush1.bf16.msra.mxu0 0
        %1678 = vmatprep.subr.bf16.mxu0 0
        %1679 = vmatpush1.bf16.msra.mxu0 0
        %1680 = vmatprep.subr.bf16.mxu0 0
        %1681 = vmatpush1.bf16.msra.mxu0 0
        %1682 = vmatprep.subr.bf16.mxu0 0
        %1683 = vmatpush1.bf16.msra.mxu0 0
        %1684 = vmatprep.subr.bf16.mxu0 0
        %1685 = vmatpush1.bf16.msra.mxu0 0
        %1686 = vmatprep.subr.bf16.mxu0 0
        %1687 = vmatpush1.bf16.msra.mxu0 0
        %1688 = vmatprep.mubr.bf16.mxu0 0
        %1689 = vmatmul.mubr.bf16.gmra.mrb[0].mxu0 %v1654
        %v1690 = vpop.f32.mrb[0].mxu0
        %v1691 = vadd.f32 %v1645, %v1690
        %v1692 = vpop.f32.mrb[0].mxu0
        %v1693 = vpop.f32.mrb[0].mxu0
        %v1694 = vadd.f32 %v1645, %v1693
        %v1695 = vpop.f32.mrb[0].mxu0
        %1696 = vdwg.mxu0
        %v1697 = vpack.c.bf16 %v1568, %v1568
        %v1698 = vpack.c.bf16 %v1632, %v1629
        %v1700 = vsel %vm1151, %v1697, 0
        %v1703 = vsel %vm1151, %v1698, 0
        %1705 = vmatprep.subr.bf16.mxu0 0
        %1706 = vmatpush1.bf16.xpose.msra.mxu0 %v1703
        %1707 = vmatprep.subr.bf16.mxu0 0
        %1708 = vmatpush1.bf16.xpose.msra.mxu0 0
        %1709 = vmatprep.subr.bf16.mxu0 0
        %1710 = vmatpush1.bf16.xpose.msra.mxu0 0
        %1711 = vmatprep.subr.bf16.mxu0 0
        %1712 = vmatpush1.bf16.xpose.msra.mxu0 0
        %1713 = vmatprep.subr.bf16.mxu0 0
        %1714 = vmatpush1.bf16.xpose.msra.mxu0 0
        %1715 = vmatprep.subr.bf16.mxu0 0
        %1716 = vmatpush1.bf16.xpose.msra.mxu0 0
        %1717 = vmatprep.subr.bf16.mxu0 0
        %1718 = vmatpush1.bf16.xpose.msra.mxu0 0
        %1719 = vmatprep.subr.bf16.mxu0 0
        %1720 = vmatpush1.bf16.xpose.msra.mxu0 0
        %1721 = vmatprep.subr.bf16.mxu0 0
        %1722 = vmatpush1.bf16.xpose.msra.mxu0 0
        %1723 = vmatprep.subr.bf16.mxu0 0
        %1724 = vmatpush1.bf16.xpose.msra.mxu0 0
        %1725 = vmatprep.subr.bf16.mxu0 0
        %1726 = vmatpush1.bf16.xpose.msra.mxu0 0
        %1727 = vmatprep.subr.bf16.mxu0 0
        %1728 = vmatpush1.bf16.xpose.msra.mxu0 0
        %1729 = vmatprep.subr.bf16.mxu0 0
        %1730 = vmatpush1.bf16.xpose.msra.mxu0 0
        %1731 = vmatprep.subr.bf16.mxu0 0
        %1732 = vmatpush1.bf16.xpose.msra.mxu0 0
        %1733 = vmatprep.subr.bf16.mxu0 0
        %1734 = vmatpush1.bf16.xpose.msra.mxu0 0
        %1735 = vmatprep.subr.bf16.mxu0 0
        %1736 = vmatpush1.bf16.xpose.msra.mxu0 0
        %1737 = vmatprep.mubr.bf16.mxu0 0
        %1738 = vmatmul.mubr.bf16.gmra.mrb[0].mxu0 %v1700
        %v1739 = vpop.f32.mrb[0].mxu0
        %v1740 = vadd.f32 0.0, %v1739
        %v1741 = vpop.f32.mrb[0].mxu0
        %v1742 = vpop.f32.mrb[0].mxu0
        %v1743 = vpop.f32.mrb[0].mxu0
        %1744 = vdwg.mxu0
        %v1745 = vmul.f32 %v1740, 0.25
        %v1746 = vsel %vm1480, %v1745, -inf
        %1747 = vmax.xlane.f32.xlu0 %v1746
        %v1748 = vpop.xlane.xlu0 %1747
        %v1749 = vsub.f32 %v1745, %v1748
        %v1750 = vmul.f32 %v1749, 1.442695
        %v1751 = vpow.pop %v1750
        %v1752 = vsel %vm1480, %v1751, 0.0
        %1753 = vadd.xlane.f32.xlu0 %v1752
        %v1754 = vpop.xlane.xlu0 %1753
        %v1755 = vrcp.pop %v1754
        %v1756 = vmul.f32 %v1751, %v1755
        %v1757 = vpack.c.bf16 %v1756, %v1756
        %v1758 = vpack.c.bf16 %v1694, %v1691
        %v1760 = vsel %vm1151, %v1757, 0
        %1762 = vmatprep.subr.bf16.mxu0 0
        %1763 = vmatpush1.bf16.msra.mxu0 %v1758
        %1764 = vmatprep.subr.bf16.mxu0 0
        %1765 = vmatpush1.bf16.msra.mxu0 0
        %1766 = vmatprep.subr.bf16.mxu0 0
        %1767 = vmatpush1.bf16.msra.mxu0 0
        %1768 = vmatprep.subr.bf16.mxu0 0
        %1769 = vmatpush1.bf16.msra.mxu0 0
        %1770 = vmatprep.subr.bf16.mxu0 0
        %1771 = vmatpush1.bf16.msra.mxu0 0
        %1772 = vmatprep.subr.bf16.mxu0 0
        %1773 = vmatpush1.bf16.msra.mxu0 0
        %1774 = vmatprep.subr.bf16.mxu0 0
        %1775 = vmatpush1.bf16.msra.mxu0 0
        %1776 = vmatprep.subr.bf16.mxu0 0
        %1777 = vmatpush1.bf16.msra.mxu0 0
        %1778 = vmatprep.subr.bf16.mxu0 0
        %1779 = vmatpush1.bf16.msra.mxu0 0
        %1780 = vmatprep.subr.bf16.mxu0 0
        %1781 = vmatpush1.bf16.msra.mxu0 0
        %1782 = vmatprep.subr.bf16.mxu0 0
        %1783 = vmatpush1.bf16.msra.mxu0 0
        %1784 = vmatprep.subr.bf16.mxu0 0
        %1785 = vmatpush1.bf16.msra.mxu0 0
        %1786 = vmatprep.subr.bf16.mxu0 0
        %1787 = vmatpush1.bf16.msra.mxu0 0
        %1788 = vmatprep.subr.bf16.mxu0 0
        %1789 = vmatpush1.bf16.msra.mxu0 0
        %1790 = vmatprep.subr.bf16.mxu0 0
        %1791 = vmatpush1.bf16.msra.mxu0 0
        %1792 = vmatprep.subr.bf16.mxu0 0
        %1793 = vmatpush1.bf16.msra.mxu0 0
        %1794 = vmatprep.mubr.bf16.mxu0 0
        %1795 = vmatmul.mubr.bf16.gmra.mrb[0].mxu0 %v1760
        %v1796 = vpop.f32.mrb[0].mxu0
        %v1797 = vadd.f32 0.0, %v1796
        %v1798 = vpop.f32.mrb[0].mxu0
        %v1799 = vpop.f32.mrb[0].mxu0
        %v1800 = vpop.f32.mrb[0].mxu0
        %1801 = vdwg.mxu0
        %s1802 = scalar_lea.vmem %s21, 8
        %v1803 = vld [vmem:[%s1802] sm:$0xf]
        %v1804 = vld [vmem:[%s1802 + $0x4] sm:$0xf]
        %v1805 = vpack.c.bf16 %v1797, %v1797
        %s1806 = scalar_lea.vmem %s23, 1
        %v1807 = vld [vmem:[%s1806] sm:$0x1]
        %v1809 = vlaneseq
        %v1810 = vshrl.u32 %v1809, 7
        %v1811 = vsub.s32 0, %v1810
        %v1812 = vrot.slane %v1807, %v1811
        %v1816 = vunpack.c.l.b16 %v1803
        %v1817 = vunpack.c.l.b16 %v1804
        %v1818 = vpack.c.b16 %v1817, %v1816
        %v1821 = vsel %vm1151, %v1805, 0
        %1823 = vmatprep.subr.bf16.mxu0 0
        %1824 = vmatpush1.bf16.msra.mxu0 %v1818
        %1825 = vmatprep.subr.bf16.mxu0 0
        %1826 = vmatpush1.bf16.msra.mxu0 0
        %1827 = vmatprep.subr.bf16.mxu0 0
        %1828 = vmatpush1.bf16.msra.mxu0 0
        %1829 = vmatprep.subr.bf16.mxu0 0
        %1830 = vmatpush1.bf16.msra.mxu0 0
        %1831 = vmatprep.subr.bf16.mxu0 0
        %1832 = vmatpush1.bf16.msra.mxu0 0
        %1833 = vmatprep.subr.bf16.mxu0 0
        %1834 = vmatpush1.bf16.msra.mxu0 0
        %1835 = vmatprep.subr.bf16.mxu0 0
        %1836 = vmatpush1.bf16.msra.mxu0 0
        %1837 = vmatprep.subr.bf16.mxu0 0
        %1838 = vmatpush1.bf16.msra.mxu0 0
        %1839 = vmatprep.subr.bf16.mxu0 0
        %1840 = vmatpush1.bf16.msra.mxu0 0
        %1841 = vmatprep.subr.bf16.mxu0 0
        %1842 = vmatpush1.bf16.msra.mxu0 0
        %1843 = vmatprep.subr.bf16.mxu0 0
        %1844 = vmatpush1.bf16.msra.mxu0 0
        %1845 = vmatprep.subr.bf16.mxu0 0
        %1846 = vmatpush1.bf16.msra.mxu0 0
        %1847 = vmatprep.subr.bf16.mxu0 0
        %1848 = vmatpush1.bf16.msra.mxu0 0
        %1849 = vmatprep.subr.bf16.mxu0 0
        %1850 = vmatpush1.bf16.msra.mxu0 0
        %1851 = vmatprep.subr.bf16.mxu0 0
        %1852 = vmatpush1.bf16.msra.mxu0 0
        %1853 = vmatprep.subr.bf16.mxu0 0
        %1854 = vmatpush1.bf16.msra.mxu0 0
        %1855 = vmatprep.mubr.bf16.mxu0 0
        %1856 = vmatmul.mubr.bf16.gmra.mrb[0].mxu0 %v1821
        %v1857 = vpop.f32.mrb[0].mxu0
        %v1858 = vadd.f32 %v1812, %v1857
        %v1859 = vpop.f32.mrb[0].mxu0
        %v1860 = vpop.f32.mrb[0].mxu0
        %v1861 = vpop.f32.mrb[0].mxu0
        %1862 = vdwg.mxu0
        %v1863 = vadd.f32 %v1508, %v1858
        %s1864 = scalar_lea.vmem %s25, 1
        %v1865 = vld [vmem:[%s1864] sm:$0x1]
        %s1866 = scalar_lea.vmem %s27, 1
        %v1867 = vld [vmem:[%s1866] sm:$0x1]
        %v1868 = vsel %vm1480, %v1863, 0.0
        %1869 = vadd.xlane.f32.xlu0 %v1868
        %v1870 = vpop.xlane.xlu0 %1869
        %v1871 = vmul.f32 %v1870, %v1484
        %v1872 = vsub.f32 %v1863, %v1871
        %v1873 = vmul.f32 %v1872, %v1872
        %v1874 = vsel %vm1480, %v1873, 0.0
        %1875 = vadd.xlane.f32.xlu0 %v1874
        %v1876 = vpop.xlane.xlu0 %1875
        %v1877 = vmul.f32 %v1876, %v1484
        %v1878 = vadd.f32 %v1877, 1e-06
        %v1879 = vrsqrt.pop %v1878
        %v1880 = vmul.f32 %v1872, %v1879
        %v1882 = vlaneseq
        %v1883 = vshrl.u32 %v1882, 7
        %v1884 = vsub.s32 0, %v1883
        %v1885 = vrot.slane %v1865, %v1884
        %v1887 = vmul.f32 %v1880, %v1885
        %v1889 = vlaneseq
        %v1890 = vshrl.u32 %v1889, 7
        %v1891 = vsub.s32 0, %v1890
        %v1892 = vrot.slane %v1867, %v1891
        %v1894 = vadd.f32 %v1887, %v1892
        %v1895 = vld [vmem:[%s29] sm:$0xf]
        %v1896 = vld [vmem:[%s29 + $0x4] sm:$0xf]
        %v1897 = vpack.c.bf16 %v1894, %v1894
        %v1898 = vld [vmem:[%s31] sm:$0x1]
        %v1900 = vlaneseq
        %v1901 = vshrl.u32 %v1900, 7
        %v1902 = vsub.s32 0, %v1901
        %v1903 = vrot.slane %v1898, %v1902
        %v1907 = vunpack.c.l.b16 %v1895
        %v1908 = vunpack.c.l.b16 %v1896
        %v1909 = vpack.c.b16 %v1908, %v1907
        %v1912 = vsel %vm1151, %v1897, 0
        %1914 = vmatprep.subr.bf16.mxu0 0
        %1915 = vmatpush1.bf16.msra.mxu0 %v1909
        %1916 = vmatprep.subr.bf16.mxu0 0
        %1917 = vmatpush1.bf16.msra.mxu0 0
        %1918 = vmatprep.subr.bf16.mxu0 0
        %1919 = vmatpush1.bf16.msra.mxu0 0
        %1920 = vmatprep.subr.bf16.mxu0 0
        %1921 = vmatpush1.bf16.msra.mxu0 0
        %1922 = vmatprep.subr.bf16.mxu0 0
        %1923 = vmatpush1.bf16.msra.mxu0 0
        %1924 = vmatprep.subr.bf16.mxu0 0
        %1925 = vmatpush1.bf16.msra.mxu0 0
        %1926 = vmatprep.subr.bf16.mxu0 0
        %1927 = vmatpush1.bf16.msra.mxu0 0
        %1928 = vmatprep.subr.bf16.mxu0 0
        %1929 = vmatpush1.bf16.msra.mxu0 0
        %1930 = vmatprep.subr.bf16.mxu0 0
        %1931 = vmatpush1.bf16.msra.mxu0 0
        %1932 = vmatprep.subr.bf16.mxu0 0
        %1933 = vmatpush1.bf16.msra.mxu0 0
        %1934 = vmatprep.subr.bf16.mxu0 0
        %1935 = vmatpush1.bf16.msra.mxu0 0
        %1936 = vmatprep.subr.bf16.mxu0 0
        %1937 = vmatpush1.bf16.msra.mxu0 0
        %1938 = vmatprep.subr.bf16.mxu0 0
        %1939 = vmatpush1.bf16.msra.mxu0 0
        %1940 = vmatprep.subr.bf16.mxu0 0
        %1941 = vmatpush1.bf16.msra.mxu0 0
        %1942 = vmatprep.subr.bf16.mxu0 0
        %1943 = vmatpush1.bf16.msra.mxu0 0
        %1944 = vmatprep.subr.bf16.mxu0 0
        %1945 = vmatpush1.bf16.msra.mxu0 0
        %1946 = vmatprep.mubr.bf16.mxu0 0
        %1947 = vmatmul.mubr.bf16.gmra.mrb[0].mxu0 %v1912
        %v1948 = vpop.f32.mrb[0].mxu0
        %v1949 = vadd.f32 %v1903, %v1948
        %v1950 = vpop.f32.mrb[0].mxu0
        %v1951 = vpop.f32.mrb[0].mxu0
        %v1952 = vpop.f32.mrb[0].mxu0
        %1953 = vdwg.mxu0
        %v1954 = vmax.f32 %v1949, 0.0
        %v1955 = vld [vmem:[%s33] sm:$0xf]
        %v1956 = vld [vmem:[%s33 + $0x4] sm:$0xf]
        %v1957 = vld [vmem:[%s33 + $0x8] sm:$0xf]
        %v1958 = vld [vmem:[%s33 + $0xc] sm:$0xf]
        %v1959 = vpack.c.bf16 %v1954, %v1954
        %v1960 = vld [vmem:[%s35] sm:$0x1]
        %v1962 = vlaneseq
        %v1963 = vshrl.u32 %v1962, 7
        %v1964 = vsub.s32 0, %v1963
        %v1965 = vrot.slane %v1960, %v1964
        %v1971 = vunpack.c.l.b16 %v1955
        %v1972 = vunpack.c.l.b16 %v1956
        %v1973 = vunpack.c.l.b16 %v1957
        %v1974 = vunpack.c.l.b16 %v1958
        %v1975 = vpack.c.b16 %v1972, %v1971
        %v1976 = vpack.c.b16 %v1974, %v1973
        %vm1979 = vcmask 261120
        %v1981 = vsel %vm1979, %v1959, 0
        %1983 = vmatprep.subr.bf16.mxu0 0
        %1984 = vmatpush1.bf16.msra.mxu0 %v1975
        %1985 = vmatprep.subr.bf16.mxu0 0
        %1986 = vmatpush1.bf16.msra.mxu0 %v1976
        %1987 = vmatprep.subr.bf16.mxu0 0
        %1988 = vmatpush1.bf16.msra.mxu0 0
        %1989 = vmatprep.subr.bf16.mxu0 0
        %1990 = vmatpush1.bf16.msra.mxu0 0
        %1991 = vmatprep.subr.bf16.mxu0 0
        %1992 = vmatpush1.bf16.msra.mxu0 0
        %1993 = vmatprep.subr.bf16.mxu0 0
        %1994 = vmatpush1.bf16.msra.mxu0 0
        %1995 = vmatprep.subr.bf16.mxu0 0
        %1996 = vmatpush1.bf16.msra.mxu0 0
        %1997 = vmatprep.subr.bf16.mxu0 0
        %1998 = vmatpush1.bf16.msra.mxu0 0
        %1999 = vmatprep.subr.bf16.mxu0 0
        %2000 = vmatpush1.bf16.msra.mxu0 0
        %2001 = vmatprep.subr.bf16.mxu0 0
        %2002 = vmatpush1.bf16.msra.mxu0 0
        %2003 = vmatprep.subr.bf16.mxu0 0
        %2004 = vmatpush1.bf16.msra.mxu0 0
        %2005 = vmatprep.subr.bf16.mxu0 0
        %2006 = vmatpush1.bf16.msra.mxu0 0
        %2007 = vmatprep.subr.bf16.mxu0 0
        %2008 = vmatpush1.bf16.msra.mxu0 0
        %2009 = vmatprep.subr.bf16.mxu0 0
        %2010 = vmatpush1.bf16.msra.mxu0 0
        %2011 = vmatprep.subr.bf16.mxu0 0
        %2012 = vmatpush1.bf16.msra.mxu0 0
        %2013 = vmatprep.subr.bf16.mxu0 0
        %2014 = vmatpush1.bf16.msra.mxu0 0
        %2015 = vmatprep.mubr.bf16.mxu0 0
        %2016 = vmatmul.mubr.bf16.gmra.mrb[0].mxu0 %v1981
        %v2017 = vpop.f32.mrb[0].mxu0
        %v2018 = vadd.f32 %v1965, %v2017
        %v2019 = vpop.f32.mrb[0].mxu0
        %v2020 = vpop.f32.mrb[0].mxu0
        %v2021 = vpop.f32.mrb[0].mxu0
        %2022 = vdwg.mxu0
        %v2023 = vadd.f32 %v1894, %v2018
        %s2024 = scalar_lea.vmem %s25, 2
        %v2025 = vld [vmem:[%s2024] sm:$0x1]
        %s2026 = scalar_lea.vmem %s27, 2
        %v2027 = vld [vmem:[%s2026] sm:$0x1]
        %v2028 = vsel %vm1480, %v2023, 0.0
        %2029 = vadd.xlane.f32.xlu0 %v2028
        %v2030 = vpop.xlane.xlu0 %2029
        %v2031 = vmul.f32 %v2030, %v1484
        %v2032 = vsub.f32 %v2023, %v2031
        %v2033 = vmul.f32 %v2032, %v2032
        %v2034 = vsel %vm1480, %v2033, 0.0
        %2035 = vadd.xlane.f32.xlu0 %v2034
        %v2036 = vpop.xlane.xlu0 %2035
        %v2037 = vmul.f32 %v2036, %v1484
        %v2038 = vadd.f32 %v2037, 1e-06
        %v2039 = vrsqrt.pop %v2038
        %v2040 = vmul.f32 %v2032, %v2039
        %v2042 = vlaneseq
        %v2043 = vshrl.u32 %v2042, 7
        %v2044 = vsub.s32 0, %v2043
        %v2045 = vrot.slane %v2025, %v2044
        %v2047 = vmul.f32 %v2040, %v2045
        %v2049 = vlaneseq
        %v2050 = vshrl.u32 %v2049, 7
        %v2051 = vsub.s32 0, %v2050
        %v2052 = vrot.slane %v2027, %v2051
        %v2054 = vadd.f32 %v2047, %v2052
        %v2055 = vadd.f32 %v2054, %v1121
        %s2056 = scalar_lea.vmem %s9, 16
        %v2057 = vld [vmem:[%s2056] sm:$0xf]
        %v2058 = vld [vmem:[%s2056 + $0x4] sm:$0xf]
        %s2059 = scalar_lea.vmem %s11, 2
        %v2060 = vld [vmem:[%s2059] sm:$0x1]
        %v2062 = vlaneseq
        %v2063 = vshrl.u32 %v2062, 7
        %v2064 = vsub.s32 0, %v2063
        %v2065 = vrot.slane %v2060, %v2064
        %v2069 = vunpack.c.l.b16 %v2057
        %v2070 = vunpack.c.l.b16 %v2058
        %v2071 = vpack.c.b16 %v2070, %v2069
        %2073 = vmatprep.subr.bf16.mxu0 0
        %2074 = vmatpush1.bf16.msra.mxu0 %v2071
        %2075 = vmatprep.subr.bf16.mxu0 0
        %2076 = vmatpush1.bf16.msra.mxu0 0
        %2077 = vmatprep.subr.bf16.mxu0 0
        %2078 = vmatpush1.bf16.msra.mxu0 0
        %2079 = vmatprep.subr.bf16.mxu0 0
        %2080 = vmatpush1.bf16.msra.mxu0 0
        %2081 = vmatprep.subr.bf16.mxu0 0
        %2082 = vmatpush1.bf16.msra.mxu0 0
        %2083 = vmatprep.subr.bf16.mxu0 0
        %2084 = vmatpush1.bf16.msra.mxu0 0
        %2085 = vmatprep.subr.bf16.mxu0 0
        %2086 = vmatpush1.bf16.msra.mxu0 0
        %2087 = vmatprep.subr.bf16.mxu0 0
        %2088 = vmatpush1.bf16.msra.mxu0 0
        %2089 = vmatprep.subr.bf16.mxu0 0
        %2090 = vmatpush1.bf16.msra.mxu0 0
        %2091 = vmatprep.subr.bf16.mxu0 0
        %2092 = vmatpush1.bf16.msra.mxu0 0
        %2093 = vmatprep.subr.bf16.mxu0 0
        %2094 = vmatpush1.bf16.msra.mxu0 0
        %2095 = vmatprep.subr.bf16.mxu0 0
        %2096 = vmatpush1.bf16.msra.mxu0 0
        %2097 = vmatprep.subr.bf16.mxu0 0
        %2098 = vmatpush1.bf16.msra.mxu0 0
        %2099 = vmatprep.subr.bf16.mxu0 0
        %2100 = vmatpush1.bf16.msra.mxu0 0
        %2101 = vmatprep.subr.bf16.mxu0 0
        %2102 = vmatpush1.bf16.msra.mxu0 0
        %2103 = vmatprep.subr.bf16.mxu0 0
        %2104 = vmatpush1.bf16.msra.mxu0 0
        %2105 = vmatprep.mubr.bf16.mxu0 0
        %2106 = vmatmul.mubr.bf16.gmra.mrb[0].mxu0 %v1592
        %v2107 = vpop.f32.mrb[0].mxu0
        %v2108 = vadd.f32 %v2065, %v2107
        %v2109 = vpop.f32.mrb[0].mxu0
        %v2110 = vpop.f32.mrb[0].mxu0
        %v2111 = vadd.f32 %v2065, %v2110
        %v2112 = vpop.f32.mrb[0].mxu0
        %2113 = vdwg.mxu0
        %s2114 = scalar_lea.vmem %s13, 16
        %v2115 = vld [vmem:[%s2114] sm:$0xf]
        %v2116 = vld [vmem:[%s2114 + $0x4] sm:$0xf]
        %v2117 = vpack.c.bf16 %v2055, %v2055
        %s2118 = scalar_lea.vmem %s15, 2
        %v2119 = vld [vmem:[%s2118] sm:$0x1]
        %v2121 = vlaneseq
        %v2122 = vshrl.u32 %v2121, 7
        %v2123 = vsub.s32 0, %v2122
        %v2124 = vrot.slane %v2119, %v2123
        %v2128 = vunpack.c.l.b16 %v2115
        %v2129 = vunpack.c.l.b16 %v2116
        %v2130 = vpack.c.b16 %v2129, %v2128
        %v2133 = vsel %vm1151, %v2117, 0
        %2135 = vmatprep.subr.bf16.mxu0 0
        %2136 = vmatpush1.bf16.msra.mxu0 %v2130
        %2137 = vmatprep.subr.bf16.mxu0 0
        %2138 = vmatpush1.bf16.msra.mxu0 0
        %2139 = vmatprep.subr.bf16.mxu0 0
        %2140 = vmatpush1.bf16.msra.mxu0 0
        %2141 = vmatprep.subr.bf16.mxu0 0
        %2142 = vmatpush1.bf16.msra.mxu0 0
        %2143 = vmatprep.subr.bf16.mxu0 0
        %2144 = vmatpush1.bf16.msra.mxu0 0
        %2145 = vmatprep.subr.bf16.mxu0 0
        %2146 = vmatpush1.bf16.msra.mxu0 0
        %2147 = vmatprep.subr.bf16.mxu0 0
        %2148 = vmatpush1.bf16.msra.mxu0 0
        %2149 = vmatprep.subr.bf16.mxu0 0
        %2150 = vmatpush1.bf16.msra.mxu0 0
        %2151 = vmatprep.subr.bf16.mxu0 0
        %2152 = vmatpush1.bf16.msra.mxu0 0
        %2153 = vmatprep.subr.bf16.mxu0 0
        %2154 = vmatpush1.bf16.msra.mxu0 0
        %2155 = vmatprep.subr.bf16.mxu0 0
        %2156 = vmatpush1.bf16.msra.mxu0 0
        %2157 = vmatprep.subr.bf16.mxu0 0
        %2158 = vmatpush1.bf16.msra.mxu0 0
        %2159 = vmatprep.subr.bf16.mxu0 0
        %2160 = vmatpush1.bf16.msra.mxu0 0
        %2161 = vmatprep.subr.bf16.mxu0 0
        %2162 = vmatpush1.bf16.msra.mxu0 0
        %2163 = vmatprep.subr.bf16.mxu0 0
        %2164 = vmatpush1.bf16.msra.mxu0 0
        %2165 = vmatprep.subr.bf16.mxu0 0
        %2166 = vmatpush1.bf16.msra.mxu0 0
        %2167 = vmatprep.mubr.bf16.mxu0 0
        %2168 = vmatmul.mubr.bf16.gmra.mrb[0].mxu0 %v2133
        %v2169 = vpop.f32.mrb[0].mxu0
        %v2170 = vadd.f32 %v2124, %v2169
        %v2171 = vpop.f32.mrb[0].mxu0
        %v2172 = vpop.f32.mrb[0].mxu0
        %v2173 = vpop.f32.mrb[0].mxu0
        %2174 = vdwg.mxu0
        %s2175 = scalar_lea.vmem %s17, 16
        %v2176 = vld [vmem:[%s2175] sm:$0xf]
        %v2177 = vld [vmem:[%s2175 + $0x4] sm:$0xf]
        %v2178 = vpack.c.bf16 %v2054, %v2054
        %s2179 = scalar_lea.vmem %s19, 2
        %v2180 = vld [vmem:[%s2179] sm:$0x1]
        %v2182 = vlaneseq
        %v2183 = vshrl.u32 %v2182, 7
        %v2184 = vsub.s32 0, %v2183
        %v2185 = vrot.slane %v2180, %v2184
        %v2189 = vunpack.c.l.b16 %v2176
        %v2190 = vunpack.c.l.b16 %v2177
        %v2191 = vpack.c.b16 %v2190, %v2189
        %v2194 = vsel %vm1151, %v2178, 0
        %2196 = vmatprep.subr.bf16.mxu0 0
        %2197 = vmatpush1.bf16.msra.mxu0 %v2191
        %2198 = vmatprep.subr.bf16.mxu0 0
        %2199 = vmatpush1.bf16.msra.mxu0 0
        %2200 = vmatprep.subr.bf16.mxu0 0
        %2201 = vmatpush1.bf16.msra.mxu0 0
        %2202 = vmatprep.subr.bf16.mxu0 0
        %2203 = vmatpush1.bf16.msra.mxu0 0
        %2204 = vmatprep.subr.bf16.mxu0 0
        %2205 = vmatpush1.bf16.msra.mxu0 0
        %2206 = vmatprep.subr.bf16.mxu0 0
        %2207 = vmatpush1.bf16.msra.mxu0 0
        %2208 = vmatprep.subr.bf16.mxu0 0
        %2209 = vmatpush1.bf16.msra.mxu0 0
        %2210 = vmatprep.subr.bf16.mxu0 0
        %2211 = vmatpush1.bf16.msra.mxu0 0
        %2212 = vmatprep.subr.bf16.mxu0 0
        %2213 = vmatpush1.bf16.msra.mxu0 0
        %2214 = vmatprep.subr.bf16.mxu0 0
        %2215 = vmatpush1.bf16.msra.mxu0 0
        %2216 = vmatprep.subr.bf16.mxu0 0
        %2217 = vmatpush1.bf16.msra.mxu0 0
        %2218 = vmatprep.subr.bf16.mxu0 0
        %2219 = vmatpush1.bf16.msra.mxu0 0
        %2220 = vmatprep.subr.bf16.mxu0 0
        %2221 = vmatpush1.bf16.msra.mxu0 0
        %2222 = vmatprep.subr.bf16.mxu0 0
        %2223 = vmatpush1.bf16.msra.mxu0 0
        %2224 = vmatprep.subr.bf16.mxu0 0
        %2225 = vmatpush1.bf16.msra.mxu0 0
        %2226 = vmatprep.subr.bf16.mxu0 0
        %2227 = vmatpush1.bf16.msra.mxu0 0
        %2228 = vmatprep.mubr.bf16.mxu0 0
        %2229 = vmatmul.mubr.bf16.gmra.mrb[0].mxu0 %v2194
        %v2230 = vpop.f32.mrb[0].mxu0
        %v2231 = vadd.f32 %v2185, %v2230
        %v2232 = vpop.f32.mrb[0].mxu0
        %v2233 = vpop.f32.mrb[0].mxu0
        %v2234 = vpop.f32.mrb[0].mxu0
        %2235 = vdwg.mxu0
        %v2236 = vpack.c.bf16 %v2111, %v2108
        %v2237 = vpack.c.bf16 %v2170, %v2170
        %v2239 = vsel %vm1151, %v2236, 0
        %v2242 = vsel %vm1151, %v2237, 0
        %2244 = vmatprep.subr.bf16.mxu0 0
        %2245 = vmatpush1.bf16.xpose.msra.mxu0 %v2242
        %2246 = vmatprep.subr.bf16.mxu0 0
        %2247 = vmatpush1.bf16.xpose.msra.mxu0 0
        %2248 = vmatprep.subr.bf16.mxu0 0
        %2249 = vmatpush1.bf16.xpose.msra.mxu0 0
        %2250 = vmatprep.subr.bf16.mxu0 0
        %2251 = vmatpush1.bf16.xpose.msra.mxu0 0
        %2252 = vmatprep.subr.bf16.mxu0 0
        %2253 = vmatpush1.bf16.xpose.msra.mxu0 0
        %2254 = vmatprep.subr.bf16.mxu0 0
        %2255 = vmatpush1.bf16.xpose.msra.mxu0 0
        %2256 = vmatprep.subr.bf16.mxu0 0
        %2257 = vmatpush1.bf16.xpose.msra.mxu0 0
        %2258 = vmatprep.subr.bf16.mxu0 0
        %2259 = vmatpush1.bf16.xpose.msra.mxu0 0
        %2260 = vmatprep.subr.bf16.mxu0 0
        %2261 = vmatpush1.bf16.xpose.msra.mxu0 0
        %2262 = vmatprep.subr.bf16.mxu0 0
        %2263 = vmatpush1.bf16.xpose.msra.mxu0 0
        %2264 = vmatprep.subr.bf16.mxu0 0
        %2265 = vmatpush1.bf16.xpose.msra.mxu0 0
        %2266 = vmatprep.subr.bf16.mxu0 0
        %2267 = vmatpush1.bf16.xpose.msra.mxu0 0
        %2268 = vmatprep.subr.bf16.mxu0 0
        %2269 = vmatpush1.bf16.xpose.msra.mxu0 0
        %2270 = vmatprep.subr.bf16.mxu0 0
        %2271 = vmatpush1.bf16.xpose.msra.mxu0 0
        %2272 = vmatprep.subr.bf16.mxu0 0
        %2273 = vmatpush1.bf16.xpose.msra.mxu0 0
        %2274 = vmatprep.subr.bf16.mxu0 0
        %2275 = vmatpush1.bf16.xpose.msra.mxu0 0
        %2276 = vmatprep.mubr.bf16.mxu0 0
        %2277 = vmatmul.mubr.bf16.gmra.mrb[0].mxu0 %v2239
        %v2278 = vpop.f32.mrb[0].mxu0
        %v2279 = vadd.f32 0.0, %v2278
        %v2280 = vpop.f32.mrb[0].mxu0
        %v2281 = vpop.f32.mrb[0].mxu0
        %v2282 = vadd.f32 0.0, %v2281
        %v2283 = vpop.f32.mrb[0].mxu0
        %2284 = vdwg.mxu0
        %v2285 = vmul.f32 %v2279, 0.25
        %v2286 = vmul.f32 %v2282, 0.25
        %v2287 = vsel %vm1368, %v2285, -inf
        %2288 = vmax.xlane.f32.xlu0 %v2287
        %v2289 = vpop.xlane.xlu0 %2288
        %v2290 = vsel %vm1368, %v2286, -inf
        %2291 = vmax.xlane.f32.xlu0 %v2290
        %v2292 = vpop.xlane.xlu0 %2291
        %v2293 = vsub.f32 %v2285, %v2289
        %v2294 = vsub.f32 %v2286, %v2292
        %v2295 = vmul.f32 %v2293, 1.442695
        %v2296 = vpow.pop %v2295
        %v2297 = vmul.f32 %v2294, 1.442695
        %v2298 = vpow.pop %v2297
        %v2299 = vsel %vm1368, %v2296, 0.0
        %2300 = vadd.xlane.f32.xlu0 %v2299
        %v2301 = vpop.xlane.xlu0 %2300
        %v2302 = vsel %vm1368, %v2298, 0.0
        %2303 = vadd.xlane.f32.xlu0 %v2302
        %v2304 = vpop.xlane.xlu0 %2303
        %v2305 = vrcp.pop %v2301
        %v2306 = vrcp.pop %v2304
        %v2307 = vmul.f32 %v2296, %v2305
        %v2308 = vmul.f32 %v2298, %v2306
        %v2309 = vpack.c.bf16 %v2308, %v2307
        %v2310 = vpack.c.bf16 %v2231, %v2231
        %v2312 = vsel %vm1368, %v2309, 0
        %v2315 = vand.u32 %v2310, %v1375
        %2317 = vmatprep.subr.bf16.mxu0 0
        %2318 = vmatpush1.bf16.msra.mxu0 %v2315
        %2319 = vmatprep.subr.bf16.mxu0 0
        %2320 = vmatpush1.bf16.msra.mxu0 0
        %2321 = vmatprep.subr.bf16.mxu0 0
        %2322 = vmatpush1.bf16.msra.mxu0 0
        %2323 = vmatprep.subr.bf16.mxu0 0
        %2324 = vmatpush1.bf16.msra.mxu0 0
        %2325 = vmatprep.subr.bf16.mxu0 0
        %2326 = vmatpush1.bf16.msra.mxu0 0
        %2327 = vmatprep.subr.bf16.mxu0 0
        %2328 = vmatpush1.bf16.msra.mxu0 0
        %2329 = vmatprep.subr.bf16.mxu0 0
        %2330 = vmatpush1.bf16.msra.mxu0 0
        %2331 = vmatprep.subr.bf16.mxu0 0
        %2332 = vmatpush1.bf16.msra.mxu0 0
        %2333 = vmatprep.subr.bf16.mxu0 0
        %2334 = vmatpush1.bf16.msra.mxu0 0
        %2335 = vmatprep.subr.bf16.mxu0 0
        %2336 = vmatpush1.bf16.msra.mxu0 0
        %2337 = vmatprep.subr.bf16.mxu0 0
        %2338 = vmatpush1.bf16.msra.mxu0 0
        %2339 = vmatprep.subr.bf16.mxu0 0
        %2340 = vmatpush1.bf16.msra.mxu0 0
        %2341 = vmatprep.subr.bf16.mxu0 0
        %2342 = vmatpush1.bf16.msra.mxu0 0
        %2343 = vmatprep.subr.bf16.mxu0 0
        %2344 = vmatpush1.bf16.msra.mxu0 0
        %2345 = vmatprep.subr.bf16.mxu0 0
        %2346 = vmatpush1.bf16.msra.mxu0 0
        %2347 = vmatprep.subr.bf16.mxu0 0
        %2348 = vmatpush1.bf16.msra.mxu0 0
        %2349 = vmatprep.mubr.bf16.mxu0 0
        %2350 = vmatmul.mubr.bf16.gmra.mrb[0].mxu0 %v2312
        %v2351 = vpop.f32.mrb[0].mxu0
        %v2352 = vadd.f32 0.0, %v2351
        %v2353 = vpop.f32.mrb[0].mxu0
        %v2354 = vpop.f32.mrb[0].mxu0
        %v2355 = vadd.f32 0.0, %v2354
        %v2356 = vpop.f32.mrb[0].mxu0
        %2357 = vdwg.mxu0
        %s2358 = scalar_lea.vmem %s21, 16
        %v2359 = vld [vmem:[%s2358] sm:$0xf]
        %v2360 = vld [vmem:[%s2358 + $0x4] sm:$0xf]
        %v2361 = vpack.c.bf16 %v2355, %v2352
        %s2362 = scalar_lea.vmem %s23, 2
        %v2363 = vld [vmem:[%s2362] sm:$0x1]
        %v2365 = vlaneseq
        %v2366 = vshrl.u32 %v2365, 7
        %v2367 = vsub.s32 0, %v2366
        %v2368 = vrot.slane %v2363, %v2367
        %v2372 = vunpack.c.l.b16 %v2359
        %v2373 = vunpack.c.l.b16 %v2360
        %v2374 = vpack.c.b16 %v2373, %v2372
        %v2377 = vsel %vm1151, %v2361, 0
        %2379 = vmatprep.subr.bf16.mxu0 0
        %2380 = vmatpush1.bf16.msra.mxu0 %v2374
        %2381 = vmatprep.subr.bf16.mxu0 0
        %2382 = vmatpush1.bf16.msra.mxu0 0
        %2383 = vmatprep.subr.bf16.mxu0 0
        %2384 = vmatpush1.bf16.msra.mxu0 0
        %2385 = vmatprep.subr.bf16.mxu0 0
        %2386 = vmatpush1.bf16.msra.mxu0 0
        %2387 = vmatprep.subr.bf16.mxu0 0
        %2388 = vmatpush1.bf16.msra.mxu0 0
        %2389 = vmatprep.subr.bf16.mxu0 0
        %2390 = vmatpush1.bf16.msra.mxu0 0
        %2391 = vmatprep.subr.bf16.mxu0 0
        %2392 = vmatpush1.bf16.msra.mxu0 0
        %2393 = vmatprep.subr.bf16.mxu0 0
        %2394 = vmatpush1.bf16.msra.mxu0 0
        %2395 = vmatprep.subr.bf16.mxu0 0
        %2396 = vmatpush1.bf16.msra.mxu0 0
        %2397 = vmatprep.subr.bf16.mxu0 0
        %2398 = vmatpush1.bf16.msra.mxu0 0
        %2399 = vmatprep.subr.bf16.mxu0 0
        %2400 = vmatpush1.bf16.msra.mxu0 0
        %2401 = vmatprep.subr.bf16.mxu0 0
        %2402 = vmatpush1.bf16.msra.mxu0 0
        %2403 = vmatprep.subr.bf16.mxu0 0
        %2404 = vmatpush1.bf16.msra.mxu0 0
        %2405 = vmatprep.subr.bf16.mxu0 0
        %2406 = vmatpush1.bf16.msra.mxu0 0
        %2407 = vmatprep.subr.bf16.mxu0 0
        %2408 = vmatpush1.bf16.msra.mxu0 0
        %2409 = vmatprep.subr.bf16.mxu0 0
        %2410 = vmatpush1.bf16.msra.mxu0 0
        %2411 = vmatprep.mubr.bf16.mxu0 0
        %2412 = vmatmul.mubr.bf16.gmra.mrb[0].mxu0 %v2377
        %v2413 = vpop.f32.mrb[0].mxu0
        %v2414 = vadd.f32 %v2368, %v2413
        %v2415 = vpop.f32.mrb[0].mxu0
        %v2416 = vpop.f32.mrb[0].mxu0
        %v2417 = vadd.f32 %v2368, %v2416
        %v2418 = vpop.f32.mrb[0].mxu0
        %2419 = vdwg.mxu0
        %v2420 = vadd.f32 %v1131, %v2414
        %v2421 = vadd.f32 %v1132, %v2417
        %s2422 = scalar_lea.vmem %s25, 3
        %v2423 = vld [vmem:[%s2422] sm:$0x1]
        %s2424 = scalar_lea.vmem %s27, 3
        %v2425 = vld [vmem:[%s2424] sm:$0x1]
        %v2426 = vsel %vm1151, %v2420, 0.0
        %2427 = vadd.xlane.f32.xlu0 %v2426
        %v2428 = vpop.xlane.xlu0 %2427
        %v2429 = vsel %vm1151, %v2421, 0.0
        %2430 = vadd.xlane.f32.xlu0 %v2429
        %v2431 = vpop.xlane.xlu0 %2430
        %v2432 = vmul.f32 %v2428, %v1484
        %v2433 = vmul.f32 %v2431, %v1484
        %v2434 = vsub.f32 %v2420, %v2432
        %v2435 = vsub.f32 %v2421, %v2433
        %v2436 = vmul.f32 %v2434, %v2434
        %v2437 = vmul.f32 %v2435, %v2435
        %v2438 = vsel %vm1151, %v2436, 0.0
        %2439 = vadd.xlane.f32.xlu0 %v2438
        %v2440 = vpop.xlane.xlu0 %2439
        %v2441 = vsel %vm1151, %v2437, 0.0
        %2442 = vadd.xlane.f32.xlu0 %v2441
        %v2443 = vpop.xlane.xlu0 %2442
        %v2444 = vmul.f32 %v2440, %v1484
        %v2445 = vmul.f32 %v2443, %v1484
        %v2446 = vadd.f32 %v2444, 1e-06
        %v2447 = vadd.f32 %v2445, 1e-06
        %v2448 = vrsqrt.pop %v2446
        %v2449 = vrsqrt.pop %v2447
        %v2450 = vmul.f32 %v2434, %v2448
        %v2451 = vmul.f32 %v2435, %v2449
        %v2453 = vlaneseq
        %v2454 = vshrl.u32 %v2453, 7
        %v2455 = vsub.s32 0, %v2454
        %v2456 = vrot.slane %v2423, %v2455
        %v2458 = vmul.f32 %v2450, %v2456
        %v2459 = vmul.f32 %v2451, %v2456
        %v2461 = vlaneseq
        %v2462 = vshrl.u32 %v2461, 7
        %v2463 = vsub.s32 0, %v2462
        %v2464 = vrot.slane %v2425, %v2463
        %v2466 = vadd.f32 %v2458, %v2464
        %v2467 = vadd.f32 %v2459, %v2464
        %v2468 = vadd.f32 %v2466, %v1133
        %v2469 = vadd.f32 %v2467, %v1134
        %s2470 = scalar_lea.vmem %s9, 24
        %v2471 = vld [vmem:[%s2470] sm:$0xf]
        %v2472 = vld [vmem:[%s2470 + $0x4] sm:$0xf]
        %s2473 = scalar_lea.vmem %s11, 3
        %v2474 = vld [vmem:[%s2473] sm:$0x1]
        %v2476 = vlaneseq
        %v2477 = vshrl.u32 %v2476, 7
        %v2478 = vsub.s32 0, %v2477
        %v2479 = vrot.slane %v2474, %v2478
        %v2483 = vunpack.c.l.b16 %v2471
        %v2484 = vunpack.c.l.b16 %v2472
        %v2485 = vpack.c.b16 %v2484, %v2483
        %2487 = vmatprep.subr.bf16.mxu0 0
        %2488 = vmatpush1.bf16.msra.mxu0 %v2485
        %2489 = vmatprep.subr.bf16.mxu0 0
        %2490 = vmatpush1.bf16.msra.mxu0 0
        %2491 = vmatprep.subr.bf16.mxu0 0
        %2492 = vmatpush1.bf16.msra.mxu0 0
        %2493 = vmatprep.subr.bf16.mxu0 0
        %2494 = vmatpush1.bf16.msra.mxu0 0
        %2495 = vmatprep.subr.bf16.mxu0 0
        %2496 = vmatpush1.bf16.msra.mxu0 0
        %2497 = vmatprep.subr.bf16.mxu0 0
        %2498 = vmatpush1.bf16.msra.mxu0 0
        %2499 = vmatprep.subr.bf16.mxu0 0
        %2500 = vmatpush1.bf16.msra.mxu0 0
        %2501 = vmatprep.subr.bf16.mxu0 0
        %2502 = vmatpush1.bf16.msra.mxu0 0
        %2503 = vmatprep.subr.bf16.mxu0 0
        %2504 = vmatpush1.bf16.msra.mxu0 0
        %2505 = vmatprep.subr.bf16.mxu0 0
        %2506 = vmatpush1.bf16.msra.mxu0 0
        %2507 = vmatprep.subr.bf16.mxu0 0
        %2508 = vmatpush1.bf16.msra.mxu0 0
        %2509 = vmatprep.subr.bf16.mxu0 0
        %2510 = vmatpush1.bf16.msra.mxu0 0
        %2511 = vmatprep.subr.bf16.mxu0 0
        %2512 = vmatpush1.bf16.msra.mxu0 0
        %2513 = vmatprep.subr.bf16.mxu0 0
        %2514 = vmatpush1.bf16.msra.mxu0 0
        %2515 = vmatprep.subr.bf16.mxu0 0
        %2516 = vmatpush1.bf16.msra.mxu0 0
        %2517 = vmatprep.subr.bf16.mxu0 0
        %2518 = vmatpush1.bf16.msra.mxu0 0
        %2519 = vmatprep.mubr.bf16.mxu0 0
        %2520 = vmatmul.mubr.bf16.gmra.mrb[0].mxu0 %v2133
        %v2521 = vpop.f32.mrb[0].mxu0
        %v2522 = vadd.f32 %v2479, %v2521
        %v2523 = vpop.f32.mrb[0].mxu0
        %v2524 = vpop.f32.mrb[0].mxu0
        %v2525 = vpop.f32.mrb[0].mxu0
        %2526 = vdwg.mxu0
        %s2527 = scalar_lea.vmem %s13, 24
        %v2528 = vld [vmem:[%s2527] sm:$0xf]
        %v2529 = vld [vmem:[%s2527 + $0x4] sm:$0xf]
        %v2530 = vpack.c.bf16 %v2469, %v2468
        %s2531 = scalar_lea.vmem %s15, 3
        %v2532 = vld [vmem:[%s2531] sm:$0x1]
        %v2534 = vlaneseq
        %v2535 = vshrl.u32 %v2534, 7
        %v2536 = vsub.s32 0, %v2535
        %v2537 = vrot.slane %v2532, %v2536
        %v2541 = vunpack.c.l.b16 %v2528
        %v2542 = vunpack.c.l.b16 %v2529
        %v2543 = vpack.c.b16 %v2542, %v2541
        %v2546 = vsel %vm1151, %v2530, 0
        %2548 = vmatprep.subr.bf16.mxu0 0
        %2549 = vmatpush1.bf16.msra.mxu0 %v2543
        %2550 = vmatprep.subr.bf16.mxu0 0
        %2551 = vmatpush1.bf16.msra.mxu0 0
        %2552 = vmatprep.subr.bf16.mxu0 0
        %2553 = vmatpush1.bf16.msra.mxu0 0
        %2554 = vmatprep.subr.bf16.mxu0 0
        %2555 = vmatpush1.bf16.msra.mxu0 0
        %2556 = vmatprep.subr.bf16.mxu0 0
        %2557 = vmatpush1.bf16.msra.mxu0 0
        %2558 = vmatprep.subr.bf16.mxu0 0
        %2559 = vmatpush1.bf16.msra.mxu0 0
        %2560 = vmatprep.subr.bf16.mxu0 0
        %2561 = vmatpush1.bf16.msra.mxu0 0
        %2562 = vmatprep.subr.bf16.mxu0 0
        %2563 = vmatpush1.bf16.msra.mxu0 0
        %2564 = vmatprep.subr.bf16.mxu0 0
        %2565 = vmatpush1.bf16.msra.mxu0 0
        %2566 = vmatprep.subr.bf16.mxu0 0
        %2567 = vmatpush1.bf16.msra.mxu0 0
        %2568 = vmatprep.subr.bf16.mxu0 0
        %2569 = vmatpush1.bf16.msra.mxu0 0
        %2570 = vmatprep.subr.bf16.mxu0 0
        %2571 = vmatpush1.bf16.msra.mxu0 0
        %2572 = vmatprep.subr.bf16.mxu0 0
        %2573 = vmatpush1.bf16.msra.mxu0 0
        %2574 = vmatprep.subr.bf16.mxu0 0
        %2575 = vmatpush1.bf16.msra.mxu0 0
        %2576 = vmatprep.subr.bf16.mxu0 0
        %2577 = vmatpush1.bf16.msra.mxu0 0
        %2578 = vmatprep.subr.bf16.mxu0 0
        %2579 = vmatpush1.bf16.msra.mxu0 0
        %2580 = vmatprep.mubr.bf16.mxu0 0
        %2581 = vmatmul.mubr.bf16.gmra.mrb[0].mxu0 %v2546
        %v2582 = vpop.f32.mrb[0].mxu0
        %v2583 = vadd.f32 %v2537, %v2582
        %v2584 = vpop.f32.mrb[0].mxu0
        %v2585 = vpop.f32.mrb[0].mxu0
        %v2586 = vadd.f32 %v2537, %v2585
        %v2587 = vpop.f32.mrb[0].mxu0
        %2588 = vdwg.mxu0
        %s2589 = scalar_lea.vmem %s17, 24
        %v2590 = vld [vmem:[%s2589] sm:$0xf]
        %v2591 = vld [vmem:[%s2589 + $0x4] sm:$0xf]
        %v2592 = vpack.c.bf16 %v2467, %v2466
        %s2593 = scalar_lea.vmem %s19, 3
        %v2594 = vld [vmem:[%s2593] sm:$0x1]
        %v2596 = vlaneseq
        %v2597 = vshrl.u32 %v2596, 7
        %v2598 = vsub.s32 0, %v2597
        %v2599 = vrot.slane %v2594, %v2598
        %v2603 = vunpack.c.l.b16 %v2590
        %v2604 = vunpack.c.l.b16 %v2591
        %v2605 = vpack.c.b16 %v2604, %v2603
        %v2608 = vsel %vm1151, %v2592, 0
        %2610 = vmatprep.subr.bf16.mxu0 0
        %2611 = vmatpush1.bf16.msra.mxu0 %v2605
        %2612 = vmatprep.subr.bf16.mxu0 0
        %2613 = vmatpush1.bf16.msra.mxu0 0
        %2614 = vmatprep.subr.bf16.mxu0 0
        %2615 = vmatpush1.bf16.msra.mxu0 0
        %2616 = vmatprep.subr.bf16.mxu0 0
        %2617 = vmatpush1.bf16.msra.mxu0 0
        %2618 = vmatprep.subr.bf16.mxu0 0
        %2619 = vmatpush1.bf16.msra.mxu0 0
        %2620 = vmatprep.subr.bf16.mxu0 0
        %2621 = vmatpush1.bf16.msra.mxu0 0
        %2622 = vmatprep.subr.bf16.mxu0 0
        %2623 = vmatpush1.bf16.msra.mxu0 0
        %2624 = vmatprep.subr.bf16.mxu0 0
        %2625 = vmatpush1.bf16.msra.mxu0 0
        %2626 = vmatprep.subr.bf16.mxu0 0
        %2627 = vmatpush1.bf16.msra.mxu0 0
        %2628 = vmatprep.subr.bf16.mxu0 0
        %2629 = vmatpush1.bf16.msra.mxu0 0
        %2630 = vmatprep.subr.bf16.mxu0 0
        %2631 = vmatpush1.bf16.msra.mxu0 0
        %2632 = vmatprep.subr.bf16.mxu0 0
        %2633 = vmatpush1.bf16.msra.mxu0 0
        %2634 = vmatprep.subr.bf16.mxu0 0
        %2635 = vmatpush1.bf16.msra.mxu0 0
        %2636 = vmatprep.subr.bf16.mxu0 0
        %2637 = vmatpush1.bf16.msra.mxu0 0
        %2638 = vmatprep.subr.bf16.mxu0 0
        %2639 = vmatpush1.bf16.msra.mxu0 0
        %2640 = vmatprep.subr.bf16.mxu0 0
        %2641 = vmatpush1.bf16.msra.mxu0 0
        %2642 = vmatprep.mubr.bf16.mxu0 0
        %2643 = vmatmul.mubr.bf16.gmra.mrb[0].mxu0 %v2608
        %v2644 = vpop.f32.mrb[0].mxu0
        %v2645 = vadd.f32 %v2599, %v2644
        %v2646 = vpop.f32.mrb[0].mxu0
        %v2647 = vpop.f32.mrb[0].mxu0
        %v2648 = vadd.f32 %v2599, %v2647
        %v2649 = vpop.f32.mrb[0].mxu0
        %2650 = vdwg.mxu0
        %v2651 = vpack.c.bf16 %v2522, %v2522
        %v2652 = vpack.c.bf16 %v2586, %v2583
        %v2654 = vsel %vm1151, %v2651, 0
        %v2657 = vsel %vm1151, %v2652, 0
        %2659 = vmatprep.subr.bf16.mxu0 0
        %2660 = vmatpush1.bf16.xpose.msra.mxu0 %v2657
        %2661 = vmatprep.subr.bf16.mxu0 0
        %2662 = vmatpush1.bf16.xpose.msra.mxu0 0
        %2663 = vmatprep.subr.bf16.mxu0 0
        %2664 = vmatpush1.bf16.xpose.msra.mxu0 0
        %2665 = vmatprep.subr.bf16.mxu0 0
        %2666 = vmatpush1.bf16.xpose.msra.mxu0 0
        %2667 = vmatprep.subr.bf16.mxu0 0
        %2668 = vmatpush1.bf16.xpose.msra.mxu0 0
        %2669 = vmatprep.subr.bf16.mxu0 0
        %2670 = vmatpush1.bf16.xpose.msra.mxu0 0
        %2671 = vmatprep.subr.bf16.mxu0 0
        %2672 = vmatpush1.bf16.xpose.msra.mxu0 0
        %2673 = vmatprep.subr.bf16.mxu0 0
        %2674 = vmatpush1.bf16.xpose.msra.mxu0 0
        %2675 = vmatprep.subr.bf16.mxu0 0
        %2676 = vmatpush1.bf16.xpose.msra.mxu0 0
        %2677 = vmatprep.subr.bf16.mxu0 0
        %2678 = vmatpush1.bf16.xpose.msra.mxu0 0
        %2679 = vmatprep.subr.bf16.mxu0 0
        %2680 = vmatpush1.bf16.xpose.msra.mxu0 0
        %2681 = vmatprep.subr.bf16.mxu0 0
        %2682 = vmatpush1.bf16.xpose.msra.mxu0 0
        %2683 = vmatprep.subr.bf16.mxu0 0
        %2684 = vmatpush1.bf16.xpose.msra.mxu0 0
        %2685 = vmatprep.subr.bf16.mxu0 0
        %2686 = vmatpush1.bf16.xpose.msra.mxu0 0
        %2687 = vmatprep.subr.bf16.mxu0 0
        %2688 = vmatpush1.bf16.xpose.msra.mxu0 0
        %2689 = vmatprep.subr.bf16.mxu0 0
        %2690 = vmatpush1.bf16.xpose.msra.mxu0 0
        %2691 = vmatprep.mubr.bf16.mxu0 0
        %2692 = vmatmul.mubr.bf16.gmra.mrb[0].mxu0 %v2654
        %v2693 = vpop.f32.mrb[0].mxu0
        %v2694 = vadd.f32 0.0, %v2693
        %v2695 = vpop.f32.mrb[0].mxu0
        %v2696 = vpop.f32.mrb[0].mxu0
        %v2697 = vpop.f32.mrb[0].mxu0
        %2698 = vdwg.mxu0
        %v2699 = vmul.f32 %v2694, 0.25
        %v2700 = vsel %vm1480, %v2699, -inf
        %2701 = vmax.xlane.f32.xlu0 %v2700
        %v2702 = vpop.xlane.xlu0 %2701
        %v2703 = vsub.f32 %v2699, %v2702
        %v2704 = vmul.f32 %v2703, 1.442695
        %v2705 = vpow.pop %v2704
        %v2706 = vsel %vm1480, %v2705, 0.0
        %2707 = vadd.xlane.f32.xlu0 %v2706
        %v2708 = vpop.xlane.xlu0 %2707
        %v2709 = vrcp.pop %v2708
        %v2710 = vmul.f32 %v2705, %v2709
        %v2711 = vpack.c.bf16 %v2710, %v2710
        %v2712 = vpack.c.bf16 %v2648, %v2645
        %v2714 = vsel %vm1151, %v2711, 0
        %2716 = vmatprep.subr.bf16.mxu0 0
        %2717 = vmatpush1.bf16.msra.mxu0 %v2712
        %2718 = vmatprep.subr.bf16.mxu0 0
        %2719 = vmatpush1.bf16.msra.mxu0 0
        %2720 = vmatprep.subr.bf16.mxu0 0
        %2721 = vmatpush1.bf16.msra.mxu0 0
        %2722 = vmatprep.subr.bf16.mxu0 0
        %2723 = vmatpush1.bf16.msra.mxu0 0
        %2724 = vmatprep.subr.bf16.mxu0 0
        %2725 = vmatpush1.bf16.msra.mxu0 0
        %2726 = vmatprep.subr.bf16.mxu0 0
        %2727 = vmatpush1.bf16.msra.mxu0 0
        %2728 = vmatprep.subr.bf16.mxu0 0
        %2729 = vmatpush1.bf16.msra.mxu0 0
        %2730 = vmatprep.subr.bf16.mxu0 0
        %2731 = vmatpush1.bf16.msra.mxu0 0
        %2732 = vmatprep.subr.bf16.mxu0 0
        %2733 = vmatpush1.bf16.msra.mxu0 0
        %2734 = vmatprep.subr.bf16.mxu0 0
        %2735 = vmatpush1.bf16.msra.mxu0 0
        %2736 = vmatprep.subr.bf16.mxu0 0
        %2737 = vmatpush1.bf16.msra.mxu0 0
        %2738 = vmatprep.subr.bf16.mxu0 0
        %2739 = vmatpush1.bf16.msra.mxu0 0
        %2740 = vmatprep.subr.bf16.mxu0 0
        %2741 = vmatpush1.bf16.msra.mxu0 0
        %2742 = vmatprep.subr.bf16.mxu0 0
        %2743 = vmatpush1.bf16.msra.mxu0 0
        %2744 = vmatprep.subr.bf16.mxu0 0
        %2745 = vmatpush1.bf16.msra.mxu0 0
        %2746 = vmatprep.subr.bf16.mxu0 0
        %2747 = vmatpush1.bf16.msra.mxu0 0
        %2748 = vmatprep.mubr.bf16.mxu0 0
        %2749 = vmatmul.mubr.bf16.gmra.mrb[0].mxu0 %v2714
        %v2750 = vpop.f32.mrb[0].mxu0
        %v2751 = vadd.f32 0.0, %v2750
        %v2752 = vpop.f32.mrb[0].mxu0
        %v2753 = vpop.f32.mrb[0].mxu0
        %v2754 = vpop.f32.mrb[0].mxu0
        %2755 = vdwg.mxu0
        %s2756 = scalar_lea.vmem %s21, 24
        %v2757 = vld [vmem:[%s2756] sm:$0xf]
        %v2758 = vld [vmem:[%s2756 + $0x4] sm:$0xf]
        %v2759 = vpack.c.bf16 %v2751, %v2751
        %s2760 = scalar_lea.vmem %s23, 3
        %v2761 = vld [vmem:[%s2760] sm:$0x1]
        %v2763 = vlaneseq
        %v2764 = vshrl.u32 %v2763, 7
        %v2765 = vsub.s32 0, %v2764
        %v2766 = vrot.slane %v2761, %v2765
        %v2770 = vunpack.c.l.b16 %v2757
        %v2771 = vunpack.c.l.b16 %v2758
        %v2772 = vpack.c.b16 %v2771, %v2770
        %v2775 = vsel %vm1151, %v2759, 0
        %2777 = vmatprep.subr.bf16.mxu0 0
        %2778 = vmatpush1.bf16.msra.mxu0 %v2772
        %2779 = vmatprep.subr.bf16.mxu0 0
        %2780 = vmatpush1.bf16.msra.mxu0 0
        %2781 = vmatprep.subr.bf16.mxu0 0
        %2782 = vmatpush1.bf16.msra.mxu0 0
        %2783 = vmatprep.subr.bf16.mxu0 0
        %2784 = vmatpush1.bf16.msra.mxu0 0
        %2785 = vmatprep.subr.bf16.mxu0 0
        %2786 = vmatpush1.bf16.msra.mxu0 0
        %2787 = vmatprep.subr.bf16.mxu0 0
        %2788 = vmatpush1.bf16.msra.mxu0 0
        %2789 = vmatprep.subr.bf16.mxu0 0
        %2790 = vmatpush1.bf16.msra.mxu0 0
        %2791 = vmatprep.subr.bf16.mxu0 0
        %2792 = vmatpush1.bf16.msra.mxu0 0
        %2793 = vmatprep.subr.bf16.mxu0 0
        %2794 = vmatpush1.bf16.msra.mxu0 0
        %2795 = vmatprep.subr.bf16.mxu0 0
        %2796 = vmatpush1.bf16.msra.mxu0 0
        %2797 = vmatprep.subr.bf16.mxu0 0
        %2798 = vmatpush1.bf16.msra.mxu0 0
        %2799 = vmatprep.subr.bf16.mxu0 0
        %2800 = vmatpush1.bf16.msra.mxu0 0
        %2801 = vmatprep.subr.bf16.mxu0 0
        %2802 = vmatpush1.bf16.msra.mxu0 0
        %2803 = vmatprep.subr.bf16.mxu0 0
        %2804 = vmatpush1.bf16.msra.mxu0 0
        %2805 = vmatprep.subr.bf16.mxu0 0
        %2806 = vmatpush1.bf16.msra.mxu0 0
        %2807 = vmatprep.subr.bf16.mxu0 0
        %2808 = vmatpush1.bf16.msra.mxu0 0
        %2809 = vmatprep.mubr.bf16.mxu0 0
        %2810 = vmatmul.mubr.bf16.gmra.mrb[0].mxu0 %v2775
        %v2811 = vpop.f32.mrb[0].mxu0
        %v2812 = vadd.f32 %v2766, %v2811
        %v2813 = vpop.f32.mrb[0].mxu0
        %v2814 = vpop.f32.mrb[0].mxu0
        %v2815 = vpop.f32.mrb[0].mxu0
        %2816 = vdwg.mxu0
        %v2817 = vadd.f32 %v2054, %v2812
        %s2818 = scalar_lea.vmem %s25, 4
        %v2819 = vld [vmem:[%s2818] sm:$0x1]
        %s2820 = scalar_lea.vmem %s27, 4
        %v2821 = vld [vmem:[%s2820] sm:$0x1]
        %v2822 = vsel %vm1480, %v2817, 0.0
        %2823 = vadd.xlane.f32.xlu0 %v2822
        %v2824 = vpop.xlane.xlu0 %2823
        %v2825 = vmul.f32 %v2824, %v1484
        %v2826 = vsub.f32 %v2817, %v2825
        %v2827 = vmul.f32 %v2826, %v2826
        %v2828 = vsel %vm1480, %v2827, 0.0
        %2829 = vadd.xlane.f32.xlu0 %v2828
        %v2830 = vpop.xlane.xlu0 %2829
        %v2831 = vmul.f32 %v2830, %v1484
        %v2832 = vadd.f32 %v2831, 1e-06
        %v2833 = vrsqrt.pop %v2832
        %v2834 = vmul.f32 %v2826, %v2833
        %v2836 = vlaneseq
        %v2837 = vshrl.u32 %v2836, 7
        %v2838 = vsub.s32 0, %v2837
        %v2839 = vrot.slane %v2819, %v2838
        %v2841 = vmul.f32 %v2834, %v2839
        %v2843 = vlaneseq
        %v2844 = vshrl.u32 %v2843, 7
        %v2845 = vsub.s32 0, %v2844
        %v2846 = vrot.slane %v2821, %v2845
        %v2848 = vadd.f32 %v2841, %v2846
        %v2849 = vld [vmem:[%s37] sm:$0xf]
        %v2850 = vld [vmem:[%s37 + $0x4] sm:$0xf]
        %v2851 = vld [vmem:[#allocation2] sm:$0x1]
        %v2853 = vlaneseq
        %v2854 = vshrl.u32 %v2853, 7
        %v2855 = vsub.s32 0, %v2854
        %v2856 = vrot.slane %v2851, %v2855
        %v2860 = vunpack.c.l.b16 %v2849
        %v2861 = vunpack.c.l.b16 %v2850
        %v2862 = vpack.c.b16 %v2861, %v2860
        %2864 = vmatprep.subr.bf16.mxu0 0
        %2865 = vmatpush1.bf16.msra.mxu0 %v2862
        %2866 = vmatprep.subr.bf16.mxu0 0
        %2867 = vmatpush1.bf16.msra.mxu0 0
        %2868 = vmatprep.subr.bf16.mxu0 0
        %2869 = vmatpush1.bf16.msra.mxu0 0
        %2870 = vmatprep.subr.bf16.mxu0 0
        %2871 = vmatpush1.bf16.msra.mxu0 0
        %2872 = vmatprep.subr.bf16.mxu0 0
        %2873 = vmatpush1.bf16.msra.mxu0 0
        %2874 = vmatprep.subr.bf16.mxu0 0
        %2875 = vmatpush1.bf16.msra.mxu0 0
        %2876 = vmatprep.subr.bf16.mxu0 0
        %2877 = vmatpush1.bf16.msra.mxu0 0
        %2878 = vmatprep.subr.bf16.mxu0 0
        %2879 = vmatpush1.bf16.msra.mxu0 0
        %2880 = vmatprep.subr.bf16.mxu0 0
        %2881 = vmatpush1.bf16.msra.mxu0 0
        %2882 = vmatprep.subr.bf16.mxu0 0
        %2883 = vmatpush1.bf16.msra.mxu0 0
        %2884 = vmatprep.subr.bf16.mxu0 0
        %2885 = vmatpush1.bf16.msra.mxu0 0
        %2886 = vmatprep.subr.bf16.mxu0 0
        %2887 = vmatpush1.bf16.msra.mxu0 0
        %2888 = vmatprep.subr.bf16.mxu0 0
        %2889 = vmatpush1.bf16.msra.mxu0 0
        %2890 = vmatprep.subr.bf16.mxu0 0
        %2891 = vmatpush1.bf16.msra.mxu0 0
        %2892 = vmatprep.subr.bf16.mxu0 0
        %2893 = vmatpush1.bf16.msra.mxu0 0
        %2894 = vmatprep.subr.bf16.mxu0 0
        %2895 = vmatpush1.bf16.msra.mxu0 0
        %2896 = vmatprep.mubr.bf16.mxu0 0
        %2897 = vmatmul.mubr.bf16.gmra.mrb[0].mxu0 %v2608
        %v2898 = vpop.f32.mrb[0].mxu0
        %v2899 = vadd.f32 %v2856, %v2898
        %v2900 = vpop.f32.mrb[0].mxu0
        %v2901 = vpop.f32.mrb[0].mxu0
        %v2902 = vadd.f32 %v2856, %v2901
        %v2903 = vpop.f32.mrb[0].mxu0
        %2904 = vdwg.mxu0
        %v2905 = vld [vmem:[%s45] sm:$0xff]
        %v2906 = vld [vmem:[%s45 + $0x8] sm:$0xff]
        %v2907 = vld [vmem:[%s45 + $0x10] sm:$0xff]
        %v2908 = vld [vmem:[%s45 + $0x18] sm:$0xff]
        %v2910 = vsel %vm1979, %v2899, 0
        %v2913 = vsel %vm1979, %v2902, 0
        %2915 = vmatprep.subr.mxu0 0.0
        %2916 = vmatpush1.msra.mxu0 %v2905
        %2917 = vmatprep.subr.mxu0 0.0
        %2918 = vmatpush1.msra.mxu0 %v2906
        %2919 = vmatprep.subr.mxu0 0.0
        %2920 = vmatpush1.msra.mxu0 %v2907
        %2921 = vmatprep.subr.mxu0 0.0
        %2922 = vmatpush1.msra.mxu0 %v2908
        %2923 = vmatprep.subr.mxu0 0.0
        %2924 = vmatpush1.msra.mxu0 0.0
        %2925 = vmatprep.subr.mxu0 0.0
        %2926 = vmatpush1.msra.mxu0 0.0
        %2927 = vmatprep.subr.mxu0 0.0
        %2928 = vmatpush1.msra.mxu0 0.0
        %2929 = vmatprep.subr.mxu0 0.0
        %2930 = vmatpush1.msra.mxu0 0.0
        %2931 = vmatprep.subr.mxu0 0.0
        %2932 = vmatpush1.msra.mxu0 0.0
        %2933 = vmatprep.subr.mxu0 0.0
        %2934 = vmatpush1.msra.mxu0 0.0
        %2935 = vmatprep.subr.mxu0 0.0
        %2936 = vmatpush1.msra.mxu0 0.0
        %2937 = vmatprep.subr.mxu0 0.0
        %2938 = vmatpush1.msra.mxu0 0.0
        %2939 = vmatprep.subr.mxu0 0.0
        %2940 = vmatpush1.msra.mxu0 0.0
        %2941 = vmatprep.subr.mxu0 0.0
        %2942 = vmatpush1.msra.mxu0 0.0
        %2943 = vmatprep.subr.mxu0 0.0
        %2944 = vmatpush1.msra.mxu0 0.0
        %2945 = vmatprep.subr.mxu0 0.0
        %2946 = vmatpush1.msra.mxu0 0.0
        %2947 = vmatprep.subr.mxu0 0.0
        %2948 = vmatpush1.msra.mxu0 0.0
        %2949 = vmatprep.subr.mxu0 0.0
        %2950 = vmatpush1.msra.mxu0 0.0
        %2951 = vmatprep.subr.mxu0 0.0
        %2952 = vmatpush1.msra.mxu0 0.0
        %2953 = vmatprep.subr.mxu0 0.0
        %2954 = vmatpush1.msra.mxu0 0.0
        %2955 = vmatprep.subr.mxu0 0.0
        %2956 = vmatpush1.msra.mxu0 0.0
        %2957 = vmatprep.subr.mxu0 0.0
        %2958 = vmatpush1.msra.mxu0 0.0
        %2959 = vmatprep.subr.mxu0 0.0
        %2960 = vmatpush1.msra.mxu0 0.0
        %2961 = vmatprep.subr.mxu0 0.0
        %2962 = vmatpush1.msra.mxu0 0.0
        %2963 = vmatprep.subr.mxu0 0.0
        %2964 = vmatpush1.msra.mxu0 0.0
        %2965 = vmatprep.subr.mxu0 0.0
        %2966 = vmatpush1.msra.mxu0 0.0
        %2967 = vmatprep.subr.mxu0 0.0
        %2968 = vmatpush1.msra.mxu0 0.0
        %2969 = vmatprep.subr.mxu0 0.0
        %2970 = vmatpush1.msra.mxu0 0.0
        %2971 = vmatprep.subr.mxu0 0.0
        %2972 = vmatpush1.msra.mxu0 0.0
        %2973 = vmatprep.subr.mxu0 0.0
        %2974 = vmatpush1.msra.mxu0 0.0
        %2975 = vmatprep.subr.mxu0 0.0
        %2976 = vmatpush1.msra.mxu0 0.0
        %2977 = vmatprep.subr.mxu0 0.0
        %2978 = vmatpush1.msra.mxu0 0.0
        %2979 = vmatprep.mubr.f32.mxu0 0.0
        %2980 = vmatmul.mubr.f32.gmra.mrb[0].mxu0 %v2910
        %v2981 = vpop.f32.mrb[0].mxu0
        %v2982 = vadd.f32 0.0, %v2981
        %v2983 = vpop.f32.mrb[0].mxu0
        %2984 = vmatprep.mubr.f32.mxu0 0.0
        %2985 = vmatmul.mubr.f32.gmra.mrb[0].mxu0 %v2913
        %v2986 = vpop.f32.mrb[0].mxu0
        %v2987 = vadd.f32 0.0, %v2986
        %v2988 = vpop.f32.mrb[0].mxu0
        %2989 = vdwg.mxu0
        %v2990 = vsub.f32 %v2899, %v2982
        %v2991 = vsub.f32 %v2902, %v2987
        %v2992 = vmul.f32 %v2990, %v2990
        %v2993 = vmul.f32 %v2991, %v2991
        %v2995 = vsel %vm1979, %v2992, 0
        %v2998 = vsel %vm1979, %v2993, 0
        %3000 = vmatprep.subr.mxu0 0.0
        %3001 = vmatpush1.msra.mxu0 %v2905
        %3002 = vmatprep.subr.mxu0 0.0
        %3003 = vmatpush1.msra.mxu0 %v2906
        %3004 = vmatprep.subr.mxu0 0.0
        %3005 = vmatpush1.msra.mxu0 %v2907
        %3006 = vmatprep.subr.mxu0 0.0
        %3007 = vmatpush1.msra.mxu0 %v2908
        %3008 = vmatprep.subr.mxu0 0.0
        %3009 = vmatpush1.msra.mxu0 0.0
        %3010 = vmatprep.subr.mxu0 0.0
        %3011 = vmatpush1.msra.mxu0 0.0
        %3012 = vmatprep.subr.mxu0 0.0
        %3013 = vmatpush1.msra.mxu0 0.0
        %3014 = vmatprep.subr.mxu0 0.0
        %3015 = vmatpush1.msra.mxu0 0.0
        %3016 = vmatprep.subr.mxu0 0.0
        %3017 = vmatpush1.msra.mxu0 0.0
        %3018 = vmatprep.subr.mxu0 0.0
        %3019 = vmatpush1.msra.mxu0 0.0
        %3020 = vmatprep.subr.mxu0 0.0
        %3021 = vmatpush1.msra.mxu0 0.0
        %3022 = vmatprep.subr.mxu0 0.0
        %3023 = vmatpush1.msra.mxu0 0.0
        %3024 = vmatprep.subr.mxu0 0.0
        %3025 = vmatpush1.msra.mxu0 0.0
        %3026 = vmatprep.subr.mxu0 0.0
        %3027 = vmatpush1.msra.mxu0 0.0
        %3028 = vmatprep.subr.mxu0 0.0
        %3029 = vmatpush1.msra.mxu0 0.0
        %3030 = vmatprep.subr.mxu0 0.0
        %3031 = vmatpush1.msra.mxu0 0.0
        %3032 = vmatprep.subr.mxu0 0.0
        %3033 = vmatpush1.msra.mxu0 0.0
        %3034 = vmatprep.subr.mxu0 0.0
        %3035 = vmatpush1.msra.mxu0 0.0
        %3036 = vmatprep.subr.mxu0 0.0
        %3037 = vmatpush1.msra.mxu0 0.0
        %3038 = vmatprep.subr.mxu0 0.0
        %3039 = vmatpush1.msra.mxu0 0.0
        %3040 = vmatprep.subr.mxu0 0.0
        %3041 = vmatpush1.msra.mxu0 0.0
        %3042 = vmatprep.subr.mxu0 0.0
        %3043 = vmatpush1.msra.mxu0 0.0
        %3044 = vmatprep.subr.mxu0 0.0
        %3045 = vmatpush1.msra.mxu0 0.0
        %3046 = vmatprep.subr.mxu0 0.0
        %3047 = vmatpush1.msra.mxu0 0.0
        %3048 = vmatprep.subr.mxu0 0.0
        %3049 = vmatpush1.msra.mxu0 0.0
        %3050 = vmatprep.subr.mxu0 0.0
        %3051 = vmatpush1.msra.mxu0 0.0
        %3052 = vmatprep.subr.mxu0 0.0
        %3053 = vmatpush1.msra.mxu0 0.0
        %3054 = vmatprep.subr.mxu0 0.0
        %3055 = vmatpush1.msra.mxu0 0.0
        %3056 = vmatprep.subr.mxu0 0.0
        %3057 = vmatpush1.msra.mxu0 0.0
        %3058 = vmatprep.subr.mxu0 0.0
        %3059 = vmatpush1.msra.mxu0 0.0
        %3060 = vmatprep.subr.mxu0 0.0
        %3061 = vmatpush1.msra.mxu0 0.0
        %3062 = vmatprep.subr.mxu0 0.0
        %3063 = vmatpush1.msra.mxu0 0.0
        %3064 = vmatprep.mubr.f32.mxu0 0.0
        %3065 = vmatmul.mubr.f32.gmra.mrb[0].mxu0 %v2995
        %v3066 = vpop.f32.mrb[0].mxu0
        %v3067 = vadd.f32 1e-06, %v3066
        %v3068 = vpop.f32.mrb[0].mxu0
        %3069 = vmatprep.mubr.f32.mxu0 0.0
        %3070 = vmatmul.mubr.f32.gmra.mrb[0].mxu0 %v2998
        %v3071 = vpop.f32.mrb[0].mxu0
        %v3072 = vadd.f32 1e-06, %v3071
        %v3073 = vpop.f32.mrb[0].mxu0
        %3074 = vdwg.mxu0
        %v3075 = vrsqrt.pop %v3067
        %v3076 = vrsqrt.pop %v3072
        %v3077 = vmul.f32 %v2990, %v3075
        %v3078 = vmul.f32 %v2991, %v3076
        %v3079 = vld [vmem:[#allocation4] sm:$0x1]
        %v3081 = vlaneseq
        %v3082 = vshrl.u32 %v3081, 7
        %v3083 = vsub.s32 0, %v3082
        %v3084 = vrot.slane %v3079, %v3083
        %v3086 = vmul.f32 %v3077, %v3084
        %v3087 = vmul.f32 %v3078, %v3084
        %v3088 = vld [vmem:[#allocation6] sm:$0x1]
        %v3090 = vlaneseq
        %v3091 = vshrl.u32 %v3090, 7
        %v3092 = vsub.s32 0, %v3091
        %v3093 = vrot.slane %v3088, %v3092
        %v3095 = vadd.f32 %v3086, %v3093
        %v3096 = vadd.f32 %v3087, %v3093
        %v3097 = vmul.f32 %v3095, 0.5
        %v3098 = vmul.f32 %v3096, 0.5
        %v3099 = vmul.f32 %v3095, 0.044715
        %v3100 = vmul.f32 %v3096, 0.044715
        %v3101 = vmul.f32 %v3099, %v3095
        %v3102 = vmul.f32 %v3100, %v3096
        %v3103 = vmul.f32 %v3101, %v3095
        %v3104 = vmul.f32 %v3102, %v3096
        %v3105 = vadd.f32 %v3095, %v3103
        %v3106 = vadd.f32 %v3096, %v3104
        %v3107 = vmul.f32 %v3105, 0.7978846
        %v3108 = vmul.f32 %v3106, 0.7978846
        %v3109 = vtanh.pop %v3107
        %v3110 = vtanh.pop %v3108
        %v3111 = vadd.f32 %v3109, 1.0
        %v3112 = vadd.f32 %v3110, 1.0
        %v3113 = vmul.f32 %v3097, %v3111
        %v3114 = vmul.f32 %v3098, %v3112
        %v3115 = vld [vmem:[%s47] sm:$0xf]
        %v3116 = vld [vmem:[%s47 + $0x4] sm:$0xf]
        %v3117 = vld [vmem:[%s47 + $0x8] sm:$0xf]
        %v3118 = vld [vmem:[%s47 + $0xc] sm:$0xf]
        %v3119 = vpack.c.bf16 %v3114, %v3113
        %v3120 = vld [vmem:[#allocation7] sm:$0x1]
        %v3122 = vlaneseq
        %v3123 = vshrl.u32 %v3122, 7
        %v3124 = vsub.s32 0, %v3123
        %v3125 = vrot.slane %v3120, %v3124
        %v3131 = vunpack.c.l.b16 %v3115
        %v3132 = vunpack.c.l.b16 %v3116
        %v3133 = vunpack.c.l.b16 %v3117
        %v3134 = vunpack.c.l.b16 %v3118
        %v3135 = vpack.c.b16 %v3132, %v3131
        %v3136 = vpack.c.b16 %v3134, %v3133
        %v3140 = vsel %vm1979, %v3119, 0
        %3142 = vmatprep.subr.bf16.mxu0 0
        %3143 = vmatpush1.bf16.msra.mxu0 %v3135
        %3144 = vmatprep.subr.bf16.mxu0 0
        %3145 = vmatpush1.bf16.msra.mxu0 %v3136
        %3146 = vmatprep.subr.bf16.mxu0 0
        %3147 = vmatpush1.bf16.msra.mxu0 0
        %3148 = vmatprep.subr.bf16.mxu0 0
        %3149 = vmatpush1.bf16.msra.mxu0 0
        %3150 = vmatprep.subr.bf16.mxu0 0
        %3151 = vmatpush1.bf16.msra.mxu0 0
        %3152 = vmatprep.subr.bf16.mxu0 0
        %3153 = vmatpush1.bf16.msra.mxu0 0
        %3154 = vmatprep.subr.bf16.mxu0 0
        %3155 = vmatpush1.bf16.msra.mxu0 0
        %3156 = vmatprep.subr.bf16.mxu0 0
        %3157 = vmatpush1.bf16.msra.mxu0 0
        %3158 = vmatprep.subr.bf16.mxu0 0
        %3159 = vmatpush1.bf16.msra.mxu0 0
        %3160 = vmatprep.subr.bf16.mxu0 0
        %3161 = vmatpush1.bf16.msra.mxu0 0
        %3162 = vmatprep.subr.bf16.mxu0 0
        %3163 = vmatpush1.bf16.msra.mxu0 0
        %3164 = vmatprep.subr.bf16.mxu0 0
        %3165 = vmatpush1.bf16.msra.mxu0 0
        %3166 = vmatprep.subr.bf16.mxu0 0
        %3167 = vmatpush1.bf16.msra.mxu0 0
        %3168 = vmatprep.subr.bf16.mxu0 0
        %3169 = vmatpush1.bf16.msra.mxu0 0
        %3170 = vmatprep.subr.bf16.mxu0 0
        %3171 = vmatpush1.bf16.msra.mxu0 0
        %3172 = vmatprep.subr.bf16.mxu0 0
        %3173 = vmatpush1.bf16.msra.mxu0 0
        %3174 = vmatprep.mubr.bf16.mxu0 0
        %3175 = vmatmul.mubr.bf16.gmra.mrb[0].mxu0 %v3140
        %v3176 = vpop.f32.mrb[0].mxu0
        %v3177 = vadd.f32 %v3125, %v3176
        %v3178 = vpop.f32.mrb[0].mxu0
        %v3179 = vpop.f32.mrb[0].mxu0
        %v3180 = vadd.f32 %v3125, %v3179
        %v3181 = vpop.f32.mrb[0].mxu0
        %3182 = vdwg.mxu0
        %v3183 = vmul.f32 %v3177, 0.5
        %v3184 = vmul.f32 %v3180, 0.5
        %v3185 = vmul.f32 %v3177, 0.044715
        %v3186 = vmul.f32 %v3180, 0.044715
        %v3187 = vmul.f32 %v3185, %v3177
        %v3188 = vmul.f32 %v3186, %v3180
        %v3189 = vmul.f32 %v3187, %v3177
        %v3190 = vmul.f32 %v3188, %v3180
        %v3191 = vadd.f32 %v3177, %v3189
        %v3192 = vadd.f32 %v3180, %v3190
        %v3193 = vmul.f32 %v3191, 0.7978846
        %v3194 = vmul.f32 %v3192, 0.7978846
        %v3195 = vtanh.pop %v3193
        %v3196 = vtanh.pop %v3194
        %v3197 = vadd.f32 %v3195, 1.0
        %v3198 = vadd.f32 %v3196, 1.0
        %v3199 = vmul.f32 %v3183, %v3197
        %v3200 = vmul.f32 %v3184, %v3198
        %v3201 = vld [vmem:[%s51] sm:$0xf]
        %v3202 = vld [vmem:[%s51 + $0x4] sm:$0xf]
        %v3203 = vpack.c.bf16 %v2848, %v2848
        %v3204 = vld [vmem:[#allocation9] sm:$0x1]
        %v3206 = vshrl.u32 %v3203, 16
        %v3210 = vunpack.c.l.b16 %v3201
        %v3211 = vunpack.c.l.b16 %v3202
        %v3212 = vpack.c.b16 %v3211, %v3210
        %v3215 = vsel %vm1151, %v3206, 0
        %3217 = vmatprep.subr.bf16.mxu0 0
        %3218 = vmatpush1.bf16.msra.mxu0 %v3212
        %3219 = vmatprep.subr.bf16.mxu0 0
        %3220 = vmatpush1.bf16.msra.mxu0 0
        %3221 = vmatprep.subr.bf16.mxu0 0
        %3222 = vmatpush1.bf16.msra.mxu0 0
        %3223 = vmatprep.subr.bf16.mxu0 0
        %3224 = vmatpush1.bf16.msra.mxu0 0
        %3225 = vmatprep.subr.bf16.mxu0 0
        %3226 = vmatpush1.bf16.msra.mxu0 0
        %3227 = vmatprep.subr.bf16.mxu0 0
        %3228 = vmatpush1.bf16.msra.mxu0 0
        %3229 = vmatprep.subr.bf16.mxu0 0
        %3230 = vmatpush1.bf16.msra.mxu0 0
        %3231 = vmatprep.subr.bf16.mxu0 0
        %3232 = vmatpush1.bf16.msra.mxu0 0
        %3233 = vmatprep.subr.bf16.mxu0 0
        %3234 = vmatpush1.bf16.msra.mxu0 0
        %3235 = vmatprep.subr.bf16.mxu0 0
        %3236 = vmatpush1.bf16.msra.mxu0 0
        %3237 = vmatprep.subr.bf16.mxu0 0
        %3238 = vmatpush1.bf16.msra.mxu0 0
        %3239 = vmatprep.subr.bf16.mxu0 0
        %3240 = vmatpush1.bf16.msra.mxu0 0
        %3241 = vmatprep.subr.bf16.mxu0 0
        %3242 = vmatpush1.bf16.msra.mxu0 0
        %3243 = vmatprep.subr.bf16.mxu0 0
        %3244 = vmatpush1.bf16.msra.mxu0 0
        %3245 = vmatprep.subr.bf16.mxu0 0
        %3246 = vmatpush1.bf16.msra.mxu0 0
        %3247 = vmatprep.subr.bf16.mxu0 0
        %3248 = vmatpush1.bf16.msra.mxu0 0
        %3249 = vmatprep.mubr.bf16.mxu0 0
        %3250 = vmatmul.mubr.bf16.gmra.mrb[0].mxu0 %v3215
        %v3251 = vpop.f32.mrb[0].mxu0
        %v3252 = vadd.f32 %v3204, %v3251
        %v3253 = vpop.f32.mrb[0].mxu0
        %v3254 = vpop.f32.mrb[0].mxu0
        %v3255 = vpop.f32.mrb[0].mxu0
        %3256 = vdwg.mxu0
        %v3257 = vmax.f32 %v3252, 0.0
        %v3258 = vld [vmem:[%s55] sm:$0xf]
        %v3259 = vld [vmem:[%s55 + $0x4] sm:$0xf]
        %v3260 = vpack.c.bf16 %v3257, %v3257
        %v3261 = vld [vmem:[#allocation10] sm:$0x1]
        %v3264 = vunpack.c.l.b16 %v3258
        %v3265 = vunpack.c.l.b16 %v3259
        %v3266 = vpack.c.b16 %v3265, %v3264
        %v3269 = vsel %vm1151, %v3260, 0
        %3271 = vmatprep.subr.bf16.mxu0 0
        %3272 = vmatpush1.bf16.msra.mxu0 %v3266
        %3273 = vmatprep.subr.bf16.mxu0 0
        %3274 = vmatpush1.bf16.msra.mxu0 0
        %3275 = vmatprep.subr.bf16.mxu0 0
        %3276 = vmatpush1.bf16.msra.mxu0 0
        %3277 = vmatprep.subr.bf16.mxu0 0
        %3278 = vmatpush1.bf16.msra.mxu0 0
        %3279 = vmatprep.subr.bf16.mxu0 0
        %3280 = vmatpush1.bf16.msra.mxu0 0
        %3281 = vmatprep.subr.bf16.mxu0 0
        %3282 = vmatpush1.bf16.msra.mxu0 0
        %3283 = vmatprep.subr.bf16.mxu0 0
        %3284 = vmatpush1.bf16.msra.mxu0 0
        %3285 = vmatprep.subr.bf16.mxu0 0
        %3286 = vmatpush1.bf16.msra.mxu0 0
        %3287 = vmatprep.subr.bf16.mxu0 0
        %3288 = vmatpush1.bf16.msra.mxu0 0
        %3289 = vmatprep.subr.bf16.mxu0 0
        %3290 = vmatpush1.bf16.msra.mxu0 0
        %3291 = vmatprep.subr.bf16.mxu0 0
        %3292 = vmatpush1.bf16.msra.mxu0 0
        %3293 = vmatprep.subr.bf16.mxu0 0
        %3294 = vmatpush1.bf16.msra.mxu0 0
        %3295 = vmatprep.subr.bf16.mxu0 0
        %3296 = vmatpush1.bf16.msra.mxu0 0
        %3297 = vmatprep.subr.bf16.mxu0 0
        %3298 = vmatpush1.bf16.msra.mxu0 0
        %3299 = vmatprep.subr.bf16.mxu0 0
        %3300 = vmatpush1.bf16.msra.mxu0 0
        %3301 = vmatprep.subr.bf16.mxu0 0
        %3302 = vmatpush1.bf16.msra.mxu0 0
        %3303 = vmatprep.mubr.bf16.mxu0 0
        %3304 = vmatmul.mubr.bf16.gmra.mrb[0].mxu0 %v3269
        %v3305 = vpop.f32.mrb[0].mxu0
        %v3306 = vadd.f32 %v3261, %v3305
        %v3307 = vpop.f32.mrb[0].mxu0
        %v3308 = vpop.f32.mrb[0].mxu0
        %v3309 = vpop.f32.mrb[0].mxu0
        %3310 = vdwg.mxu0
        %v3311 = vmax.f32 %v3306, 0.0
        %v3312 = vld [vmem:[%s59] sm:$0xf]
        %v3313 = vld [vmem:[%s59 + $0x4] sm:$0xf]
        %v3314 = vpack.c.bf16 %v3311, %v3311
        %v3315 = vld [vmem:[#allocation12] sm:$0x1]
        %v3318 = vunpack.c.l.b16 %v3312
        %v3319 = vunpack.c.l.b16 %v3313
        %v3320 = vpack.c.b16 %v3319, %v3318
        %v3323 = vsel %vm1151, %v3314, 0
        %3325 = vmatprep.subr.bf16.mxu0 0
        %3326 = vmatpush1.bf16.msra.mxu0 %v3320
        %3327 = vmatprep.subr.bf16.mxu0 0
        %3328 = vmatpush1.bf16.msra.mxu0 0
        %3329 = vmatprep.subr.bf16.mxu0 0
        %3330 = vmatpush1.bf16.msra.mxu0 0
        %3331 = vmatprep.subr.bf16.mxu0 0
        %3332 = vmatpush1.bf16.msra.mxu0 0
        %3333 = vmatprep.subr.bf16.mxu0 0
        %3334 = vmatpush1.bf16.msra.mxu0 0
        %3335 = vmatprep.subr.bf16.mxu0 0
        %3336 = vmatpush1.bf16.msra.mxu0 0
        %3337 = vmatprep.subr.bf16.mxu0 0
        %3338 = vmatpush1.bf16.msra.mxu0 0
        %3339 = vmatprep.subr.bf16.mxu0 0
        %3340 = vmatpush1.bf16.msra.mxu0 0
        %3341 = vmatprep.subr.bf16.mxu0 0
        %3342 = vmatpush1.bf16.msra.mxu0 0
        %3343 = vmatprep.subr.bf16.mxu0 0
        %3344 = vmatpush1.bf16.msra.mxu0 0
        %3345 = vmatprep.subr.bf16.mxu0 0
        %3346 = vmatpush1.bf16.msra.mxu0 0
        %3347 = vmatprep.subr.bf16.mxu0 0
        %3348 = vmatpush1.bf16.msra.mxu0 0
        %3349 = vmatprep.subr.bf16.mxu0 0
        %3350 = vmatpush1.bf16.msra.mxu0 0
        %3351 = vmatprep.subr.bf16.mxu0 0
        %3352 = vmatpush1.bf16.msra.mxu0 0
        %3353 = vmatprep.subr.bf16.mxu0 0
        %3354 = vmatpush1.bf16.msra.mxu0 0
        %3355 = vmatprep.subr.bf16.mxu0 0
        %3356 = vmatpush1.bf16.msra.mxu0 0
        %3357 = vmatprep.mubr.bf16.mxu0 0
        %3358 = vmatmul.mubr.bf16.gmra.mrb[0].mxu0 %v3323
        %v3359 = vpop.f32.mrb[0].mxu0
        %v3360 = vadd.f32 %v3315, %v3359
        %v3361 = vpop.f32.mrb[0].mxu0
        %v3362 = vpop.f32.mrb[0].mxu0
        %v3363 = vpop.f32.mrb[0].mxu0
        %3364 = vdwg.mxu0
        %v3365 = vld [vmem:[%s63] sm:$0xf]
        %vm3366 = vcmask 31744
        %v3368 = vsel %vm3366, %v3360, 0
        %v3371 = vsel %vm1373, %v3365, 0
        %3373 = vmatprep.subr.mxu0 0.0
        %3374 = vmatpush1.msra.mxu0 %v3371
        %3375 = vmatprep.subr.mxu0 0.0
        %3376 = vmatpush1.msra.mxu0 0.0
        %3377 = vmatprep.subr.mxu0 0.0
        %3378 = vmatpush1.msra.mxu0 0.0
        %3379 = vmatprep.subr.mxu0 0.0
        %3380 = vmatpush1.msra.mxu0 0.0
        %3381 = vmatprep.subr.mxu0 0.0
        %3382 = vmatpush1.msra.mxu0 0.0
        %3383 = vmatprep.subr.mxu0 0.0
        %3384 = vmatpush1.msra.mxu0 0.0
        %3385 = vmatprep.subr.mxu0 0.0
        %3386 = vmatpush1.msra.mxu0 0.0
        %3387 = vmatprep.subr.mxu0 0.0
        %3388 = vmatpush1.msra.mxu0 0.0
        %3389 = vmatprep.subr.mxu0 0.0
        %3390 = vmatpush1.msra.mxu0 0.0
        %3391 = vmatprep.subr.mxu0 0.0
        %3392 = vmatpush1.msra.mxu0 0.0
        %3393 = vmatprep.subr.mxu0 0.0
        %3394 = vmatpush1.msra.mxu0 0.0
        %3395 = vmatprep.subr.mxu0 0.0
        %3396 = vmatpush1.msra.mxu0 0.0
        %3397 = vmatprep.subr.mxu0 0.0
        %3398 = vmatpush1.msra.mxu0 0.0
        %3399 = vmatprep.subr.mxu0 0.0
        %3400 = vmatpush1.msra.mxu0 0.0
        %3401 = vmatprep.subr.mxu0 0.0
        %3402 = vmatpush1.msra.mxu0 0.0
        %3403 = vmatprep.subr.mxu0 0.0
        %3404 = vmatpush1.msra.mxu0 0.0
        %3405 = vmatprep.subr.mxu0 0.0
        %3406 = vmatpush1.msra.mxu0 0.0
        %3407 = vmatprep.subr.mxu0 0.0
        %3408 = vmatpush1.msra.mxu0 0.0
        %3409 = vmatprep.subr.mxu0 0.0
        %3410 = vmatpush1.msra.mxu0 0.0
        %3411 = vmatprep.subr.mxu0 0.0
        %3412 = vmatpush1.msra.mxu0 0.0
        %3413 = vmatprep.subr.mxu0 0.0
        %3414 = vmatpush1.msra.mxu0 0.0
        %3415 = vmatprep.subr.mxu0 0.0
        %3416 = vmatpush1.msra.mxu0 0.0
        %3417 = vmatprep.subr.mxu0 0.0
        %3418 = vmatpush1.msra.mxu0 0.0
        %3419 = vmatprep.subr.mxu0 0.0
        %3420 = vmatpush1.msra.mxu0 0.0
        %3421 = vmatprep.subr.mxu0 0.0
        %3422 = vmatpush1.msra.mxu0 0.0
        %3423 = vmatprep.subr.mxu0 0.0
        %3424 = vmatpush1.msra.mxu0 0.0
        %3425 = vmatprep.subr.mxu0 0.0
        %3426 = vmatpush1.msra.mxu0 0.0
        %3427 = vmatprep.subr.mxu0 0.0
        %3428 = vmatpush1.msra.mxu0 0.0
        %3429 = vmatprep.subr.mxu0 0.0
        %3430 = vmatpush1.msra.mxu0 0.0
        %3431 = vmatprep.subr.mxu0 0.0
        %3432 = vmatpush1.msra.mxu0 0.0
        %3433 = vmatprep.subr.mxu0 0.0
        %3434 = vmatpush1.msra.mxu0 0.0
        %3435 = vmatprep.subr.mxu0 0.0
        %3436 = vmatpush1.msra.mxu0 0.0
        %3437 = vmatprep.mubr.f32.mxu0 0.0
        %3438 = vmatmul.mubr.f32.gmra.mrb[0].mxu0 %v3368
        %v3439 = vpop.f32.mrb[0].mxu0
        %v3440 = vadd.f32 0.0, %v3439
        %v3441 = vpop.f32.mrb[0].mxu0
        %3442 = vdwg.mxu0
        %v3443 = vlaneseq
        %v3444 = vshrl.u32 %v3443, 7
        %v3445 = vsub.s32 0, %v3444
        %v3446 = vrot.slane %v3440, %v3445
        %v3447 = vmul.f32 %v3199, %v3446
        %v3448 = vmul.f32 %v3200, %v3446
        %v3449 = vld [vmem:[%s65] sm:$0xff]
        %v3450 = vld [vmem:[%s65 + $0x8] sm:$0xff]
        %v3451 = vld [vmem:[%s65 + $0x10] sm:$0xff]
        %v3452 = vld [vmem:[%s65 + $0x18] sm:$0xff]
        %v3453 = vld [vmem:[%s65 + $0x20] sm:$0xff]
        %v3454 = vld [vmem:[%s65 + $0x28] sm:$0xff]
        %v3455 = vld [vmem:[%s65 + $0x30] sm:$0xff]
        %v3456 = vld [vmem:[%s65 + $0x38] sm:$0xff]
        %vm3457 = vcmask 523264
        %v3459 = vsel %vm3457, %v3447, 0
        %v3462 = vsel %vm3457, %v3448, 0
        %3464 = vmatprep.subr.mxu0 0.0
        %3465 = vmatpush1.msra.mxu0 %v3449
        %3466 = vmatprep.subr.mxu0 0.0
        %3467 = vmatpush1.msra.mxu0 %v3450
        %3468 = vmatprep.subr.mxu0 0.0
        %3469 = vmatpush1.msra.mxu0 %v3451
        %3470 = vmatprep.subr.mxu0 0.0
        %3471 = vmatpush1.msra.mxu0 %v3452
        %3472 = vmatprep.subr.mxu0 0.0
        %3473 = vmatpush1.msra.mxu0 %v3453
        %3474 = vmatprep.subr.mxu0 0.0
        %3475 = vmatpush1.msra.mxu0 %v3454
        %3476 = vmatprep.subr.mxu0 0.0
        %3477 = vmatpush1.msra.mxu0 %v3455
        %3478 = vmatprep.subr.mxu0 0.0
        %3479 = vmatpush1.msra.mxu0 %v3456
        %3480 = vmatprep.subr.mxu0 0.0
        %3481 = vmatpush1.msra.mxu0 0.0
        %3482 = vmatprep.subr.mxu0 0.0
        %3483 = vmatpush1.msra.mxu0 0.0
        %3484 = vmatprep.subr.mxu0 0.0
        %3485 = vmatpush1.msra.mxu0 0.0
        %3486 = vmatprep.subr.mxu0 0.0
        %3487 = vmatpush1.msra.mxu0 0.0
        %3488 = vmatprep.subr.mxu0 0.0
        %3489 = vmatpush1.msra.mxu0 0.0
        %3490 = vmatprep.subr.mxu0 0.0
        %3491 = vmatpush1.msra.mxu0 0.0
        %3492 = vmatprep.subr.mxu0 0.0
        %3493 = vmatpush1.msra.mxu0 0.0
        %3494 = vmatprep.subr.mxu0 0.0
        %3495 = vmatpush1.msra.mxu0 0.0
        %3496 = vmatprep.subr.mxu0 0.0
        %3497 = vmatpush1.msra.mxu0 0.0
        %3498 = vmatprep.subr.mxu0 0.0
        %3499 = vmatpush1.msra.mxu0 0.0
        %3500 = vmatprep.subr.mxu0 0.0
        %3501 = vmatpush1.msra.mxu0 0.0
        %3502 = vmatprep.subr.mxu0 0.0
        %3503 = vmatpush1.msra.mxu0 0.0
        %3504 = vmatprep.subr.mxu0 0.0
        %3505 = vmatpush1.msra.mxu0 0.0
        %3506 = vmatprep.subr.mxu0 0.0
        %3507 = vmatpush1.msra.mxu0 0.0
        %3508 = vmatprep.subr.mxu0 0.0
        %3509 = vmatpush1.msra.mxu0 0.0
        %3510 = vmatprep.subr.mxu0 0.0
        %3511 = vmatpush1.msra.mxu0 0.0
        %3512 = vmatprep.subr.mxu0 0.0
        %3513 = vmatpush1.msra.mxu0 0.0
        %3514 = vmatprep.subr.mxu0 0.0
        %3515 = vmatpush1.msra.mxu0 0.0
        %3516 = vmatprep.subr.mxu0 0.0
        %3517 = vmatpush1.msra.mxu0 0.0
        %3518 = vmatprep.subr.mxu0 0.0
        %3519 = vmatpush1.msra.mxu0 0.0
        %3520 = vmatprep.subr.mxu0 0.0
        %3521 = vmatpush1.msra.mxu0 0.0
        %3522 = vmatprep.subr.mxu0 0.0
        %3523 = vmatpush1.msra.mxu0 0.0
        %3524 = vmatprep.subr.mxu0 0.0
        %3525 = vmatpush1.msra.mxu0 0.0
        %3526 = vmatprep.subr.mxu0 0.0
        %3527 = vmatpush1.msra.mxu0 0.0
        %3528 = vmatprep.mubr.f32.mxu0 0.0
        %3529 = vmatmul.mubr.f32.gmra.mrb[0].mxu0 %v3459
        %v3530 = vpop.f32.mrb[0].mxu0
        %v3531 = vadd.f32 0.0, %v3530
        %v3532 = vpop.f32.mrb[0].mxu0
        %3533 = vmatprep.mubr.f32.mxu0 0.0
        %3534 = vmatmul.mubr.f32.gmra.mrb[0].mxu0 %v3462
        %v3535 = vpop.f32.mrb[0].mxu0
        %v3536 = vadd.f32 0.0, %v3535
        %v3537 = vpop.f32.mrb[0].mxu0
        %3538 = vdwg.mxu0
        %3539 = vst.msk [vmem:[%s1119] sm:$0xff] %vm1151, %v3531
        %3540 = vst.msk [vmem:[%s1119 + $0x8] sm:$0xff] %vm1151, %v3536
        %p3541 = scmp.lt.s32.totalorder %s82, 1
        %s3542 = scalar_select %p3541, %s82, 1
        %s3543 = smul.addr %s3542, 2
        %s3544 = smul.addr %s3543, 8
        %s3545 = scalar_lea.vmem %s67, %s3544
        // Predicated region
        $region181: #{medsam_forward.4} parent=151 // pred_check
          %p3546 = pneg %p803
        $region182: #{medsam_forward.4} parent=151 // pred_check_branch
          %3548 = sbr.rel (%p3546) target = $region184
        $region183: #{medsam_forward.4} parent=151 // pred_region
          _
        $region184: #{medsam_forward.4} parent=151 // pred_fallthru
          _
      $region152: #{medsam_forward.4} parent=5 // pred_fallthru
        _
      %p3549 = scmp.le.s32.totalorder 2, %s77
      // Predicated region
      $region185: #{medsam_forward.4} parent=5 // pred_check
        %p3550 = pneg %p3549
      $region186: #{medsam_forward.4} parent=5 // pred_check_branch
        %3552 = sbr.rel (%p3550) target = $region188
      $region187: #{medsam_forward.4} parent=5 // pred_region
        %s3553 = ssub.s32 %s77, 2
        // Predicated region
        $region189: #{medsam_forward.4} parent=187 // pred_check
          %p3554 = pneg %p809
        $region190: #{medsam_forward.4} parent=187 // pred_check_branch
          %3556 = sbr.rel (%p3554) target = $region192
        $region191: #{medsam_forward.4} parent=187 // pred_region
          %p3557 = scmp.lt.s32.totalorder %s83, 1
          %s3558 = scalar_select %p3557, %s83, 1
          %s3559 = smul.addr %s3558, 2
          %s3560 = smul.addr %s3559, 8
          %s3561 = scalar_lea.vmem %s67, %s3560
        $region192: #{medsam_forward.4} parent=187 // pred_fallthru
          _
      $region188: #{medsam_forward.4} parent=5 // pred_fallthru
        _
    $region6: #{medsam_forward.4} parent=1 // loop_footer
      %s81 = sadd.s32 1, %s77
    $region7: #{medsam_forward.4} parent=1 // loop_footer_branch
      %76 = sbr.rel target = $region3
    $region8: #{medsam_forward.4} parent=1 // loop_exit
      _
    %3562 = vsyncpa [#allocation3], 1
    %s3563 = scalar_lea.sflag [#allocation3], 1
    %3564 = vsyncpa %s3563, 1
    %3565 = vsyncpa [#allocation5], 1
    %3566 = vsyncpa [#allocation8], 1
    %3567 = vsyncpa [#allocation11], 1

</llo_original>
